<compile_context>
chip_gen: v7x
topology: tpu7x:2x2x1
jax: 0.10.0
libtpu: 0.0.40
codegen_flags: <defaults>
</compile_context>

<pallas_src>
import jax
import jax.numpy as jnp
import numpy as np
from jax.experimental import pallas as pl
from jax.experimental.pallas import tpu as pltpu

EPS = 1e-5

# Fixed DConvNet architecture: kernel sizes / pads / output channels.
K1, K2, K3, K4 = 9, 1, 3, 5
P1, P3, P4 = 4, 1, 2
C1, C2, C3, C4 = 64, 64, 32, 1
KK1 = K1 * K1                 # 81
KK1_PAD = 128                 # conv1 contraction dim padded to a full lane tile
NTAB = C1 + C2 + C3           # 160: packed [bias; scale; shift] table width

LP3 = 8                       # sublane-aligned interior start in conv3 scratch
LP4 = 8                       # sublane-aligned interior start in conv4 scratch


def _round_up(x, m):
    return (x + m - 1) // m * m


def _pick_bb(batch, max_bb=4):
    """Largest Bb <= max_bb dividing batch while keeping grid length >= 2."""
    bb = 1
    for cand in range(2, max_bb + 1):
        if batch % cand == 0 and batch // cand >= 2:
            bb = cand
    return bb


def _fused_kernel(H, W, Bb):
    HW = H * W
    M = Bb * HW
    Hp3, Wp3 = H + 2 * P3, _round_up(LP3 + W + P3, 8)
    Hp4, Wp4 = H + 2 * P4, _round_up(LP4 + W + P4, 8)

    def kernel(patches_ref, w1_ref, w2_ref, w3_ref, w4_ref, ptab_ref, b4_ref,
               o_ref, pad1_ref, pad3_ref):
        # ---- conv1: 9x9, 1 -> 64 (wrapper-side im2col) + bias + ReLU + BN ----
        a = jnp.dot(patches_ref[...], w1_ref[...],
                    preferred_element_type=jnp.float32)               # (M, 64)
        a = jnp.maximum(a + ptab_ref[0:1, 0:C1], 0.0)
        a = a * ptab_ref[1:2, 0:C1] + ptab_ref[2:3, 0:C1]

        # ---- conv2: 1x1, 64 -> 64 + bias + ReLU + BN ----
        a = jnp.dot(a, w2_ref[...], preferred_element_type=jnp.float32)
        a = jnp.maximum(a + ptab_ref[0:1, C1:C1 + C2], 0.0)
        a = a * ptab_ref[1:2, C1:C1 + C2] + ptab_ref[2:3, C1:C1 + C2]

        # ---- conv3: 3x3 pad 1, 64 -> 32 + bias + ReLU + BN ----
        # Halo-only zeroing every step (scratch persists across steps / cores),
        # interior write at a sublane-aligned offset, then 9 tap-wise
        # matmul-accumulates (no K=576 im2col concat is ever materialized).
        pad1_ref[:, 0:P3, :, :] = jnp.zeros((Bb, P3, Wp3, C2), jnp.float32)
        pad1_ref[:, P3 + H:Hp3, :, :] = jnp.zeros((Bb, P3, Wp3, C2),
                                                  jnp.float32)
        pad1_ref[:, :, LP3 - P3:LP3, :] = jnp.zeros((Bb, Hp3, P3, C2),
                                                    jnp.float32)
        pad1_ref[:, :, LP3 + W:LP3 + W + P3, :] = jnp.zeros((Bb, Hp3, P3, C2),
                                                            jnp.float32)
        pad1_ref[:, P3:P3 + H, LP3:LP3 + W, :] = a.reshape(Bb, H, W, C2)

        acc3 = jnp.zeros((M, C3), jnp.float32)
        for kh in range(K3):
            for kw in range(K3):
                cs = LP3 - P3 + kw
                tap = pad1_ref[:, kh:kh + H, cs:cs + W, :]
                acc3 = acc3 + jnp.dot(tap.reshape(M, C2),
                                      w3_ref[kh * K3 + kw],
                                      preferred_element_type=jnp.float32)
        a3 = jnp.maximum(acc3 + ptab_ref[0:1, C1 + C2:NTAB], 0.0)
        a3 = a3 * ptab_ref[1:2, C1 + C2:NTAB] + ptab_ref[2:3, C1 + C2:NTAB]

        # ---- conv4: 5x5 pad 2, 32 -> 1, + bias (no ReLU / BN) ----
        # 25 tap-wise VPU FMAs on a (Bb,H,W,32) accumulator + one 32-lane reduce.
        pad3_ref[:, 0:P4, :, :] = jnp.zeros((Bb, P4, Wp4, C3), jnp.float32)
        pad3_ref[:, P4 + H:Hp4, :, :] = jnp.zeros((Bb, P4, Wp4, C3),
                                                  jnp.float32)
        pad3_ref[:, :, LP4 - P4:LP4, :] = jnp.zeros((Bb, Hp4, P4, C3),
                                                    jnp.float32)
        pad3_ref[:, :, LP4 + W:LP4 + W + P4, :] = jnp.zeros((Bb, Hp4, P4, C3),
                                                            jnp.float32)
        pad3_ref[:, P4:P4 + H, LP4:LP4 + W, :] = a3.reshape(Bb, H, W, C3)

        acc4 = jnp.zeros((Bb, H, W, C3), jnp.float32)
        for kh in range(K4):
            for kw in range(K4):
                cs = LP4 - P4 + kw
                t = kh * K4 + kw
                tap = pad3_ref[:, kh:kh + H, cs:cs + W, :]
                acc4 = acc4 + tap * w4_ref[t:t + 1, :]
        out = jnp.sum(acc4, axis=-1) + b4_ref[0]                      # (Bb,H,W)
        o_ref[...] = out.reshape(Bb, 1, HW)       # lane-dense (256-lane) store

    return kernel, (Hp3, Wp3), (Hp4, Wp4)


def prepare_params(p):
    """Reshape OIHW conv weights to GEMM / tap form and fold conv bias +
    eval-mode BatchNorm into one packed (3, 160) table [bias; scale; shift]."""
    def gemm_w(w_oihw):   # (Cout, Cin, KH, KW) -> (KH*KW*Cin, Cout)
        cout = w_oihw.shape[0]
        return jnp.transpose(w_oihw, (2, 3, 1, 0)).reshape(-1, cout)

    def fold(bias, bn):
        gamma, beta, mean, var = bn
        scale = gamma * jax.lax.rsqrt(var + EPS)
        shift = beta - mean * scale
        return jnp.stack([bias, scale, shift], axis=0)   # (3, C)

    ptab = jnp.concatenate([fold(p["b1"], p["bn1"]),
                            fold(p["b2"], p["bn2"]),
                            fold(p["b3"], p["bn3"])], axis=1)          # (3,160)
    return {
        "w1": jnp.pad(gemm_w(p["w1"]), ((0, KK1_PAD - KK1), (0, 0))),  # (128,64)
        "w2": gemm_w(p["w2"]),                                         # (64,64)
        "w3": jnp.transpose(p["w3"], (2, 3, 1, 0)).reshape(K3 * K3, C2, C3),
        "w4": jnp.transpose(p["w4"], (2, 3, 1, 0)).reshape(K4 * K4, C3),
        "ptab": ptab,
        "b4": p["b4"].reshape(1,),                                     # SMEM
    }


def dconvnet_forward(x_nchw, kp):
    """Full DConvNet forward.  Input/output: NCHW (b, 1, h, w), like PyTorch."""
    B, Cin, H, W = x_nchw.shape
    assert Cin == 1
    assert H % 8 == 0 and W % 8 == 0, "spatial dims must be multiples of 8"
    HW = H * W
    Bb = _pick_bb(B)

    # Wrapper-side im2col for the single-channel first layer; column order
    # (kh*K1 + kw) matches the (KH,KW,Cin,Cout) weight reshape. K padded to 128.
    xp = jnp.pad(x_nchw.reshape(B, H, W), ((0, 0), (P1, P1), (P1, P1)))
    cols = [xp[:, kh:kh + H, kw:kw + W].reshape(B, HW, 1)
            for kh in range(K1) for kw in range(K1)]
    patches = jnp.pad(jnp.concatenate(cols, axis=-1),
                      ((0, 0), (0, 0), (0, KK1_PAD - KK1)))   # (B, HW, 128)
    patches = patches.reshape(B * HW, KK1_PAD)

    kernel, (hp3, wp3), (hp4, wp4) = _fused_kernel(H, W, Bb)
    out = pl.pallas_call(
        kernel,
        out_shape=jax.ShapeDtypeStruct((B, 1, HW), jnp.float32),
        grid=(B // Bb,),
        in_specs=[
            pl.BlockSpec((Bb * HW, KK1_PAD), lambda b: (b, 0)),
            pl.BlockSpec((KK1_PAD, C1), lambda b: (0, 0)),
            pl.BlockSpec((C1, C2), lambda b: (0, 0)),
            pl.BlockSpec((K3 * K3, C2, C3), lambda b: (0, 0, 0)),
            pl.BlockSpec((K4 * K4, C3), lambda b: (0, 0)),
            pl.BlockSpec((3, NTAB), lambda b: (0, 0)),
            pl.BlockSpec(memory_space=pltpu.MemorySpace.SMEM),  # conv4 bias
        ],
        out_specs=pl.BlockSpec((Bb, 1, HW), lambda b: (b, 0, 0)),
        scratch_shapes=[
            pltpu.VMEM((Bb, hp3, wp3, C2), jnp.float32),   # conv3 padded act
            pltpu.VMEM((Bb, hp4, wp4, C3), jnp.float32),   # conv4 padded act
        ],
        compiler_params=pltpu.CompilerParams(
            dimension_semantics=("parallel",)),   # batch steps split across TCs
    )(patches, kp["w1"], kp["w2"], kp["w3"], kp["w4"], kp["ptab"], kp["b4"])
    return out.reshape(B, 1, H, W)


# ----------------------------- reference (plain JAX) ------------------------

def dconvnet_reference(x_nchw, p):
    def conv(x, w_oihw, b, pad):
        w = jnp.transpose(w_oihw, (2, 3, 1, 0))   # OIHW -> HWIO
        y = jax.lax.conv_general_dilated(
            x, w, window_strides=(1, 1),
            padding=[(pad, pad), (pad, pad)],
            dimension_numbers=("NHWC", "HWIO", "NHWC"))
        return y + b.reshape(1, 1, 1, -1)

    def bn(x, gamma, beta, mean, var):
        return (x - mean) * (gamma * jax.lax.rsqrt(var + EPS)) + beta

    x = jnp.transpose(x_nchw, (0, 2, 3, 1))
    x = bn(jnp.maximum(conv(x, p["w1"], p["b1"], P1), 0.0), *p["bn1"])
    x = bn(jnp.maximum(conv(x, p["w2"], p["b2"], 0), 0.0), *p["bn2"])
    x = bn(jnp.maximum(conv(x, p["w3"], p["b3"], P3), 0.0), *p["bn3"])
    x = conv(x, p["w4"], p["b4"], P4)
    return jnp.transpose(x, (0, 3, 1, 2))


# ----------------------------- parameter init -------------------------------

def init_params(key):
    """Deterministic synthetic parameters in PyTorch layout (OIHW weights)."""
    def conv_w(k, cout, cin, ksz):
        w = jax.random.normal(k, (cout, cin, ksz, ksz), jnp.float32)
        return w * (0.5 / np.sqrt(cin * ksz * ksz))

    def bn(k, c):
        k1, k2, k3, k4 = jax.random.split(k, 4)
        gamma = 1.0 + 0.1 * jax.random.normal(k1, (c,), jnp.float32)
        beta = 0.1 * jax.random.normal(k2, (c,), jnp.float32)
        mean = 0.1 * jax.random.normal(k3, (c,), jnp.float32)
        var = jax.random.uniform(k4, (c,), jnp.float32, 0.5, 1.5)
        return (gamma, beta, mean, var)

    ks = jax.random.split(key, 12)
    return {
        "w1": conv_w(ks[0], C1, 1, K1),
        "b1": 0.05 * jax.random.normal(ks[1], (C1,), jnp.float32),
        "bn1": bn(ks[2], C1),
        "w2": conv_w(ks[3], C2, C1, K2),
        "b2": 0.05 * jax.random.normal(ks[4], (C2,), jnp.float32),
        "bn2": bn(ks[5], C2),
        "w3": conv_w(ks[6], C3, C2, K3),
        "b3": 0.05 * jax.random.normal(ks[7], (C3,), jnp.float32),
        "bn3": bn(ks[8], C3),
        "w4": conv_w(ks[9], C4, C3, K4),
        "b4": 0.05 * jax.random.normal(ks[10], (C4,), jnp.float32),
    }


if __name__ == "__main__":
    key = jax.random.PRNGKey(0)
    kp, kx = jax.random.split(key)
    params = init_params(kp)

    # Input: (b, 1, h, w) as the PyTorch forward expects.
    x = jax.random.normal(kx, (2, 1, 16, 16), jnp.float32)

    fwd = jax.jit(lambda xx, pp: dconvnet_forward(xx, prepare_params(pp)))
    out = jax.block_until_ready(fwd(x, params))
    assert out.shape == (2, 1, 16, 16), out.shape

    ref = jax.block_until_ready(jax.jit(dconvnet_reference)(x, params))
    np.testing.assert_allclose(np.asarray(out), np.asarray(ref),
                               rtol=1e-4, atol=2e-4)

    print("KERNEL_OK")
</pallas_src>

<mosaic_0001>
module attributes {stable_mosaic.version = 11 : i64} {
  func.func @kernel(%arg0: i32, %arg1: memref<256x128xf32, #tpu.memory_space<vmem>>, %arg2: memref<128x64xf32, #tpu.memory_space<vmem>>, %arg3: memref<64x64xf32, #tpu.memory_space<vmem>>, %arg4: memref<9x64x32xf32, #tpu.memory_space<vmem>>, %arg5: memref<25x32xf32, #tpu.memory_space<vmem>>, %arg6: memref<3x160xf32, #tpu.memory_space<vmem>>, %arg7: memref<1xf32, #tpu.memory_space<smem>>, %arg8: memref<1x1x256xf32, #tpu.memory_space<vmem>>, %arg9: memref<1x18x32x64xf32, #tpu.memory_space<vmem>>, %arg10: memref<1x20x32x32xf32, #tpu.memory_space<vmem>>) attributes {dimension_semantics = [#tpu.dimension_semantics<parallel>], iteration_bounds = array<i64: 2>, scalar_prefetch = 0 : i64, scratch_operands = 2 : i64, tpu.core_type = #tpu.core_type<tc>, window_params = [{transform_indices = @transform_0, window_bounds = array<i64: 256, 128>}, {pipeline_mode = #tpu.pipeline_mode<synchronous>, transform_indices = @transform_1, window_bounds = array<i64: 128, 64>}, {pipeline_mode = #tpu.pipeline_mode<synchronous>, transform_indices = @transform_2, window_bounds = array<i64: 64, 64>}, {pipeline_mode = #tpu.pipeline_mode<synchronous>, transform_indices = @transform_3, window_bounds = array<i64: 9, 64, 32>}, {pipeline_mode = #tpu.pipeline_mode<synchronous>, transform_indices = @transform_4, window_bounds = array<i64: 25, 32>}, {pipeline_mode = #tpu.pipeline_mode<synchronous>, transform_indices = @transform_5, window_bounds = array<i64: 3, 160>}, {transform_indices = @transform_6, window_bounds = array<i64: 1>}, {transform_indices = @transform_7, window_bounds = array<i64: 1, 1, 256>}]} {
    %c0 = arith.constant 0 : index
    %c0_0 = arith.constant 0 : index
    %0 = vector.load %arg1[%c0, %c0_0] : memref<256x128xf32, #tpu.memory_space<vmem>>, vector<256x128xf32>
    %c0_1 = arith.constant 0 : index
    %c0_2 = arith.constant 0 : index
    %1 = vector.load %arg2[%c0_1, %c0_2] : memref<128x64xf32, #tpu.memory_space<vmem>>, vector<128x64xf32>
    %cst = arith.constant dense<0.000000e+00> : vector<256x64xf32>
    %2 = tpu.matmul %0, %1, %cst {dimension_numbers = #tpu.dot_dimension_numbers<[1], [0], [0], [1], [0, 0, 1, 1], [], []>} : vector<256x128xf32>, vector<128x64xf32>, vector<256x64xf32> -> vector<256x64xf32>
    %c0_3 = arith.constant 0 : index
    %c0_4 = arith.constant 0 : index
    %3 = vector.load %arg6[%c0_3, %c0_4] : memref<3x160xf32, #tpu.memory_space<vmem>>, vector<1x64xf32>
    %4 = vector.broadcast %3 : vector<1x64xf32> to vector<256x64xf32>
    %5 = arith.addf %2, %4 : vector<256x64xf32>
    %cst_5 = arith.constant 0.000000e+00 : f32
    %6 = vector.broadcast %cst_5 : f32 to vector<256x64xf32>
    %7 = arith.maximumf %5, %6 : vector<256x64xf32>
    %c1 = arith.constant 1 : index
    %c0_6 = arith.constant 0 : index
    %8 = vector.load %arg6[%c1, %c0_6] : memref<3x160xf32, #tpu.memory_space<vmem>>, vector<1x64xf32>
    %9 = vector.broadcast %8 : vector<1x64xf32> to vector<256x64xf32>
    %10 = arith.mulf %7, %9 : vector<256x64xf32>
    %c2 = arith.constant 2 : index
    %c0_7 = arith.constant 0 : index
    %11 = vector.load %arg6[%c2, %c0_7] : memref<3x160xf32, #tpu.memory_space<vmem>>, vector<1x64xf32>
    %12 = vector.broadcast %11 : vector<1x64xf32> to vector<256x64xf32>
    %13 = arith.addf %10, %12 : vector<256x64xf32>
    %c0_8 = arith.constant 0 : index
    %c0_9 = arith.constant 0 : index
    %14 = vector.load %arg3[%c0_8, %c0_9] : memref<64x64xf32, #tpu.memory_space<vmem>>, vector<64x64xf32>
    %cst_10 = arith.constant dense<0.000000e+00> : vector<256x64xf32>
    %15 = tpu.matmul %13, %14, %cst_10 {dimension_numbers = #tpu.dot_dimension_numbers<[1], [0], [0], [1], [0, 0, 1, 1], [], []>} : vector<256x64xf32>, vector<64x64xf32>, vector<256x64xf32> -> vector<256x64xf32>
    %c0_11 = arith.constant 0 : index
    %c64 = arith.constant 64 : index
    %16 = vector.load %arg6[%c0_11, %c64] : memref<3x160xf32, #tpu.memory_space<vmem>>, vector<1x64xf32>
    %17 = vector.broadcast %16 : vector<1x64xf32> to vector<256x64xf32>
    %18 = arith.addf %15, %17 : vector<256x64xf32>
    %cst_12 = arith.constant 0.000000e+00 : f32
    %19 = vector.broadcast %cst_12 : f32 to vector<256x64xf32>
    %20 = arith.maximumf %18, %19 : vector<256x64xf32>
    %c1_13 = arith.constant 1 : index
    %c64_14 = arith.constant 64 : index
    %21 = vector.load %arg6[%c1_13, %c64_14] : memref<3x160xf32, #tpu.memory_space<vmem>>, vector<1x64xf32>
    %22 = vector.broadcast %21 : vector<1x64xf32> to vector<256x64xf32>
    %23 = arith.mulf %20, %22 : vector<256x64xf32>
    %c2_15 = arith.constant 2 : index
    %c64_16 = arith.constant 64 : index
    %24 = vector.load %arg6[%c2_15, %c64_16] : memref<3x160xf32, #tpu.memory_space<vmem>>, vector<1x64xf32>
    %25 = vector.broadcast %24 : vector<1x64xf32> to vector<256x64xf32>
    %26 = arith.addf %23, %25 : vector<256x64xf32>
    %cst_17 = arith.constant 0.000000e+00 : f32
    %27 = vector.broadcast %cst_17 : f32 to vector<1x1x32x64xf32>
    %c0_18 = arith.constant 0 : index
    %c0_19 = arith.constant 0 : index
    %c0_20 = arith.constant 0 : index
    %c0_21 = arith.constant 0 : index
    %28 = vector.load %arg9[%c0_18, %c0_19, %c0_20, %c0_21] : memref<1x18x32x64xf32, #tpu.memory_space<vmem>>, vector<1x1x32x64xf32>
    tpu.vector_store %arg9[%c0_18, %c0_19, %c0_20, %c0_21], %27 {strides = array<i32>} : memref<1x18x32x64xf32, #tpu.memory_space<vmem>>, vector<1x1x32x64xf32>,
    %cst_22 = arith.constant 0.000000e+00 : f32
    %29 = vector.broadcast %cst_22 : f32 to vector<1x1x32x64xf32>
    %c0_23 = arith.constant 0 : index
    %c17 = arith.constant 17 : index
    %c0_24 = arith.constant 0 : index
    %c0_25 = arith.constant 0 : index
    %30 = vector.load %arg9[%c0_23, %c17, %c0_24, %c0_25] : memref<1x18x32x64xf32, #tpu.memory_space<vmem>>, vector<1x1x32x64xf32>
    tpu.vector_store %arg9[%c0_23, %c17, %c0_24, %c0_25], %29 {strides = array<i32>} : memref<1x18x32x64xf32, #tpu.memory_space<vmem>>, vector<1x1x32x64xf32>,
    %cst_26 = arith.constant 0.000000e+00 : f32
    %31 = vector.broadcast %cst_26 : f32 to vector<1x18x1x64xf32>
    %c0_27 = arith.constant 0 : index
    %c0_28 = arith.constant 0 : index
    %c7 = arith.constant 7 : index
    %c0_29 = arith.constant 0 : index
    %32 = vector.load %arg9[%c0_27, %c0_28, %c7, %c0_29] : memref<1x18x32x64xf32, #tpu.memory_space<vmem>>, vector<1x18x1x64xf32>
    tpu.vector_store %arg9[%c0_27, %c0_28, %c7, %c0_29], %31 {strides = array<i32>} : memref<1x18x32x64xf32, #tpu.memory_space<vmem>>, vector<1x18x1x64xf32>,
    %cst_30 = arith.constant 0.000000e+00 : f32
    %33 = vector.broadcast %cst_30 : f32 to vector<1x18x1x64xf32>
    %c0_31 = arith.constant 0 : index
    %c0_32 = arith.constant 0 : index
    %c24 = arith.constant 24 : index
    %c0_33 = arith.constant 0 : index
    %34 = vector.load %arg9[%c0_31, %c0_32, %c24, %c0_33] : memref<1x18x32x64xf32, #tpu.memory_space<vmem>>, vector<1x18x1x64xf32>
    tpu.vector_store %arg9[%c0_31, %c0_32, %c24, %c0_33], %33 {strides = array<i32>} : memref<1x18x32x64xf32, #tpu.memory_space<vmem>>, vector<1x18x1x64xf32>,
    %35 = vector.shape_cast %26 : vector<256x64xf32> to vector<1x16x16x64xf32>
    %c0_34 = arith.constant 0 : index
    %c1_35 = arith.constant 1 : index
    %c8 = arith.constant 8 : index
    %c0_36 = arith.constant 0 : index
    %36 = vector.load %arg9[%c0_34, %c1_35, %c8, %c0_36] : memref<1x18x32x64xf32, #tpu.memory_space<vmem>>, vector<1x16x16x64xf32>
    tpu.vector_store %arg9[%c0_34, %c1_35, %c8, %c0_36], %35 {strides = array<i32>} : memref<1x18x32x64xf32, #tpu.memory_space<vmem>>, vector<1x16x16x64xf32>,
    %cst_37 = arith.constant 0.000000e+00 : f32
    %37 = vector.broadcast %cst_37 : f32 to vector<256x32xf32>
    %c0_38 = arith.constant 0 : index
    %c0_39 = arith.constant 0 : index
    %c7_40 = arith.constant 7 : index
    %c0_41 = arith.constant 0 : index
    %38 = vector.load %arg9[%c0_38, %c0_39, %c7_40, %c0_41] : memref<1x18x32x64xf32, #tpu.memory_space<vmem>>, vector<1x16x16x64xf32>
    %39 = vector.shape_cast %38 : vector<1x16x16x64xf32> to vector<256x64xf32>
    %c0_42 = arith.constant 0 : index
    %c0_43 = arith.constant 0 : index
    %c0_44 = arith.constant 0 : index
    %40 = vector.load %arg4[%c0_42, %c0_43, %c0_44] : memref<9x64x32xf32, #tpu.memory_space<vmem>>, vector<1x64x32xf32>
    %41 = vector.shape_cast %40 : vector<1x64x32xf32> to vector<64x32xf32>
    %cst_45 = arith.constant dense<0.000000e+00> : vector<256x32xf32>
    %42 = tpu.matmul %39, %41, %cst_45 {dimension_numbers = #tpu.dot_dimension_numbers<[1], [0], [0], [1], [0, 0, 1, 1], [], []>} : vector<256x64xf32>, vector<64x32xf32>, vector<256x32xf32> -> vector<256x32xf32>
    %43 = arith.addf %37, %42 : vector<256x32xf32>
    %c0_46 = arith.constant 0 : index
    %c0_47 = arith.constant 0 : index
    %c8_48 = arith.constant 8 : index
    %c0_49 = arith.constant 0 : index
    %44 = vector.load %arg9[%c0_46, %c0_47, %c8_48, %c0_49] : memref<1x18x32x64xf32, #tpu.memory_space<vmem>>, vector<1x16x16x64xf32>
    %45 = vector.shape_cast %44 : vector<1x16x16x64xf32> to vector<256x64xf32>
    %c1_50 = arith.constant 1 : index
    %c0_51 = arith.constant 0 : index
    %c0_52 = arith.constant 0 : index
    %46 = vector.load %arg4[%c1_50, %c0_51, %c0_52] : memref<9x64x32xf32, #tpu.memory_space<vmem>>, vector<1x64x32xf32>
    %47 = vector.shape_cast %46 : vector<1x64x32xf32> to vector<64x32xf32>
    %cst_53 = arith.constant dense<0.000000e+00> : vector<256x32xf32>
    %48 = tpu.matmul %45, %47, %cst_53 {dimension_numbers = #tpu.dot_dimension_numbers<[1], [0], [0], [1], [0, 0, 1, 1], [], []>} : vector<256x64xf32>, vector<64x32xf32>, vector<256x32xf32> -> vector<256x32xf32>
    %49 = arith.addf %43, %48 : vector<256x32xf32>
    %c0_54 = arith.constant 0 : index
    %c0_55 = arith.constant 0 : index
    %c9 = arith.constant 9 : index
    %c0_56 = arith.constant 0 : index
    %50 = vector.load %arg9[%c0_54, %c0_55, %c9, %c0_56] : memref<1x18x32x64xf32, #tpu.memory_space<vmem>>, vector<1x16x16x64xf32>
    %51 = vector.shape_cast %50 : vector<1x16x16x64xf32> to vector<256x64xf32>
    %c2_57 = arith.constant 2 : index
    %c0_58 = arith.constant 0 : index
    %c0_59 = arith.constant 0 : index
    %52 = vector.load %arg4[%c2_57, %c0_58, %c0_59] : memref<9x64x32xf32, #tpu.memory_space<vmem>>, vector<1x64x32xf32>
    %53 = vector.shape_cast %52 : vector<1x64x32xf32> to vector<64x32xf32>
    %cst_60 = arith.constant dense<0.000000e+00> : vector<256x32xf32>
    %54 = tpu.matmul %51, %53, %cst_60 {dimension_numbers = #tpu.dot_dimension_numbers<[1], [0], [0], [1], [0, 0, 1, 1], [], []>} : vector<256x64xf32>, vector<64x32xf32>, vector<256x32xf32> -> vector<256x32xf32>
    %55 = arith.addf %49, %54 : vector<256x32xf32>
    %c0_61 = arith.constant 0 : index
    %c1_62 = arith.constant 1 : index
    %c7_63 = arith.constant 7 : index
    %c0_64 = arith.constant 0 : index
    %56 = vector.load %arg9[%c0_61, %c1_62, %c7_63, %c0_64] : memref<1x18x32x64xf32, #tpu.memory_space<vmem>>, vector<1x16x16x64xf32>
    %57 = vector.shape_cast %56 : vector<1x16x16x64xf32> to vector<256x64xf32>
    %c3 = arith.constant 3 : index
    %c0_65 = arith.constant 0 : index
    %c0_66 = arith.constant 0 : index
    %58 = vector.load %arg4[%c3, %c0_65, %c0_66] : memref<9x64x32xf32, #tpu.memory_space<vmem>>, vector<1x64x32xf32>
    %59 = vector.shape_cast %58 : vector<1x64x32xf32> to vector<64x32xf32>
    %cst_67 = arith.constant dense<0.000000e+00> : vector<256x32xf32>
    %60 = tpu.matmul %57, %59, %cst_67 {dimension_numbers = #tpu.dot_dimension_numbers<[1], [0], [0], [1], [0, 0, 1, 1], [], []>} : vector<256x64xf32>, vector<64x32xf32>, vector<256x32xf32> -> vector<256x32xf32>
    %61 = arith.addf %55, %60 : vector<256x32xf32>
    %c0_68 = arith.constant 0 : index
    %c1_69 = arith.constant 1 : index
    %c8_70 = arith.constant 8 : index
    %c0_71 = arith.constant 0 : index
    %62 = vector.load %arg9[%c0_68, %c1_69, %c8_70, %c0_71] : memref<1x18x32x64xf32, #tpu.memory_space<vmem>>, vector<1x16x16x64xf32>
    %63 = vector.shape_cast %62 : vector<1x16x16x64xf32> to vector<256x64xf32>
    %c4 = arith.constant 4 : index
    %c0_72 = arith.constant 0 : index
    %c0_73 = arith.constant 0 : index
    %64 = vector.load %arg4[%c4, %c0_72, %c0_73] : memref<9x64x32xf32, #tpu.memory_space<vmem>>, vector<1x64x32xf32>
    %65 = vector.shape_cast %64 : vector<1x64x32xf32> to vector<64x32xf32>
    %cst_74 = arith.constant dense<0.000000e+00> : vector<256x32xf32>
    %66 = tpu.matmul %63, %65, %cst_74 {dimension_numbers = #tpu.dot_dimension_numbers<[1], [0], [0], [1], [0, 0, 1, 1], [], []>} : vector<256x64xf32>, vector<64x32xf32>, vector<256x32xf32> -> vector<256x32xf32>
    %67 = arith.addf %61, %66 : vector<256x32xf32>
    %c0_75 = arith.constant 0 : index
    %c1_76 = arith.constant 1 : index
    %c9_77 = arith.constant 9 : index
    %c0_78 = arith.constant 0 : index
    %68 = vector.load %arg9[%c0_75, %c1_76, %c9_77, %c0_78] : memref<1x18x32x64xf32, #tpu.memory_space<vmem>>, vector<1x16x16x64xf32>
    %69 = vector.shape_cast %68 : vector<1x16x16x64xf32> to vector<256x64xf32>
    %c5 = arith.constant 5 : index
    %c0_79 = arith.constant 0 : index
    %c0_80 = arith.constant 0 : index
    %70 = vector.load %arg4[%c5, %c0_79, %c0_80] : memref<9x64x32xf32, #tpu.memory_space<vmem>>, vector<1x64x32xf32>
    %71 = vector.shape_cast %70 : vector<1x64x32xf32> to vector<64x32xf32>
    %cst_81 = arith.constant dense<0.000000e+00> : vector<256x32xf32>
    %72 = tpu.matmul %69, %71, %cst_81 {dimension_numbers = #tpu.dot_dimension_numbers<[1], [0], [0], [1], [0, 0, 1, 1], [], []>} : vector<256x64xf32>, vector<64x32xf32>, vector<256x32xf32> -> vector<256x32xf32>
    %73 = arith.addf %67, %72 : vector<256x32xf32>
    %c0_82 = arith.constant 0 : index
    %c2_83 = arith.constant 2 : index
    %c7_84 = arith.constant 7 : index
    %c0_85 = arith.constant 0 : index
    %74 = vector.load %arg9[%c0_82, %c2_83, %c7_84, %c0_85] : memref<1x18x32x64xf32, #tpu.memory_space<vmem>>, vector<1x16x16x64xf32>
    %75 = vector.shape_cast %74 : vector<1x16x16x64xf32> to vector<256x64xf32>
    %c6 = arith.constant 6 : index
    %c0_86 = arith.constant 0 : index
    %c0_87 = arith.constant 0 : index
    %76 = vector.load %arg4[%c6, %c0_86, %c0_87] : memref<9x64x32xf32, #tpu.memory_space<vmem>>, vector<1x64x32xf32>
    %77 = vector.shape_cast %76 : vector<1x64x32xf32> to vector<64x32xf32>
    %cst_88 = arith.constant dense<0.000000e+00> : vector<256x32xf32>
    %78 = tpu.matmul %75, %77, %cst_88 {dimension_numbers = #tpu.dot_dimension_numbers<[1], [0], [0], [1], [0, 0, 1, 1], [], []>} : vector<256x64xf32>, vector<64x32xf32>, vector<256x32xf32> -> vector<256x32xf32>
    %79 = arith.addf %73, %78 : vector<256x32xf32>
    %c0_89 = arith.constant 0 : index
    %c2_90 = arith.constant 2 : index
    %c8_91 = arith.constant 8 : index
    %c0_92 = arith.constant 0 : index
    %80 = vector.load %arg9[%c0_89, %c2_90, %c8_91, %c0_92] : memref<1x18x32x64xf32, #tpu.memory_space<vmem>>, vector<1x16x16x64xf32>
    %81 = vector.shape_cast %80 : vector<1x16x16x64xf32> to vector<256x64xf32>
    %c7_93 = arith.constant 7 : index
    %c0_94 = arith.constant 0 : index
    %c0_95 = arith.constant 0 : index
    %82 = vector.load %arg4[%c7_93, %c0_94, %c0_95] : memref<9x64x32xf32, #tpu.memory_space<vmem>>, vector<1x64x32xf32>
    %83 = vector.shape_cast %82 : vector<1x64x32xf32> to vector<64x32xf32>
    %cst_96 = arith.constant dense<0.000000e+00> : vector<256x32xf32>
    %84 = tpu.matmul %81, %83, %cst_96 {dimension_numbers = #tpu.dot_dimension_numbers<[1], [0], [0], [1], [0, 0, 1, 1], [], []>} : vector<256x64xf32>, vector<64x32xf32>, vector<256x32xf32> -> vector<256x32xf32>
    %85 = arith.addf %79, %84 : vector<256x32xf32>
    %c0_97 = arith.constant 0 : index
    %c2_98 = arith.constant 2 : index
    %c9_99 = arith.constant 9 : index
    %c0_100 = arith.constant 0 : index
    %86 = vector.load %arg9[%c0_97, %c2_98, %c9_99, %c0_100] : memref<1x18x32x64xf32, #tpu.memory_space<vmem>>, vector<1x16x16x64xf32>
    %87 = vector.shape_cast %86 : vector<1x16x16x64xf32> to vector<256x64xf32>
    %c8_101 = arith.constant 8 : index
    %c0_102 = arith.constant 0 : index
    %c0_103 = arith.constant 0 : index
    %88 = vector.load %arg4[%c8_101, %c0_102, %c0_103] : memref<9x64x32xf32, #tpu.memory_space<vmem>>, vector<1x64x32xf32>
    %89 = vector.shape_cast %88 : vector<1x64x32xf32> to vector<64x32xf32>
    %cst_104 = arith.constant dense<0.000000e+00> : vector<256x32xf32>
    %90 = tpu.matmul %87, %89, %cst_104 {dimension_numbers = #tpu.dot_dimension_numbers<[1], [0], [0], [1], [0, 0, 1, 1], [], []>} : vector<256x64xf32>, vector<64x32xf32>, vector<256x32xf32> -> vector<256x32xf32>
    %91 = arith.addf %85, %90 : vector<256x32xf32>
    %c0_105 = arith.constant 0 : index
    %c128 = arith.constant 128 : index
    %92 = vector.load %arg6[%c0_105, %c128] : memref<3x160xf32, #tpu.memory_space<vmem>>, vector<1x32xf32>
    %93 = vector.broadcast %92 : vector<1x32xf32> to vector<256x32xf32>
    %94 = arith.addf %91, %93 : vector<256x32xf32>
    %cst_106 = arith.constant 0.000000e+00 : f32
    %95 = vector.broadcast %cst_106 : f32 to vector<256x32xf32>
    %96 = arith.maximumf %94, %95 : vector<256x32xf32>
    %c1_107 = arith.constant 1 : index
    %c128_108 = arith.constant 128 : index
    %97 = vector.load %arg6[%c1_107, %c128_108] : memref<3x160xf32, #tpu.memory_space<vmem>>, vector<1x32xf32>
    %98 = vector.broadcast %97 : vector<1x32xf32> to vector<256x32xf32>
    %99 = arith.mulf %96, %98 : vector<256x32xf32>
    %c2_109 = arith.constant 2 : index
    %c128_110 = arith.constant 128 : index
    %100 = vector.load %arg6[%c2_109, %c128_110] : memref<3x160xf32, #tpu.memory_space<vmem>>, vector<1x32xf32>
    %101 = vector.broadcast %100 : vector<1x32xf32> to vector<256x32xf32>
    %102 = arith.addf %99, %101 : vector<256x32xf32>
    %cst_111 = arith.constant 0.000000e+00 : f32
    %103 = vector.broadcast %cst_111 : f32 to vector<1x2x32x32xf32>
    %c0_112 = arith.constant 0 : index
    %c0_113 = arith.constant 0 : index
    %c0_114 = arith.constant 0 : index
    %c0_115 = arith.constant 0 : index
    %104 = vector.load %arg10[%c0_112, %c0_113, %c0_114, %c0_115] : memref<1x20x32x32xf32, #tpu.memory_space<vmem>>, vector<1x2x32x32xf32>
    tpu.vector_store %arg10[%c0_112, %c0_113, %c0_114, %c0_115], %103 {strides = array<i32>} : memref<1x20x32x32xf32, #tpu.memory_space<vmem>>, vector<1x2x32x32xf32>,
    %cst_116 = arith.constant 0.000000e+00 : f32
    %105 = vector.broadcast %cst_116 : f32 to vector<1x2x32x32xf32>
    %c0_117 = arith.constant 0 : index
    %c18 = arith.constant 18 : index
    %c0_118 = arith.constant 0 : index
    %c0_119 = arith.constant 0 : index
    %106 = vector.load %arg10[%c0_117, %c18, %c0_118, %c0_119] : memref<1x20x32x32xf32, #tpu.memory_space<vmem>>, vector<1x2x32x32xf32>
    tpu.vector_store %arg10[%c0_117, %c18, %c0_118, %c0_119], %105 {strides = array<i32>} : memref<1x20x32x32xf32, #tpu.memory_space<vmem>>, vector<1x2x32x32xf32>,
    %cst_120 = arith.constant 0.000000e+00 : f32
    %107 = vector.broadcast %cst_120 : f32 to vector<1x20x2x32xf32>
    %c0_121 = arith.constant 0 : index
    %c0_122 = arith.constant 0 : index
    %c6_123 = arith.constant 6 : index
    %c0_124 = arith.constant 0 : index
    %108 = vector.load %arg10[%c0_121, %c0_122, %c6_123, %c0_124] : memref<1x20x32x32xf32, #tpu.memory_space<vmem>>, vector<1x20x2x32xf32>
    tpu.vector_store %arg10[%c0_121, %c0_122, %c6_123, %c0_124], %107 {strides = array<i32>} : memref<1x20x32x32xf32, #tpu.memory_space<vmem>>, vector<1x20x2x32xf32>,
    %cst_125 = arith.constant 0.000000e+00 : f32
    %109 = vector.broadcast %cst_125 : f32 to vector<1x20x2x32xf32>
    %c0_126 = arith.constant 0 : index
    %c0_127 = arith.constant 0 : index
    %c24_128 = arith.constant 24 : index
    %c0_129 = arith.constant 0 : index
    %110 = vector.load %arg10[%c0_126, %c0_127, %c24_128, %c0_129] : memref<1x20x32x32xf32, #tpu.memory_space<vmem>>, vector<1x20x2x32xf32>
    tpu.vector_store %arg10[%c0_126, %c0_127, %c24_128, %c0_129], %109 {strides = array<i32>} : memref<1x20x32x32xf32, #tpu.memory_space<vmem>>, vector<1x20x2x32xf32>,
    %111 = vector.shape_cast %102 : vector<256x32xf32> to vector<1x16x16x32xf32>
    %c0_130 = arith.constant 0 : index
    %c2_131 = arith.constant 2 : index
    %c8_132 = arith.constant 8 : index
    %c0_133 = arith.constant 0 : index
    %112 = vector.load %arg10[%c0_130, %c2_131, %c8_132, %c0_133] : memref<1x20x32x32xf32, #tpu.memory_space<vmem>>, vector<1x16x16x32xf32>
    tpu.vector_store %arg10[%c0_130, %c2_131, %c8_132, %c0_133], %111 {strides = array<i32>} : memref<1x20x32x32xf32, #tpu.memory_space<vmem>>, vector<1x16x16x32xf32>,
    %cst_134 = arith.constant 0.000000e+00 : f32
    %113 = vector.broadcast %cst_134 : f32 to vector<1x16x16x32xf32>
    %c0_135 = arith.constant 0 : index
    %c0_136 = arith.constant 0 : index
    %c6_137 = arith.constant 6 : index
    %c0_138 = arith.constant 0 : index
    %114 = vector.load %arg10[%c0_135, %c0_136, %c6_137, %c0_138] : memref<1x20x32x32xf32, #tpu.memory_space<vmem>>, vector<1x16x16x32xf32>
    %c0_139 = arith.constant 0 : index
    %c0_140 = arith.constant 0 : index
    %115 = vector.load %arg5[%c0_139, %c0_140] : memref<25x32xf32, #tpu.memory_space<vmem>>, vector<1x32xf32>
    %116 = vector.shape_cast %115 : vector<1x32xf32> to vector<1x1x1x32xf32>
    %117 = vector.broadcast %116 : vector<1x1x1x32xf32> to vector<1x16x16x32xf32>
    %118 = arith.mulf %114, %117 : vector<1x16x16x32xf32>
    %119 = arith.addf %113, %118 : vector<1x16x16x32xf32>
    %c0_141 = arith.constant 0 : index
    %c0_142 = arith.constant 0 : index
    %c7_143 = arith.constant 7 : index
    %c0_144 = arith.constant 0 : index
    %120 = vector.load %arg10[%c0_141, %c0_142, %c7_143, %c0_144] : memref<1x20x32x32xf32, #tpu.memory_space<vmem>>, vector<1x16x16x32xf32>
    %c1_145 = arith.constant 1 : index
    %c0_146 = arith.constant 0 : index
    %121 = vector.load %arg5[%c1_145, %c0_146] : memref<25x32xf32, #tpu.memory_space<vmem>>, vector<1x32xf32>
    %122 = vector.shape_cast %121 : vector<1x32xf32> to vector<1x1x1x32xf32>
    %123 = vector.broadcast %122 : vector<1x1x1x32xf32> to vector<1x16x16x32xf32>
    %124 = arith.mulf %120, %123 : vector<1x16x16x32xf32>
    %125 = arith.addf %119, %124 : vector<1x16x16x32xf32>
    %c0_147 = arith.constant 0 : index
    %c0_148 = arith.constant 0 : index
    %c8_149 = arith.constant 8 : index
    %c0_150 = arith.constant 0 : index
    %126 = vector.load %arg10[%c0_147, %c0_148, %c8_149, %c0_150] : memref<1x20x32x32xf32, #tpu.memory_space<vmem>>, vector<1x16x16x32xf32>
    %c2_151 = arith.constant 2 : index
    %c0_152 = arith.constant 0 : index
    %127 = vector.load %arg5[%c2_151, %c0_152] : memref<25x32xf32, #tpu.memory_space<vmem>>, vector<1x32xf32>
    %128 = vector.shape_cast %127 : vector<1x32xf32> to vector<1x1x1x32xf32>
    %129 = vector.broadcast %128 : vector<1x1x1x32xf32> to vector<1x16x16x32xf32>
    %130 = arith.mulf %126, %129 : vector<1x16x16x32xf32>
    %131 = arith.addf %125, %130 : vector<1x16x16x32xf32>
    %c0_153 = arith.constant 0 : index
    %c0_154 = arith.constant 0 : index
    %c9_155 = arith.constant 9 : index
    %c0_156 = arith.constant 0 : index
    %132 = vector.load %arg10[%c0_153, %c0_154, %c9_155, %c0_156] : memref<1x20x32x32xf32, #tpu.memory_space<vmem>>, vector<1x16x16x32xf32>
    %c3_157 = arith.constant 3 : index
    %c0_158 = arith.constant 0 : index
    %133 = vector.load %arg5[%c3_157, %c0_158] : memref<25x32xf32, #tpu.memory_space<vmem>>, vector<1x32xf32>
    %134 = vector.shape_cast %133 : vector<1x32xf32> to vector<1x1x1x32xf32>
    %135 = vector.broadcast %134 : vector<1x1x1x32xf32> to vector<1x16x16x32xf32>
    %136 = arith.mulf %132, %135 : vector<1x16x16x32xf32>
    %137 = arith.addf %131, %136 : vector<1x16x16x32xf32>
    %c0_159 = arith.constant 0 : index
    %c0_160 = arith.constant 0 : index
    %c10 = arith.constant 10 : index
    %c0_161 = arith.constant 0 : index
    %138 = vector.load %arg10[%c0_159, %c0_160, %c10, %c0_161] : memref<1x20x32x32xf32, #tpu.memory_space<vmem>>, vector<1x16x16x32xf32>
    %c4_162 = arith.constant 4 : index
    %c0_163 = arith.constant 0 : index
    %139 = vector.load %arg5[%c4_162, %c0_163] : memref<25x32xf32, #tpu.memory_space<vmem>>, vector<1x32xf32>
    %140 = vector.shape_cast %139 : vector<1x32xf32> to vector<1x1x1x32xf32>
    %141 = vector.broadcast %140 : vector<1x1x1x32xf32> to vector<1x16x16x32xf32>
    %142 = arith.mulf %138, %141 : vector<1x16x16x32xf32>
    %143 = arith.addf %137, %142 : vector<1x16x16x32xf32>
    %c0_164 = arith.constant 0 : index
    %c1_165 = arith.constant 1 : index
    %c6_166 = arith.constant 6 : index
    %c0_167 = arith.constant 0 : index
    %144 = vector.load %arg10[%c0_164, %c1_165, %c6_166, %c0_167] : memref<1x20x32x32xf32, #tpu.memory_space<vmem>>, vector<1x16x16x32xf32>
    %c5_168 = arith.constant 5 : index
    %c0_169 = arith.constant 0 : index
    %145 = vector.load %arg5[%c5_168, %c0_169] : memref<25x32xf32, #tpu.memory_space<vmem>>, vector<1x32xf32>
    %146 = vector.shape_cast %145 : vector<1x32xf32> to vector<1x1x1x32xf32>
    %147 = vector.broadcast %146 : vector<1x1x1x32xf32> to vector<1x16x16x32xf32>
    %148 = arith.mulf %144, %147 : vector<1x16x16x32xf32>
    %149 = arith.addf %143, %148 : vector<1x16x16x32xf32>
    %c0_170 = arith.constant 0 : index
    %c1_171 = arith.constant 1 : index
    %c7_172 = arith.constant 7 : index
    %c0_173 = arith.constant 0 : index
    %150 = vector.load %arg10[%c0_170, %c1_171, %c7_172, %c0_173] : memref<1x20x32x32xf32, #tpu.memory_space<vmem>>, vector<1x16x16x32xf32>
    %c6_174 = arith.constant 6 : index
    %c0_175 = arith.constant 0 : index
    %151 = vector.load %arg5[%c6_174, %c0_175] : memref<25x32xf32, #tpu.memory_space<vmem>>, vector<1x32xf32>
    %152 = vector.shape_cast %151 : vector<1x32xf32> to vector<1x1x1x32xf32>
    %153 = vector.broadcast %152 : vector<1x1x1x32xf32> to vector<1x16x16x32xf32>
    %154 = arith.mulf %150, %153 : vector<1x16x16x32xf32>
    %155 = arith.addf %149, %154 : vector<1x16x16x32xf32>
    %c0_176 = arith.constant 0 : index
    %c1_177 = arith.constant 1 : index
    %c8_178 = arith.constant 8 : index
    %c0_179 = arith.constant 0 : index
    %156 = vector.load %arg10[%c0_176, %c1_177, %c8_178, %c0_179] : memref<1x20x32x32xf32, #tpu.memory_space<vmem>>, vector<1x16x16x32xf32>
    %c7_180 = arith.constant 7 : index
    %c0_181 = arith.constant 0 : index
    %157 = vector.load %arg5[%c7_180, %c0_181] : memref<25x32xf32, #tpu.memory_space<vmem>>, vector<1x32xf32>
    %158 = vector.shape_cast %157 : vector<1x32xf32> to vector<1x1x1x32xf32>
    %159 = vector.broadcast %158 : vector<1x1x1x32xf32> to vector<1x16x16x32xf32>
    %160 = arith.mulf %156, %159 : vector<1x16x16x32xf32>
    %161 = arith.addf %155, %160 : vector<1x16x16x32xf32>
    %c0_182 = arith.constant 0 : index
    %c1_183 = arith.constant 1 : index
    %c9_184 = arith.constant 9 : index
    %c0_185 = arith.constant 0 : index
    %162 = vector.load %arg10[%c0_182, %c1_183, %c9_184, %c0_185] : memref<1x20x32x32xf32, #tpu.memory_space<vmem>>, vector<1x16x16x32xf32>
    %c8_186 = arith.constant 8 : index
    %c0_187 = arith.constant 0 : index
    %163 = vector.load %arg5[%c8_186, %c0_187] : memref<25x32xf32, #tpu.memory_space<vmem>>, vector<1x32xf32>
    %164 = vector.shape_cast %163 : vector<1x32xf32> to vector<1x1x1x32xf32>
    %165 = vector.broadcast %164 : vector<1x1x1x32xf32> to vector<1x16x16x32xf32>
    %166 = arith.mulf %162, %165 : vector<1x16x16x32xf32>
    %167 = arith.addf %161, %166 : vector<1x16x16x32xf32>
    %c0_188 = arith.constant 0 : index
    %c1_189 = arith.constant 1 : index
    %c10_190 = arith.constant 10 : index
    %c0_191 = arith.constant 0 : index
    %168 = vector.load %arg10[%c0_188, %c1_189, %c10_190, %c0_191] : memref<1x20x32x32xf32, #tpu.memory_space<vmem>>, vector<1x16x16x32xf32>
    %c9_192 = arith.constant 9 : index
    %c0_193 = arith.constant 0 : index
    %169 = vector.load %arg5[%c9_192, %c0_193] : memref<25x32xf32, #tpu.memory_space<vmem>>, vector<1x32xf32>
    %170 = vector.shape_cast %169 : vector<1x32xf32> to vector<1x1x1x32xf32>
    %171 = vector.broadcast %170 : vector<1x1x1x32xf32> to vector<1x16x16x32xf32>
    %172 = arith.mulf %168, %171 : vector<1x16x16x32xf32>
    %173 = arith.addf %167, %172 : vector<1x16x16x32xf32>
    %c0_194 = arith.constant 0 : index
    %c2_195 = arith.constant 2 : index
    %c6_196 = arith.constant 6 : index
    %c0_197 = arith.constant 0 : index
    %174 = vector.load %arg10[%c0_194, %c2_195, %c6_196, %c0_197] : memref<1x20x32x32xf32, #tpu.memory_space<vmem>>, vector<1x16x16x32xf32>
    %c10_198 = arith.constant 10 : index
    %c0_199 = arith.constant 0 : index
    %175 = vector.load %arg5[%c10_198, %c0_199] : memref<25x32xf32, #tpu.memory_space<vmem>>, vector<1x32xf32>
    %176 = vector.shape_cast %175 : vector<1x32xf32> to vector<1x1x1x32xf32>
    %177 = vector.broadcast %176 : vector<1x1x1x32xf32> to vector<1x16x16x32xf32>
    %178 = arith.mulf %174, %177 : vector<1x16x16x32xf32>
    %179 = arith.addf %173, %178 : vector<1x16x16x32xf32>
    %c0_200 = arith.constant 0 : index
    %c2_201 = arith.constant 2 : index
    %c7_202 = arith.constant 7 : index
    %c0_203 = arith.constant 0 : index
    %180 = vector.load %arg10[%c0_200, %c2_201, %c7_202, %c0_203] : memref<1x20x32x32xf32, #tpu.memory_space<vmem>>, vector<1x16x16x32xf32>
    %c11 = arith.constant 11 : index
    %c0_204 = arith.constant 0 : index
    %181 = vector.load %arg5[%c11, %c0_204] : memref<25x32xf32, #tpu.memory_space<vmem>>, vector<1x32xf32>
    %182 = vector.shape_cast %181 : vector<1x32xf32> to vector<1x1x1x32xf32>
    %183 = vector.broadcast %182 : vector<1x1x1x32xf32> to vector<1x16x16x32xf32>
    %184 = arith.mulf %180, %183 : vector<1x16x16x32xf32>
    %185 = arith.addf %179, %184 : vector<1x16x16x32xf32>
    %c0_205 = arith.constant 0 : index
    %c2_206 = arith.constant 2 : index
    %c8_207 = arith.constant 8 : index
    %c0_208 = arith.constant 0 : index
    %186 = vector.load %arg10[%c0_205, %c2_206, %c8_207, %c0_208] : memref<1x20x32x32xf32, #tpu.memory_space<vmem>>, vector<1x16x16x32xf32>
    %c12 = arith.constant 12 : index
    %c0_209 = arith.constant 0 : index
    %187 = vector.load %arg5[%c12, %c0_209] : memref<25x32xf32, #tpu.memory_space<vmem>>, vector<1x32xf32>
    %188 = vector.shape_cast %187 : vector<1x32xf32> to vector<1x1x1x32xf32>
    %189 = vector.broadcast %188 : vector<1x1x1x32xf32> to vector<1x16x16x32xf32>
    %190 = arith.mulf %186, %189 : vector<1x16x16x32xf32>
    %191 = arith.addf %185, %190 : vector<1x16x16x32xf32>
    %c0_210 = arith.constant 0 : index
    %c2_211 = arith.constant 2 : index
    %c9_212 = arith.constant 9 : index
    %c0_213 = arith.constant 0 : index
    %192 = vector.load %arg10[%c0_210, %c2_211, %c9_212, %c0_213] : memref<1x20x32x32xf32, #tpu.memory_space<vmem>>, vector<1x16x16x32xf32>
    %c13 = arith.constant 13 : index
    %c0_214 = arith.constant 0 : index
    %193 = vector.load %arg5[%c13, %c0_214] : memref<25x32xf32, #tpu.memory_space<vmem>>, vector<1x32xf32>
    %194 = vector.shape_cast %193 : vector<1x32xf32> to vector<1x1x1x32xf32>
    %195 = vector.broadcast %194 : vector<1x1x1x32xf32> to vector<1x16x16x32xf32>
    %196 = arith.mulf %192, %195 : vector<1x16x16x32xf32>
    %197 = arith.addf %191, %196 : vector<1x16x16x32xf32>
    %c0_215 = arith.constant 0 : index
    %c2_216 = arith.constant 2 : index
    %c10_217 = arith.constant 10 : index
    %c0_218 = arith.constant 0 : index
    %198 = vector.load %arg10[%c0_215, %c2_216, %c10_217, %c0_218] : memref<1x20x32x32xf32, #tpu.memory_space<vmem>>, vector<1x16x16x32xf32>
    %c14 = arith.constant 14 : index
    %c0_219 = arith.constant 0 : index
    %199 = vector.load %arg5[%c14, %c0_219] : memref<25x32xf32, #tpu.memory_space<vmem>>, vector<1x32xf32>
    %200 = vector.shape_cast %199 : vector<1x32xf32> to vector<1x1x1x32xf32>
    %201 = vector.broadcast %200 : vector<1x1x1x32xf32> to vector<1x16x16x32xf32>
    %202 = arith.mulf %198, %201 : vector<1x16x16x32xf32>
    %203 = arith.addf %197, %202 : vector<1x16x16x32xf32>
    %c0_220 = arith.constant 0 : index
    %c3_221 = arith.constant 3 : index
    %c6_222 = arith.constant 6 : index
    %c0_223 = arith.constant 0 : index
    %204 = vector.load %arg10[%c0_220, %c3_221, %c6_222, %c0_223] : memref<1x20x32x32xf32, #tpu.memory_space<vmem>>, vector<1x16x16x32xf32>
    %c15 = arith.constant 15 : index
    %c0_224 = arith.constant 0 : index
    %205 = vector.load %arg5[%c15, %c0_224] : memref<25x32xf32, #tpu.memory_space<vmem>>, vector<1x32xf32>
    %206 = vector.shape_cast %205 : vector<1x32xf32> to vector<1x1x1x32xf32>
    %207 = vector.broadcast %206 : vector<1x1x1x32xf32> to vector<1x16x16x32xf32>
    %208 = arith.mulf %204, %207 : vector<1x16x16x32xf32>
    %209 = arith.addf %203, %208 : vector<1x16x16x32xf32>
    %c0_225 = arith.constant 0 : index
    %c3_226 = arith.constant 3 : index
    %c7_227 = arith.constant 7 : index
    %c0_228 = arith.constant 0 : index
    %210 = vector.load %arg10[%c0_225, %c3_226, %c7_227, %c0_228] : memref<1x20x32x32xf32, #tpu.memory_space<vmem>>, vector<1x16x16x32xf32>
    %c16 = arith.constant 16 : index
    %c0_229 = arith.constant 0 : index
    %211 = vector.load %arg5[%c16, %c0_229] : memref<25x32xf32, #tpu.memory_space<vmem>>, vector<1x32xf32>
    %212 = vector.shape_cast %211 : vector<1x32xf32> to vector<1x1x1x32xf32>
    %213 = vector.broadcast %212 : vector<1x1x1x32xf32> to vector<1x16x16x32xf32>
    %214 = arith.mulf %210, %213 : vector<1x16x16x32xf32>
    %215 = arith.addf %209, %214 : vector<1x16x16x32xf32>
    %c0_230 = arith.constant 0 : index
    %c3_231 = arith.constant 3 : index
    %c8_232 = arith.constant 8 : index
    %c0_233 = arith.constant 0 : index
    %216 = vector.load %arg10[%c0_230, %c3_231, %c8_232, %c0_233] : memref<1x20x32x32xf32, #tpu.memory_space<vmem>>, vector<1x16x16x32xf32>
    %c17_234 = arith.constant 17 : index
    %c0_235 = arith.constant 0 : index
    %217 = vector.load %arg5[%c17_234, %c0_235] : memref<25x32xf32, #tpu.memory_space<vmem>>, vector<1x32xf32>
    %218 = vector.shape_cast %217 : vector<1x32xf32> to vector<1x1x1x32xf32>
    %219 = vector.broadcast %218 : vector<1x1x1x32xf32> to vector<1x16x16x32xf32>
    %220 = arith.mulf %216, %219 : vector<1x16x16x32xf32>
    %221 = arith.addf %215, %220 : vector<1x16x16x32xf32>
    %c0_236 = arith.constant 0 : index
    %c3_237 = arith.constant 3 : index
    %c9_238 = arith.constant 9 : index
    %c0_239 = arith.constant 0 : index
    %222 = vector.load %arg10[%c0_236, %c3_237, %c9_238, %c0_239] : memref<1x20x32x32xf32, #tpu.memory_space<vmem>>, vector<1x16x16x32xf32>
    %c18_240 = arith.constant 18 : index
    %c0_241 = arith.constant 0 : index
    %223 = vector.load %arg5[%c18_240, %c0_241] : memref<25x32xf32, #tpu.memory_space<vmem>>, vector<1x32xf32>
    %224 = vector.shape_cast %223 : vector<1x32xf32> to vector<1x1x1x32xf32>
    %225 = vector.broadcast %224 : vector<1x1x1x32xf32> to vector<1x16x16x32xf32>
    %226 = arith.mulf %222, %225 : vector<1x16x16x32xf32>
    %227 = arith.addf %221, %226 : vector<1x16x16x32xf32>
    %c0_242 = arith.constant 0 : index
    %c3_243 = arith.constant 3 : index
    %c10_244 = arith.constant 10 : index
    %c0_245 = arith.constant 0 : index
    %228 = vector.load %arg10[%c0_242, %c3_243, %c10_244, %c0_245] : memref<1x20x32x32xf32, #tpu.memory_space<vmem>>, vector<1x16x16x32xf32>
    %c19 = arith.constant 19 : index
    %c0_246 = arith.constant 0 : index
    %229 = vector.load %arg5[%c19, %c0_246] : memref<25x32xf32, #tpu.memory_space<vmem>>, vector<1x32xf32>
    %230 = vector.shape_cast %229 : vector<1x32xf32> to vector<1x1x1x32xf32>
    %231 = vector.broadcast %230 : vector<1x1x1x32xf32> to vector<1x16x16x32xf32>
    %232 = arith.mulf %228, %231 : vector<1x16x16x32xf32>
    %233 = arith.addf %227, %232 : vector<1x16x16x32xf32>
    %c0_247 = arith.constant 0 : index
    %c4_248 = arith.constant 4 : index
    %c6_249 = arith.constant 6 : index
    %c0_250 = arith.constant 0 : index
    %234 = vector.load %arg10[%c0_247, %c4_248, %c6_249, %c0_250] : memref<1x20x32x32xf32, #tpu.memory_space<vmem>>, vector<1x16x16x32xf32>
    %c20 = arith.constant 20 : index
    %c0_251 = arith.constant 0 : index
    %235 = vector.load %arg5[%c20, %c0_251] : memref<25x32xf32, #tpu.memory_space<vmem>>, vector<1x32xf32>
    %236 = vector.shape_cast %235 : vector<1x32xf32> to vector<1x1x1x32xf32>
    %237 = vector.broadcast %236 : vector<1x1x1x32xf32> to vector<1x16x16x32xf32>
    %238 = arith.mulf %234, %237 : vector<1x16x16x32xf32>
    %239 = arith.addf %233, %238 : vector<1x16x16x32xf32>
    %c0_252 = arith.constant 0 : index
    %c4_253 = arith.constant 4 : index
    %c7_254 = arith.constant 7 : index
    %c0_255 = arith.constant 0 : index
    %240 = vector.load %arg10[%c0_252, %c4_253, %c7_254, %c0_255] : memref<1x20x32x32xf32, #tpu.memory_space<vmem>>, vector<1x16x16x32xf32>
    %c21 = arith.constant 21 : index
    %c0_256 = arith.constant 0 : index
    %241 = vector.load %arg5[%c21, %c0_256] : memref<25x32xf32, #tpu.memory_space<vmem>>, vector<1x32xf32>
    %242 = vector.shape_cast %241 : vector<1x32xf32> to vector<1x1x1x32xf32>
    %243 = vector.broadcast %242 : vector<1x1x1x32xf32> to vector<1x16x16x32xf32>
    %244 = arith.mulf %240, %243 : vector<1x16x16x32xf32>
    %245 = arith.addf %239, %244 : vector<1x16x16x32xf32>
    %c0_257 = arith.constant 0 : index
    %c4_258 = arith.constant 4 : index
    %c8_259 = arith.constant 8 : index
    %c0_260 = arith.constant 0 : index
    %246 = vector.load %arg10[%c0_257, %c4_258, %c8_259, %c0_260] : memref<1x20x32x32xf32, #tpu.memory_space<vmem>>, vector<1x16x16x32xf32>
    %c22 = arith.constant 22 : index
    %c0_261 = arith.constant 0 : index
    %247 = vector.load %arg5[%c22, %c0_261] : memref<25x32xf32, #tpu.memory_space<vmem>>, vector<1x32xf32>
    %248 = vector.shape_cast %247 : vector<1x32xf32> to vector<1x1x1x32xf32>
    %249 = vector.broadcast %248 : vector<1x1x1x32xf32> to vector<1x16x16x32xf32>
    %250 = arith.mulf %246, %249 : vector<1x16x16x32xf32>
    %251 = arith.addf %245, %250 : vector<1x16x16x32xf32>
    %c0_262 = arith.constant 0 : index
    %c4_263 = arith.constant 4 : index
    %c9_264 = arith.constant 9 : index
    %c0_265 = arith.constant 0 : index
    %252 = vector.load %arg10[%c0_262, %c4_263, %c9_264, %c0_265] : memref<1x20x32x32xf32, #tpu.memory_space<vmem>>, vector<1x16x16x32xf32>
    %c23 = arith.constant 23 : index
    %c0_266 = arith.constant 0 : index
    %253 = vector.load %arg5[%c23, %c0_266] : memref<25x32xf32, #tpu.memory_space<vmem>>, vector<1x32xf32>
    %254 = vector.shape_cast %253 : vector<1x32xf32> to vector<1x1x1x32xf32>
    %255 = vector.broadcast %254 : vector<1x1x1x32xf32> to vector<1x16x16x32xf32>
    %256 = arith.mulf %252, %255 : vector<1x16x16x32xf32>
    %257 = arith.addf %251, %256 : vector<1x16x16x32xf32>
    %c0_267 = arith.constant 0 : index
    %c4_268 = arith.constant 4 : index
    %c10_269 = arith.constant 10 : index
    %c0_270 = arith.constant 0 : index
    %258 = vector.load %arg10[%c0_267, %c4_268, %c10_269, %c0_270] : memref<1x20x32x32xf32, #tpu.memory_space<vmem>>, vector<1x16x16x32xf32>
    %c24_271 = arith.constant 24 : index
    %c0_272 = arith.constant 0 : index
    %259 = vector.load %arg5[%c24_271, %c0_272] : memref<25x32xf32, #tpu.memory_space<vmem>>, vector<1x32xf32>
    %260 = vector.shape_cast %259 : vector<1x32xf32> to vector<1x1x1x32xf32>
    %261 = vector.broadcast %260 : vector<1x1x1x32xf32> to vector<1x16x16x32xf32>
    %262 = arith.mulf %258, %261 : vector<1x16x16x32xf32>
    %263 = arith.addf %257, %262 : vector<1x16x16x32xf32>
    %cst_273 = arith.constant dense<0.000000e+00> : vector<1x16x16xf32>
    %264 = vector.multi_reduction <add>, %263, %cst_273 [3] : vector<1x16x16x32xf32> to vector<1x16x16xf32>
    %c0_274 = arith.constant 0 : index
    %265 = memref.load %arg7[%c0_274] : memref<1xf32, #tpu.memory_space<smem>>
    %266 = vector.broadcast %265 : f32 to vector<1x16x16xf32>
    %267 = arith.addf %264, %266 : vector<1x16x16xf32>
    %268 = vector.shape_cast %267 : vector<1x16x16xf32> to vector<1x1x256xf32>
    %c0_275 = arith.constant 0 : index
    %c0_276 = arith.constant 0 : index
    %c0_277 = arith.constant 0 : index
    %269 = vector.load %arg8[%c0_275, %c0_276, %c0_277] : memref<1x1x256xf32, #tpu.memory_space<vmem>>, vector<1x1x256xf32>
    tpu.vector_store %arg8[%c0_275, %c0_276, %c0_277], %268 {strides = array<i32>} : memref<1x1x256xf32, #tpu.memory_space<vmem>>, vector<1x1x256xf32>,
    return
  }
  func.func @transform_0(%arg0: i32) -> (i32, i32) {
    %c0_i32 = arith.constant 0 : i32
    %c0_i32_0 = arith.constant 0 : i32
    return %arg0, %c0_i32 : i32, i32
  }
  func.func @transform_1(%arg0: i32) -> (i32, i32) {
    %c0_i32 = arith.constant 0 : i32
    %c0_i32_0 = arith.constant 0 : i32
    %c0_i32_1 = arith.constant 0 : i32
    return %c0_i32, %c0_i32_0 : i32, i32
  }
  func.func @transform_2(%arg0: i32) -> (i32, i32) {
    %c0_i32 = arith.constant 0 : i32
    %c0_i32_0 = arith.constant 0 : i32
    %c0_i32_1 = arith.constant 0 : i32
    return %c0_i32, %c0_i32_0 : i32, i32
  }
  func.func @transform_3(%arg0: i32) -> (i32, i32, i32) {
    %c0_i32 = arith.constant 0 : i32
    %c0_i32_0 = arith.constant 0 : i32
    %c0_i32_1 = arith.constant 0 : i32
    %c0_i32_2 = arith.constant 0 : i32
    return %c0_i32, %c0_i32_0, %c0_i32_1 : i32, i32, i32
  }
  func.func @transform_4(%arg0: i32) -> (i32, i32) {
    %c0_i32 = arith.constant 0 : i32
    %c0_i32_0 = arith.constant 0 : i32
    %c0_i32_1 = arith.constant 0 : i32
    return %c0_i32, %c0_i32_0 : i32, i32
  }
  func.func @transform_5(%arg0: i32) -> (i32, i32) {
    %c0_i32 = arith.constant 0 : i32
    %c0_i32_0 = arith.constant 0 : i32
    %c0_i32_1 = arith.constant 0 : i32
    return %c0_i32, %c0_i32_0 : i32, i32
  }
  func.func @transform_6(%arg0: i32) -> i32 {
    %c0_i32 = arith.constant 0 : i32
    %c0_i32_0 = arith.constant 0 : i32
    return %c0_i32 : i32
  }
  func.func @transform_7(%arg0: i32) -> (i32, i32, i32) {
    %c0_i32 = arith.constant 0 : i32
    %c0_i32_0 = arith.constant 0 : i32
    %c0_i32_1 = arith.constant 0 : i32
    return %arg0, %c0_i32, %c0_i32_0 : i32, i32, i32
  }
}

</mosaic_0001>

<llo_original>
// kernel: _lambda_.1
$region0: #{_lambda_.1}
  #allocation0 [shape = 'u32[]', space=smem, size = 0x4, offset = 0x4, fixed_abs, tag = 'smem constant byte address 0x4 - core index']
  #allocation1 [shape = 'u32[144,128]{1,0:T(1,128)}', space=vmem, size = 0x12000, scoped, tag = 'internal scratch']
  #allocation2 [shape = 'f32[1,18,32,64]{3,2,1,0:T(8,128)}', space=vmem, size = 0x48000, scoped, tag = 'scratch operand']
  #allocation3 [shape = 'f32[1,20,32,32]{3,2,1,0:T(8,128)}', space=vmem, size = 0x50000, scoped, tag = 'scratch operand']
  #allocation4 [shape = 'f32[1]{0:T(128)S(6)}', space=smem, size = 0x200, scoped, tag = 'scoped memory for _lambda_.1']
  %s0 = inlined_call_operand.vmem [shape: f32[512,128], index: 0, kind: input, shape index: {}]
  %s1 = inlined_call_operand.vmem [shape: f32[128,64], index: 1, kind: input, shape index: {}]
  %s2 = inlined_call_operand.vmem [shape: f32[64,64], index: 2, kind: input, shape index: {}]
  %s3 = inlined_call_operand.vmem [shape: f32[9,64,32], index: 3, kind: input, shape index: {}]
  %s4 = inlined_call_operand.vmem [shape: f32[25,32], index: 4, kind: input, shape index: {}]
  %s5 = inlined_call_operand.vmem [shape: f32[3,160], index: 5, kind: input, shape index: {}]
  %s6 = inlined_call_operand.<no memory space> [shape: f32[1], index: 6, kind: input, shape index: {}]
  %s7 = inlined_call_operand.vmem [shape: f32[2,1,256], index: 7, kind: output, shape index: {}]
  %s8 = sld [smem:[#allocation0]]
  $region61: #{_lambda_.1} parent=0
    _
  %s10 = ssub.s32 1, %s8
  %s11 = scalar_select 0, %s10, %s8
  %12 = sst [smem:[#allocation4]] %s6
  loop: start=0, step=1, limit=4
  $region2: #{_lambda_.1} parent=0 // loop_pre_header
    _
  $region3: #{_lambda_.1} parent=0 // loop_header
    %s14 = sphi 0, %s18
    %p15 = scmp.ge.s32.totalorder %s14, 4
    %s24 = sphi 0, %s26
    %s27 = sphi 0, %s24
    %s28 = sphi 0, %s27
    %s44 = sphi 0, %s28
    %s48 = sphi 0, %s48
    %s50 = sphi 0, %s48
    %s51 = sphi 0, %s50
    %s65 = sphi 0, %s51
    %s69 = sphi 0, %s69
    %s71 = sphi 0, %s69
    %s72 = sphi 0, %s71
    %s86 = sphi 0, %s72
    %s90 = sphi 0, %s90
    %s92 = sphi 0, %s90
    %s93 = sphi 0, %s92
    %s107 = sphi 0, %s93
    %s111 = sphi 0, %s111
    %s113 = sphi 0, %s111
    %s114 = sphi 0, %s113
    %s128 = sphi 0, %s114
    %s132 = sphi 0, %s132
    %s134 = sphi 0, %s132
    %s135 = sphi 0, %s134
    %s149 = sphi 0, %s135
    %s153 = sphi 0, %s153
    %s155 = sphi 0, %s153
    %s156 = sphi 0, %s155
    %s170 = sphi 0, %s156
    %s176 = sphi 0, %s178
    %s179 = sphi 0, %s176
    %s180 = sphi 0, %s179
    %s196 = sphi 0, %s180
  $region4: #{_lambda_.1} parent=0 // loop_header_branch
    %17 = sbr.rel (%p15) target = $region8
  $region5: #{_lambda_.1} parent=0 // loop_body
    %s19 = ssub.s32 %s14, 1
    %s20 = ssub.s32 %s14, 2
    %s21 = sadd.s32 %s14, 1
    %s22 = ssub.s32 %s14, %s21
    %p23 = scmp.eq.s32.totalorder %s22, 0
    %s25 = sadd.s32 %s24, 1
    %s26 = scalar_select %p23, %s24, %s25
    %p29 = pneg %p23
    %p30 = scmp.eq.s32.totalorder %s14, 1
    %p31 = por %p29, %p30
    %p32 = scmp.ne.s32.totalorder %s24, %s27
    %p33 = scmp.eq.s32.totalorder %s14, 0
    %p34 = por %p32, %p33
    %p35 = scmp.ne.s32.totalorder %s24, %s27
    %p36 = scmp.eq.s32.totalorder %s19, 1
    %p37 = por %p35, %p36
    %p38 = scmp.ne.s32.totalorder %s27, %s28
    %p39 = scmp.eq.s32.totalorder %s19, 0
    %p40 = por %p38, %p39
    %p41 = scmp.ne.s32.totalorder %s27, %s28
    %p42 = scmp.eq.s32.totalorder %s20, 1
    %p43 = por %p41, %p42
    %p45 = scmp.ne.s32.totalorder %s28, %s44
    %p46 = scmp.eq.s32.totalorder %s20, 0
    %p47 = por %p45, %p46
    %s49 = sadd.s32 %s48, 1
    %p52 = scmp.eq.s32.totalorder %s14, 1
    %p53 = scmp.ne.s32.totalorder %s48, %s50
    %p54 = scmp.eq.s32.totalorder %s14, 0
    %p55 = por %p53, %p54
    %p56 = scmp.ne.s32.totalorder %s48, %s50
    %p57 = scmp.eq.s32.totalorder %s19, 1
    %p58 = por %p56, %p57
    %p59 = scmp.ne.s32.totalorder %s50, %s51
    %p60 = scmp.eq.s32.totalorder %s19, 0
    %p61 = por %p59, %p60
    %p62 = scmp.ne.s32.totalorder %s50, %s51
    %p63 = scmp.eq.s32.totalorder %s20, 1
    %p64 = por %p62, %p63
    %p66 = scmp.ne.s32.totalorder %s51, %s65
    %p67 = scmp.eq.s32.totalorder %s20, 0
    %p68 = por %p66, %p67
    %s70 = sadd.s32 %s69, 1
    %p73 = scmp.eq.s32.totalorder %s14, 1
    %p74 = scmp.ne.s32.totalorder %s69, %s71
    %p75 = scmp.eq.s32.totalorder %s14, 0
    %p76 = por %p74, %p75
    %p77 = scmp.ne.s32.totalorder %s69, %s71
    %p78 = scmp.eq.s32.totalorder %s19, 1
    %p79 = por %p77, %p78
    %p80 = scmp.ne.s32.totalorder %s71, %s72
    %p81 = scmp.eq.s32.totalorder %s19, 0
    %p82 = por %p80, %p81
    %p83 = scmp.ne.s32.totalorder %s71, %s72
    %p84 = scmp.eq.s32.totalorder %s20, 1
    %p85 = por %p83, %p84
    %p87 = scmp.ne.s32.totalorder %s72, %s86
    %p88 = scmp.eq.s32.totalorder %s20, 0
    %p89 = por %p87, %p88
    %s91 = sadd.s32 %s90, 1
    %p94 = scmp.eq.s32.totalorder %s14, 1
    %p95 = scmp.ne.s32.totalorder %s90, %s92
    %p96 = scmp.eq.s32.totalorder %s14, 0
    %p97 = por %p95, %p96
    %p98 = scmp.ne.s32.totalorder %s90, %s92
    %p99 = scmp.eq.s32.totalorder %s19, 1
    %p100 = por %p98, %p99
    %p101 = scmp.ne.s32.totalorder %s92, %s93
    %p102 = scmp.eq.s32.totalorder %s19, 0
    %p103 = por %p101, %p102
    %p104 = scmp.ne.s32.totalorder %s92, %s93
    %p105 = scmp.eq.s32.totalorder %s20, 1
    %p106 = por %p104, %p105
    %p108 = scmp.ne.s32.totalorder %s93, %s107
    %p109 = scmp.eq.s32.totalorder %s20, 0
    %p110 = por %p108, %p109
    %s112 = sadd.s32 %s111, 1
    %p115 = scmp.eq.s32.totalorder %s14, 1
    %p116 = scmp.ne.s32.totalorder %s111, %s113
    %p117 = scmp.eq.s32.totalorder %s14, 0
    %p118 = por %p116, %p117
    %p119 = scmp.ne.s32.totalorder %s111, %s113
    %p120 = scmp.eq.s32.totalorder %s19, 1
    %p121 = por %p119, %p120
    %p122 = scmp.ne.s32.totalorder %s113, %s114
    %p123 = scmp.eq.s32.totalorder %s19, 0
    %p124 = por %p122, %p123
    %p125 = scmp.ne.s32.totalorder %s113, %s114
    %p126 = scmp.eq.s32.totalorder %s20, 1
    %p127 = por %p125, %p126
    %p129 = scmp.ne.s32.totalorder %s114, %s128
    %p130 = scmp.eq.s32.totalorder %s20, 0
    %p131 = por %p129, %p130
    %s133 = sadd.s32 %s132, 1
    %p136 = scmp.eq.s32.totalorder %s14, 1
    %p137 = scmp.ne.s32.totalorder %s132, %s134
    %p138 = scmp.eq.s32.totalorder %s14, 0
    %p139 = por %p137, %p138
    %p140 = scmp.ne.s32.totalorder %s132, %s134
    %p141 = scmp.eq.s32.totalorder %s19, 1
    %p142 = por %p140, %p141
    %p143 = scmp.ne.s32.totalorder %s134, %s135
    %p144 = scmp.eq.s32.totalorder %s19, 0
    %p145 = por %p143, %p144
    %p146 = scmp.ne.s32.totalorder %s134, %s135
    %p147 = scmp.eq.s32.totalorder %s20, 1
    %p148 = por %p146, %p147
    %p150 = scmp.ne.s32.totalorder %s135, %s149
    %p151 = scmp.eq.s32.totalorder %s20, 0
    %p152 = por %p150, %p151
    %s154 = sadd.s32 %s153, 1
    %p157 = scmp.eq.s32.totalorder %s14, 1
    %p158 = scmp.ne.s32.totalorder %s153, %s155
    %p159 = scmp.eq.s32.totalorder %s14, 0
    %p160 = por %p158, %p159
    %p161 = scmp.ne.s32.totalorder %s153, %s155
    %p162 = scmp.eq.s32.totalorder %s19, 1
    %p163 = por %p161, %p162
    %p164 = scmp.ne.s32.totalorder %s155, %s156
    %p165 = scmp.eq.s32.totalorder %s19, 0
    %p166 = por %p164, %p165
    %p167 = scmp.ne.s32.totalorder %s155, %s156
    %p168 = scmp.eq.s32.totalorder %s20, 1
    %p169 = por %p167, %p168
    %p171 = scmp.ne.s32.totalorder %s156, %s170
    %p172 = scmp.eq.s32.totalorder %s20, 0
    %p173 = por %p171, %p172
    %s174 = ssub.s32 %s14, %s21
    %p175 = scmp.eq.s32.totalorder %s174, 0
    %s177 = sadd.s32 %s176, 1
    %s178 = scalar_select %p175, %s176, %s177
    %p181 = pneg %p175
    %p182 = scmp.eq.s32.totalorder %s14, 1
    %p183 = por %p181, %p182
    %p184 = scmp.ne.s32.totalorder %s176, %s179
    %p185 = scmp.eq.s32.totalorder %s14, 0
    %p186 = por %p184, %p185
    %p187 = scmp.ne.s32.totalorder %s176, %s179
    %p188 = scmp.eq.s32.totalorder %s19, 1
    %p189 = por %p187, %p188
    %p190 = scmp.ne.s32.totalorder %s179, %s180
    %p191 = scmp.eq.s32.totalorder %s19, 0
    %p192 = por %p190, %p191
    %p193 = scmp.ne.s32.totalorder %s179, %s180
    %p194 = scmp.eq.s32.totalorder %s20, 1
    %p195 = por %p193, %p194
    %p197 = scmp.ne.s32.totalorder %s180, %s196
    %p198 = scmp.eq.s32.totalorder %s20, 0
    %p199 = por %p197, %p198
    %p200 = scmp.le.s32.totalorder 1, %s14
    %p201 = scmp.lt.s32.totalorder %s14, 3
    %p202 = pnand %p200, %p201
    %p203 = pneg %p202
    // Predicated region
    $region9: #{_lambda_.1} parent=5 // pred_check
      _
    $region10: #{_lambda_.1} parent=5 // pred_check_branch
      %205 = sbr.rel (%p202) target = $region12
    $region11: #{_lambda_.1} parent=5 // pred_region
      %s206 = ssub.s32 %s14, 1
      // Predicated region
      $region13: #{_lambda_.1} parent=11 // pred_check
        %p207 = pneg %p61
      $region14: #{_lambda_.1} parent=11 // pred_check_branch
        %209 = sbr.rel (%p207) target = $region16
      $region15: #{_lambda_.1} parent=11 // pred_region
        _
      $region16: #{_lambda_.1} parent=11 // pred_fallthru
        _
      // Predicated region
      $region17: #{_lambda_.1} parent=11 // pred_check
        %p210 = pneg %p82
      $region18: #{_lambda_.1} parent=11 // pred_check_branch
        %212 = sbr.rel (%p210) target = $region20
      $region19: #{_lambda_.1} parent=11 // pred_region
        _
      $region20: #{_lambda_.1} parent=11 // pred_fallthru
        _
      // Predicated region
      $region21: #{_lambda_.1} parent=11 // pred_check
        %p213 = pneg %p103
      $region22: #{_lambda_.1} parent=11 // pred_check_branch
        %215 = sbr.rel (%p213) target = $region24
      $region23: #{_lambda_.1} parent=11 // pred_region
        _
      $region24: #{_lambda_.1} parent=11 // pred_fallthru
        _
      // Predicated region
      $region25: #{_lambda_.1} parent=11 // pred_check
        %p216 = pneg %p124
      $region26: #{_lambda_.1} parent=11 // pred_check_branch
        %218 = sbr.rel (%p216) target = $region28
      $region27: #{_lambda_.1} parent=11 // pred_region
        _
      $region28: #{_lambda_.1} parent=11 // pred_fallthru
        _
      // Predicated region
      $region29: #{_lambda_.1} parent=11 // pred_check
        %p219 = pneg %p145
      $region30: #{_lambda_.1} parent=11 // pred_check_branch
        %221 = sbr.rel (%p219) target = $region32
      $region31: #{_lambda_.1} parent=11 // pred_region
        _
      $region32: #{_lambda_.1} parent=11 // pred_fallthru
        _
      // Predicated region
      $region33: #{_lambda_.1} parent=11 // pred_check
        %p222 = pneg %p166
      $region34: #{_lambda_.1} parent=11 // pred_check_branch
        %224 = sbr.rel (%p222) target = $region36
      $region35: #{_lambda_.1} parent=11 // pred_region
        _
      $region36: #{_lambda_.1} parent=11 // pred_fallthru
        _
    $region12: #{_lambda_.1} parent=5 // pred_fallthru
      _
    %p225 = scmp.lt.s32.totalorder %s14, 2
    // Predicated region
    $region37: #{_lambda_.1} parent=5 // pred_check
      %p226 = pneg %p225
    $region38: #{_lambda_.1} parent=5 // pred_check_branch
      %228 = sbr.rel (%p226) target = $region40
    $region39: #{_lambda_.1} parent=5 // pred_region
      // Predicated region
      $region41: #{_lambda_.1} parent=39 // pred_check
        %p229 = pneg %p34
      $region42: #{_lambda_.1} parent=39 // pred_check_branch
        %231 = sbr.rel (%p229) target = $region44
      $region43: #{_lambda_.1} parent=39 // pred_region
        %s232 = smul.u32 32, %s14
        %p233 = scmp.lt.s32.totalorder %s232, 63
        %s234 = scalar_select %p233, %s232, 63
        %s235 = smul.addr %s234, 8
        %s236 = scalar_lea.vmem %s0, %s235
        %s237 = smul.u32 32, %s14
      $region44: #{_lambda_.1} parent=39 // pred_fallthru
        _
    $region40: #{_lambda_.1} parent=5 // pred_fallthru
      _
    %p238 = scmp.le.s32.totalorder 1, %s14
    %p239 = scmp.lt.s32.totalorder %s14, 3
    %p240 = pnand %p238, %p239
    %p241 = pneg %p240
    // Predicated region
    $region45: #{_lambda_.1} parent=5 // pred_check
      _
    $region46: #{_lambda_.1} parent=5 // pred_check_branch
      %243 = sbr.rel (%p240) target = $region48
    $region47: #{_lambda_.1} parent=5 // pred_region
      %s244 = ssub.s32 %s14, 1
      %s245 = smul.u32 32, %s19
      %p246 = scmp.lt.s32.totalorder %s245, 63
      %s247 = scalar_select %p246, %s245, 63
      %s248 = smul.addr %s247, 8
      %s249 = scalar_lea.vmem %s0, %s248
      %p250 = pneg %p40
      %p251 = pneg %p37
      %p252 = pneg %p61
      %p253 = pneg %p58
      %p254 = pneg %p82
      %p255 = pneg %p79
      %p256 = pneg %p103
      %p257 = pneg %p100
      %p258 = pneg %p124
      %p259 = pneg %p121
      %p260 = pneg %p145
      %p261 = pneg %p142
      %p262 = pneg %p166
      %p263 = pneg %p163
      %p264 = pneg %p192
      %p265 = pneg %p189
      %p266 = scmp.lt.s32.totalorder %s19, 1
      %s267 = scalar_select %p266, %s19, 1
      %s268 = smul.addr %s267, 2
      %s269 = scalar_lea.vmem %s7, %s268
      %s270 = smul.u32 32, %s19
      %p271 = scmp.lt.s32.totalorder %s270, 63
      %s272 = scalar_select %p271, %s270, 63
      %s273 = smul.addr %s272, 8
      %s274 = scalar_lea.vmem %s0, %s273
      %s275 = smul.u32 32, %s19
      %p276 = scmp.lt.s32.totalorder %s19, 1
      %s277 = scalar_select %p276, %s19, 1
      %s278 = smul.addr %s277, 2
      %s279 = scalar_lea.vmem %s7, %s278
      %v280 = vld [vmem:[%s274] sm:$0xff]
      %v281 = vld [vmem:[%s274 + $0x8] sm:$0xff]
      %v282 = vld [vmem:[%s274 + $0x10] sm:$0xff]
      %v283 = vld [vmem:[%s274 + $0x18] sm:$0xff]
      %v284 = vld [vmem:[%s274 + $0x20] sm:$0xff]
      %v285 = vld [vmem:[%s274 + $0x28] sm:$0xff]
      %v286 = vld [vmem:[%s274 + $0x30] sm:$0xff]
      %v287 = vld [vmem:[%s274 + $0x38] sm:$0xff]
      %v288 = vld [vmem:[%s274 + $0x40] sm:$0xff]
      %v289 = vld [vmem:[%s274 + $0x48] sm:$0xff]
      %v290 = vld [vmem:[%s274 + $0x50] sm:$0xff]
      %v291 = vld [vmem:[%s274 + $0x58] sm:$0xff]
      %v292 = vld [vmem:[%s274 + $0x60] sm:$0xff]
      %v293 = vld [vmem:[%s274 + $0x68] sm:$0xff]
      %v294 = vld [vmem:[%s274 + $0x70] sm:$0xff]
      %v295 = vld [vmem:[%s274 + $0x78] sm:$0xff]
      %v296 = vld [vmem:[%s274 + $0x80] sm:$0xff]
      %v297 = vld [vmem:[%s274 + $0x88] sm:$0xff]
      %v298 = vld [vmem:[%s274 + $0x90] sm:$0xff]
      %v299 = vld [vmem:[%s274 + $0x98] sm:$0xff]
      %v300 = vld [vmem:[%s274 + $0xa0] sm:$0xff]
      %v301 = vld [vmem:[%s274 + $0xa8] sm:$0xff]
      %v302 = vld [vmem:[%s274 + $0xb0] sm:$0xff]
      %v303 = vld [vmem:[%s274 + $0xb8] sm:$0xff]
      %v304 = vld [vmem:[%s274 + $0xc0] sm:$0xff]
      %v305 = vld [vmem:[%s274 + $0xc8] sm:$0xff]
      %v306 = vld [vmem:[%s274 + $0xd0] sm:$0xff]
      %v307 = vld [vmem:[%s274 + $0xd8] sm:$0xff]
      %v308 = vld [vmem:[%s274 + $0xe0] sm:$0xff]
      %v309 = vld [vmem:[%s274 + $0xe8] sm:$0xff]
      %v310 = vld [vmem:[%s274 + $0xf0] sm:$0xff]
      %v311 = vld [vmem:[%s274 + $0xf8] sm:$0xff]
      %v312 = vld [vmem:[%s1] sm:$0xff]
      %v313 = vld [vmem:[%s1 + $0x8] sm:$0xff]
      %v314 = vld [vmem:[%s1 + $0x10] sm:$0xff]
      %v315 = vld [vmem:[%s1 + $0x18] sm:$0xff]
      %v316 = vld [vmem:[%s1 + $0x20] sm:$0xff]
      %v317 = vld [vmem:[%s1 + $0x28] sm:$0xff]
      %v318 = vld [vmem:[%s1 + $0x30] sm:$0xff]
      %v319 = vld [vmem:[%s1 + $0x38] sm:$0xff]
      %v320 = vld [vmem:[%s1 + $0x40] sm:$0xff]
      %v321 = vld [vmem:[%s1 + $0x48] sm:$0xff]
      %v322 = vld [vmem:[%s1 + $0x50] sm:$0xff]
      %v323 = vld [vmem:[%s1 + $0x58] sm:$0xff]
      %v324 = vld [vmem:[%s1 + $0x60] sm:$0xff]
      %v325 = vld [vmem:[%s1 + $0x68] sm:$0xff]
      %v326 = vld [vmem:[%s1 + $0x70] sm:$0xff]
      %v327 = vld [vmem:[%s1 + $0x78] sm:$0xff]
      %v328 = vld [vmem:[%s5] sm:$0x1]
      %v329 = vlaneseq
      %v330 = vshrl.u32 %v329, 7
      %v331 = vsub.s32 0, %v330
      %v332 = vrot.slane %v328, %v331
      %333 = vmatprep.subr.mxu0 0.0
      %334 = vmatpush1.msra.mxu0 %v312
      %335 = vmatprep.subr.mxu0 0.0
      %336 = vmatpush1.msra.mxu0 %v313
      %337 = vmatprep.subr.mxu0 0.0
      %338 = vmatpush1.msra.mxu0 %v314
      %339 = vmatprep.subr.mxu0 0.0
      %340 = vmatpush1.msra.mxu0 %v315
      %341 = vmatprep.subr.mxu0 0.0
      %342 = vmatpush1.msra.mxu0 %v316
      %343 = vmatprep.subr.mxu0 0.0
      %344 = vmatpush1.msra.mxu0 %v317
      %345 = vmatprep.subr.mxu0 0.0
      %346 = vmatpush1.msra.mxu0 %v318
      %347 = vmatprep.subr.mxu0 0.0
      %348 = vmatpush1.msra.mxu0 %v319
      %349 = vmatprep.subr.mxu0 0.0
      %350 = vmatpush1.msra.mxu0 %v320
      %351 = vmatprep.subr.mxu0 0.0
      %352 = vmatpush1.msra.mxu0 %v321
      %353 = vmatprep.subr.mxu0 0.0
      %354 = vmatpush1.msra.mxu0 %v322
      %355 = vmatprep.subr.mxu0 0.0
      %356 = vmatpush1.msra.mxu0 %v323
      %357 = vmatprep.subr.mxu0 0.0
      %358 = vmatpush1.msra.mxu0 %v324
      %359 = vmatprep.subr.mxu0 0.0
      %360 = vmatpush1.msra.mxu0 %v325
      %361 = vmatprep.subr.mxu0 0.0
      %362 = vmatpush1.msra.mxu0 %v326
      %363 = vmatprep.subr.mxu0 0.0
      %364 = vmatpush1.msra.mxu0 %v327
      %365 = vmatprep.subr.mxu0 0.0
      %366 = vmatpush1.msra.mxu0 0.0
      %367 = vmatprep.subr.mxu0 0.0
      %368 = vmatpush1.msra.mxu0 0.0
      %369 = vmatprep.subr.mxu0 0.0
      %370 = vmatpush1.msra.mxu0 0.0
      %371 = vmatprep.subr.mxu0 0.0
      %372 = vmatpush1.msra.mxu0 0.0
      %373 = vmatprep.subr.mxu0 0.0
      %374 = vmatpush1.msra.mxu0 0.0
      %375 = vmatprep.subr.mxu0 0.0
      %376 = vmatpush1.msra.mxu0 0.0
      %377 = vmatprep.subr.mxu0 0.0
      %378 = vmatpush1.msra.mxu0 0.0
      %379 = vmatprep.subr.mxu0 0.0
      %380 = vmatpush1.msra.mxu0 0.0
      %381 = vmatprep.subr.mxu0 0.0
      %382 = vmatpush1.msra.mxu0 0.0
      %383 = vmatprep.subr.mxu0 0.0
      %384 = vmatpush1.msra.mxu0 0.0
      %385 = vmatprep.subr.mxu0 0.0
      %386 = vmatpush1.msra.mxu0 0.0
      %387 = vmatprep.subr.mxu0 0.0
      %388 = vmatpush1.msra.mxu0 0.0
      %389 = vmatprep.subr.mxu0 0.0
      %390 = vmatpush1.msra.mxu0 0.0
      %391 = vmatprep.subr.mxu0 0.0
      %392 = vmatpush1.msra.mxu0 0.0
      %393 = vmatprep.subr.mxu0 0.0
      %394 = vmatpush1.msra.mxu0 0.0
      %395 = vmatprep.subr.mxu0 0.0
      %396 = vmatpush1.msra.mxu0 0.0
      %397 = vmatprep.mubr.f32.mxu0 0.0
      %398 = vmatmul.mubr.f32.gmra.mrb[0].mxu0 %v280
      %v399 = vpop.f32.mrb[0].mxu0
      %v400 = vadd.f32 %v332, %v399
      %v401 = vpop.f32.mrb[0].mxu0
      %402 = vmatprep.mubr.f32.mxu0 0.0
      %403 = vmatmul.mubr.f32.gmra.mrb[0].mxu0 %v281
      %v404 = vpop.f32.mrb[0].mxu0
      %v405 = vadd.f32 %v332, %v404
      %v406 = vpop.f32.mrb[0].mxu0
      %407 = vmatprep.mubr.f32.mxu0 0.0
      %408 = vmatmul.mubr.f32.gmra.mrb[0].mxu0 %v282
      %v409 = vpop.f32.mrb[0].mxu0
      %v410 = vadd.f32 %v332, %v409
      %v411 = vpop.f32.mrb[0].mxu0
      %412 = vmatprep.mubr.f32.mxu0 0.0
      %413 = vmatmul.mubr.f32.gmra.mrb[0].mxu0 %v283
      %v414 = vpop.f32.mrb[0].mxu0
      %v415 = vadd.f32 %v332, %v414
      %v416 = vpop.f32.mrb[0].mxu0
      %417 = vmatprep.mubr.f32.mxu0 0.0
      %418 = vmatmul.mubr.f32.gmra.mrb[0].mxu0 %v284
      %v419 = vpop.f32.mrb[0].mxu0
      %v420 = vadd.f32 %v332, %v419
      %v421 = vpop.f32.mrb[0].mxu0
      %422 = vmatprep.mubr.f32.mxu0 0.0
      %423 = vmatmul.mubr.f32.gmra.mrb[0].mxu0 %v285
      %v424 = vpop.f32.mrb[0].mxu0
      %v425 = vadd.f32 %v332, %v424
      %v426 = vpop.f32.mrb[0].mxu0
      %427 = vmatprep.mubr.f32.mxu0 0.0
      %428 = vmatmul.mubr.f32.gmra.mrb[0].mxu0 %v286
      %v429 = vpop.f32.mrb[0].mxu0
      %v430 = vadd.f32 %v332, %v429
      %v431 = vpop.f32.mrb[0].mxu0
      %432 = vmatprep.mubr.f32.mxu0 0.0
      %433 = vmatmul.mubr.f32.gmra.mrb[0].mxu0 %v287
      %v434 = vpop.f32.mrb[0].mxu0
      %v435 = vadd.f32 %v332, %v434
      %v436 = vpop.f32.mrb[0].mxu0
      %437 = vmatprep.mubr.f32.mxu0 0.0
      %438 = vmatmul.mubr.f32.gmra.mrb[0].mxu0 %v288
      %v439 = vpop.f32.mrb[0].mxu0
      %v440 = vadd.f32 %v332, %v439
      %v441 = vpop.f32.mrb[0].mxu0
      %442 = vmatprep.mubr.f32.mxu0 0.0
      %443 = vmatmul.mubr.f32.gmra.mrb[0].mxu0 %v289
      %v444 = vpop.f32.mrb[0].mxu0
      %v445 = vadd.f32 %v332, %v444
      %v446 = vpop.f32.mrb[0].mxu0
      %447 = vmatprep.mubr.f32.mxu0 0.0
      %448 = vmatmul.mubr.f32.gmra.mrb[0].mxu0 %v290
      %v449 = vpop.f32.mrb[0].mxu0
      %v450 = vadd.f32 %v332, %v449
      %v451 = vpop.f32.mrb[0].mxu0
      %452 = vmatprep.mubr.f32.mxu0 0.0
      %453 = vmatmul.mubr.f32.gmra.mrb[0].mxu0 %v291
      %v454 = vpop.f32.mrb[0].mxu0
      %v455 = vadd.f32 %v332, %v454
      %v456 = vpop.f32.mrb[0].mxu0
      %457 = vmatprep.mubr.f32.mxu0 0.0
      %458 = vmatmul.mubr.f32.gmra.mrb[0].mxu0 %v292
      %v459 = vpop.f32.mrb[0].mxu0
      %v460 = vadd.f32 %v332, %v459
      %v461 = vpop.f32.mrb[0].mxu0
      %462 = vmatprep.mubr.f32.mxu0 0.0
      %463 = vmatmul.mubr.f32.gmra.mrb[0].mxu0 %v293
      %v464 = vpop.f32.mrb[0].mxu0
      %v465 = vadd.f32 %v332, %v464
      %v466 = vpop.f32.mrb[0].mxu0
      %467 = vmatprep.mubr.f32.mxu0 0.0
      %468 = vmatmul.mubr.f32.gmra.mrb[0].mxu0 %v294
      %v469 = vpop.f32.mrb[0].mxu0
      %v470 = vadd.f32 %v332, %v469
      %v471 = vpop.f32.mrb[0].mxu0
      %472 = vmatprep.mubr.f32.mxu0 0.0
      %473 = vmatmul.mubr.f32.gmra.mrb[0].mxu0 %v295
      %v474 = vpop.f32.mrb[0].mxu0
      %v475 = vadd.f32 %v332, %v474
      %v476 = vpop.f32.mrb[0].mxu0
      %477 = vmatprep.mubr.f32.mxu0 0.0
      %478 = vmatmul.mubr.f32.gmra.mrb[0].mxu0 %v296
      %v479 = vpop.f32.mrb[0].mxu0
      %v480 = vadd.f32 %v332, %v479
      %v481 = vpop.f32.mrb[0].mxu0
      %482 = vmatprep.mubr.f32.mxu0 0.0
      %483 = vmatmul.mubr.f32.gmra.mrb[0].mxu0 %v297
      %v484 = vpop.f32.mrb[0].mxu0
      %v485 = vadd.f32 %v332, %v484
      %v486 = vpop.f32.mrb[0].mxu0
      %487 = vmatprep.mubr.f32.mxu0 0.0
      %488 = vmatmul.mubr.f32.gmra.mrb[0].mxu0 %v298
      %v489 = vpop.f32.mrb[0].mxu0
      %v490 = vadd.f32 %v332, %v489
      %v491 = vpop.f32.mrb[0].mxu0
      %492 = vmatprep.mubr.f32.mxu0 0.0
      %493 = vmatmul.mubr.f32.gmra.mrb[0].mxu0 %v299
      %v494 = vpop.f32.mrb[0].mxu0
      %v495 = vadd.f32 %v332, %v494
      %v496 = vpop.f32.mrb[0].mxu0
      %497 = vmatprep.mubr.f32.mxu0 0.0
      %498 = vmatmul.mubr.f32.gmra.mrb[0].mxu0 %v300
      %v499 = vpop.f32.mrb[0].mxu0
      %v500 = vadd.f32 %v332, %v499
      %v501 = vpop.f32.mrb[0].mxu0
      %502 = vmatprep.mubr.f32.mxu0 0.0
      %503 = vmatmul.mubr.f32.gmra.mrb[0].mxu0 %v301
      %v504 = vpop.f32.mrb[0].mxu0
      %v505 = vadd.f32 %v332, %v504
      %v506 = vpop.f32.mrb[0].mxu0
      %507 = vmatprep.mubr.f32.mxu0 0.0
      %508 = vmatmul.mubr.f32.gmra.mrb[0].mxu0 %v302
      %v509 = vpop.f32.mrb[0].mxu0
      %v510 = vadd.f32 %v332, %v509
      %v511 = vpop.f32.mrb[0].mxu0
      %512 = vmatprep.mubr.f32.mxu0 0.0
      %513 = vmatmul.mubr.f32.gmra.mrb[0].mxu0 %v303
      %v514 = vpop.f32.mrb[0].mxu0
      %v515 = vadd.f32 %v332, %v514
      %v516 = vpop.f32.mrb[0].mxu0
      %517 = vmatprep.mubr.f32.mxu0 0.0
      %518 = vmatmul.mubr.f32.gmra.mrb[0].mxu0 %v304
      %v519 = vpop.f32.mrb[0].mxu0
      %v520 = vadd.f32 %v332, %v519
      %v521 = vpop.f32.mrb[0].mxu0
      %522 = vmatprep.mubr.f32.mxu0 0.0
      %523 = vmatmul.mubr.f32.gmra.mrb[0].mxu0 %v305
      %v524 = vpop.f32.mrb[0].mxu0
      %v525 = vadd.f32 %v332, %v524
      %v526 = vpop.f32.mrb[0].mxu0
      %527 = vmatprep.mubr.f32.mxu0 0.0
      %528 = vmatmul.mubr.f32.gmra.mrb[0].mxu0 %v306
      %v529 = vpop.f32.mrb[0].mxu0
      %v530 = vadd.f32 %v332, %v529
      %v531 = vpop.f32.mrb[0].mxu0
      %532 = vmatprep.mubr.f32.mxu0 0.0
      %533 = vmatmul.mubr.f32.gmra.mrb[0].mxu0 %v307
      %v534 = vpop.f32.mrb[0].mxu0
      %v535 = vadd.f32 %v332, %v534
      %v536 = vpop.f32.mrb[0].mxu0
      %537 = vmatprep.mubr.f32.mxu0 0.0
      %538 = vmatmul.mubr.f32.gmra.mrb[0].mxu0 %v308
      %v539 = vpop.f32.mrb[0].mxu0
      %v540 = vadd.f32 %v332, %v539
      %v541 = vpop.f32.mrb[0].mxu0
      %542 = vmatprep.mubr.f32.mxu0 0.0
      %543 = vmatmul.mubr.f32.gmra.mrb[0].mxu0 %v309
      %v544 = vpop.f32.mrb[0].mxu0
      %v545 = vadd.f32 %v332, %v544
      %v546 = vpop.f32.mrb[0].mxu0
      %547 = vmatprep.mubr.f32.mxu0 0.0
      %548 = vmatmul.mubr.f32.gmra.mrb[0].mxu0 %v310
      %v549 = vpop.f32.mrb[0].mxu0
      %v550 = vadd.f32 %v332, %v549
      %v551 = vpop.f32.mrb[0].mxu0
      %552 = vmatprep.mubr.f32.mxu0 0.0
      %553 = vmatmul.mubr.f32.gmra.mrb[0].mxu0 %v311
      %v554 = vpop.f32.mrb[0].mxu0
      %v555 = vadd.f32 %v332, %v554
      %v556 = vpop.f32.mrb[0].mxu0
      %557 = vdwg.mxu0
      %v558 = vmax.f32 %v400, 0.0
      %v559 = vmax.f32 %v405, 0.0
      %v560 = vmax.f32 %v410, 0.0
      %v561 = vmax.f32 %v415, 0.0
      %v562 = vmax.f32 %v420, 0.0
      %v563 = vmax.f32 %v425, 0.0
      %v564 = vmax.f32 %v430, 0.0
      %v565 = vmax.f32 %v435, 0.0
      %v566 = vmax.f32 %v440, 0.0
      %v567 = vmax.f32 %v445, 0.0
      %v568 = vmax.f32 %v450, 0.0
      %v569 = vmax.f32 %v455, 0.0
      %v570 = vmax.f32 %v460, 0.0
      %v571 = vmax.f32 %v465, 0.0
      %v572 = vmax.f32 %v470, 0.0
      %v573 = vmax.f32 %v475, 0.0
      %v574 = vmax.f32 %v480, 0.0
      %v575 = vmax.f32 %v485, 0.0
      %v576 = vmax.f32 %v490, 0.0
      %v577 = vmax.f32 %v495, 0.0
      %v578 = vmax.f32 %v500, 0.0
      %v579 = vmax.f32 %v505, 0.0
      %v580 = vmax.f32 %v510, 0.0
      %v581 = vmax.f32 %v515, 0.0
      %v582 = vmax.f32 %v520, 0.0
      %v583 = vmax.f32 %v525, 0.0
      %v584 = vmax.f32 %v530, 0.0
      %v585 = vmax.f32 %v535, 0.0
      %v586 = vmax.f32 %v540, 0.0
      %v587 = vmax.f32 %v545, 0.0
      %v588 = vmax.f32 %v550, 0.0
      %v589 = vmax.f32 %v555, 0.0
      %v590 = vld [vmem:[%s5 + $0x1] sm:$0x1]
      %v591 = vlaneseq
      %v592 = vshrl.u32 %v591, 7
      %v593 = vsub.s32 0, %v592
      %v594 = vrot.slane %v590, %v593
      %v595 = vmul.f32 %v558, %v594
      %v596 = vmul.f32 %v559, %v594
      %v597 = vmul.f32 %v560, %v594
      %v598 = vmul.f32 %v561, %v594
      %v599 = vmul.f32 %v562, %v594
      %v600 = vmul.f32 %v563, %v594
      %v601 = vmul.f32 %v564, %v594
      %v602 = vmul.f32 %v565, %v594
      %v603 = vmul.f32 %v566, %v594
      %v604 = vmul.f32 %v567, %v594
      %v605 = vmul.f32 %v568, %v594
      %v606 = vmul.f32 %v569, %v594
      %v607 = vmul.f32 %v570, %v594
      %v608 = vmul.f32 %v571, %v594
      %v609 = vmul.f32 %v572, %v594
      %v610 = vmul.f32 %v573, %v594
      %v611 = vmul.f32 %v574, %v594
      %v612 = vmul.f32 %v575, %v594
      %v613 = vmul.f32 %v576, %v594
      %v614 = vmul.f32 %v577, %v594
      %v615 = vmul.f32 %v578, %v594
      %v616 = vmul.f32 %v579, %v594
      %v617 = vmul.f32 %v580, %v594
      %v618 = vmul.f32 %v581, %v594
      %v619 = vmul.f32 %v582, %v594
      %v620 = vmul.f32 %v583, %v594
      %v621 = vmul.f32 %v584, %v594
      %v622 = vmul.f32 %v585, %v594
      %v623 = vmul.f32 %v586, %v594
      %v624 = vmul.f32 %v587, %v594
      %v625 = vmul.f32 %v588, %v594
      %v626 = vmul.f32 %v589, %v594
      %v627 = vld [vmem:[%s5 + $0x2] sm:$0x1]
      %v628 = vlaneseq
      %v629 = vshrl.u32 %v628, 7
      %v630 = vsub.s32 0, %v629
      %v631 = vrot.slane %v627, %v630
      %v632 = vadd.f32 %v595, %v631
      %v633 = vadd.f32 %v596, %v631
      %v634 = vadd.f32 %v597, %v631
      %v635 = vadd.f32 %v598, %v631
      %v636 = vadd.f32 %v599, %v631
      %v637 = vadd.f32 %v600, %v631
      %v638 = vadd.f32 %v601, %v631
      %v639 = vadd.f32 %v602, %v631
      %v640 = vadd.f32 %v603, %v631
      %v641 = vadd.f32 %v604, %v631
      %v642 = vadd.f32 %v605, %v631
      %v643 = vadd.f32 %v606, %v631
      %v644 = vadd.f32 %v607, %v631
      %v645 = vadd.f32 %v608, %v631
      %v646 = vadd.f32 %v609, %v631
      %v647 = vadd.f32 %v610, %v631
      %v648 = vadd.f32 %v611, %v631
      %v649 = vadd.f32 %v612, %v631
      %v650 = vadd.f32 %v613, %v631
      %v651 = vadd.f32 %v614, %v631
      %v652 = vadd.f32 %v615, %v631
      %v653 = vadd.f32 %v616, %v631
      %v654 = vadd.f32 %v617, %v631
      %v655 = vadd.f32 %v618, %v631
      %v656 = vadd.f32 %v619, %v631
      %v657 = vadd.f32 %v620, %v631
      %v658 = vadd.f32 %v621, %v631
      %v659 = vadd.f32 %v622, %v631
      %v660 = vadd.f32 %v623, %v631
      %v661 = vadd.f32 %v624, %v631
      %v662 = vadd.f32 %v625, %v631
      %v663 = vadd.f32 %v626, %v631
      %v664 = vld [vmem:[%s2] sm:$0xff]
      %v665 = vld [vmem:[%s2 + $0x8] sm:$0xff]
      %v666 = vld [vmem:[%s2 + $0x10] sm:$0xff]
      %v667 = vld [vmem:[%s2 + $0x18] sm:$0xff]
      %v668 = vld [vmem:[%s2 + $0x20] sm:$0xff]
      %v669 = vld [vmem:[%s2 + $0x28] sm:$0xff]
      %v670 = vld [vmem:[%s2 + $0x30] sm:$0xff]
      %v671 = vld [vmem:[%s2 + $0x38] sm:$0xff]
      %673 = vrot.lane.b32.xlu0 %v332, 64
      %v674 = vpop.permute.xlu0 %673
      %vm676 = vcmask 523264
      %v678 = vsel %vm676, %v632, 0
      %v681 = vsel %vm676, %v633, 0
      %v684 = vsel %vm676, %v634, 0
      %v687 = vsel %vm676, %v635, 0
      %v690 = vsel %vm676, %v636, 0
      %v693 = vsel %vm676, %v637, 0
      %v696 = vsel %vm676, %v638, 0
      %v699 = vsel %vm676, %v639, 0
      %v702 = vsel %vm676, %v640, 0
      %v705 = vsel %vm676, %v641, 0
      %v708 = vsel %vm676, %v642, 0
      %v711 = vsel %vm676, %v643, 0
      %v714 = vsel %vm676, %v644, 0
      %v717 = vsel %vm676, %v645, 0
      %v720 = vsel %vm676, %v646, 0
      %v723 = vsel %vm676, %v647, 0
      %v726 = vsel %vm676, %v648, 0
      %v729 = vsel %vm676, %v649, 0
      %v732 = vsel %vm676, %v650, 0
      %v735 = vsel %vm676, %v651, 0
      %v738 = vsel %vm676, %v652, 0
      %v741 = vsel %vm676, %v653, 0
      %v744 = vsel %vm676, %v654, 0
      %v747 = vsel %vm676, %v655, 0
      %v750 = vsel %vm676, %v656, 0
      %v753 = vsel %vm676, %v657, 0
      %v756 = vsel %vm676, %v658, 0
      %v759 = vsel %vm676, %v659, 0
      %v762 = vsel %vm676, %v660, 0
      %v765 = vsel %vm676, %v661, 0
      %v768 = vsel %vm676, %v662, 0
      %v771 = vsel %vm676, %v663, 0
      %773 = vmatprep.subr.mxu0 0.0
      %774 = vmatpush1.msra.mxu0 %v664
      %775 = vmatprep.subr.mxu0 0.0
      %776 = vmatpush1.msra.mxu0 %v665
      %777 = vmatprep.subr.mxu0 0.0
      %778 = vmatpush1.msra.mxu0 %v666
      %779 = vmatprep.subr.mxu0 0.0
      %780 = vmatpush1.msra.mxu0 %v667
      %781 = vmatprep.subr.mxu0 0.0
      %782 = vmatpush1.msra.mxu0 %v668
      %783 = vmatprep.subr.mxu0 0.0
      %784 = vmatpush1.msra.mxu0 %v669
      %785 = vmatprep.subr.mxu0 0.0
      %786 = vmatpush1.msra.mxu0 %v670
      %787 = vmatprep.subr.mxu0 0.0
      %788 = vmatpush1.msra.mxu0 %v671
      %789 = vmatprep.subr.mxu0 0.0
      %790 = vmatpush1.msra.mxu0 0.0
      %791 = vmatprep.subr.mxu0 0.0
      %792 = vmatpush1.msra.mxu0 0.0
      %793 = vmatprep.subr.mxu0 0.0
      %794 = vmatpush1.msra.mxu0 0.0
      %795 = vmatprep.subr.mxu0 0.0
      %796 = vmatpush1.msra.mxu0 0.0
      %797 = vmatprep.subr.mxu0 0.0
      %798 = vmatpush1.msra.mxu0 0.0
      %799 = vmatprep.subr.mxu0 0.0
      %800 = vmatpush1.msra.mxu0 0.0
      %801 = vmatprep.subr.mxu0 0.0
      %802 = vmatpush1.msra.mxu0 0.0
      %803 = vmatprep.subr.mxu0 0.0
      %804 = vmatpush1.msra.mxu0 0.0
      %805 = vmatprep.subr.mxu0 0.0
      %806 = vmatpush1.msra.mxu0 0.0
      %807 = vmatprep.subr.mxu0 0.0
      %808 = vmatpush1.msra.mxu0 0.0
      %809 = vmatprep.subr.mxu0 0.0
      %810 = vmatpush1.msra.mxu0 0.0
      %811 = vmatprep.subr.mxu0 0.0
      %812 = vmatpush1.msra.mxu0 0.0
      %813 = vmatprep.subr.mxu0 0.0
      %814 = vmatpush1.msra.mxu0 0.0
      %815 = vmatprep.subr.mxu0 0.0
      %816 = vmatpush1.msra.mxu0 0.0
      %817 = vmatprep.subr.mxu0 0.0
      %818 = vmatpush1.msra.mxu0 0.0
      %819 = vmatprep.subr.mxu0 0.0
      %820 = vmatpush1.msra.mxu0 0.0
      %821 = vmatprep.subr.mxu0 0.0
      %822 = vmatpush1.msra.mxu0 0.0
      %823 = vmatprep.subr.mxu0 0.0
      %824 = vmatpush1.msra.mxu0 0.0
      %825 = vmatprep.subr.mxu0 0.0
      %826 = vmatpush1.msra.mxu0 0.0
      %827 = vmatprep.subr.mxu0 0.0
      %828 = vmatpush1.msra.mxu0 0.0
      %829 = vmatprep.subr.mxu0 0.0
      %830 = vmatpush1.msra.mxu0 0.0
      %831 = vmatprep.subr.mxu0 0.0
      %832 = vmatpush1.msra.mxu0 0.0
      %833 = vmatprep.subr.mxu0 0.0
      %834 = vmatpush1.msra.mxu0 0.0
      %835 = vmatprep.subr.mxu0 0.0
      %836 = vmatpush1.msra.mxu0 0.0
      %837 = vmatprep.mubr.f32.mxu0 0.0
      %838 = vmatmul.mubr.f32.gmra.mrb[0].mxu0 %v678
      %v839 = vpop.f32.mrb[0].mxu0
      %v840 = vadd.f32 %v674, %v839
      %v841 = vpop.f32.mrb[0].mxu0
      %842 = vmatprep.mubr.f32.mxu0 0.0
      %843 = vmatmul.mubr.f32.gmra.mrb[0].mxu0 %v681
      %v844 = vpop.f32.mrb[0].mxu0
      %v845 = vadd.f32 %v674, %v844
      %v846 = vpop.f32.mrb[0].mxu0
      %847 = vmatprep.mubr.f32.mxu0 0.0
      %848 = vmatmul.mubr.f32.gmra.mrb[0].mxu0 %v684
      %v849 = vpop.f32.mrb[0].mxu0
      %v850 = vadd.f32 %v674, %v849
      %v851 = vpop.f32.mrb[0].mxu0
      %852 = vmatprep.mubr.f32.mxu0 0.0
      %853 = vmatmul.mubr.f32.gmra.mrb[0].mxu0 %v687
      %v854 = vpop.f32.mrb[0].mxu0
      %v855 = vadd.f32 %v674, %v854
      %v856 = vpop.f32.mrb[0].mxu0
      %857 = vmatprep.mubr.f32.mxu0 0.0
      %858 = vmatmul.mubr.f32.gmra.mrb[0].mxu0 %v690
      %v859 = vpop.f32.mrb[0].mxu0
      %v860 = vadd.f32 %v674, %v859
      %v861 = vpop.f32.mrb[0].mxu0
      %862 = vmatprep.mubr.f32.mxu0 0.0
      %863 = vmatmul.mubr.f32.gmra.mrb[0].mxu0 %v693
      %v864 = vpop.f32.mrb[0].mxu0
      %v865 = vadd.f32 %v674, %v864
      %v866 = vpop.f32.mrb[0].mxu0
      %867 = vmatprep.mubr.f32.mxu0 0.0
      %868 = vmatmul.mubr.f32.gmra.mrb[0].mxu0 %v696
      %v869 = vpop.f32.mrb[0].mxu0
      %v870 = vadd.f32 %v674, %v869
      %v871 = vpop.f32.mrb[0].mxu0
      %872 = vmatprep.mubr.f32.mxu0 0.0
      %873 = vmatmul.mubr.f32.gmra.mrb[0].mxu0 %v699
      %v874 = vpop.f32.mrb[0].mxu0
      %v875 = vadd.f32 %v674, %v874
      %v876 = vpop.f32.mrb[0].mxu0
      %877 = vmatprep.mubr.f32.mxu0 0.0
      %878 = vmatmul.mubr.f32.gmra.mrb[0].mxu0 %v702
      %v879 = vpop.f32.mrb[0].mxu0
      %v880 = vadd.f32 %v674, %v879
      %v881 = vpop.f32.mrb[0].mxu0
      %882 = vmatprep.mubr.f32.mxu0 0.0
      %883 = vmatmul.mubr.f32.gmra.mrb[0].mxu0 %v705
      %v884 = vpop.f32.mrb[0].mxu0
      %v885 = vadd.f32 %v674, %v884
      %v886 = vpop.f32.mrb[0].mxu0
      %887 = vmatprep.mubr.f32.mxu0 0.0
      %888 = vmatmul.mubr.f32.gmra.mrb[0].mxu0 %v708
      %v889 = vpop.f32.mrb[0].mxu0
      %v890 = vadd.f32 %v674, %v889
      %v891 = vpop.f32.mrb[0].mxu0
      %892 = vmatprep.mubr.f32.mxu0 0.0
      %893 = vmatmul.mubr.f32.gmra.mrb[0].mxu0 %v711
      %v894 = vpop.f32.mrb[0].mxu0
      %v895 = vadd.f32 %v674, %v894
      %v896 = vpop.f32.mrb[0].mxu0
      %897 = vmatprep.mubr.f32.mxu0 0.0
      %898 = vmatmul.mubr.f32.gmra.mrb[0].mxu0 %v714
      %v899 = vpop.f32.mrb[0].mxu0
      %v900 = vadd.f32 %v674, %v899
      %v901 = vpop.f32.mrb[0].mxu0
      %902 = vmatprep.mubr.f32.mxu0 0.0
      %903 = vmatmul.mubr.f32.gmra.mrb[0].mxu0 %v717
      %v904 = vpop.f32.mrb[0].mxu0
      %v905 = vadd.f32 %v674, %v904
      %v906 = vpop.f32.mrb[0].mxu0
      %907 = vmatprep.mubr.f32.mxu0 0.0
      %908 = vmatmul.mubr.f32.gmra.mrb[0].mxu0 %v720
      %v909 = vpop.f32.mrb[0].mxu0
      %v910 = vadd.f32 %v674, %v909
      %v911 = vpop.f32.mrb[0].mxu0
      %912 = vmatprep.mubr.f32.mxu0 0.0
      %913 = vmatmul.mubr.f32.gmra.mrb[0].mxu0 %v723
      %v914 = vpop.f32.mrb[0].mxu0
      %v915 = vadd.f32 %v674, %v914
      %v916 = vpop.f32.mrb[0].mxu0
      %917 = vmatprep.mubr.f32.mxu0 0.0
      %918 = vmatmul.mubr.f32.gmra.mrb[0].mxu0 %v726
      %v919 = vpop.f32.mrb[0].mxu0
      %v920 = vadd.f32 %v674, %v919
      %v921 = vpop.f32.mrb[0].mxu0
      %922 = vmatprep.mubr.f32.mxu0 0.0
      %923 = vmatmul.mubr.f32.gmra.mrb[0].mxu0 %v729
      %v924 = vpop.f32.mrb[0].mxu0
      %v925 = vadd.f32 %v674, %v924
      %v926 = vpop.f32.mrb[0].mxu0
      %927 = vmatprep.mubr.f32.mxu0 0.0
      %928 = vmatmul.mubr.f32.gmra.mrb[0].mxu0 %v732
      %v929 = vpop.f32.mrb[0].mxu0
      %v930 = vadd.f32 %v674, %v929
      %v931 = vpop.f32.mrb[0].mxu0
      %932 = vmatprep.mubr.f32.mxu0 0.0
      %933 = vmatmul.mubr.f32.gmra.mrb[0].mxu0 %v735
      %v934 = vpop.f32.mrb[0].mxu0
      %v935 = vadd.f32 %v674, %v934
      %v936 = vpop.f32.mrb[0].mxu0
      %937 = vmatprep.mubr.f32.mxu0 0.0
      %938 = vmatmul.mubr.f32.gmra.mrb[0].mxu0 %v738
      %v939 = vpop.f32.mrb[0].mxu0
      %v940 = vadd.f32 %v674, %v939
      %v941 = vpop.f32.mrb[0].mxu0
      %942 = vmatprep.mubr.f32.mxu0 0.0
      %943 = vmatmul.mubr.f32.gmra.mrb[0].mxu0 %v741
      %v944 = vpop.f32.mrb[0].mxu0
      %v945 = vadd.f32 %v674, %v944
      %v946 = vpop.f32.mrb[0].mxu0
      %947 = vmatprep.mubr.f32.mxu0 0.0
      %948 = vmatmul.mubr.f32.gmra.mrb[0].mxu0 %v744
      %v949 = vpop.f32.mrb[0].mxu0
      %v950 = vadd.f32 %v674, %v949
      %v951 = vpop.f32.mrb[0].mxu0
      %952 = vmatprep.mubr.f32.mxu0 0.0
      %953 = vmatmul.mubr.f32.gmra.mrb[0].mxu0 %v747
      %v954 = vpop.f32.mrb[0].mxu0
      %v955 = vadd.f32 %v674, %v954
      %v956 = vpop.f32.mrb[0].mxu0
      %957 = vmatprep.mubr.f32.mxu0 0.0
      %958 = vmatmul.mubr.f32.gmra.mrb[0].mxu0 %v750
      %v959 = vpop.f32.mrb[0].mxu0
      %v960 = vadd.f32 %v674, %v959
      %v961 = vpop.f32.mrb[0].mxu0
      %962 = vmatprep.mubr.f32.mxu0 0.0
      %963 = vmatmul.mubr.f32.gmra.mrb[0].mxu0 %v753
      %v964 = vpop.f32.mrb[0].mxu0
      %v965 = vadd.f32 %v674, %v964
      %v966 = vpop.f32.mrb[0].mxu0
      %967 = vmatprep.mubr.f32.mxu0 0.0
      %968 = vmatmul.mubr.f32.gmra.mrb[0].mxu0 %v756
      %v969 = vpop.f32.mrb[0].mxu0
      %v970 = vadd.f32 %v674, %v969
      %v971 = vpop.f32.mrb[0].mxu0
      %972 = vmatprep.mubr.f32.mxu0 0.0
      %973 = vmatmul.mubr.f32.gmra.mrb[0].mxu0 %v759
      %v974 = vpop.f32.mrb[0].mxu0
      %v975 = vadd.f32 %v674, %v974
      %v976 = vpop.f32.mrb[0].mxu0
      %977 = vmatprep.mubr.f32.mxu0 0.0
      %978 = vmatmul.mubr.f32.gmra.mrb[0].mxu0 %v762
      %v979 = vpop.f32.mrb[0].mxu0
      %v980 = vadd.f32 %v674, %v979
      %v981 = vpop.f32.mrb[0].mxu0
      %982 = vmatprep.mubr.f32.mxu0 0.0
      %983 = vmatmul.mubr.f32.gmra.mrb[0].mxu0 %v765
      %v984 = vpop.f32.mrb[0].mxu0
      %v985 = vadd.f32 %v674, %v984
      %v986 = vpop.f32.mrb[0].mxu0
      %987 = vmatprep.mubr.f32.mxu0 0.0
      %988 = vmatmul.mubr.f32.gmra.mrb[0].mxu0 %v768
      %v989 = vpop.f32.mrb[0].mxu0
      %v990 = vadd.f32 %v674, %v989
      %v991 = vpop.f32.mrb[0].mxu0
      %992 = vmatprep.mubr.f32.mxu0 0.0
      %993 = vmatmul.mubr.f32.gmra.mrb[0].mxu0 %v771
      %v994 = vpop.f32.mrb[0].mxu0
      %v995 = vadd.f32 %v674, %v994
      %v996 = vpop.f32.mrb[0].mxu0
      %997 = vdwg.mxu0
      %v998 = vmax.f32 %v840, 0.0
      %v999 = vmax.f32 %v845, 0.0
      %v1000 = vmax.f32 %v850, 0.0
      %v1001 = vmax.f32 %v855, 0.0
      %v1002 = vmax.f32 %v860, 0.0
      %v1003 = vmax.f32 %v865, 0.0
      %v1004 = vmax.f32 %v870, 0.0
      %v1005 = vmax.f32 %v875, 0.0
      %v1006 = vmax.f32 %v880, 0.0
      %v1007 = vmax.f32 %v885, 0.0
      %v1008 = vmax.f32 %v890, 0.0
      %v1009 = vmax.f32 %v895, 0.0
      %v1010 = vmax.f32 %v900, 0.0
      %v1011 = vmax.f32 %v905, 0.0
      %v1012 = vmax.f32 %v910, 0.0
      %v1013 = vmax.f32 %v915, 0.0
      %v1014 = vmax.f32 %v920, 0.0
      %v1015 = vmax.f32 %v925, 0.0
      %v1016 = vmax.f32 %v930, 0.0
      %v1017 = vmax.f32 %v935, 0.0
      %v1018 = vmax.f32 %v940, 0.0
      %v1019 = vmax.f32 %v945, 0.0
      %v1020 = vmax.f32 %v950, 0.0
      %v1021 = vmax.f32 %v955, 0.0
      %v1022 = vmax.f32 %v960, 0.0
      %v1023 = vmax.f32 %v965, 0.0
      %v1024 = vmax.f32 %v970, 0.0
      %v1025 = vmax.f32 %v975, 0.0
      %v1026 = vmax.f32 %v980, 0.0
      %v1027 = vmax.f32 %v985, 0.0
      %v1028 = vmax.f32 %v990, 0.0
      %v1029 = vmax.f32 %v995, 0.0
      %1031 = vrot.lane.b32.xlu0 %v594, 64
      %v1032 = vpop.permute.xlu0 %1031
      %v1034 = vmul.f32 %v998, %v1032
      %v1035 = vmul.f32 %v999, %v1032
      %v1036 = vmul.f32 %v1000, %v1032
      %v1037 = vmul.f32 %v1001, %v1032
      %v1038 = vmul.f32 %v1002, %v1032
      %v1039 = vmul.f32 %v1003, %v1032
      %v1040 = vmul.f32 %v1004, %v1032
      %v1041 = vmul.f32 %v1005, %v1032
      %v1042 = vmul.f32 %v1006, %v1032
      %v1043 = vmul.f32 %v1007, %v1032
      %v1044 = vmul.f32 %v1008, %v1032
      %v1045 = vmul.f32 %v1009, %v1032
      %v1046 = vmul.f32 %v1010, %v1032
      %v1047 = vmul.f32 %v1011, %v1032
      %v1048 = vmul.f32 %v1012, %v1032
      %v1049 = vmul.f32 %v1013, %v1032
      %v1050 = vmul.f32 %v1014, %v1032
      %v1051 = vmul.f32 %v1015, %v1032
      %v1052 = vmul.f32 %v1016, %v1032
      %v1053 = vmul.f32 %v1017, %v1032
      %v1054 = vmul.f32 %v1018, %v1032
      %v1055 = vmul.f32 %v1019, %v1032
      %v1056 = vmul.f32 %v1020, %v1032
      %v1057 = vmul.f32 %v1021, %v1032
      %v1058 = vmul.f32 %v1022, %v1032
      %v1059 = vmul.f32 %v1023, %v1032
      %v1060 = vmul.f32 %v1024, %v1032
      %v1061 = vmul.f32 %v1025, %v1032
      %v1062 = vmul.f32 %v1026, %v1032
      %v1063 = vmul.f32 %v1027, %v1032
      %v1064 = vmul.f32 %v1028, %v1032
      %v1065 = vmul.f32 %v1029, %v1032
      %1067 = vrot.lane.b32.xlu0 %v631, 64
      %v1068 = vpop.permute.xlu0 %1067
      %v1070 = vadd.f32 %v1034, %v1068
      %v1071 = vadd.f32 %v1035, %v1068
      %v1072 = vadd.f32 %v1036, %v1068
      %v1073 = vadd.f32 %v1037, %v1068
      %v1074 = vadd.f32 %v1038, %v1068
      %v1075 = vadd.f32 %v1039, %v1068
      %v1076 = vadd.f32 %v1040, %v1068
      %v1077 = vadd.f32 %v1041, %v1068
      %v1078 = vadd.f32 %v1042, %v1068
      %v1079 = vadd.f32 %v1043, %v1068
      %v1080 = vadd.f32 %v1044, %v1068
      %v1081 = vadd.f32 %v1045, %v1068
      %v1082 = vadd.f32 %v1046, %v1068
      %v1083 = vadd.f32 %v1047, %v1068
      %v1084 = vadd.f32 %v1048, %v1068
      %v1085 = vadd.f32 %v1049, %v1068
      %v1086 = vadd.f32 %v1050, %v1068
      %v1087 = vadd.f32 %v1051, %v1068
      %v1088 = vadd.f32 %v1052, %v1068
      %v1089 = vadd.f32 %v1053, %v1068
      %v1090 = vadd.f32 %v1054, %v1068
      %v1091 = vadd.f32 %v1055, %v1068
      %v1092 = vadd.f32 %v1056, %v1068
      %v1093 = vadd.f32 %v1057, %v1068
      %v1094 = vadd.f32 %v1058, %v1068
      %v1095 = vadd.f32 %v1059, %v1068
      %v1096 = vadd.f32 %v1060, %v1068
      %v1097 = vadd.f32 %v1061, %v1068
      %v1098 = vadd.f32 %v1062, %v1068
      %v1099 = vadd.f32 %v1063, %v1068
      %v1100 = vadd.f32 %v1064, %v1068
      %v1101 = vadd.f32 %v1065, %v1068
      %1102 = vst.msk [vmem:[#allocation2] sm:$0xff] %vm676, 0.0
      %1103 = vst.msk [vmem:[#allocation2 + $0x8] sm:$0xff] %vm676, 0.0
      %1104 = vst.msk [vmem:[#allocation2 + $0x10] sm:$0xff] %vm676, 0.0
      %1105 = vst.msk [vmem:[#allocation2 + $0x18] sm:$0xff] %vm676, 0.0
      %s1106 = scalar_lea.vmem [#allocation2], 544
      %1107 = vst.msk [vmem:[%s1106] sm:$0xff] %vm676, 0.0
      %1108 = vst.msk [vmem:[%s1106 + $0x8] sm:$0xff] %vm676, 0.0
      %1109 = vst.msk [vmem:[%s1106 + $0x10] sm:$0xff] %vm676, 0.0
      %1110 = vst.msk [vmem:[%s1106 + $0x18] sm:$0xff] %vm676, 0.0
      %vm1111 = vcmask 516096
      %1112 = vst.msk [vmem:[#allocation2 + $0x7] sm:$0x1] %vm1111, 0.0
      %1113 = vst.msk [vmem:[#allocation2 + $0x27] sm:$0x1] %vm1111, 0.0
      %1114 = vst.msk [vmem:[#allocation2 + $0x47] sm:$0x1] %vm1111, 0.0
      %1115 = vst.msk [vmem:[#allocation2 + $0x67] sm:$0x1] %vm1111, 0.0
      %1116 = vst.msk [vmem:[#allocation2 + $0x87] sm:$0x1] %vm1111, 0.0
      %1117 = vst.msk [vmem:[#allocation2 + $0xa7] sm:$0x1] %vm1111, 0.0
      %1118 = vst.msk [vmem:[#allocation2 + $0xc7] sm:$0x1] %vm1111, 0.0
      %1119 = vst.msk [vmem:[#allocation2 + $0xe7] sm:$0x1] %vm1111, 0.0
      %1120 = vst.msk [vmem:[#allocation2 + $0x107] sm:$0x1] %vm1111, 0.0
      %1121 = vst.msk [vmem:[#allocation2 + $0x127] sm:$0x1] %vm1111, 0.0
      %1122 = vst.msk [vmem:[#allocation2 + $0x147] sm:$0x1] %vm1111, 0.0
      %1123 = vst.msk [vmem:[#allocation2 + $0x167] sm:$0x1] %vm1111, 0.0
      %1124 = vst.msk [vmem:[#allocation2 + $0x187] sm:$0x1] %vm1111, 0.0
      %1125 = vst.msk [vmem:[#allocation2 + $0x1a7] sm:$0x1] %vm1111, 0.0
      %1126 = vst.msk [vmem:[#allocation2 + $0x1c7] sm:$0x1] %vm1111, 0.0
      %1127 = vst.msk [vmem:[#allocation2 + $0x1e7] sm:$0x1] %vm1111, 0.0
      %1128 = vst.msk [vmem:[#allocation2 + $0x207] sm:$0x1] %vm1111, 0.0
      %1129 = vst.msk [vmem:[#allocation2 + $0x227] sm:$0x1] %vm1111, 0.0
      %1130 = vst.msk [vmem:[#allocation2 + $0x18] sm:$0x1] %vm1111, 0.0
      %1131 = vst.msk [vmem:[#allocation2 + $0x38] sm:$0x1] %vm1111, 0.0
      %1132 = vst.msk [vmem:[#allocation2 + $0x58] sm:$0x1] %vm1111, 0.0
      %1133 = vst.msk [vmem:[#allocation2 + $0x78] sm:$0x1] %vm1111, 0.0
      %1134 = vst.msk [vmem:[#allocation2 + $0x98] sm:$0x1] %vm1111, 0.0
      %1135 = vst.msk [vmem:[#allocation2 + $0xb8] sm:$0x1] %vm1111, 0.0
      %1136 = vst.msk [vmem:[#allocation2 + $0xd8] sm:$0x1] %vm1111, 0.0
      %1137 = vst.msk [vmem:[#allocation2 + $0xf8] sm:$0x1] %vm1111, 0.0
      %1138 = vst.msk [vmem:[#allocation2 + $0x118] sm:$0x1] %vm1111, 0.0
      %1139 = vst.msk [vmem:[#allocation2 + $0x138] sm:$0x1] %vm1111, 0.0
      %1140 = vst.msk [vmem:[#allocation2 + $0x158] sm:$0x1] %vm1111, 0.0
      %1141 = vst.msk [vmem:[#allocation2 + $0x178] sm:$0x1] %vm1111, 0.0
      %1142 = vst.msk [vmem:[#allocation2 + $0x198] sm:$0x1] %vm1111, 0.0
      %1143 = vst.msk [vmem:[#allocation2 + $0x1b8] sm:$0x1] %vm1111, 0.0
      %1144 = vst.msk [vmem:[#allocation2 + $0x1d8] sm:$0x1] %vm1111, 0.0
      %1145 = vst.msk [vmem:[#allocation2 + $0x1f8] sm:$0x1] %vm1111, 0.0
      %1146 = vst.msk [vmem:[#allocation2 + $0x218] sm:$0x1] %vm1111, 0.0
      %1147 = vst.msk [vmem:[#allocation2 + $0x238] sm:$0x1] %vm1111, 0.0
      %s1148 = scalar_lea.vmem [#allocation2], 32
      %1149 = vst.msk [vmem:[%s1148 + $0x8] sm:$0xff] %vm676, %v1070
      %1150 = vst.msk [vmem:[%s1148 + $0x10] sm:$0xff] %vm676, %v1071
      %1151 = vst.msk [vmem:[%s1148 + $0x28] sm:$0xff] %vm676, %v1072
      %1152 = vst.msk [vmem:[%s1148 + $0x30] sm:$0xff] %vm676, %v1073
      %1153 = vst.msk [vmem:[%s1148 + $0x48] sm:$0xff] %vm676, %v1074
      %1154 = vst.msk [vmem:[%s1148 + $0x50] sm:$0xff] %vm676, %v1075
      %1155 = vst.msk [vmem:[%s1148 + $0x68] sm:$0xff] %vm676, %v1076
      %1156 = vst.msk [vmem:[%s1148 + $0x70] sm:$0xff] %vm676, %v1077
      %1157 = vst.msk [vmem:[%s1148 + $0x88] sm:$0xff] %vm676, %v1078
      %1158 = vst.msk [vmem:[%s1148 + $0x90] sm:$0xff] %vm676, %v1079
      %1159 = vst.msk [vmem:[%s1148 + $0xa8] sm:$0xff] %vm676, %v1080
      %1160 = vst.msk [vmem:[%s1148 + $0xb0] sm:$0xff] %vm676, %v1081
      %1161 = vst.msk [vmem:[%s1148 + $0xc8] sm:$0xff] %vm676, %v1082
      %1162 = vst.msk [vmem:[%s1148 + $0xd0] sm:$0xff] %vm676, %v1083
      %1163 = vst.msk [vmem:[%s1148 + $0xe8] sm:$0xff] %vm676, %v1084
      %1164 = vst.msk [vmem:[%s1148 + $0xf0] sm:$0xff] %vm676, %v1085
      %1165 = vst.msk [vmem:[%s1148 + $0x108] sm:$0xff] %vm676, %v1086
      %1166 = vst.msk [vmem:[%s1148 + $0x110] sm:$0xff] %vm676, %v1087
      %1167 = vst.msk [vmem:[%s1148 + $0x128] sm:$0xff] %vm676, %v1088
      %1168 = vst.msk [vmem:[%s1148 + $0x130] sm:$0xff] %vm676, %v1089
      %1169 = vst.msk [vmem:[%s1148 + $0x148] sm:$0xff] %vm676, %v1090
      %1170 = vst.msk [vmem:[%s1148 + $0x150] sm:$0xff] %vm676, %v1091
      %1171 = vst.msk [vmem:[%s1148 + $0x168] sm:$0xff] %vm676, %v1092
      %1172 = vst.msk [vmem:[%s1148 + $0x170] sm:$0xff] %vm676, %v1093
      %1173 = vst.msk [vmem:[%s1148 + $0x188] sm:$0xff] %vm676, %v1094
      %1174 = vst.msk [vmem:[%s1148 + $0x190] sm:$0xff] %vm676, %v1095
      %1175 = vst.msk [vmem:[%s1148 + $0x1a8] sm:$0xff] %vm676, %v1096
      %1176 = vst.msk [vmem:[%s1148 + $0x1b0] sm:$0xff] %vm676, %v1097
      %1177 = vst.msk [vmem:[%s1148 + $0x1c8] sm:$0xff] %vm676, %v1098
      %1178 = vst.msk [vmem:[%s1148 + $0x1d0] sm:$0xff] %vm676, %v1099
      %1179 = vst.msk [vmem:[%s1148 + $0x1e8] sm:$0xff] %vm676, %v1100
      %1180 = vst.msk [vmem:[%s1148 + $0x1f0] sm:$0xff] %vm676, %v1101
      %v1181 = vld [vmem:[#allocation2 + $0x7] sm:$0xff]
      %v1182 = vld [vmem:[#allocation2 + $0xf] sm:$0xff]
      %v1183 = vld [vmem:[#allocation2 + $0x27] sm:$0xff]
      %v1184 = vld [vmem:[#allocation2 + $0x2f] sm:$0xff]
      %v1185 = vld [vmem:[#allocation2 + $0x47] sm:$0xff]
      %v1186 = vld [vmem:[#allocation2 + $0x4f] sm:$0xff]
      %v1187 = vld [vmem:[#allocation2 + $0x67] sm:$0xff]
      %v1188 = vld [vmem:[#allocation2 + $0x6f] sm:$0xff]
      %v1189 = vld [vmem:[#allocation2 + $0x87] sm:$0xff]
      %v1190 = vld [vmem:[#allocation2 + $0x8f] sm:$0xff]
      %v1191 = vld [vmem:[#allocation2 + $0xa7] sm:$0xff]
      %v1192 = vld [vmem:[#allocation2 + $0xaf] sm:$0xff]
      %v1193 = vld [vmem:[#allocation2 + $0xc7] sm:$0xff]
      %v1194 = vld [vmem:[#allocation2 + $0xcf] sm:$0xff]
      %v1195 = vld [vmem:[#allocation2 + $0xe7] sm:$0xff]
      %v1196 = vld [vmem:[#allocation2 + $0xef] sm:$0xff]
      %v1197 = vld [vmem:[#allocation2 + $0x107] sm:$0xff]
      %v1198 = vld [vmem:[#allocation2 + $0x10f] sm:$0xff]
      %v1199 = vld [vmem:[#allocation2 + $0x127] sm:$0xff]
      %v1200 = vld [vmem:[#allocation2 + $0x12f] sm:$0xff]
      %v1201 = vld [vmem:[#allocation2 + $0x147] sm:$0xff]
      %v1202 = vld [vmem:[#allocation2 + $0x14f] sm:$0xff]
      %v1203 = vld [vmem:[#allocation2 + $0x167] sm:$0xff]
      %v1204 = vld [vmem:[#allocation2 + $0x16f] sm:$0xff]
      %v1205 = vld [vmem:[#allocation2 + $0x187] sm:$0xff]
      %v1206 = vld [vmem:[#allocation2 + $0x18f] sm:$0xff]
      %v1207 = vld [vmem:[#allocation2 + $0x1a7] sm:$0xff]
      %v1208 = vld [vmem:[#allocation2 + $0x1af] sm:$0xff]
      %v1209 = vld [vmem:[#allocation2 + $0x1c7] sm:$0xff]
      %v1210 = vld [vmem:[#allocation2 + $0x1cf] sm:$0xff]
      %v1211 = vld [vmem:[#allocation2 + $0x1e7] sm:$0xff]
      %v1212 = vld [vmem:[#allocation2 + $0x1ef] sm:$0xff]
      %v1213 = vld [vmem:[%s3] sm:$0xff]
      %v1214 = vld [vmem:[%s3 + $0x8] sm:$0xff]
      %v1215 = vld [vmem:[%s3 + $0x10] sm:$0xff]
      %v1216 = vld [vmem:[%s3 + $0x18] sm:$0xff]
      %v1217 = vld [vmem:[%s3 + $0x20] sm:$0xff]
      %v1218 = vld [vmem:[%s3 + $0x28] sm:$0xff]
      %v1219 = vld [vmem:[%s3 + $0x30] sm:$0xff]
      %v1220 = vld [vmem:[%s3 + $0x38] sm:$0xff]
      %v1221 = vld [vmem:[#allocation2 + $0x8] sm:$0xff]
      %v1222 = vld [vmem:[#allocation2 + $0x10] sm:$0xff]
      %v1223 = vld [vmem:[#allocation2 + $0x28] sm:$0xff]
      %v1224 = vld [vmem:[#allocation2 + $0x30] sm:$0xff]
      %v1225 = vld [vmem:[#allocation2 + $0x48] sm:$0xff]
      %v1226 = vld [vmem:[#allocation2 + $0x50] sm:$0xff]
      %v1227 = vld [vmem:[#allocation2 + $0x68] sm:$0xff]
      %v1228 = vld [vmem:[#allocation2 + $0x70] sm:$0xff]
      %v1229 = vld [vmem:[#allocation2 + $0x88] sm:$0xff]
      %v1230 = vld [vmem:[#allocation2 + $0x90] sm:$0xff]
      %v1231 = vld [vmem:[#allocation2 + $0xa8] sm:$0xff]
      %v1232 = vld [vmem:[#allocation2 + $0xb0] sm:$0xff]
      %v1233 = vld [vmem:[#allocation2 + $0xc8] sm:$0xff]
      %v1234 = vld [vmem:[#allocation2 + $0xd0] sm:$0xff]
      %v1235 = vld [vmem:[#allocation2 + $0xe8] sm:$0xff]
      %v1236 = vld [vmem:[#allocation2 + $0xf0] sm:$0xff]
      %v1237 = vld [vmem:[#allocation2 + $0x108] sm:$0xff]
      %v1238 = vld [vmem:[#allocation2 + $0x110] sm:$0xff]
      %v1239 = vld [vmem:[#allocation2 + $0x128] sm:$0xff]
      %v1240 = vld [vmem:[#allocation2 + $0x130] sm:$0xff]
      %v1241 = vld [vmem:[#allocation2 + $0x148] sm:$0xff]
      %v1242 = vld [vmem:[#allocation2 + $0x150] sm:$0xff]
      %v1243 = vld [vmem:[#allocation2 + $0x168] sm:$0xff]
      %v1244 = vld [vmem:[#allocation2 + $0x170] sm:$0xff]
      %v1245 = vld [vmem:[#allocation2 + $0x188] sm:$0xff]
      %v1246 = vld [vmem:[#allocation2 + $0x190] sm:$0xff]
      %v1247 = vld [vmem:[#allocation2 + $0x1a8] sm:$0xff]
      %v1248 = vld [vmem:[#allocation2 + $0x1b0] sm:$0xff]
      %v1249 = vld [vmem:[#allocation2 + $0x1c8] sm:$0xff]
      %v1250 = vld [vmem:[#allocation2 + $0x1d0] sm:$0xff]
      %v1251 = vld [vmem:[#allocation2 + $0x1e8] sm:$0xff]
      %v1252 = vld [vmem:[#allocation2 + $0x1f0] sm:$0xff]
      %s1253 = scalar_lea.vmem %s3, 64
      %v1254 = vld [vmem:[%s1253] sm:$0xff]
      %v1255 = vld [vmem:[%s1253 + $0x8] sm:$0xff]
      %v1256 = vld [vmem:[%s1253 + $0x10] sm:$0xff]
      %v1257 = vld [vmem:[%s1253 + $0x18] sm:$0xff]
      %v1258 = vld [vmem:[%s1253 + $0x20] sm:$0xff]
      %v1259 = vld [vmem:[%s1253 + $0x28] sm:$0xff]
      %v1260 = vld [vmem:[%s1253 + $0x30] sm:$0xff]
      %v1261 = vld [vmem:[%s1253 + $0x38] sm:$0xff]
      %v1263 = vsel %vm676, %v1221, 0
      %v1266 = vsel %vm676, %v1222, 0
      %v1269 = vsel %vm676, %v1223, 0
      %v1272 = vsel %vm676, %v1224, 0
      %v1275 = vsel %vm676, %v1225, 0
      %v1278 = vsel %vm676, %v1226, 0
      %v1281 = vsel %vm676, %v1227, 0
      %v1284 = vsel %vm676, %v1228, 0
      %v1287 = vsel %vm676, %v1229, 0
      %v1290 = vsel %vm676, %v1230, 0
      %v1293 = vsel %vm676, %v1231, 0
      %v1296 = vsel %vm676, %v1232, 0
      %v1299 = vsel %vm676, %v1233, 0
      %v1302 = vsel %vm676, %v1234, 0
      %v1305 = vsel %vm676, %v1235, 0
      %v1308 = vsel %vm676, %v1236, 0
      %v1311 = vsel %vm676, %v1237, 0
      %v1314 = vsel %vm676, %v1238, 0
      %v1317 = vsel %vm676, %v1239, 0
      %v1320 = vsel %vm676, %v1240, 0
      %v1323 = vsel %vm676, %v1241, 0
      %v1326 = vsel %vm676, %v1242, 0
      %v1329 = vsel %vm676, %v1243, 0
      %v1332 = vsel %vm676, %v1244, 0
      %v1335 = vsel %vm676, %v1245, 0
      %v1338 = vsel %vm676, %v1246, 0
      %v1341 = vsel %vm676, %v1247, 0
      %v1344 = vsel %vm676, %v1248, 0
      %v1347 = vsel %vm676, %v1249, 0
      %v1350 = vsel %vm676, %v1250, 0
      %v1353 = vsel %vm676, %v1251, 0
      %v1356 = vsel %vm676, %v1252, 0
      %1358 = vmatprep.subr.mxu0 0.0
      %1359 = vmatpush1.msra.mxu0 %v1254
      %1360 = vmatprep.subr.mxu0 0.0
      %1361 = vmatpush1.msra.mxu0 %v1255
      %1362 = vmatprep.subr.mxu0 0.0
      %1363 = vmatpush1.msra.mxu0 %v1256
      %1364 = vmatprep.subr.mxu0 0.0
      %1365 = vmatpush1.msra.mxu0 %v1257
      %1366 = vmatprep.subr.mxu0 0.0
      %1367 = vmatpush1.msra.mxu0 %v1258
      %1368 = vmatprep.subr.mxu0 0.0
      %1369 = vmatpush1.msra.mxu0 %v1259
      %1370 = vmatprep.subr.mxu0 0.0
      %1371 = vmatpush1.msra.mxu0 %v1260
      %1372 = vmatprep.subr.mxu0 0.0
      %1373 = vmatpush1.msra.mxu0 %v1261
      %1374 = vmatprep.subr.mxu0 0.0
      %1375 = vmatpush1.msra.mxu0 0.0
      %1376 = vmatprep.subr.mxu0 0.0
      %1377 = vmatpush1.msra.mxu0 0.0
      %1378 = vmatprep.subr.mxu0 0.0
      %1379 = vmatpush1.msra.mxu0 0.0
      %1380 = vmatprep.subr.mxu0 0.0
      %1381 = vmatpush1.msra.mxu0 0.0
      %1382 = vmatprep.subr.mxu0 0.0
      %1383 = vmatpush1.msra.mxu0 0.0
      %1384 = vmatprep.subr.mxu0 0.0
      %1385 = vmatpush1.msra.mxu0 0.0
      %1386 = vmatprep.subr.mxu0 0.0
      %1387 = vmatpush1.msra.mxu0 0.0
      %1388 = vmatprep.subr.mxu0 0.0
      %1389 = vmatpush1.msra.mxu0 0.0
      %1390 = vmatprep.subr.mxu0 0.0
      %1391 = vmatpush1.msra.mxu0 0.0
      %1392 = vmatprep.subr.mxu0 0.0
      %1393 = vmatpush1.msra.mxu0 0.0
      %1394 = vmatprep.subr.mxu0 0.0
      %1395 = vmatpush1.msra.mxu0 0.0
      %1396 = vmatprep.subr.mxu0 0.0
      %1397 = vmatpush1.msra.mxu0 0.0
      %1398 = vmatprep.subr.mxu0 0.0
      %1399 = vmatpush1.msra.mxu0 0.0
      %1400 = vmatprep.subr.mxu0 0.0
      %1401 = vmatpush1.msra.mxu0 0.0
      %1402 = vmatprep.subr.mxu0 0.0
      %1403 = vmatpush1.msra.mxu0 0.0
      %1404 = vmatprep.subr.mxu0 0.0
      %1405 = vmatpush1.msra.mxu0 0.0
      %1406 = vmatprep.subr.mxu0 0.0
      %1407 = vmatpush1.msra.mxu0 0.0
      %1408 = vmatprep.subr.mxu0 0.0
      %1409 = vmatpush1.msra.mxu0 0.0
      %1410 = vmatprep.subr.mxu0 0.0
      %1411 = vmatpush1.msra.mxu0 0.0
      %1412 = vmatprep.subr.mxu0 0.0
      %1413 = vmatpush1.msra.mxu0 0.0
      %1414 = vmatprep.subr.mxu0 0.0
      %1415 = vmatpush1.msra.mxu0 0.0
      %1416 = vmatprep.subr.mxu0 0.0
      %1417 = vmatpush1.msra.mxu0 0.0
      %1418 = vmatprep.subr.mxu0 0.0
      %1419 = vmatpush1.msra.mxu0 0.0
      %1420 = vmatprep.subr.mxu0 0.0
      %1421 = vmatpush1.msra.mxu0 0.0
      %1422 = vmatprep.mubr.f32.mxu0 0.0
      %1423 = vmatmul.mubr.f32.gmra.mrb[0].mxu0 %v1263
      %v1424 = vpop.f32.mrb[0].mxu0
      %v1425 = vadd.f32 0.0, %v1424
      %v1426 = vpop.f32.mrb[0].mxu0
      %1427 = vmatprep.mubr.f32.mxu0 0.0
      %1428 = vmatmul.mubr.f32.gmra.mrb[0].mxu0 %v1266
      %v1429 = vpop.f32.mrb[0].mxu0
      %v1430 = vadd.f32 0.0, %v1429
      %v1431 = vpop.f32.mrb[0].mxu0
      %1432 = vmatprep.mubr.f32.mxu0 0.0
      %1433 = vmatmul.mubr.f32.gmra.mrb[0].mxu0 %v1269
      %v1434 = vpop.f32.mrb[0].mxu0
      %v1435 = vadd.f32 0.0, %v1434
      %v1436 = vpop.f32.mrb[0].mxu0
      %1437 = vmatprep.mubr.f32.mxu0 0.0
      %1438 = vmatmul.mubr.f32.gmra.mrb[0].mxu0 %v1272
      %v1439 = vpop.f32.mrb[0].mxu0
      %v1440 = vadd.f32 0.0, %v1439
      %v1441 = vpop.f32.mrb[0].mxu0
      %1442 = vmatprep.mubr.f32.mxu0 0.0
      %1443 = vmatmul.mubr.f32.gmra.mrb[0].mxu0 %v1275
      %v1444 = vpop.f32.mrb[0].mxu0
      %v1445 = vadd.f32 0.0, %v1444
      %v1446 = vpop.f32.mrb[0].mxu0
      %1447 = vmatprep.mubr.f32.mxu0 0.0
      %1448 = vmatmul.mubr.f32.gmra.mrb[0].mxu0 %v1278
      %v1449 = vpop.f32.mrb[0].mxu0
      %v1450 = vadd.f32 0.0, %v1449
      %v1451 = vpop.f32.mrb[0].mxu0
      %1452 = vmatprep.mubr.f32.mxu0 0.0
      %1453 = vmatmul.mubr.f32.gmra.mrb[0].mxu0 %v1281
      %v1454 = vpop.f32.mrb[0].mxu0
      %v1455 = vadd.f32 0.0, %v1454
      %v1456 = vpop.f32.mrb[0].mxu0
      %1457 = vmatprep.mubr.f32.mxu0 0.0
      %1458 = vmatmul.mubr.f32.gmra.mrb[0].mxu0 %v1284
      %v1459 = vpop.f32.mrb[0].mxu0
      %v1460 = vadd.f32 0.0, %v1459
      %v1461 = vpop.f32.mrb[0].mxu0
      %1462 = vmatprep.mubr.f32.mxu0 0.0
      %1463 = vmatmul.mubr.f32.gmra.mrb[0].mxu0 %v1287
      %v1464 = vpop.f32.mrb[0].mxu0
      %v1465 = vadd.f32 0.0, %v1464
      %v1466 = vpop.f32.mrb[0].mxu0
      %1467 = vmatprep.mubr.f32.mxu0 0.0
      %1468 = vmatmul.mubr.f32.gmra.mrb[0].mxu0 %v1290
      %v1469 = vpop.f32.mrb[0].mxu0
      %v1470 = vadd.f32 0.0, %v1469
      %v1471 = vpop.f32.mrb[0].mxu0
      %1472 = vmatprep.mubr.f32.mxu0 0.0
      %1473 = vmatmul.mubr.f32.gmra.mrb[0].mxu0 %v1293
      %v1474 = vpop.f32.mrb[0].mxu0
      %v1475 = vadd.f32 0.0, %v1474
      %v1476 = vpop.f32.mrb[0].mxu0
      %1477 = vmatprep.mubr.f32.mxu0 0.0
      %1478 = vmatmul.mubr.f32.gmra.mrb[0].mxu0 %v1296
      %v1479 = vpop.f32.mrb[0].mxu0
      %v1480 = vadd.f32 0.0, %v1479
      %v1481 = vpop.f32.mrb[0].mxu0
      %1482 = vmatprep.mubr.f32.mxu0 0.0
      %1483 = vmatmul.mubr.f32.gmra.mrb[0].mxu0 %v1299
      %v1484 = vpop.f32.mrb[0].mxu0
      %v1485 = vadd.f32 0.0, %v1484
      %v1486 = vpop.f32.mrb[0].mxu0
      %1487 = vmatprep.mubr.f32.mxu0 0.0
      %1488 = vmatmul.mubr.f32.gmra.mrb[0].mxu0 %v1302
      %v1489 = vpop.f32.mrb[0].mxu0
      %v1490 = vadd.f32 0.0, %v1489
      %v1491 = vpop.f32.mrb[0].mxu0
      %1492 = vmatprep.mubr.f32.mxu0 0.0
      %1493 = vmatmul.mubr.f32.gmra.mrb[0].mxu0 %v1305
      %v1494 = vpop.f32.mrb[0].mxu0
      %v1495 = vadd.f32 0.0, %v1494
      %v1496 = vpop.f32.mrb[0].mxu0
      %1497 = vmatprep.mubr.f32.mxu0 0.0
      %1498 = vmatmul.mubr.f32.gmra.mrb[0].mxu0 %v1308
      %v1499 = vpop.f32.mrb[0].mxu0
      %v1500 = vadd.f32 0.0, %v1499
      %v1501 = vpop.f32.mrb[0].mxu0
      %1502 = vmatprep.mubr.f32.mxu0 0.0
      %1503 = vmatmul.mubr.f32.gmra.mrb[0].mxu0 %v1311
      %v1504 = vpop.f32.mrb[0].mxu0
      %v1505 = vadd.f32 0.0, %v1504
      %v1506 = vpop.f32.mrb[0].mxu0
      %1507 = vmatprep.mubr.f32.mxu0 0.0
      %1508 = vmatmul.mubr.f32.gmra.mrb[0].mxu0 %v1314
      %v1509 = vpop.f32.mrb[0].mxu0
      %v1510 = vadd.f32 0.0, %v1509
      %v1511 = vpop.f32.mrb[0].mxu0
      %1512 = vmatprep.mubr.f32.mxu0 0.0
      %1513 = vmatmul.mubr.f32.gmra.mrb[0].mxu0 %v1317
      %v1514 = vpop.f32.mrb[0].mxu0
      %v1515 = vadd.f32 0.0, %v1514
      %v1516 = vpop.f32.mrb[0].mxu0
      %1517 = vmatprep.mubr.f32.mxu0 0.0
      %1518 = vmatmul.mubr.f32.gmra.mrb[0].mxu0 %v1320
      %v1519 = vpop.f32.mrb[0].mxu0
      %v1520 = vadd.f32 0.0, %v1519
      %v1521 = vpop.f32.mrb[0].mxu0
      %1522 = vmatprep.mubr.f32.mxu0 0.0
      %1523 = vmatmul.mubr.f32.gmra.mrb[0].mxu0 %v1323
      %v1524 = vpop.f32.mrb[0].mxu0
      %v1525 = vadd.f32 0.0, %v1524
      %v1526 = vpop.f32.mrb[0].mxu0
      %1527 = vmatprep.mubr.f32.mxu0 0.0
      %1528 = vmatmul.mubr.f32.gmra.mrb[0].mxu0 %v1326
      %v1529 = vpop.f32.mrb[0].mxu0
      %v1530 = vadd.f32 0.0, %v1529
      %v1531 = vpop.f32.mrb[0].mxu0
      %1532 = vmatprep.mubr.f32.mxu0 0.0
      %1533 = vmatmul.mubr.f32.gmra.mrb[0].mxu0 %v1329
      %v1534 = vpop.f32.mrb[0].mxu0
      %v1535 = vadd.f32 0.0, %v1534
      %v1536 = vpop.f32.mrb[0].mxu0
      %1537 = vmatprep.mubr.f32.mxu0 0.0
      %1538 = vmatmul.mubr.f32.gmra.mrb[0].mxu0 %v1332
      %v1539 = vpop.f32.mrb[0].mxu0
      %v1540 = vadd.f32 0.0, %v1539
      %v1541 = vpop.f32.mrb[0].mxu0
      %1542 = vmatprep.mubr.f32.mxu0 0.0
      %1543 = vmatmul.mubr.f32.gmra.mrb[0].mxu0 %v1335
      %v1544 = vpop.f32.mrb[0].mxu0
      %v1545 = vadd.f32 0.0, %v1544
      %v1546 = vpop.f32.mrb[0].mxu0
      %1547 = vmatprep.mubr.f32.mxu0 0.0
      %1548 = vmatmul.mubr.f32.gmra.mrb[0].mxu0 %v1338
      %v1549 = vpop.f32.mrb[0].mxu0
      %v1550 = vadd.f32 0.0, %v1549
      %v1551 = vpop.f32.mrb[0].mxu0
      %1552 = vmatprep.mubr.f32.mxu0 0.0
      %1553 = vmatmul.mubr.f32.gmra.mrb[0].mxu0 %v1341
      %v1554 = vpop.f32.mrb[0].mxu0
      %v1555 = vadd.f32 0.0, %v1554
      %v1556 = vpop.f32.mrb[0].mxu0
      %1557 = vmatprep.mubr.f32.mxu0 0.0
      %1558 = vmatmul.mubr.f32.gmra.mrb[0].mxu0 %v1344
      %v1559 = vpop.f32.mrb[0].mxu0
      %v1560 = vadd.f32 0.0, %v1559
      %v1561 = vpop.f32.mrb[0].mxu0
      %1562 = vmatprep.mubr.f32.mxu0 0.0
      %1563 = vmatmul.mubr.f32.gmra.mrb[0].mxu0 %v1347
      %v1564 = vpop.f32.mrb[0].mxu0
      %v1565 = vadd.f32 0.0, %v1564
      %v1566 = vpop.f32.mrb[0].mxu0
      %1567 = vmatprep.mubr.f32.mxu0 0.0
      %1568 = vmatmul.mubr.f32.gmra.mrb[0].mxu0 %v1350
      %v1569 = vpop.f32.mrb[0].mxu0
      %v1570 = vadd.f32 0.0, %v1569
      %v1571 = vpop.f32.mrb[0].mxu0
      %1572 = vmatprep.mubr.f32.mxu0 0.0
      %1573 = vmatmul.mubr.f32.gmra.mrb[0].mxu0 %v1353
      %v1574 = vpop.f32.mrb[0].mxu0
      %v1575 = vadd.f32 0.0, %v1574
      %v1576 = vpop.f32.mrb[0].mxu0
      %1577 = vmatprep.mubr.f32.mxu0 0.0
      %1578 = vmatmul.mubr.f32.gmra.mrb[0].mxu0 %v1356
      %v1579 = vpop.f32.mrb[0].mxu0
      %v1580 = vadd.f32 0.0, %v1579
      %v1581 = vpop.f32.mrb[0].mxu0
      %1582 = vdwg.mxu0
      %v1584 = vsel %vm676, %v1181, 0
      %v1587 = vsel %vm676, %v1182, 0
      %v1590 = vsel %vm676, %v1183, 0
      %v1593 = vsel %vm676, %v1184, 0
      %v1596 = vsel %vm676, %v1185, 0
      %v1599 = vsel %vm676, %v1186, 0
      %v1602 = vsel %vm676, %v1187, 0
      %v1605 = vsel %vm676, %v1188, 0
      %v1608 = vsel %vm676, %v1189, 0
      %v1611 = vsel %vm676, %v1190, 0
      %v1614 = vsel %vm676, %v1191, 0
      %v1617 = vsel %vm676, %v1192, 0
      %v1620 = vsel %vm676, %v1193, 0
      %v1623 = vsel %vm676, %v1194, 0
      %v1626 = vsel %vm676, %v1195, 0
      %v1629 = vsel %vm676, %v1196, 0
      %v1632 = vsel %vm676, %v1197, 0
      %v1635 = vsel %vm676, %v1198, 0
      %v1638 = vsel %vm676, %v1199, 0
      %v1641 = vsel %vm676, %v1200, 0
      %v1644 = vsel %vm676, %v1201, 0
      %v1647 = vsel %vm676, %v1202, 0
      %v1650 = vsel %vm676, %v1203, 0
      %v1653 = vsel %vm676, %v1204, 0
      %v1656 = vsel %vm676, %v1205, 0
      %v1659 = vsel %vm676, %v1206, 0
      %v1662 = vsel %vm676, %v1207, 0
      %v1665 = vsel %vm676, %v1208, 0
      %v1668 = vsel %vm676, %v1209, 0
      %v1671 = vsel %vm676, %v1210, 0
      %v1674 = vsel %vm676, %v1211, 0
      %v1677 = vsel %vm676, %v1212, 0
      %1679 = vmatprep.subr.mxu0 0.0
      %1680 = vmatpush1.msra.mxu0 %v1213
      %1681 = vmatprep.subr.mxu0 0.0
      %1682 = vmatpush1.msra.mxu0 %v1214
      %1683 = vmatprep.subr.mxu0 0.0
      %1684 = vmatpush1.msra.mxu0 %v1215
      %1685 = vmatprep.subr.mxu0 0.0
      %1686 = vmatpush1.msra.mxu0 %v1216
      %1687 = vmatprep.subr.mxu0 0.0
      %1688 = vmatpush1.msra.mxu0 %v1217
      %1689 = vmatprep.subr.mxu0 0.0
      %1690 = vmatpush1.msra.mxu0 %v1218
      %1691 = vmatprep.subr.mxu0 0.0
      %1692 = vmatpush1.msra.mxu0 %v1219
      %1693 = vmatprep.subr.mxu0 0.0
      %1694 = vmatpush1.msra.mxu0 %v1220
      %1695 = vmatprep.subr.mxu0 0.0
      %1696 = vmatpush1.msra.mxu0 0.0
      %1697 = vmatprep.subr.mxu0 0.0
      %1698 = vmatpush1.msra.mxu0 0.0
      %1699 = vmatprep.subr.mxu0 0.0
      %1700 = vmatpush1.msra.mxu0 0.0
      %1701 = vmatprep.subr.mxu0 0.0
      %1702 = vmatpush1.msra.mxu0 0.0
      %1703 = vmatprep.subr.mxu0 0.0
      %1704 = vmatpush1.msra.mxu0 0.0
      %1705 = vmatprep.subr.mxu0 0.0
      %1706 = vmatpush1.msra.mxu0 0.0
      %1707 = vmatprep.subr.mxu0 0.0
      %1708 = vmatpush1.msra.mxu0 0.0
      %1709 = vmatprep.subr.mxu0 0.0
      %1710 = vmatpush1.msra.mxu0 0.0
      %1711 = vmatprep.subr.mxu0 0.0
      %1712 = vmatpush1.msra.mxu0 0.0
      %1713 = vmatprep.subr.mxu0 0.0
      %1714 = vmatpush1.msra.mxu0 0.0
      %1715 = vmatprep.subr.mxu0 0.0
      %1716 = vmatpush1.msra.mxu0 0.0
      %1717 = vmatprep.subr.mxu0 0.0
      %1718 = vmatpush1.msra.mxu0 0.0
      %1719 = vmatprep.subr.mxu0 0.0
      %1720 = vmatpush1.msra.mxu0 0.0
      %1721 = vmatprep.subr.mxu0 0.0
      %1722 = vmatpush1.msra.mxu0 0.0
      %1723 = vmatprep.subr.mxu0 0.0
      %1724 = vmatpush1.msra.mxu0 0.0
      %1725 = vmatprep.subr.mxu0 0.0
      %1726 = vmatpush1.msra.mxu0 0.0
      %1727 = vmatprep.subr.mxu0 0.0
      %1728 = vmatpush1.msra.mxu0 0.0
      %1729 = vmatprep.subr.mxu0 0.0
      %1730 = vmatpush1.msra.mxu0 0.0
      %1731 = vmatprep.subr.mxu0 0.0
      %1732 = vmatpush1.msra.mxu0 0.0
      %1733 = vmatprep.subr.mxu0 0.0
      %1734 = vmatpush1.msra.mxu0 0.0
      %1735 = vmatprep.subr.mxu0 0.0
      %1736 = vmatpush1.msra.mxu0 0.0
      %1737 = vmatprep.subr.mxu0 0.0
      %1738 = vmatpush1.msra.mxu0 0.0
      %1739 = vmatprep.subr.mxu0 0.0
      %1740 = vmatpush1.msra.mxu0 0.0
      %1741 = vmatprep.subr.mxu0 0.0
      %1742 = vmatpush1.msra.mxu0 0.0
      %1743 = vmatprep.mubr.f32.mxu0 0.0
      %1744 = vmatmul.mubr.f32.gmra.mrb[0].mxu0 %v1584
      %v1745 = vpop.f32.mrb[0].mxu0
      %v1746 = vadd.f32 %v1425, %v1745
      %v1747 = vpop.f32.mrb[0].mxu0
      %1748 = vmatprep.mubr.f32.mxu0 0.0
      %1749 = vmatmul.mubr.f32.gmra.mrb[0].mxu0 %v1587
      %v1750 = vpop.f32.mrb[0].mxu0
      %v1751 = vadd.f32 %v1430, %v1750
      %v1752 = vpop.f32.mrb[0].mxu0
      %1753 = vmatprep.mubr.f32.mxu0 0.0
      %1754 = vmatmul.mubr.f32.gmra.mrb[0].mxu0 %v1590
      %v1755 = vpop.f32.mrb[0].mxu0
      %v1756 = vadd.f32 %v1435, %v1755
      %v1757 = vpop.f32.mrb[0].mxu0
      %1758 = vmatprep.mubr.f32.mxu0 0.0
      %1759 = vmatmul.mubr.f32.gmra.mrb[0].mxu0 %v1593
      %v1760 = vpop.f32.mrb[0].mxu0
      %v1761 = vadd.f32 %v1440, %v1760
      %v1762 = vpop.f32.mrb[0].mxu0
      %1763 = vmatprep.mubr.f32.mxu0 0.0
      %1764 = vmatmul.mubr.f32.gmra.mrb[0].mxu0 %v1596
      %v1765 = vpop.f32.mrb[0].mxu0
      %v1766 = vadd.f32 %v1445, %v1765
      %v1767 = vpop.f32.mrb[0].mxu0
      %1768 = vmatprep.mubr.f32.mxu0 0.0
      %1769 = vmatmul.mubr.f32.gmra.mrb[0].mxu0 %v1599
      %v1770 = vpop.f32.mrb[0].mxu0
      %v1771 = vadd.f32 %v1450, %v1770
      %v1772 = vpop.f32.mrb[0].mxu0
      %1773 = vmatprep.mubr.f32.mxu0 0.0
      %1774 = vmatmul.mubr.f32.gmra.mrb[0].mxu0 %v1602
      %v1775 = vpop.f32.mrb[0].mxu0
      %v1776 = vadd.f32 %v1455, %v1775
      %v1777 = vpop.f32.mrb[0].mxu0
      %1778 = vmatprep.mubr.f32.mxu0 0.0
      %1779 = vmatmul.mubr.f32.gmra.mrb[0].mxu0 %v1605
      %v1780 = vpop.f32.mrb[0].mxu0
      %v1781 = vadd.f32 %v1460, %v1780
      %v1782 = vpop.f32.mrb[0].mxu0
      %1783 = vmatprep.mubr.f32.mxu0 0.0
      %1784 = vmatmul.mubr.f32.gmra.mrb[0].mxu0 %v1608
      %v1785 = vpop.f32.mrb[0].mxu0
      %v1786 = vadd.f32 %v1465, %v1785
      %v1787 = vpop.f32.mrb[0].mxu0
      %1788 = vmatprep.mubr.f32.mxu0 0.0
      %1789 = vmatmul.mubr.f32.gmra.mrb[0].mxu0 %v1611
      %v1790 = vpop.f32.mrb[0].mxu0
      %v1791 = vadd.f32 %v1470, %v1790
      %v1792 = vpop.f32.mrb[0].mxu0
      %1793 = vmatprep.mubr.f32.mxu0 0.0
      %1794 = vmatmul.mubr.f32.gmra.mrb[0].mxu0 %v1614
      %v1795 = vpop.f32.mrb[0].mxu0
      %v1796 = vadd.f32 %v1475, %v1795
      %v1797 = vpop.f32.mrb[0].mxu0
      %1798 = vmatprep.mubr.f32.mxu0 0.0
      %1799 = vmatmul.mubr.f32.gmra.mrb[0].mxu0 %v1617
      %v1800 = vpop.f32.mrb[0].mxu0
      %v1801 = vadd.f32 %v1480, %v1800
      %v1802 = vpop.f32.mrb[0].mxu0
      %1803 = vmatprep.mubr.f32.mxu0 0.0
      %1804 = vmatmul.mubr.f32.gmra.mrb[0].mxu0 %v1620
      %v1805 = vpop.f32.mrb[0].mxu0
      %v1806 = vadd.f32 %v1485, %v1805
      %v1807 = vpop.f32.mrb[0].mxu0
      %1808 = vmatprep.mubr.f32.mxu0 0.0
      %1809 = vmatmul.mubr.f32.gmra.mrb[0].mxu0 %v1623
      %v1810 = vpop.f32.mrb[0].mxu0
      %v1811 = vadd.f32 %v1490, %v1810
      %v1812 = vpop.f32.mrb[0].mxu0
      %1813 = vmatprep.mubr.f32.mxu0 0.0
      %1814 = vmatmul.mubr.f32.gmra.mrb[0].mxu0 %v1626
      %v1815 = vpop.f32.mrb[0].mxu0
      %v1816 = vadd.f32 %v1495, %v1815
      %v1817 = vpop.f32.mrb[0].mxu0
      %1818 = vmatprep.mubr.f32.mxu0 0.0
      %1819 = vmatmul.mubr.f32.gmra.mrb[0].mxu0 %v1629
      %v1820 = vpop.f32.mrb[0].mxu0
      %v1821 = vadd.f32 %v1500, %v1820
      %v1822 = vpop.f32.mrb[0].mxu0
      %1823 = vmatprep.mubr.f32.mxu0 0.0
      %1824 = vmatmul.mubr.f32.gmra.mrb[0].mxu0 %v1632
      %v1825 = vpop.f32.mrb[0].mxu0
      %v1826 = vadd.f32 %v1505, %v1825
      %v1827 = vpop.f32.mrb[0].mxu0
      %1828 = vmatprep.mubr.f32.mxu0 0.0
      %1829 = vmatmul.mubr.f32.gmra.mrb[0].mxu0 %v1635
      %v1830 = vpop.f32.mrb[0].mxu0
      %v1831 = vadd.f32 %v1510, %v1830
      %v1832 = vpop.f32.mrb[0].mxu0
      %1833 = vmatprep.mubr.f32.mxu0 0.0
      %1834 = vmatmul.mubr.f32.gmra.mrb[0].mxu0 %v1638
      %v1835 = vpop.f32.mrb[0].mxu0
      %v1836 = vadd.f32 %v1515, %v1835
      %v1837 = vpop.f32.mrb[0].mxu0
      %1838 = vmatprep.mubr.f32.mxu0 0.0
      %1839 = vmatmul.mubr.f32.gmra.mrb[0].mxu0 %v1641
      %v1840 = vpop.f32.mrb[0].mxu0
      %v1841 = vadd.f32 %v1520, %v1840
      %v1842 = vpop.f32.mrb[0].mxu0
      %1843 = vmatprep.mubr.f32.mxu0 0.0
      %1844 = vmatmul.mubr.f32.gmra.mrb[0].mxu0 %v1644
      %v1845 = vpop.f32.mrb[0].mxu0
      %v1846 = vadd.f32 %v1525, %v1845
      %v1847 = vpop.f32.mrb[0].mxu0
      %1848 = vmatprep.mubr.f32.mxu0 0.0
      %1849 = vmatmul.mubr.f32.gmra.mrb[0].mxu0 %v1647
      %v1850 = vpop.f32.mrb[0].mxu0
      %v1851 = vadd.f32 %v1530, %v1850
      %v1852 = vpop.f32.mrb[0].mxu0
      %1853 = vmatprep.mubr.f32.mxu0 0.0
      %1854 = vmatmul.mubr.f32.gmra.mrb[0].mxu0 %v1650
      %v1855 = vpop.f32.mrb[0].mxu0
      %v1856 = vadd.f32 %v1535, %v1855
      %v1857 = vpop.f32.mrb[0].mxu0
      %1858 = vmatprep.mubr.f32.mxu0 0.0
      %1859 = vmatmul.mubr.f32.gmra.mrb[0].mxu0 %v1653
      %v1860 = vpop.f32.mrb[0].mxu0
      %v1861 = vadd.f32 %v1540, %v1860
      %v1862 = vpop.f32.mrb[0].mxu0
      %1863 = vmatprep.mubr.f32.mxu0 0.0
      %1864 = vmatmul.mubr.f32.gmra.mrb[0].mxu0 %v1656
      %v1865 = vpop.f32.mrb[0].mxu0
      %v1866 = vadd.f32 %v1545, %v1865
      %v1867 = vpop.f32.mrb[0].mxu0
      %1868 = vmatprep.mubr.f32.mxu0 0.0
      %1869 = vmatmul.mubr.f32.gmra.mrb[0].mxu0 %v1659
      %v1870 = vpop.f32.mrb[0].mxu0
      %v1871 = vadd.f32 %v1550, %v1870
      %v1872 = vpop.f32.mrb[0].mxu0
      %1873 = vmatprep.mubr.f32.mxu0 0.0
      %1874 = vmatmul.mubr.f32.gmra.mrb[0].mxu0 %v1662
      %v1875 = vpop.f32.mrb[0].mxu0
      %v1876 = vadd.f32 %v1555, %v1875
      %v1877 = vpop.f32.mrb[0].mxu0
      %1878 = vmatprep.mubr.f32.mxu0 0.0
      %1879 = vmatmul.mubr.f32.gmra.mrb[0].mxu0 %v1665
      %v1880 = vpop.f32.mrb[0].mxu0
      %v1881 = vadd.f32 %v1560, %v1880
      %v1882 = vpop.f32.mrb[0].mxu0
      %1883 = vmatprep.mubr.f32.mxu0 0.0
      %1884 = vmatmul.mubr.f32.gmra.mrb[0].mxu0 %v1668
      %v1885 = vpop.f32.mrb[0].mxu0
      %v1886 = vadd.f32 %v1565, %v1885
      %v1887 = vpop.f32.mrb[0].mxu0
      %1888 = vmatprep.mubr.f32.mxu0 0.0
      %1889 = vmatmul.mubr.f32.gmra.mrb[0].mxu0 %v1671
      %v1890 = vpop.f32.mrb[0].mxu0
      %v1891 = vadd.f32 %v1570, %v1890
      %v1892 = vpop.f32.mrb[0].mxu0
      %1893 = vmatprep.mubr.f32.mxu0 0.0
      %1894 = vmatmul.mubr.f32.gmra.mrb[0].mxu0 %v1674
      %v1895 = vpop.f32.mrb[0].mxu0
      %v1896 = vadd.f32 %v1575, %v1895
      %v1897 = vpop.f32.mrb[0].mxu0
      %1898 = vmatprep.mubr.f32.mxu0 0.0
      %1899 = vmatmul.mubr.f32.gmra.mrb[0].mxu0 %v1677
      %v1900 = vpop.f32.mrb[0].mxu0
      %v1901 = vadd.f32 %v1580, %v1900
      %v1902 = vpop.f32.mrb[0].mxu0
      %1903 = vdwg.mxu0
      %v1904 = vld [vmem:[#allocation2 + $0x9] sm:$0xff]
      %v1905 = vld [vmem:[#allocation2 + $0x11] sm:$0xff]
      %v1906 = vld [vmem:[#allocation2 + $0x29] sm:$0xff]
      %v1907 = vld [vmem:[#allocation2 + $0x31] sm:$0xff]
      %v1908 = vld [vmem:[#allocation2 + $0x49] sm:$0xff]
      %v1909 = vld [vmem:[#allocation2 + $0x51] sm:$0xff]
      %v1910 = vld [vmem:[#allocation2 + $0x69] sm:$0xff]
      %v1911 = vld [vmem:[#allocation2 + $0x71] sm:$0xff]
      %v1912 = vld [vmem:[#allocation2 + $0x89] sm:$0xff]
      %v1913 = vld [vmem:[#allocation2 + $0x91] sm:$0xff]
      %v1914 = vld [vmem:[#allocation2 + $0xa9] sm:$0xff]
      %v1915 = vld [vmem:[#allocation2 + $0xb1] sm:$0xff]
      %v1916 = vld [vmem:[#allocation2 + $0xc9] sm:$0xff]
      %v1917 = vld [vmem:[#allocation2 + $0xd1] sm:$0xff]
      %v1918 = vld [vmem:[#allocation2 + $0xe9] sm:$0xff]
      %v1919 = vld [vmem:[#allocation2 + $0xf1] sm:$0xff]
      %v1920 = vld [vmem:[#allocation2 + $0x109] sm:$0xff]
      %v1921 = vld [vmem:[#allocation2 + $0x111] sm:$0xff]
      %v1922 = vld [vmem:[#allocation2 + $0x129] sm:$0xff]
      %v1923 = vld [vmem:[#allocation2 + $0x131] sm:$0xff]
      %v1924 = vld [vmem:[#allocation2 + $0x149] sm:$0xff]
      %v1925 = vld [vmem:[#allocation2 + $0x151] sm:$0xff]
      %v1926 = vld [vmem:[#allocation2 + $0x169] sm:$0xff]
      %v1927 = vld [vmem:[#allocation2 + $0x171] sm:$0xff]
      %v1928 = vld [vmem:[#allocation2 + $0x189] sm:$0xff]
      %v1929 = vld [vmem:[#allocation2 + $0x191] sm:$0xff]
      %v1930 = vld [vmem:[#allocation2 + $0x1a9] sm:$0xff]
      %v1931 = vld [vmem:[#allocation2 + $0x1b1] sm:$0xff]
      %v1932 = vld [vmem:[#allocation2 + $0x1c9] sm:$0xff]
      %v1933 = vld [vmem:[#allocation2 + $0x1d1] sm:$0xff]
      %v1934 = vld [vmem:[#allocation2 + $0x1e9] sm:$0xff]
      %v1935 = vld [vmem:[#allocation2 + $0x1f1] sm:$0xff]
      %s1936 = scalar_lea.vmem %s3, 128
      %v1937 = vld [vmem:[%s1936] sm:$0xff]
      %v1938 = vld [vmem:[%s1936 + $0x8] sm:$0xff]
      %v1939 = vld [vmem:[%s1936 + $0x10] sm:$0xff]
      %v1940 = vld [vmem:[%s1936 + $0x18] sm:$0xff]
      %v1941 = vld [vmem:[%s1936 + $0x20] sm:$0xff]
      %v1942 = vld [vmem:[%s1936 + $0x28] sm:$0xff]
      %v1943 = vld [vmem:[%s1936 + $0x30] sm:$0xff]
      %v1944 = vld [vmem:[%s1936 + $0x38] sm:$0xff]
      %v1946 = vsel %vm676, %v1904, 0
      %v1949 = vsel %vm676, %v1905, 0
      %v1952 = vsel %vm676, %v1906, 0
      %v1955 = vsel %vm676, %v1907, 0
      %v1958 = vsel %vm676, %v1908, 0
      %v1961 = vsel %vm676, %v1909, 0
      %v1964 = vsel %vm676, %v1910, 0
      %v1967 = vsel %vm676, %v1911, 0
      %v1970 = vsel %vm676, %v1912, 0
      %v1973 = vsel %vm676, %v1913, 0
      %v1976 = vsel %vm676, %v1914, 0
      %v1979 = vsel %vm676, %v1915, 0
      %v1982 = vsel %vm676, %v1916, 0
      %v1985 = vsel %vm676, %v1917, 0
      %v1988 = vsel %vm676, %v1918, 0
      %v1991 = vsel %vm676, %v1919, 0
      %v1994 = vsel %vm676, %v1920, 0
      %v1997 = vsel %vm676, %v1921, 0
      %v2000 = vsel %vm676, %v1922, 0
      %v2003 = vsel %vm676, %v1923, 0
      %v2006 = vsel %vm676, %v1924, 0
      %v2009 = vsel %vm676, %v1925, 0
      %v2012 = vsel %vm676, %v1926, 0
      %v2015 = vsel %vm676, %v1927, 0
      %v2018 = vsel %vm676, %v1928, 0
      %v2021 = vsel %vm676, %v1929, 0
      %v2024 = vsel %vm676, %v1930, 0
      %v2027 = vsel %vm676, %v1931, 0
      %v2030 = vsel %vm676, %v1932, 0
      %v2033 = vsel %vm676, %v1933, 0
      %v2036 = vsel %vm676, %v1934, 0
      %v2039 = vsel %vm676, %v1935, 0
      %2041 = vmatprep.subr.mxu0 0.0
      %2042 = vmatpush1.msra.mxu0 %v1937
      %2043 = vmatprep.subr.mxu0 0.0
      %2044 = vmatpush1.msra.mxu0 %v1938
      %2045 = vmatprep.subr.mxu0 0.0
      %2046 = vmatpush1.msra.mxu0 %v1939
      %2047 = vmatprep.subr.mxu0 0.0
      %2048 = vmatpush1.msra.mxu0 %v1940
      %2049 = vmatprep.subr.mxu0 0.0
      %2050 = vmatpush1.msra.mxu0 %v1941
      %2051 = vmatprep.subr.mxu0 0.0
      %2052 = vmatpush1.msra.mxu0 %v1942
      %2053 = vmatprep.subr.mxu0 0.0
      %2054 = vmatpush1.msra.mxu0 %v1943
      %2055 = vmatprep.subr.mxu0 0.0
      %2056 = vmatpush1.msra.mxu0 %v1944
      %2057 = vmatprep.subr.mxu0 0.0
      %2058 = vmatpush1.msra.mxu0 0.0
      %2059 = vmatprep.subr.mxu0 0.0
      %2060 = vmatpush1.msra.mxu0 0.0
      %2061 = vmatprep.subr.mxu0 0.0
      %2062 = vmatpush1.msra.mxu0 0.0
      %2063 = vmatprep.subr.mxu0 0.0
      %2064 = vmatpush1.msra.mxu0 0.0
      %2065 = vmatprep.subr.mxu0 0.0
      %2066 = vmatpush1.msra.mxu0 0.0
      %2067 = vmatprep.subr.mxu0 0.0
      %2068 = vmatpush1.msra.mxu0 0.0
      %2069 = vmatprep.subr.mxu0 0.0
      %2070 = vmatpush1.msra.mxu0 0.0
      %2071 = vmatprep.subr.mxu0 0.0
      %2072 = vmatpush1.msra.mxu0 0.0
      %2073 = vmatprep.subr.mxu0 0.0
      %2074 = vmatpush1.msra.mxu0 0.0
      %2075 = vmatprep.subr.mxu0 0.0
      %2076 = vmatpush1.msra.mxu0 0.0
      %2077 = vmatprep.subr.mxu0 0.0
      %2078 = vmatpush1.msra.mxu0 0.0
      %2079 = vmatprep.subr.mxu0 0.0
      %2080 = vmatpush1.msra.mxu0 0.0
      %2081 = vmatprep.subr.mxu0 0.0
      %2082 = vmatpush1.msra.mxu0 0.0
      %2083 = vmatprep.subr.mxu0 0.0
      %2084 = vmatpush1.msra.mxu0 0.0
      %2085 = vmatprep.subr.mxu0 0.0
      %2086 = vmatpush1.msra.mxu0 0.0
      %2087 = vmatprep.subr.mxu0 0.0
      %2088 = vmatpush1.msra.mxu0 0.0
      %2089 = vmatprep.subr.mxu0 0.0
      %2090 = vmatpush1.msra.mxu0 0.0
      %2091 = vmatprep.subr.mxu0 0.0
      %2092 = vmatpush1.msra.mxu0 0.0
      %2093 = vmatprep.subr.mxu0 0.0
      %2094 = vmatpush1.msra.mxu0 0.0
      %2095 = vmatprep.subr.mxu0 0.0
      %2096 = vmatpush1.msra.mxu0 0.0
      %2097 = vmatprep.subr.mxu0 0.0
      %2098 = vmatpush1.msra.mxu0 0.0
      %2099 = vmatprep.subr.mxu0 0.0
      %2100 = vmatpush1.msra.mxu0 0.0
      %2101 = vmatprep.subr.mxu0 0.0
      %2102 = vmatpush1.msra.mxu0 0.0
      %2103 = vmatprep.subr.mxu0 0.0
      %2104 = vmatpush1.msra.mxu0 0.0
      %2105 = vmatprep.mubr.f32.mxu0 0.0
      %2106 = vmatmul.mubr.f32.gmra.mrb[0].mxu0 %v1946
      %v2107 = vpop.f32.mrb[0].mxu0
      %v2108 = vadd.f32 0.0, %v2107
      %v2109 = vpop.f32.mrb[0].mxu0
      %2110 = vmatprep.mubr.f32.mxu0 0.0
      %2111 = vmatmul.mubr.f32.gmra.mrb[0].mxu0 %v1949
      %v2112 = vpop.f32.mrb[0].mxu0
      %v2113 = vadd.f32 0.0, %v2112
      %v2114 = vpop.f32.mrb[0].mxu0
      %2115 = vmatprep.mubr.f32.mxu0 0.0
      %2116 = vmatmul.mubr.f32.gmra.mrb[0].mxu0 %v1952
      %v2117 = vpop.f32.mrb[0].mxu0
      %v2118 = vadd.f32 0.0, %v2117
      %v2119 = vpop.f32.mrb[0].mxu0
      %2120 = vmatprep.mubr.f32.mxu0 0.0
      %2121 = vmatmul.mubr.f32.gmra.mrb[0].mxu0 %v1955
      %v2122 = vpop.f32.mrb[0].mxu0
      %v2123 = vadd.f32 0.0, %v2122
      %v2124 = vpop.f32.mrb[0].mxu0
      %2125 = vmatprep.mubr.f32.mxu0 0.0
      %2126 = vmatmul.mubr.f32.gmra.mrb[0].mxu0 %v1958
      %v2127 = vpop.f32.mrb[0].mxu0
      %v2128 = vadd.f32 0.0, %v2127
      %v2129 = vpop.f32.mrb[0].mxu0
      %2130 = vmatprep.mubr.f32.mxu0 0.0
      %2131 = vmatmul.mubr.f32.gmra.mrb[0].mxu0 %v1961
      %v2132 = vpop.f32.mrb[0].mxu0
      %v2133 = vadd.f32 0.0, %v2132
      %v2134 = vpop.f32.mrb[0].mxu0
      %2135 = vmatprep.mubr.f32.mxu0 0.0
      %2136 = vmatmul.mubr.f32.gmra.mrb[0].mxu0 %v1964
      %v2137 = vpop.f32.mrb[0].mxu0
      %v2138 = vadd.f32 0.0, %v2137
      %v2139 = vpop.f32.mrb[0].mxu0
      %2140 = vmatprep.mubr.f32.mxu0 0.0
      %2141 = vmatmul.mubr.f32.gmra.mrb[0].mxu0 %v1967
      %v2142 = vpop.f32.mrb[0].mxu0
      %v2143 = vadd.f32 0.0, %v2142
      %v2144 = vpop.f32.mrb[0].mxu0
      %2145 = vmatprep.mubr.f32.mxu0 0.0
      %2146 = vmatmul.mubr.f32.gmra.mrb[0].mxu0 %v1970
      %v2147 = vpop.f32.mrb[0].mxu0
      %v2148 = vadd.f32 0.0, %v2147
      %v2149 = vpop.f32.mrb[0].mxu0
      %2150 = vmatprep.mubr.f32.mxu0 0.0
      %2151 = vmatmul.mubr.f32.gmra.mrb[0].mxu0 %v1973
      %v2152 = vpop.f32.mrb[0].mxu0
      %v2153 = vadd.f32 0.0, %v2152
      %v2154 = vpop.f32.mrb[0].mxu0
      %2155 = vmatprep.mubr.f32.mxu0 0.0
      %2156 = vmatmul.mubr.f32.gmra.mrb[0].mxu0 %v1976
      %v2157 = vpop.f32.mrb[0].mxu0
      %v2158 = vadd.f32 0.0, %v2157
      %v2159 = vpop.f32.mrb[0].mxu0
      %2160 = vmatprep.mubr.f32.mxu0 0.0
      %2161 = vmatmul.mubr.f32.gmra.mrb[0].mxu0 %v1979
      %v2162 = vpop.f32.mrb[0].mxu0
      %v2163 = vadd.f32 0.0, %v2162
      %v2164 = vpop.f32.mrb[0].mxu0
      %2165 = vmatprep.mubr.f32.mxu0 0.0
      %2166 = vmatmul.mubr.f32.gmra.mrb[0].mxu0 %v1982
      %v2167 = vpop.f32.mrb[0].mxu0
      %v2168 = vadd.f32 0.0, %v2167
      %v2169 = vpop.f32.mrb[0].mxu0
      %2170 = vmatprep.mubr.f32.mxu0 0.0
      %2171 = vmatmul.mubr.f32.gmra.mrb[0].mxu0 %v1985
      %v2172 = vpop.f32.mrb[0].mxu0
      %v2173 = vadd.f32 0.0, %v2172
      %v2174 = vpop.f32.mrb[0].mxu0
      %2175 = vmatprep.mubr.f32.mxu0 0.0
      %2176 = vmatmul.mubr.f32.gmra.mrb[0].mxu0 %v1988
      %v2177 = vpop.f32.mrb[0].mxu0
      %v2178 = vadd.f32 0.0, %v2177
      %v2179 = vpop.f32.mrb[0].mxu0
      %2180 = vmatprep.mubr.f32.mxu0 0.0
      %2181 = vmatmul.mubr.f32.gmra.mrb[0].mxu0 %v1991
      %v2182 = vpop.f32.mrb[0].mxu0
      %v2183 = vadd.f32 0.0, %v2182
      %v2184 = vpop.f32.mrb[0].mxu0
      %2185 = vmatprep.mubr.f32.mxu0 0.0
      %2186 = vmatmul.mubr.f32.gmra.mrb[0].mxu0 %v1994
      %v2187 = vpop.f32.mrb[0].mxu0
      %v2188 = vadd.f32 0.0, %v2187
      %v2189 = vpop.f32.mrb[0].mxu0
      %2190 = vmatprep.mubr.f32.mxu0 0.0
      %2191 = vmatmul.mubr.f32.gmra.mrb[0].mxu0 %v1997
      %v2192 = vpop.f32.mrb[0].mxu0
      %v2193 = vadd.f32 0.0, %v2192
      %v2194 = vpop.f32.mrb[0].mxu0
      %2195 = vmatprep.mubr.f32.mxu0 0.0
      %2196 = vmatmul.mubr.f32.gmra.mrb[0].mxu0 %v2000
      %v2197 = vpop.f32.mrb[0].mxu0
      %v2198 = vadd.f32 0.0, %v2197
      %v2199 = vpop.f32.mrb[0].mxu0
      %2200 = vmatprep.mubr.f32.mxu0 0.0
      %2201 = vmatmul.mubr.f32.gmra.mrb[0].mxu0 %v2003
      %v2202 = vpop.f32.mrb[0].mxu0
      %v2203 = vadd.f32 0.0, %v2202
      %v2204 = vpop.f32.mrb[0].mxu0
      %2205 = vmatprep.mubr.f32.mxu0 0.0
      %2206 = vmatmul.mubr.f32.gmra.mrb[0].mxu0 %v2006
      %v2207 = vpop.f32.mrb[0].mxu0
      %v2208 = vadd.f32 0.0, %v2207
      %v2209 = vpop.f32.mrb[0].mxu0
      %2210 = vmatprep.mubr.f32.mxu0 0.0
      %2211 = vmatmul.mubr.f32.gmra.mrb[0].mxu0 %v2009
      %v2212 = vpop.f32.mrb[0].mxu0
      %v2213 = vadd.f32 0.0, %v2212
      %v2214 = vpop.f32.mrb[0].mxu0
      %2215 = vmatprep.mubr.f32.mxu0 0.0
      %2216 = vmatmul.mubr.f32.gmra.mrb[0].mxu0 %v2012
      %v2217 = vpop.f32.mrb[0].mxu0
      %v2218 = vadd.f32 0.0, %v2217
      %v2219 = vpop.f32.mrb[0].mxu0
      %2220 = vmatprep.mubr.f32.mxu0 0.0
      %2221 = vmatmul.mubr.f32.gmra.mrb[0].mxu0 %v2015
      %v2222 = vpop.f32.mrb[0].mxu0
      %v2223 = vadd.f32 0.0, %v2222
      %v2224 = vpop.f32.mrb[0].mxu0
      %2225 = vmatprep.mubr.f32.mxu0 0.0
      %2226 = vmatmul.mubr.f32.gmra.mrb[0].mxu0 %v2018
      %v2227 = vpop.f32.mrb[0].mxu0
      %v2228 = vadd.f32 0.0, %v2227
      %v2229 = vpop.f32.mrb[0].mxu0
      %2230 = vmatprep.mubr.f32.mxu0 0.0
      %2231 = vmatmul.mubr.f32.gmra.mrb[0].mxu0 %v2021
      %v2232 = vpop.f32.mrb[0].mxu0
      %v2233 = vadd.f32 0.0, %v2232
      %v2234 = vpop.f32.mrb[0].mxu0
      %2235 = vmatprep.mubr.f32.mxu0 0.0
      %2236 = vmatmul.mubr.f32.gmra.mrb[0].mxu0 %v2024
      %v2237 = vpop.f32.mrb[0].mxu0
      %v2238 = vadd.f32 0.0, %v2237
      %v2239 = vpop.f32.mrb[0].mxu0
      %2240 = vmatprep.mubr.f32.mxu0 0.0
      %2241 = vmatmul.mubr.f32.gmra.mrb[0].mxu0 %v2027
      %v2242 = vpop.f32.mrb[0].mxu0
      %v2243 = vadd.f32 0.0, %v2242
      %v2244 = vpop.f32.mrb[0].mxu0
      %2245 = vmatprep.mubr.f32.mxu0 0.0
      %2246 = vmatmul.mubr.f32.gmra.mrb[0].mxu0 %v2030
      %v2247 = vpop.f32.mrb[0].mxu0
      %v2248 = vadd.f32 0.0, %v2247
      %v2249 = vpop.f32.mrb[0].mxu0
      %2250 = vmatprep.mubr.f32.mxu0 0.0
      %2251 = vmatmul.mubr.f32.gmra.mrb[0].mxu0 %v2033
      %v2252 = vpop.f32.mrb[0].mxu0
      %v2253 = vadd.f32 0.0, %v2252
      %v2254 = vpop.f32.mrb[0].mxu0
      %2255 = vmatprep.mubr.f32.mxu0 0.0
      %2256 = vmatmul.mubr.f32.gmra.mrb[0].mxu0 %v2036
      %v2257 = vpop.f32.mrb[0].mxu0
      %v2258 = vadd.f32 0.0, %v2257
      %v2259 = vpop.f32.mrb[0].mxu0
      %2260 = vmatprep.mubr.f32.mxu0 0.0
      %2261 = vmatmul.mubr.f32.gmra.mrb[0].mxu0 %v2039
      %v2262 = vpop.f32.mrb[0].mxu0
      %v2263 = vadd.f32 0.0, %v2262
      %v2264 = vpop.f32.mrb[0].mxu0
      %2265 = vdwg.mxu0
      %v2266 = vadd.f32 %v1746, %v2108
      %v2267 = vadd.f32 %v1751, %v2113
      %v2268 = vadd.f32 %v1756, %v2118
      %v2269 = vadd.f32 %v1761, %v2123
      %v2270 = vadd.f32 %v1766, %v2128
      %v2271 = vadd.f32 %v1771, %v2133
      %v2272 = vadd.f32 %v1776, %v2138
      %v2273 = vadd.f32 %v1781, %v2143
      %v2274 = vadd.f32 %v1786, %v2148
      %v2275 = vadd.f32 %v1791, %v2153
      %v2276 = vadd.f32 %v1796, %v2158
      %v2277 = vadd.f32 %v1801, %v2163
      %v2278 = vadd.f32 %v1806, %v2168
      %v2279 = vadd.f32 %v1811, %v2173
      %v2280 = vadd.f32 %v1816, %v2178
      %v2281 = vadd.f32 %v1821, %v2183
      %v2282 = vadd.f32 %v1826, %v2188
      %v2283 = vadd.f32 %v1831, %v2193
      %v2284 = vadd.f32 %v1836, %v2198
      %v2285 = vadd.f32 %v1841, %v2203
      %v2286 = vadd.f32 %v1846, %v2208
      %v2287 = vadd.f32 %v1851, %v2213
      %v2288 = vadd.f32 %v1856, %v2218
      %v2289 = vadd.f32 %v1861, %v2223
      %v2290 = vadd.f32 %v1866, %v2228
      %v2291 = vadd.f32 %v1871, %v2233
      %v2292 = vadd.f32 %v1876, %v2238
      %v2293 = vadd.f32 %v1881, %v2243
      %v2294 = vadd.f32 %v1886, %v2248
      %v2295 = vadd.f32 %v1891, %v2253
      %v2296 = vadd.f32 %v1896, %v2258
      %v2297 = vadd.f32 %v1901, %v2263
      %v2298 = vld [vmem:[%s1148 + $0x7] sm:$0xff]
      %v2299 = vld [vmem:[%s1148 + $0xf] sm:$0xff]
      %v2300 = vld [vmem:[%s1148 + $0x27] sm:$0xff]
      %v2301 = vld [vmem:[%s1148 + $0x2f] sm:$0xff]
      %v2302 = vld [vmem:[%s1148 + $0x47] sm:$0xff]
      %v2303 = vld [vmem:[%s1148 + $0x4f] sm:$0xff]
      %v2304 = vld [vmem:[%s1148 + $0x67] sm:$0xff]
      %v2305 = vld [vmem:[%s1148 + $0x6f] sm:$0xff]
      %v2306 = vld [vmem:[%s1148 + $0x87] sm:$0xff]
      %v2307 = vld [vmem:[%s1148 + $0x8f] sm:$0xff]
      %v2308 = vld [vmem:[%s1148 + $0xa7] sm:$0xff]
      %v2309 = vld [vmem:[%s1148 + $0xaf] sm:$0xff]
      %v2310 = vld [vmem:[%s1148 + $0xc7] sm:$0xff]
      %v2311 = vld [vmem:[%s1148 + $0xcf] sm:$0xff]
      %v2312 = vld [vmem:[%s1148 + $0xe7] sm:$0xff]
      %v2313 = vld [vmem:[%s1148 + $0xef] sm:$0xff]
      %v2314 = vld [vmem:[%s1148 + $0x107] sm:$0xff]
      %v2315 = vld [vmem:[%s1148 + $0x10f] sm:$0xff]
      %v2316 = vld [vmem:[%s1148 + $0x127] sm:$0xff]
      %v2317 = vld [vmem:[%s1148 + $0x12f] sm:$0xff]
      %v2318 = vld [vmem:[%s1148 + $0x147] sm:$0xff]
      %v2319 = vld [vmem:[%s1148 + $0x14f] sm:$0xff]
      %v2320 = vld [vmem:[%s1148 + $0x167] sm:$0xff]
      %v2321 = vld [vmem:[%s1148 + $0x16f] sm:$0xff]
      %v2322 = vld [vmem:[%s1148 + $0x187] sm:$0xff]
      %v2323 = vld [vmem:[%s1148 + $0x18f] sm:$0xff]
      %v2324 = vld [vmem:[%s1148 + $0x1a7] sm:$0xff]
      %v2325 = vld [vmem:[%s1148 + $0x1af] sm:$0xff]
      %v2326 = vld [vmem:[%s1148 + $0x1c7] sm:$0xff]
      %v2327 = vld [vmem:[%s1148 + $0x1cf] sm:$0xff]
      %v2328 = vld [vmem:[%s1148 + $0x1e7] sm:$0xff]
      %v2329 = vld [vmem:[%s1148 + $0x1ef] sm:$0xff]
      %s2330 = scalar_lea.vmem %s3, 192
      %v2331 = vld [vmem:[%s2330] sm:$0xff]
      %v2332 = vld [vmem:[%s2330 + $0x8] sm:$0xff]
      %v2333 = vld [vmem:[%s2330 + $0x10] sm:$0xff]
      %v2334 = vld [vmem:[%s2330 + $0x18] sm:$0xff]
      %v2335 = vld [vmem:[%s2330 + $0x20] sm:$0xff]
      %v2336 = vld [vmem:[%s2330 + $0x28] sm:$0xff]
      %v2337 = vld [vmem:[%s2330 + $0x30] sm:$0xff]
      %v2338 = vld [vmem:[%s2330 + $0x38] sm:$0xff]
      %v2340 = vsel %vm676, %v2298, 0
      %v2343 = vsel %vm676, %v2299, 0
      %v2346 = vsel %vm676, %v2300, 0
      %v2349 = vsel %vm676, %v2301, 0
      %v2352 = vsel %vm676, %v2302, 0
      %v2355 = vsel %vm676, %v2303, 0
      %v2358 = vsel %vm676, %v2304, 0
      %v2361 = vsel %vm676, %v2305, 0
      %v2364 = vsel %vm676, %v2306, 0
      %v2367 = vsel %vm676, %v2307, 0
      %v2370 = vsel %vm676, %v2308, 0
      %v2373 = vsel %vm676, %v2309, 0
      %v2376 = vsel %vm676, %v2310, 0
      %v2379 = vsel %vm676, %v2311, 0
      %v2382 = vsel %vm676, %v2312, 0
      %v2385 = vsel %vm676, %v2313, 0
      %v2388 = vsel %vm676, %v2314, 0
      %v2391 = vsel %vm676, %v2315, 0
      %v2394 = vsel %vm676, %v2316, 0
      %v2397 = vsel %vm676, %v2317, 0
      %v2400 = vsel %vm676, %v2318, 0
      %v2403 = vsel %vm676, %v2319, 0
      %v2406 = vsel %vm676, %v2320, 0
      %v2409 = vsel %vm676, %v2321, 0
      %v2412 = vsel %vm676, %v2322, 0
      %v2415 = vsel %vm676, %v2323, 0
      %v2418 = vsel %vm676, %v2324, 0
      %v2421 = vsel %vm676, %v2325, 0
      %v2424 = vsel %vm676, %v2326, 0
      %v2427 = vsel %vm676, %v2327, 0
      %v2430 = vsel %vm676, %v2328, 0
      %v2433 = vsel %vm676, %v2329, 0
      %2435 = vmatprep.subr.mxu0 0.0
      %2436 = vmatpush1.msra.mxu0 %v2331
      %2437 = vmatprep.subr.mxu0 0.0
      %2438 = vmatpush1.msra.mxu0 %v2332
      %2439 = vmatprep.subr.mxu0 0.0
      %2440 = vmatpush1.msra.mxu0 %v2333
      %2441 = vmatprep.subr.mxu0 0.0
      %2442 = vmatpush1.msra.mxu0 %v2334
      %2443 = vmatprep.subr.mxu0 0.0
      %2444 = vmatpush1.msra.mxu0 %v2335
      %2445 = vmatprep.subr.mxu0 0.0
      %2446 = vmatpush1.msra.mxu0 %v2336
      %2447 = vmatprep.subr.mxu0 0.0
      %2448 = vmatpush1.msra.mxu0 %v2337
      %2449 = vmatprep.subr.mxu0 0.0
      %2450 = vmatpush1.msra.mxu0 %v2338
      %2451 = vmatprep.subr.mxu0 0.0
      %2452 = vmatpush1.msra.mxu0 0.0
      %2453 = vmatprep.subr.mxu0 0.0
      %2454 = vmatpush1.msra.mxu0 0.0
      %2455 = vmatprep.subr.mxu0 0.0
      %2456 = vmatpush1.msra.mxu0 0.0
      %2457 = vmatprep.subr.mxu0 0.0
      %2458 = vmatpush1.msra.mxu0 0.0
      %2459 = vmatprep.subr.mxu0 0.0
      %2460 = vmatpush1.msra.mxu0 0.0
      %2461 = vmatprep.subr.mxu0 0.0
      %2462 = vmatpush1.msra.mxu0 0.0
      %2463 = vmatprep.subr.mxu0 0.0
      %2464 = vmatpush1.msra.mxu0 0.0
      %2465 = vmatprep.subr.mxu0 0.0
      %2466 = vmatpush1.msra.mxu0 0.0
      %2467 = vmatprep.subr.mxu0 0.0
      %2468 = vmatpush1.msra.mxu0 0.0
      %2469 = vmatprep.subr.mxu0 0.0
      %2470 = vmatpush1.msra.mxu0 0.0
      %2471 = vmatprep.subr.mxu0 0.0
      %2472 = vmatpush1.msra.mxu0 0.0
      %2473 = vmatprep.subr.mxu0 0.0
      %2474 = vmatpush1.msra.mxu0 0.0
      %2475 = vmatprep.subr.mxu0 0.0
      %2476 = vmatpush1.msra.mxu0 0.0
      %2477 = vmatprep.subr.mxu0 0.0
      %2478 = vmatpush1.msra.mxu0 0.0
      %2479 = vmatprep.subr.mxu0 0.0
      %2480 = vmatpush1.msra.mxu0 0.0
      %2481 = vmatprep.subr.mxu0 0.0
      %2482 = vmatpush1.msra.mxu0 0.0
      %2483 = vmatprep.subr.mxu0 0.0
      %2484 = vmatpush1.msra.mxu0 0.0
      %2485 = vmatprep.subr.mxu0 0.0
      %2486 = vmatpush1.msra.mxu0 0.0
      %2487 = vmatprep.subr.mxu0 0.0
      %2488 = vmatpush1.msra.mxu0 0.0
      %2489 = vmatprep.subr.mxu0 0.0
      %2490 = vmatpush1.msra.mxu0 0.0
      %2491 = vmatprep.subr.mxu0 0.0
      %2492 = vmatpush1.msra.mxu0 0.0
      %2493 = vmatprep.subr.mxu0 0.0
      %2494 = vmatpush1.msra.mxu0 0.0
      %2495 = vmatprep.subr.mxu0 0.0
      %2496 = vmatpush1.msra.mxu0 0.0
      %2497 = vmatprep.subr.mxu0 0.0
      %2498 = vmatpush1.msra.mxu0 0.0
      %2499 = vmatprep.mubr.f32.mxu0 0.0
      %2500 = vmatmul.mubr.f32.gmra.mrb[0].mxu0 %v2340
      %v2501 = vpop.f32.mrb[0].mxu0
      %v2502 = vadd.f32 0.0, %v2501
      %v2503 = vpop.f32.mrb[0].mxu0
      %2504 = vmatprep.mubr.f32.mxu0 0.0
      %2505 = vmatmul.mubr.f32.gmra.mrb[0].mxu0 %v2343
      %v2506 = vpop.f32.mrb[0].mxu0
      %v2507 = vadd.f32 0.0, %v2506
      %v2508 = vpop.f32.mrb[0].mxu0
      %2509 = vmatprep.mubr.f32.mxu0 0.0
      %2510 = vmatmul.mubr.f32.gmra.mrb[0].mxu0 %v2346
      %v2511 = vpop.f32.mrb[0].mxu0
      %v2512 = vadd.f32 0.0, %v2511
      %v2513 = vpop.f32.mrb[0].mxu0
      %2514 = vmatprep.mubr.f32.mxu0 0.0
      %2515 = vmatmul.mubr.f32.gmra.mrb[0].mxu0 %v2349
      %v2516 = vpop.f32.mrb[0].mxu0
      %v2517 = vadd.f32 0.0, %v2516
      %v2518 = vpop.f32.mrb[0].mxu0
      %2519 = vmatprep.mubr.f32.mxu0 0.0
      %2520 = vmatmul.mubr.f32.gmra.mrb[0].mxu0 %v2352
      %v2521 = vpop.f32.mrb[0].mxu0
      %v2522 = vadd.f32 0.0, %v2521
      %v2523 = vpop.f32.mrb[0].mxu0
      %2524 = vmatprep.mubr.f32.mxu0 0.0
      %2525 = vmatmul.mubr.f32.gmra.mrb[0].mxu0 %v2355
      %v2526 = vpop.f32.mrb[0].mxu0
      %v2527 = vadd.f32 0.0, %v2526
      %v2528 = vpop.f32.mrb[0].mxu0
      %2529 = vmatprep.mubr.f32.mxu0 0.0
      %2530 = vmatmul.mubr.f32.gmra.mrb[0].mxu0 %v2358
      %v2531 = vpop.f32.mrb[0].mxu0
      %v2532 = vadd.f32 0.0, %v2531
      %v2533 = vpop.f32.mrb[0].mxu0
      %2534 = vmatprep.mubr.f32.mxu0 0.0
      %2535 = vmatmul.mubr.f32.gmra.mrb[0].mxu0 %v2361
      %v2536 = vpop.f32.mrb[0].mxu0
      %v2537 = vadd.f32 0.0, %v2536
      %v2538 = vpop.f32.mrb[0].mxu0
      %2539 = vmatprep.mubr.f32.mxu0 0.0
      %2540 = vmatmul.mubr.f32.gmra.mrb[0].mxu0 %v2364
      %v2541 = vpop.f32.mrb[0].mxu0
      %v2542 = vadd.f32 0.0, %v2541
      %v2543 = vpop.f32.mrb[0].mxu0
      %2544 = vmatprep.mubr.f32.mxu0 0.0
      %2545 = vmatmul.mubr.f32.gmra.mrb[0].mxu0 %v2367
      %v2546 = vpop.f32.mrb[0].mxu0
      %v2547 = vadd.f32 0.0, %v2546
      %v2548 = vpop.f32.mrb[0].mxu0
      %2549 = vmatprep.mubr.f32.mxu0 0.0
      %2550 = vmatmul.mubr.f32.gmra.mrb[0].mxu0 %v2370
      %v2551 = vpop.f32.mrb[0].mxu0
      %v2552 = vadd.f32 0.0, %v2551
      %v2553 = vpop.f32.mrb[0].mxu0
      %2554 = vmatprep.mubr.f32.mxu0 0.0
      %2555 = vmatmul.mubr.f32.gmra.mrb[0].mxu0 %v2373
      %v2556 = vpop.f32.mrb[0].mxu0
      %v2557 = vadd.f32 0.0, %v2556
      %v2558 = vpop.f32.mrb[0].mxu0
      %2559 = vmatprep.mubr.f32.mxu0 0.0
      %2560 = vmatmul.mubr.f32.gmra.mrb[0].mxu0 %v2376
      %v2561 = vpop.f32.mrb[0].mxu0
      %v2562 = vadd.f32 0.0, %v2561
      %v2563 = vpop.f32.mrb[0].mxu0
      %2564 = vmatprep.mubr.f32.mxu0 0.0
      %2565 = vmatmul.mubr.f32.gmra.mrb[0].mxu0 %v2379
      %v2566 = vpop.f32.mrb[0].mxu0
      %v2567 = vadd.f32 0.0, %v2566
      %v2568 = vpop.f32.mrb[0].mxu0
      %2569 = vmatprep.mubr.f32.mxu0 0.0
      %2570 = vmatmul.mubr.f32.gmra.mrb[0].mxu0 %v2382
      %v2571 = vpop.f32.mrb[0].mxu0
      %v2572 = vadd.f32 0.0, %v2571
      %v2573 = vpop.f32.mrb[0].mxu0
      %2574 = vmatprep.mubr.f32.mxu0 0.0
      %2575 = vmatmul.mubr.f32.gmra.mrb[0].mxu0 %v2385
      %v2576 = vpop.f32.mrb[0].mxu0
      %v2577 = vadd.f32 0.0, %v2576
      %v2578 = vpop.f32.mrb[0].mxu0
      %2579 = vmatprep.mubr.f32.mxu0 0.0
      %2580 = vmatmul.mubr.f32.gmra.mrb[0].mxu0 %v2388
      %v2581 = vpop.f32.mrb[0].mxu0
      %v2582 = vadd.f32 0.0, %v2581
      %v2583 = vpop.f32.mrb[0].mxu0
      %2584 = vmatprep.mubr.f32.mxu0 0.0
      %2585 = vmatmul.mubr.f32.gmra.mrb[0].mxu0 %v2391
      %v2586 = vpop.f32.mrb[0].mxu0
      %v2587 = vadd.f32 0.0, %v2586
      %v2588 = vpop.f32.mrb[0].mxu0
      %2589 = vmatprep.mubr.f32.mxu0 0.0
      %2590 = vmatmul.mubr.f32.gmra.mrb[0].mxu0 %v2394
      %v2591 = vpop.f32.mrb[0].mxu0
      %v2592 = vadd.f32 0.0, %v2591
      %v2593 = vpop.f32.mrb[0].mxu0
      %2594 = vmatprep.mubr.f32.mxu0 0.0
      %2595 = vmatmul.mubr.f32.gmra.mrb[0].mxu0 %v2397
      %v2596 = vpop.f32.mrb[0].mxu0
      %v2597 = vadd.f32 0.0, %v2596
      %v2598 = vpop.f32.mrb[0].mxu0
      %2599 = vmatprep.mubr.f32.mxu0 0.0
      %2600 = vmatmul.mubr.f32.gmra.mrb[0].mxu0 %v2400
      %v2601 = vpop.f32.mrb[0].mxu0
      %v2602 = vadd.f32 0.0, %v2601
      %v2603 = vpop.f32.mrb[0].mxu0
      %2604 = vmatprep.mubr.f32.mxu0 0.0
      %2605 = vmatmul.mubr.f32.gmra.mrb[0].mxu0 %v2403
      %v2606 = vpop.f32.mrb[0].mxu0
      %v2607 = vadd.f32 0.0, %v2606
      %v2608 = vpop.f32.mrb[0].mxu0
      %2609 = vmatprep.mubr.f32.mxu0 0.0
      %2610 = vmatmul.mubr.f32.gmra.mrb[0].mxu0 %v2406
      %v2611 = vpop.f32.mrb[0].mxu0
      %v2612 = vadd.f32 0.0, %v2611
      %v2613 = vpop.f32.mrb[0].mxu0
      %2614 = vmatprep.mubr.f32.mxu0 0.0
      %2615 = vmatmul.mubr.f32.gmra.mrb[0].mxu0 %v2409
      %v2616 = vpop.f32.mrb[0].mxu0
      %v2617 = vadd.f32 0.0, %v2616
      %v2618 = vpop.f32.mrb[0].mxu0
      %2619 = vmatprep.mubr.f32.mxu0 0.0
      %2620 = vmatmul.mubr.f32.gmra.mrb[0].mxu0 %v2412
      %v2621 = vpop.f32.mrb[0].mxu0
      %v2622 = vadd.f32 0.0, %v2621
      %v2623 = vpop.f32.mrb[0].mxu0
      %2624 = vmatprep.mubr.f32.mxu0 0.0
      %2625 = vmatmul.mubr.f32.gmra.mrb[0].mxu0 %v2415
      %v2626 = vpop.f32.mrb[0].mxu0
      %v2627 = vadd.f32 0.0, %v2626
      %v2628 = vpop.f32.mrb[0].mxu0
      %2629 = vmatprep.mubr.f32.mxu0 0.0
      %2630 = vmatmul.mubr.f32.gmra.mrb[0].mxu0 %v2418
      %v2631 = vpop.f32.mrb[0].mxu0
      %v2632 = vadd.f32 0.0, %v2631
      %v2633 = vpop.f32.mrb[0].mxu0
      %2634 = vmatprep.mubr.f32.mxu0 0.0
      %2635 = vmatmul.mubr.f32.gmra.mrb[0].mxu0 %v2421
      %v2636 = vpop.f32.mrb[0].mxu0
      %v2637 = vadd.f32 0.0, %v2636
      %v2638 = vpop.f32.mrb[0].mxu0
      %2639 = vmatprep.mubr.f32.mxu0 0.0
      %2640 = vmatmul.mubr.f32.gmra.mrb[0].mxu0 %v2424
      %v2641 = vpop.f32.mrb[0].mxu0
      %v2642 = vadd.f32 0.0, %v2641
      %v2643 = vpop.f32.mrb[0].mxu0
      %2644 = vmatprep.mubr.f32.mxu0 0.0
      %2645 = vmatmul.mubr.f32.gmra.mrb[0].mxu0 %v2427
      %v2646 = vpop.f32.mrb[0].mxu0
      %v2647 = vadd.f32 0.0, %v2646
      %v2648 = vpop.f32.mrb[0].mxu0
      %2649 = vmatprep.mubr.f32.mxu0 0.0
      %2650 = vmatmul.mubr.f32.gmra.mrb[0].mxu0 %v2430
      %v2651 = vpop.f32.mrb[0].mxu0
      %v2652 = vadd.f32 0.0, %v2651
      %v2653 = vpop.f32.mrb[0].mxu0
      %2654 = vmatprep.mubr.f32.mxu0 0.0
      %2655 = vmatmul.mubr.f32.gmra.mrb[0].mxu0 %v2433
      %v2656 = vpop.f32.mrb[0].mxu0
      %v2657 = vadd.f32 0.0, %v2656
      %v2658 = vpop.f32.mrb[0].mxu0
      %2659 = vdwg.mxu0
      %v2660 = vadd.f32 %v2266, %v2502
      %v2661 = vadd.f32 %v2267, %v2507
      %v2662 = vadd.f32 %v2268, %v2512
      %v2663 = vadd.f32 %v2269, %v2517
      %v2664 = vadd.f32 %v2270, %v2522
      %v2665 = vadd.f32 %v2271, %v2527
      %v2666 = vadd.f32 %v2272, %v2532
      %v2667 = vadd.f32 %v2273, %v2537
      %v2668 = vadd.f32 %v2274, %v2542
      %v2669 = vadd.f32 %v2275, %v2547
      %v2670 = vadd.f32 %v2276, %v2552
      %v2671 = vadd.f32 %v2277, %v2557
      %v2672 = vadd.f32 %v2278, %v2562
      %v2673 = vadd.f32 %v2279, %v2567
      %v2674 = vadd.f32 %v2280, %v2572
      %v2675 = vadd.f32 %v2281, %v2577
      %v2676 = vadd.f32 %v2282, %v2582
      %v2677 = vadd.f32 %v2283, %v2587
      %v2678 = vadd.f32 %v2284, %v2592
      %v2679 = vadd.f32 %v2285, %v2597
      %v2680 = vadd.f32 %v2286, %v2602
      %v2681 = vadd.f32 %v2287, %v2607
      %v2682 = vadd.f32 %v2288, %v2612
      %v2683 = vadd.f32 %v2289, %v2617
      %v2684 = vadd.f32 %v2290, %v2622
      %v2685 = vadd.f32 %v2291, %v2627
      %v2686 = vadd.f32 %v2292, %v2632
      %v2687 = vadd.f32 %v2293, %v2637
      %v2688 = vadd.f32 %v2294, %v2642
      %v2689 = vadd.f32 %v2295, %v2647
      %v2690 = vadd.f32 %v2296, %v2652
      %v2691 = vadd.f32 %v2297, %v2657
      %v2692 = vld [vmem:[%s1148 + $0x8] sm:$0xff]
      %v2693 = vld [vmem:[%s1148 + $0x10] sm:$0xff]
      %v2694 = vld [vmem:[%s1148 + $0x28] sm:$0xff]
      %v2695 = vld [vmem:[%s1148 + $0x30] sm:$0xff]
      %v2696 = vld [vmem:[%s1148 + $0x48] sm:$0xff]
      %v2697 = vld [vmem:[%s1148 + $0x50] sm:$0xff]
      %v2698 = vld [vmem:[%s1148 + $0x68] sm:$0xff]
      %v2699 = vld [vmem:[%s1148 + $0x70] sm:$0xff]
      %v2700 = vld [vmem:[%s1148 + $0x88] sm:$0xff]
      %v2701 = vld [vmem:[%s1148 + $0x90] sm:$0xff]
      %v2702 = vld [vmem:[%s1148 + $0xa8] sm:$0xff]
      %v2703 = vld [vmem:[%s1148 + $0xb0] sm:$0xff]
      %v2704 = vld [vmem:[%s1148 + $0xc8] sm:$0xff]
      %v2705 = vld [vmem:[%s1148 + $0xd0] sm:$0xff]
      %v2706 = vld [vmem:[%s1148 + $0xe8] sm:$0xff]
      %v2707 = vld [vmem:[%s1148 + $0xf0] sm:$0xff]
      %v2708 = vld [vmem:[%s1148 + $0x108] sm:$0xff]
      %v2709 = vld [vmem:[%s1148 + $0x110] sm:$0xff]
      %v2710 = vld [vmem:[%s1148 + $0x128] sm:$0xff]
      %v2711 = vld [vmem:[%s1148 + $0x130] sm:$0xff]
      %v2712 = vld [vmem:[%s1148 + $0x148] sm:$0xff]
      %v2713 = vld [vmem:[%s1148 + $0x150] sm:$0xff]
      %v2714 = vld [vmem:[%s1148 + $0x168] sm:$0xff]
      %v2715 = vld [vmem:[%s1148 + $0x170] sm:$0xff]
      %v2716 = vld [vmem:[%s1148 + $0x188] sm:$0xff]
      %v2717 = vld [vmem:[%s1148 + $0x190] sm:$0xff]
      %v2718 = vld [vmem:[%s1148 + $0x1a8] sm:$0xff]
      %v2719 = vld [vmem:[%s1148 + $0x1b0] sm:$0xff]
      %v2720 = vld [vmem:[%s1148 + $0x1c8] sm:$0xff]
      %v2721 = vld [vmem:[%s1148 + $0x1d0] sm:$0xff]
      %v2722 = vld [vmem:[%s1148 + $0x1e8] sm:$0xff]
      %v2723 = vld [vmem:[%s1148 + $0x1f0] sm:$0xff]
      %s2724 = scalar_lea.vmem %s3, 256
      %v2725 = vld [vmem:[%s2724] sm:$0xff]
      %v2726 = vld [vmem:[%s2724 + $0x8] sm:$0xff]
      %v2727 = vld [vmem:[%s2724 + $0x10] sm:$0xff]
      %v2728 = vld [vmem:[%s2724 + $0x18] sm:$0xff]
      %v2729 = vld [vmem:[%s2724 + $0x20] sm:$0xff]
      %v2730 = vld [vmem:[%s2724 + $0x28] sm:$0xff]
      %v2731 = vld [vmem:[%s2724 + $0x30] sm:$0xff]
      %v2732 = vld [vmem:[%s2724 + $0x38] sm:$0xff]
      %v2734 = vsel %vm676, %v2692, 0
      %v2737 = vsel %vm676, %v2693, 0
      %v2740 = vsel %vm676, %v2694, 0
      %v2743 = vsel %vm676, %v2695, 0
      %v2746 = vsel %vm676, %v2696, 0
      %v2749 = vsel %vm676, %v2697, 0
      %v2752 = vsel %vm676, %v2698, 0
      %v2755 = vsel %vm676, %v2699, 0
      %v2758 = vsel %vm676, %v2700, 0
      %v2761 = vsel %vm676, %v2701, 0
      %v2764 = vsel %vm676, %v2702, 0
      %v2767 = vsel %vm676, %v2703, 0
      %v2770 = vsel %vm676, %v2704, 0
      %v2773 = vsel %vm676, %v2705, 0
      %v2776 = vsel %vm676, %v2706, 0
      %v2779 = vsel %vm676, %v2707, 0
      %v2782 = vsel %vm676, %v2708, 0
      %v2785 = vsel %vm676, %v2709, 0
      %v2788 = vsel %vm676, %v2710, 0
      %v2791 = vsel %vm676, %v2711, 0
      %v2794 = vsel %vm676, %v2712, 0
      %v2797 = vsel %vm676, %v2713, 0
      %v2800 = vsel %vm676, %v2714, 0
      %v2803 = vsel %vm676, %v2715, 0
      %v2806 = vsel %vm676, %v2716, 0
      %v2809 = vsel %vm676, %v2717, 0
      %v2812 = vsel %vm676, %v2718, 0
      %v2815 = vsel %vm676, %v2719, 0
      %v2818 = vsel %vm676, %v2720, 0
      %v2821 = vsel %vm676, %v2721, 0
      %v2824 = vsel %vm676, %v2722, 0
      %v2827 = vsel %vm676, %v2723, 0
      %2829 = vmatprep.subr.mxu0 0.0
      %2830 = vmatpush1.msra.mxu0 %v2725
      %2831 = vmatprep.subr.mxu0 0.0
      %2832 = vmatpush1.msra.mxu0 %v2726
      %2833 = vmatprep.subr.mxu0 0.0
      %2834 = vmatpush1.msra.mxu0 %v2727
      %2835 = vmatprep.subr.mxu0 0.0
      %2836 = vmatpush1.msra.mxu0 %v2728
      %2837 = vmatprep.subr.mxu0 0.0
      %2838 = vmatpush1.msra.mxu0 %v2729
      %2839 = vmatprep.subr.mxu0 0.0
      %2840 = vmatpush1.msra.mxu0 %v2730
      %2841 = vmatprep.subr.mxu0 0.0
      %2842 = vmatpush1.msra.mxu0 %v2731
      %2843 = vmatprep.subr.mxu0 0.0
      %2844 = vmatpush1.msra.mxu0 %v2732
      %2845 = vmatprep.subr.mxu0 0.0
      %2846 = vmatpush1.msra.mxu0 0.0
      %2847 = vmatprep.subr.mxu0 0.0
      %2848 = vmatpush1.msra.mxu0 0.0
      %2849 = vmatprep.subr.mxu0 0.0
      %2850 = vmatpush1.msra.mxu0 0.0
      %2851 = vmatprep.subr.mxu0 0.0
      %2852 = vmatpush1.msra.mxu0 0.0
      %2853 = vmatprep.subr.mxu0 0.0
      %2854 = vmatpush1.msra.mxu0 0.0
      %2855 = vmatprep.subr.mxu0 0.0
      %2856 = vmatpush1.msra.mxu0 0.0
      %2857 = vmatprep.subr.mxu0 0.0
      %2858 = vmatpush1.msra.mxu0 0.0
      %2859 = vmatprep.subr.mxu0 0.0
      %2860 = vmatpush1.msra.mxu0 0.0
      %2861 = vmatprep.subr.mxu0 0.0
      %2862 = vmatpush1.msra.mxu0 0.0
      %2863 = vmatprep.subr.mxu0 0.0
      %2864 = vmatpush1.msra.mxu0 0.0
      %2865 = vmatprep.subr.mxu0 0.0
      %2866 = vmatpush1.msra.mxu0 0.0
      %2867 = vmatprep.subr.mxu0 0.0
      %2868 = vmatpush1.msra.mxu0 0.0
      %2869 = vmatprep.subr.mxu0 0.0
      %2870 = vmatpush1.msra.mxu0 0.0
      %2871 = vmatprep.subr.mxu0 0.0
      %2872 = vmatpush1.msra.mxu0 0.0
      %2873 = vmatprep.subr.mxu0 0.0
      %2874 = vmatpush1.msra.mxu0 0.0
      %2875 = vmatprep.subr.mxu0 0.0
      %2876 = vmatpush1.msra.mxu0 0.0
      %2877 = vmatprep.subr.mxu0 0.0
      %2878 = vmatpush1.msra.mxu0 0.0
      %2879 = vmatprep.subr.mxu0 0.0
      %2880 = vmatpush1.msra.mxu0 0.0
      %2881 = vmatprep.subr.mxu0 0.0
      %2882 = vmatpush1.msra.mxu0 0.0
      %2883 = vmatprep.subr.mxu0 0.0
      %2884 = vmatpush1.msra.mxu0 0.0
      %2885 = vmatprep.subr.mxu0 0.0
      %2886 = vmatpush1.msra.mxu0 0.0
      %2887 = vmatprep.subr.mxu0 0.0
      %2888 = vmatpush1.msra.mxu0 0.0
      %2889 = vmatprep.subr.mxu0 0.0
      %2890 = vmatpush1.msra.mxu0 0.0
      %2891 = vmatprep.subr.mxu0 0.0
      %2892 = vmatpush1.msra.mxu0 0.0
      %2893 = vmatprep.mubr.f32.mxu0 0.0
      %2894 = vmatmul.mubr.f32.gmra.mrb[0].mxu0 %v2734
      %v2895 = vpop.f32.mrb[0].mxu0
      %v2896 = vadd.f32 0.0, %v2895
      %v2897 = vpop.f32.mrb[0].mxu0
      %2898 = vmatprep.mubr.f32.mxu0 0.0
      %2899 = vmatmul.mubr.f32.gmra.mrb[0].mxu0 %v2737
      %v2900 = vpop.f32.mrb[0].mxu0
      %v2901 = vadd.f32 0.0, %v2900
      %v2902 = vpop.f32.mrb[0].mxu0
      %2903 = vmatprep.mubr.f32.mxu0 0.0
      %2904 = vmatmul.mubr.f32.gmra.mrb[0].mxu0 %v2740
      %v2905 = vpop.f32.mrb[0].mxu0
      %v2906 = vadd.f32 0.0, %v2905
      %v2907 = vpop.f32.mrb[0].mxu0
      %2908 = vmatprep.mubr.f32.mxu0 0.0
      %2909 = vmatmul.mubr.f32.gmra.mrb[0].mxu0 %v2743
      %v2910 = vpop.f32.mrb[0].mxu0
      %v2911 = vadd.f32 0.0, %v2910
      %v2912 = vpop.f32.mrb[0].mxu0
      %2913 = vmatprep.mubr.f32.mxu0 0.0
      %2914 = vmatmul.mubr.f32.gmra.mrb[0].mxu0 %v2746
      %v2915 = vpop.f32.mrb[0].mxu0
      %v2916 = vadd.f32 0.0, %v2915
      %v2917 = vpop.f32.mrb[0].mxu0
      %2918 = vmatprep.mubr.f32.mxu0 0.0
      %2919 = vmatmul.mubr.f32.gmra.mrb[0].mxu0 %v2749
      %v2920 = vpop.f32.mrb[0].mxu0
      %v2921 = vadd.f32 0.0, %v2920
      %v2922 = vpop.f32.mrb[0].mxu0
      %2923 = vmatprep.mubr.f32.mxu0 0.0
      %2924 = vmatmul.mubr.f32.gmra.mrb[0].mxu0 %v2752
      %v2925 = vpop.f32.mrb[0].mxu0
      %v2926 = vadd.f32 0.0, %v2925
      %v2927 = vpop.f32.mrb[0].mxu0
      %2928 = vmatprep.mubr.f32.mxu0 0.0
      %2929 = vmatmul.mubr.f32.gmra.mrb[0].mxu0 %v2755
      %v2930 = vpop.f32.mrb[0].mxu0
      %v2931 = vadd.f32 0.0, %v2930
      %v2932 = vpop.f32.mrb[0].mxu0
      %2933 = vmatprep.mubr.f32.mxu0 0.0
      %2934 = vmatmul.mubr.f32.gmra.mrb[0].mxu0 %v2758
      %v2935 = vpop.f32.mrb[0].mxu0
      %v2936 = vadd.f32 0.0, %v2935
      %v2937 = vpop.f32.mrb[0].mxu0
      %2938 = vmatprep.mubr.f32.mxu0 0.0
      %2939 = vmatmul.mubr.f32.gmra.mrb[0].mxu0 %v2761
      %v2940 = vpop.f32.mrb[0].mxu0
      %v2941 = vadd.f32 0.0, %v2940
      %v2942 = vpop.f32.mrb[0].mxu0
      %2943 = vmatprep.mubr.f32.mxu0 0.0
      %2944 = vmatmul.mubr.f32.gmra.mrb[0].mxu0 %v2764
      %v2945 = vpop.f32.mrb[0].mxu0
      %v2946 = vadd.f32 0.0, %v2945
      %v2947 = vpop.f32.mrb[0].mxu0
      %2948 = vmatprep.mubr.f32.mxu0 0.0
      %2949 = vmatmul.mubr.f32.gmra.mrb[0].mxu0 %v2767
      %v2950 = vpop.f32.mrb[0].mxu0
      %v2951 = vadd.f32 0.0, %v2950
      %v2952 = vpop.f32.mrb[0].mxu0
      %2953 = vmatprep.mubr.f32.mxu0 0.0
      %2954 = vmatmul.mubr.f32.gmra.mrb[0].mxu0 %v2770
      %v2955 = vpop.f32.mrb[0].mxu0
      %v2956 = vadd.f32 0.0, %v2955
      %v2957 = vpop.f32.mrb[0].mxu0
      %2958 = vmatprep.mubr.f32.mxu0 0.0
      %2959 = vmatmul.mubr.f32.gmra.mrb[0].mxu0 %v2773
      %v2960 = vpop.f32.mrb[0].mxu0
      %v2961 = vadd.f32 0.0, %v2960
      %v2962 = vpop.f32.mrb[0].mxu0
      %2963 = vmatprep.mubr.f32.mxu0 0.0
      %2964 = vmatmul.mubr.f32.gmra.mrb[0].mxu0 %v2776
      %v2965 = vpop.f32.mrb[0].mxu0
      %v2966 = vadd.f32 0.0, %v2965
      %v2967 = vpop.f32.mrb[0].mxu0
      %2968 = vmatprep.mubr.f32.mxu0 0.0
      %2969 = vmatmul.mubr.f32.gmra.mrb[0].mxu0 %v2779
      %v2970 = vpop.f32.mrb[0].mxu0
      %v2971 = vadd.f32 0.0, %v2970
      %v2972 = vpop.f32.mrb[0].mxu0
      %2973 = vmatprep.mubr.f32.mxu0 0.0
      %2974 = vmatmul.mubr.f32.gmra.mrb[0].mxu0 %v2782
      %v2975 = vpop.f32.mrb[0].mxu0
      %v2976 = vadd.f32 0.0, %v2975
      %v2977 = vpop.f32.mrb[0].mxu0
      %2978 = vmatprep.mubr.f32.mxu0 0.0
      %2979 = vmatmul.mubr.f32.gmra.mrb[0].mxu0 %v2785
      %v2980 = vpop.f32.mrb[0].mxu0
      %v2981 = vadd.f32 0.0, %v2980
      %v2982 = vpop.f32.mrb[0].mxu0
      %2983 = vmatprep.mubr.f32.mxu0 0.0
      %2984 = vmatmul.mubr.f32.gmra.mrb[0].mxu0 %v2788
      %v2985 = vpop.f32.mrb[0].mxu0
      %v2986 = vadd.f32 0.0, %v2985
      %v2987 = vpop.f32.mrb[0].mxu0
      %2988 = vmatprep.mubr.f32.mxu0 0.0
      %2989 = vmatmul.mubr.f32.gmra.mrb[0].mxu0 %v2791
      %v2990 = vpop.f32.mrb[0].mxu0
      %v2991 = vadd.f32 0.0, %v2990
      %v2992 = vpop.f32.mrb[0].mxu0
      %2993 = vmatprep.mubr.f32.mxu0 0.0
      %2994 = vmatmul.mubr.f32.gmra.mrb[0].mxu0 %v2794
      %v2995 = vpop.f32.mrb[0].mxu0
      %v2996 = vadd.f32 0.0, %v2995
      %v2997 = vpop.f32.mrb[0].mxu0
      %2998 = vmatprep.mubr.f32.mxu0 0.0
      %2999 = vmatmul.mubr.f32.gmra.mrb[0].mxu0 %v2797
      %v3000 = vpop.f32.mrb[0].mxu0
      %v3001 = vadd.f32 0.0, %v3000
      %v3002 = vpop.f32.mrb[0].mxu0
      %3003 = vmatprep.mubr.f32.mxu0 0.0
      %3004 = vmatmul.mubr.f32.gmra.mrb[0].mxu0 %v2800
      %v3005 = vpop.f32.mrb[0].mxu0
      %v3006 = vadd.f32 0.0, %v3005
      %v3007 = vpop.f32.mrb[0].mxu0
      %3008 = vmatprep.mubr.f32.mxu0 0.0
      %3009 = vmatmul.mubr.f32.gmra.mrb[0].mxu0 %v2803
      %v3010 = vpop.f32.mrb[0].mxu0
      %v3011 = vadd.f32 0.0, %v3010
      %v3012 = vpop.f32.mrb[0].mxu0
      %3013 = vmatprep.mubr.f32.mxu0 0.0
      %3014 = vmatmul.mubr.f32.gmra.mrb[0].mxu0 %v2806
      %v3015 = vpop.f32.mrb[0].mxu0
      %v3016 = vadd.f32 0.0, %v3015
      %v3017 = vpop.f32.mrb[0].mxu0
      %3018 = vmatprep.mubr.f32.mxu0 0.0
      %3019 = vmatmul.mubr.f32.gmra.mrb[0].mxu0 %v2809
      %v3020 = vpop.f32.mrb[0].mxu0
      %v3021 = vadd.f32 0.0, %v3020
      %v3022 = vpop.f32.mrb[0].mxu0
      %3023 = vmatprep.mubr.f32.mxu0 0.0
      %3024 = vmatmul.mubr.f32.gmra.mrb[0].mxu0 %v2812
      %v3025 = vpop.f32.mrb[0].mxu0
      %v3026 = vadd.f32 0.0, %v3025
      %v3027 = vpop.f32.mrb[0].mxu0
      %3028 = vmatprep.mubr.f32.mxu0 0.0
      %3029 = vmatmul.mubr.f32.gmra.mrb[0].mxu0 %v2815
      %v3030 = vpop.f32.mrb[0].mxu0
      %v3031 = vadd.f32 0.0, %v3030
      %v3032 = vpop.f32.mrb[0].mxu0
      %3033 = vmatprep.mubr.f32.mxu0 0.0
      %3034 = vmatmul.mubr.f32.gmra.mrb[0].mxu0 %v2818
      %v3035 = vpop.f32.mrb[0].mxu0
      %v3036 = vadd.f32 0.0, %v3035
      %v3037 = vpop.f32.mrb[0].mxu0
      %3038 = vmatprep.mubr.f32.mxu0 0.0
      %3039 = vmatmul.mubr.f32.gmra.mrb[0].mxu0 %v2821
      %v3040 = vpop.f32.mrb[0].mxu0
      %v3041 = vadd.f32 0.0, %v3040
      %v3042 = vpop.f32.mrb[0].mxu0
      %3043 = vmatprep.mubr.f32.mxu0 0.0
      %3044 = vmatmul.mubr.f32.gmra.mrb[0].mxu0 %v2824
      %v3045 = vpop.f32.mrb[0].mxu0
      %v3046 = vadd.f32 0.0, %v3045
      %v3047 = vpop.f32.mrb[0].mxu0
      %3048 = vmatprep.mubr.f32.mxu0 0.0
      %3049 = vmatmul.mubr.f32.gmra.mrb[0].mxu0 %v2827
      %v3050 = vpop.f32.mrb[0].mxu0
      %v3051 = vadd.f32 0.0, %v3050
      %v3052 = vpop.f32.mrb[0].mxu0
      %3053 = vdwg.mxu0
      %v3054 = vadd.f32 %v2660, %v2896
      %v3055 = vadd.f32 %v2661, %v2901
      %v3056 = vadd.f32 %v2662, %v2906
      %v3057 = vadd.f32 %v2663, %v2911
      %v3058 = vadd.f32 %v2664, %v2916
      %v3059 = vadd.f32 %v2665, %v2921
      %v3060 = vadd.f32 %v2666, %v2926
      %v3061 = vadd.f32 %v2667, %v2931
      %v3062 = vadd.f32 %v2668, %v2936
      %v3063 = vadd.f32 %v2669, %v2941
      %v3064 = vadd.f32 %v2670, %v2946
      %v3065 = vadd.f32 %v2671, %v2951
      %v3066 = vadd.f32 %v2672, %v2956
      %v3067 = vadd.f32 %v2673, %v2961
      %v3068 = vadd.f32 %v2674, %v2966
      %v3069 = vadd.f32 %v2675, %v2971
      %v3070 = vadd.f32 %v2676, %v2976
      %v3071 = vadd.f32 %v2677, %v2981
      %v3072 = vadd.f32 %v2678, %v2986
      %v3073 = vadd.f32 %v2679, %v2991
      %v3074 = vadd.f32 %v2680, %v2996
      %v3075 = vadd.f32 %v2681, %v3001
      %v3076 = vadd.f32 %v2682, %v3006
      %v3077 = vadd.f32 %v2683, %v3011
      %v3078 = vadd.f32 %v2684, %v3016
      %v3079 = vadd.f32 %v2685, %v3021
      %v3080 = vadd.f32 %v2686, %v3026
      %v3081 = vadd.f32 %v2687, %v3031
      %v3082 = vadd.f32 %v2688, %v3036
      %v3083 = vadd.f32 %v2689, %v3041
      %v3084 = vadd.f32 %v2690, %v3046
      %v3085 = vadd.f32 %v2691, %v3051
      %v3086 = vld [vmem:[%s1148 + $0x9] sm:$0xff]
      %v3087 = vld [vmem:[%s1148 + $0x11] sm:$0xff]
      %v3088 = vld [vmem:[%s1148 + $0x29] sm:$0xff]
      %v3089 = vld [vmem:[%s1148 + $0x31] sm:$0xff]
      %v3090 = vld [vmem:[%s1148 + $0x49] sm:$0xff]
      %v3091 = vld [vmem:[%s1148 + $0x51] sm:$0xff]
      %v3092 = vld [vmem:[%s1148 + $0x69] sm:$0xff]
      %v3093 = vld [vmem:[%s1148 + $0x71] sm:$0xff]
      %v3094 = vld [vmem:[%s1148 + $0x89] sm:$0xff]
      %v3095 = vld [vmem:[%s1148 + $0x91] sm:$0xff]
      %v3096 = vld [vmem:[%s1148 + $0xa9] sm:$0xff]
      %v3097 = vld [vmem:[%s1148 + $0xb1] sm:$0xff]
      %v3098 = vld [vmem:[%s1148 + $0xc9] sm:$0xff]
      %v3099 = vld [vmem:[%s1148 + $0xd1] sm:$0xff]
      %v3100 = vld [vmem:[%s1148 + $0xe9] sm:$0xff]
      %v3101 = vld [vmem:[%s1148 + $0xf1] sm:$0xff]
      %v3102 = vld [vmem:[%s1148 + $0x109] sm:$0xff]
      %v3103 = vld [vmem:[%s1148 + $0x111] sm:$0xff]
      %v3104 = vld [vmem:[%s1148 + $0x129] sm:$0xff]
      %v3105 = vld [vmem:[%s1148 + $0x131] sm:$0xff]
      %v3106 = vld [vmem:[%s1148 + $0x149] sm:$0xff]
      %v3107 = vld [vmem:[%s1148 + $0x151] sm:$0xff]
      %v3108 = vld [vmem:[%s1148 + $0x169] sm:$0xff]
      %v3109 = vld [vmem:[%s1148 + $0x171] sm:$0xff]
      %v3110 = vld [vmem:[%s1148 + $0x189] sm:$0xff]
      %v3111 = vld [vmem:[%s1148 + $0x191] sm:$0xff]
      %v3112 = vld [vmem:[%s1148 + $0x1a9] sm:$0xff]
      %v3113 = vld [vmem:[%s1148 + $0x1b1] sm:$0xff]
      %v3114 = vld [vmem:[%s1148 + $0x1c9] sm:$0xff]
      %v3115 = vld [vmem:[%s1148 + $0x1d1] sm:$0xff]
      %v3116 = vld [vmem:[%s1148 + $0x1e9] sm:$0xff]
      %v3117 = vld [vmem:[%s1148 + $0x1f1] sm:$0xff]
      %s3118 = scalar_lea.vmem %s3, 320
      %v3119 = vld [vmem:[%s3118] sm:$0xff]
      %v3120 = vld [vmem:[%s3118 + $0x8] sm:$0xff]
      %v3121 = vld [vmem:[%s3118 + $0x10] sm:$0xff]
      %v3122 = vld [vmem:[%s3118 + $0x18] sm:$0xff]
      %v3123 = vld [vmem:[%s3118 + $0x20] sm:$0xff]
      %v3124 = vld [vmem:[%s3118 + $0x28] sm:$0xff]
      %v3125 = vld [vmem:[%s3118 + $0x30] sm:$0xff]
      %v3126 = vld [vmem:[%s3118 + $0x38] sm:$0xff]
      %v3128 = vsel %vm676, %v3086, 0
      %v3131 = vsel %vm676, %v3087, 0
      %v3134 = vsel %vm676, %v3088, 0
      %v3137 = vsel %vm676, %v3089, 0
      %v3140 = vsel %vm676, %v3090, 0
      %v3143 = vsel %vm676, %v3091, 0
      %v3146 = vsel %vm676, %v3092, 0
      %v3149 = vsel %vm676, %v3093, 0
      %v3152 = vsel %vm676, %v3094, 0
      %v3155 = vsel %vm676, %v3095, 0
      %v3158 = vsel %vm676, %v3096, 0
      %v3161 = vsel %vm676, %v3097, 0
      %v3164 = vsel %vm676, %v3098, 0
      %v3167 = vsel %vm676, %v3099, 0
      %v3170 = vsel %vm676, %v3100, 0
      %v3173 = vsel %vm676, %v3101, 0
      %v3176 = vsel %vm676, %v3102, 0
      %v3179 = vsel %vm676, %v3103, 0
      %v3182 = vsel %vm676, %v3104, 0
      %v3185 = vsel %vm676, %v3105, 0
      %v3188 = vsel %vm676, %v3106, 0
      %v3191 = vsel %vm676, %v3107, 0
      %v3194 = vsel %vm676, %v3108, 0
      %v3197 = vsel %vm676, %v3109, 0
      %v3200 = vsel %vm676, %v3110, 0
      %v3203 = vsel %vm676, %v3111, 0
      %v3206 = vsel %vm676, %v3112, 0
      %v3209 = vsel %vm676, %v3113, 0
      %v3212 = vsel %vm676, %v3114, 0
      %v3215 = vsel %vm676, %v3115, 0
      %v3218 = vsel %vm676, %v3116, 0
      %v3221 = vsel %vm676, %v3117, 0
      %3223 = vmatprep.subr.mxu0 0.0
      %3224 = vmatpush1.msra.mxu0 %v3119
      %3225 = vmatprep.subr.mxu0 0.0
      %3226 = vmatpush1.msra.mxu0 %v3120
      %3227 = vmatprep.subr.mxu0 0.0
      %3228 = vmatpush1.msra.mxu0 %v3121
      %3229 = vmatprep.subr.mxu0 0.0
      %3230 = vmatpush1.msra.mxu0 %v3122
      %3231 = vmatprep.subr.mxu0 0.0
      %3232 = vmatpush1.msra.mxu0 %v3123
      %3233 = vmatprep.subr.mxu0 0.0
      %3234 = vmatpush1.msra.mxu0 %v3124
      %3235 = vmatprep.subr.mxu0 0.0
      %3236 = vmatpush1.msra.mxu0 %v3125
      %3237 = vmatprep.subr.mxu0 0.0
      %3238 = vmatpush1.msra.mxu0 %v3126
      %3239 = vmatprep.subr.mxu0 0.0
      %3240 = vmatpush1.msra.mxu0 0.0
      %3241 = vmatprep.subr.mxu0 0.0
      %3242 = vmatpush1.msra.mxu0 0.0
      %3243 = vmatprep.subr.mxu0 0.0
      %3244 = vmatpush1.msra.mxu0 0.0
      %3245 = vmatprep.subr.mxu0 0.0
      %3246 = vmatpush1.msra.mxu0 0.0
      %3247 = vmatprep.subr.mxu0 0.0
      %3248 = vmatpush1.msra.mxu0 0.0
      %3249 = vmatprep.subr.mxu0 0.0
      %3250 = vmatpush1.msra.mxu0 0.0
      %3251 = vmatprep.subr.mxu0 0.0
      %3252 = vmatpush1.msra.mxu0 0.0
      %3253 = vmatprep.subr.mxu0 0.0
      %3254 = vmatpush1.msra.mxu0 0.0
      %3255 = vmatprep.subr.mxu0 0.0
      %3256 = vmatpush1.msra.mxu0 0.0
      %3257 = vmatprep.subr.mxu0 0.0
      %3258 = vmatpush1.msra.mxu0 0.0
      %3259 = vmatprep.subr.mxu0 0.0
      %3260 = vmatpush1.msra.mxu0 0.0
      %3261 = vmatprep.subr.mxu0 0.0
      %3262 = vmatpush1.msra.mxu0 0.0
      %3263 = vmatprep.subr.mxu0 0.0
      %3264 = vmatpush1.msra.mxu0 0.0
      %3265 = vmatprep.subr.mxu0 0.0
      %3266 = vmatpush1.msra.mxu0 0.0
      %3267 = vmatprep.subr.mxu0 0.0
      %3268 = vmatpush1.msra.mxu0 0.0
      %3269 = vmatprep.subr.mxu0 0.0
      %3270 = vmatpush1.msra.mxu0 0.0
      %3271 = vmatprep.subr.mxu0 0.0
      %3272 = vmatpush1.msra.mxu0 0.0
      %3273 = vmatprep.subr.mxu0 0.0
      %3274 = vmatpush1.msra.mxu0 0.0
      %3275 = vmatprep.subr.mxu0 0.0
      %3276 = vmatpush1.msra.mxu0 0.0
      %3277 = vmatprep.subr.mxu0 0.0
      %3278 = vmatpush1.msra.mxu0 0.0
      %3279 = vmatprep.subr.mxu0 0.0
      %3280 = vmatpush1.msra.mxu0 0.0
      %3281 = vmatprep.subr.mxu0 0.0
      %3282 = vmatpush1.msra.mxu0 0.0
      %3283 = vmatprep.subr.mxu0 0.0
      %3284 = vmatpush1.msra.mxu0 0.0
      %3285 = vmatprep.subr.mxu0 0.0
      %3286 = vmatpush1.msra.mxu0 0.0
      %3287 = vmatprep.mubr.f32.mxu0 0.0
      %3288 = vmatmul.mubr.f32.gmra.mrb[0].mxu0 %v3128
      %v3289 = vpop.f32.mrb[0].mxu0
      %v3290 = vadd.f32 0.0, %v3289
      %v3291 = vpop.f32.mrb[0].mxu0
      %3292 = vmatprep.mubr.f32.mxu0 0.0
      %3293 = vmatmul.mubr.f32.gmra.mrb[0].mxu0 %v3131
      %v3294 = vpop.f32.mrb[0].mxu0
      %v3295 = vadd.f32 0.0, %v3294
      %v3296 = vpop.f32.mrb[0].mxu0
      %3297 = vmatprep.mubr.f32.mxu0 0.0
      %3298 = vmatmul.mubr.f32.gmra.mrb[0].mxu0 %v3134
      %v3299 = vpop.f32.mrb[0].mxu0
      %v3300 = vadd.f32 0.0, %v3299
      %v3301 = vpop.f32.mrb[0].mxu0
      %3302 = vmatprep.mubr.f32.mxu0 0.0
      %3303 = vmatmul.mubr.f32.gmra.mrb[0].mxu0 %v3137
      %v3304 = vpop.f32.mrb[0].mxu0
      %v3305 = vadd.f32 0.0, %v3304
      %v3306 = vpop.f32.mrb[0].mxu0
      %3307 = vmatprep.mubr.f32.mxu0 0.0
      %3308 = vmatmul.mubr.f32.gmra.mrb[0].mxu0 %v3140
      %v3309 = vpop.f32.mrb[0].mxu0
      %v3310 = vadd.f32 0.0, %v3309
      %v3311 = vpop.f32.mrb[0].mxu0
      %3312 = vmatprep.mubr.f32.mxu0 0.0
      %3313 = vmatmul.mubr.f32.gmra.mrb[0].mxu0 %v3143
      %v3314 = vpop.f32.mrb[0].mxu0
      %v3315 = vadd.f32 0.0, %v3314
      %v3316 = vpop.f32.mrb[0].mxu0
      %3317 = vmatprep.mubr.f32.mxu0 0.0
      %3318 = vmatmul.mubr.f32.gmra.mrb[0].mxu0 %v3146
      %v3319 = vpop.f32.mrb[0].mxu0
      %v3320 = vadd.f32 0.0, %v3319
      %v3321 = vpop.f32.mrb[0].mxu0
      %3322 = vmatprep.mubr.f32.mxu0 0.0
      %3323 = vmatmul.mubr.f32.gmra.mrb[0].mxu0 %v3149
      %v3324 = vpop.f32.mrb[0].mxu0
      %v3325 = vadd.f32 0.0, %v3324
      %v3326 = vpop.f32.mrb[0].mxu0
      %3327 = vmatprep.mubr.f32.mxu0 0.0
      %3328 = vmatmul.mubr.f32.gmra.mrb[0].mxu0 %v3152
      %v3329 = vpop.f32.mrb[0].mxu0
      %v3330 = vadd.f32 0.0, %v3329
      %v3331 = vpop.f32.mrb[0].mxu0
      %3332 = vmatprep.mubr.f32.mxu0 0.0
      %3333 = vmatmul.mubr.f32.gmra.mrb[0].mxu0 %v3155
      %v3334 = vpop.f32.mrb[0].mxu0
      %v3335 = vadd.f32 0.0, %v3334
      %v3336 = vpop.f32.mrb[0].mxu0
      %3337 = vmatprep.mubr.f32.mxu0 0.0
      %3338 = vmatmul.mubr.f32.gmra.mrb[0].mxu0 %v3158
      %v3339 = vpop.f32.mrb[0].mxu0
      %v3340 = vadd.f32 0.0, %v3339
      %v3341 = vpop.f32.mrb[0].mxu0
      %3342 = vmatprep.mubr.f32.mxu0 0.0
      %3343 = vmatmul.mubr.f32.gmra.mrb[0].mxu0 %v3161
      %v3344 = vpop.f32.mrb[0].mxu0
      %v3345 = vadd.f32 0.0, %v3344
      %v3346 = vpop.f32.mrb[0].mxu0
      %3347 = vmatprep.mubr.f32.mxu0 0.0
      %3348 = vmatmul.mubr.f32.gmra.mrb[0].mxu0 %v3164
      %v3349 = vpop.f32.mrb[0].mxu0
      %v3350 = vadd.f32 0.0, %v3349
      %v3351 = vpop.f32.mrb[0].mxu0
      %3352 = vmatprep.mubr.f32.mxu0 0.0
      %3353 = vmatmul.mubr.f32.gmra.mrb[0].mxu0 %v3167
      %v3354 = vpop.f32.mrb[0].mxu0
      %v3355 = vadd.f32 0.0, %v3354
      %v3356 = vpop.f32.mrb[0].mxu0
      %3357 = vmatprep.mubr.f32.mxu0 0.0
      %3358 = vmatmul.mubr.f32.gmra.mrb[0].mxu0 %v3170
      %v3359 = vpop.f32.mrb[0].mxu0
      %v3360 = vadd.f32 0.0, %v3359
      %v3361 = vpop.f32.mrb[0].mxu0
      %3362 = vmatprep.mubr.f32.mxu0 0.0
      %3363 = vmatmul.mubr.f32.gmra.mrb[0].mxu0 %v3173
      %v3364 = vpop.f32.mrb[0].mxu0
      %v3365 = vadd.f32 0.0, %v3364
      %v3366 = vpop.f32.mrb[0].mxu0
      %3367 = vmatprep.mubr.f32.mxu0 0.0
      %3368 = vmatmul.mubr.f32.gmra.mrb[0].mxu0 %v3176
      %v3369 = vpop.f32.mrb[0].mxu0
      %v3370 = vadd.f32 0.0, %v3369
      %v3371 = vpop.f32.mrb[0].mxu0
      %3372 = vmatprep.mubr.f32.mxu0 0.0
      %3373 = vmatmul.mubr.f32.gmra.mrb[0].mxu0 %v3179
      %v3374 = vpop.f32.mrb[0].mxu0
      %v3375 = vadd.f32 0.0, %v3374
      %v3376 = vpop.f32.mrb[0].mxu0
      %3377 = vmatprep.mubr.f32.mxu0 0.0
      %3378 = vmatmul.mubr.f32.gmra.mrb[0].mxu0 %v3182
      %v3379 = vpop.f32.mrb[0].mxu0
      %v3380 = vadd.f32 0.0, %v3379
      %v3381 = vpop.f32.mrb[0].mxu0
      %3382 = vmatprep.mubr.f32.mxu0 0.0
      %3383 = vmatmul.mubr.f32.gmra.mrb[0].mxu0 %v3185
      %v3384 = vpop.f32.mrb[0].mxu0
      %v3385 = vadd.f32 0.0, %v3384
      %v3386 = vpop.f32.mrb[0].mxu0
      %3387 = vmatprep.mubr.f32.mxu0 0.0
      %3388 = vmatmul.mubr.f32.gmra.mrb[0].mxu0 %v3188
      %v3389 = vpop.f32.mrb[0].mxu0
      %v3390 = vadd.f32 0.0, %v3389
      %v3391 = vpop.f32.mrb[0].mxu0
      %3392 = vmatprep.mubr.f32.mxu0 0.0
      %3393 = vmatmul.mubr.f32.gmra.mrb[0].mxu0 %v3191
      %v3394 = vpop.f32.mrb[0].mxu0
      %v3395 = vadd.f32 0.0, %v3394
      %v3396 = vpop.f32.mrb[0].mxu0
      %3397 = vmatprep.mubr.f32.mxu0 0.0
      %3398 = vmatmul.mubr.f32.gmra.mrb[0].mxu0 %v3194
      %v3399 = vpop.f32.mrb[0].mxu0
      %v3400 = vadd.f32 0.0, %v3399
      %v3401 = vpop.f32.mrb[0].mxu0
      %3402 = vmatprep.mubr.f32.mxu0 0.0
      %3403 = vmatmul.mubr.f32.gmra.mrb[0].mxu0 %v3197
      %v3404 = vpop.f32.mrb[0].mxu0
      %v3405 = vadd.f32 0.0, %v3404
      %v3406 = vpop.f32.mrb[0].mxu0
      %3407 = vmatprep.mubr.f32.mxu0 0.0
      %3408 = vmatmul.mubr.f32.gmra.mrb[0].mxu0 %v3200
      %v3409 = vpop.f32.mrb[0].mxu0
      %v3410 = vadd.f32 0.0, %v3409
      %v3411 = vpop.f32.mrb[0].mxu0
      %3412 = vmatprep.mubr.f32.mxu0 0.0
      %3413 = vmatmul.mubr.f32.gmra.mrb[0].mxu0 %v3203
      %v3414 = vpop.f32.mrb[0].mxu0
      %v3415 = vadd.f32 0.0, %v3414
      %v3416 = vpop.f32.mrb[0].mxu0
      %3417 = vmatprep.mubr.f32.mxu0 0.0
      %3418 = vmatmul.mubr.f32.gmra.mrb[0].mxu0 %v3206
      %v3419 = vpop.f32.mrb[0].mxu0
      %v3420 = vadd.f32 0.0, %v3419
      %v3421 = vpop.f32.mrb[0].mxu0
      %3422 = vmatprep.mubr.f32.mxu0 0.0
      %3423 = vmatmul.mubr.f32.gmra.mrb[0].mxu0 %v3209
      %v3424 = vpop.f32.mrb[0].mxu0
      %v3425 = vadd.f32 0.0, %v3424
      %v3426 = vpop.f32.mrb[0].mxu0
      %3427 = vmatprep.mubr.f32.mxu0 0.0
      %3428 = vmatmul.mubr.f32.gmra.mrb[0].mxu0 %v3212
      %v3429 = vpop.f32.mrb[0].mxu0
      %v3430 = vadd.f32 0.0, %v3429
      %v3431 = vpop.f32.mrb[0].mxu0
      %3432 = vmatprep.mubr.f32.mxu0 0.0
      %3433 = vmatmul.mubr.f32.gmra.mrb[0].mxu0 %v3215
      %v3434 = vpop.f32.mrb[0].mxu0
      %v3435 = vadd.f32 0.0, %v3434
      %v3436 = vpop.f32.mrb[0].mxu0
      %3437 = vmatprep.mubr.f32.mxu0 0.0
      %3438 = vmatmul.mubr.f32.gmra.mrb[0].mxu0 %v3218
      %v3439 = vpop.f32.mrb[0].mxu0
      %v3440 = vadd.f32 0.0, %v3439
      %v3441 = vpop.f32.mrb[0].mxu0
      %3442 = vmatprep.mubr.f32.mxu0 0.0
      %3443 = vmatmul.mubr.f32.gmra.mrb[0].mxu0 %v3221
      %v3444 = vpop.f32.mrb[0].mxu0
      %v3445 = vadd.f32 0.0, %v3444
      %v3446 = vpop.f32.mrb[0].mxu0
      %3447 = vdwg.mxu0
      %v3448 = vadd.f32 %v3054, %v3290
      %v3449 = vadd.f32 %v3055, %v3295
      %v3450 = vadd.f32 %v3056, %v3300
      %v3451 = vadd.f32 %v3057, %v3305
      %v3452 = vadd.f32 %v3058, %v3310
      %v3453 = vadd.f32 %v3059, %v3315
      %v3454 = vadd.f32 %v3060, %v3320
      %v3455 = vadd.f32 %v3061, %v3325
      %v3456 = vadd.f32 %v3062, %v3330
      %v3457 = vadd.f32 %v3063, %v3335
      %v3458 = vadd.f32 %v3064, %v3340
      %v3459 = vadd.f32 %v3065, %v3345
      %v3460 = vadd.f32 %v3066, %v3350
      %v3461 = vadd.f32 %v3067, %v3355
      %v3462 = vadd.f32 %v3068, %v3360
      %v3463 = vadd.f32 %v3069, %v3365
      %v3464 = vadd.f32 %v3070, %v3370
      %v3465 = vadd.f32 %v3071, %v3375
      %v3466 = vadd.f32 %v3072, %v3380
      %v3467 = vadd.f32 %v3073, %v3385
      %v3468 = vadd.f32 %v3074, %v3390
      %v3469 = vadd.f32 %v3075, %v3395
      %v3470 = vadd.f32 %v3076, %v3400
      %v3471 = vadd.f32 %v3077, %v3405
      %v3472 = vadd.f32 %v3078, %v3410
      %v3473 = vadd.f32 %v3079, %v3415
      %v3474 = vadd.f32 %v3080, %v3420
      %v3475 = vadd.f32 %v3081, %v3425
      %v3476 = vadd.f32 %v3082, %v3430
      %v3477 = vadd.f32 %v3083, %v3435
      %v3478 = vadd.f32 %v3084, %v3440
      %v3479 = vadd.f32 %v3085, %v3445
      %s3480 = scalar_lea.vmem [#allocation2], 64
      %v3481 = vld [vmem:[%s3480 + $0x7] sm:$0xff]
      %v3482 = vld [vmem:[%s3480 + $0xf] sm:$0xff]
      %v3483 = vld [vmem:[%s3480 + $0x27] sm:$0xff]
      %v3484 = vld [vmem:[%s3480 + $0x2f] sm:$0xff]
      %v3485 = vld [vmem:[%s3480 + $0x47] sm:$0xff]
      %v3486 = vld [vmem:[%s3480 + $0x4f] sm:$0xff]
      %v3487 = vld [vmem:[%s3480 + $0x67] sm:$0xff]
      %v3488 = vld [vmem:[%s3480 + $0x6f] sm:$0xff]
      %v3489 = vld [vmem:[%s3480 + $0x87] sm:$0xff]
      %v3490 = vld [vmem:[%s3480 + $0x8f] sm:$0xff]
      %v3491 = vld [vmem:[%s3480 + $0xa7] sm:$0xff]
      %v3492 = vld [vmem:[%s3480 + $0xaf] sm:$0xff]
      %v3493 = vld [vmem:[%s3480 + $0xc7] sm:$0xff]
      %v3494 = vld [vmem:[%s3480 + $0xcf] sm:$0xff]
      %v3495 = vld [vmem:[%s3480 + $0xe7] sm:$0xff]
      %v3496 = vld [vmem:[%s3480 + $0xef] sm:$0xff]
      %v3497 = vld [vmem:[%s3480 + $0x107] sm:$0xff]
      %v3498 = vld [vmem:[%s3480 + $0x10f] sm:$0xff]
      %v3499 = vld [vmem:[%s3480 + $0x127] sm:$0xff]
      %v3500 = vld [vmem:[%s3480 + $0x12f] sm:$0xff]
      %v3501 = vld [vmem:[%s3480 + $0x147] sm:$0xff]
      %v3502 = vld [vmem:[%s3480 + $0x14f] sm:$0xff]
      %v3503 = vld [vmem:[%s3480 + $0x167] sm:$0xff]
      %v3504 = vld [vmem:[%s3480 + $0x16f] sm:$0xff]
      %v3505 = vld [vmem:[%s3480 + $0x187] sm:$0xff]
      %v3506 = vld [vmem:[%s3480 + $0x18f] sm:$0xff]
      %v3507 = vld [vmem:[%s3480 + $0x1a7] sm:$0xff]
      %v3508 = vld [vmem:[%s3480 + $0x1af] sm:$0xff]
      %v3509 = vld [vmem:[%s3480 + $0x1c7] sm:$0xff]
      %v3510 = vld [vmem:[%s3480 + $0x1cf] sm:$0xff]
      %v3511 = vld [vmem:[%s3480 + $0x1e7] sm:$0xff]
      %v3512 = vld [vmem:[%s3480 + $0x1ef] sm:$0xff]
      %s3513 = scalar_lea.vmem %s3, 384
      %v3514 = vld [vmem:[%s3513] sm:$0xff]
      %v3515 = vld [vmem:[%s3513 + $0x8] sm:$0xff]
      %v3516 = vld [vmem:[%s3513 + $0x10] sm:$0xff]
      %v3517 = vld [vmem:[%s3513 + $0x18] sm:$0xff]
      %v3518 = vld [vmem:[%s3513 + $0x20] sm:$0xff]
      %v3519 = vld [vmem:[%s3513 + $0x28] sm:$0xff]
      %v3520 = vld [vmem:[%s3513 + $0x30] sm:$0xff]
      %v3521 = vld [vmem:[%s3513 + $0x38] sm:$0xff]
      %v3523 = vsel %vm676, %v3481, 0
      %v3526 = vsel %vm676, %v3482, 0
      %v3529 = vsel %vm676, %v3483, 0
      %v3532 = vsel %vm676, %v3484, 0
      %v3535 = vsel %vm676, %v3485, 0
      %v3538 = vsel %vm676, %v3486, 0
      %v3541 = vsel %vm676, %v3487, 0
      %v3544 = vsel %vm676, %v3488, 0
      %v3547 = vsel %vm676, %v3489, 0
      %v3550 = vsel %vm676, %v3490, 0
      %v3553 = vsel %vm676, %v3491, 0
      %v3556 = vsel %vm676, %v3492, 0
      %v3559 = vsel %vm676, %v3493, 0
      %v3562 = vsel %vm676, %v3494, 0
      %v3565 = vsel %vm676, %v3495, 0
      %v3568 = vsel %vm676, %v3496, 0
      %v3571 = vsel %vm676, %v3497, 0
      %v3574 = vsel %vm676, %v3498, 0
      %v3577 = vsel %vm676, %v3499, 0
      %v3580 = vsel %vm676, %v3500, 0
      %v3583 = vsel %vm676, %v3501, 0
      %v3586 = vsel %vm676, %v3502, 0
      %v3589 = vsel %vm676, %v3503, 0
      %v3592 = vsel %vm676, %v3504, 0
      %v3595 = vsel %vm676, %v3505, 0
      %v3598 = vsel %vm676, %v3506, 0
      %v3601 = vsel %vm676, %v3507, 0
      %v3604 = vsel %vm676, %v3508, 0
      %v3607 = vsel %vm676, %v3509, 0
      %v3610 = vsel %vm676, %v3510, 0
      %v3613 = vsel %vm676, %v3511, 0
      %v3616 = vsel %vm676, %v3512, 0
      %3618 = vmatprep.subr.mxu0 0.0
      %3619 = vmatpush1.msra.mxu0 %v3514
      %3620 = vmatprep.subr.mxu0 0.0
      %3621 = vmatpush1.msra.mxu0 %v3515
      %3622 = vmatprep.subr.mxu0 0.0
      %3623 = vmatpush1.msra.mxu0 %v3516
      %3624 = vmatprep.subr.mxu0 0.0
      %3625 = vmatpush1.msra.mxu0 %v3517
      %3626 = vmatprep.subr.mxu0 0.0
      %3627 = vmatpush1.msra.mxu0 %v3518
      %3628 = vmatprep.subr.mxu0 0.0
      %3629 = vmatpush1.msra.mxu0 %v3519
      %3630 = vmatprep.subr.mxu0 0.0
      %3631 = vmatpush1.msra.mxu0 %v3520
      %3632 = vmatprep.subr.mxu0 0.0
      %3633 = vmatpush1.msra.mxu0 %v3521
      %3634 = vmatprep.subr.mxu0 0.0
      %3635 = vmatpush1.msra.mxu0 0.0
      %3636 = vmatprep.subr.mxu0 0.0
      %3637 = vmatpush1.msra.mxu0 0.0
      %3638 = vmatprep.subr.mxu0 0.0
      %3639 = vmatpush1.msra.mxu0 0.0
      %3640 = vmatprep.subr.mxu0 0.0
      %3641 = vmatpush1.msra.mxu0 0.0
      %3642 = vmatprep.subr.mxu0 0.0
      %3643 = vmatpush1.msra.mxu0 0.0
      %3644 = vmatprep.subr.mxu0 0.0
      %3645 = vmatpush1.msra.mxu0 0.0
      %3646 = vmatprep.subr.mxu0 0.0
      %3647 = vmatpush1.msra.mxu0 0.0
      %3648 = vmatprep.subr.mxu0 0.0
      %3649 = vmatpush1.msra.mxu0 0.0
      %3650 = vmatprep.subr.mxu0 0.0
      %3651 = vmatpush1.msra.mxu0 0.0
      %3652 = vmatprep.subr.mxu0 0.0
      %3653 = vmatpush1.msra.mxu0 0.0
      %3654 = vmatprep.subr.mxu0 0.0
      %3655 = vmatpush1.msra.mxu0 0.0
      %3656 = vmatprep.subr.mxu0 0.0
      %3657 = vmatpush1.msra.mxu0 0.0
      %3658 = vmatprep.subr.mxu0 0.0
      %3659 = vmatpush1.msra.mxu0 0.0
      %3660 = vmatprep.subr.mxu0 0.0
      %3661 = vmatpush1.msra.mxu0 0.0
      %3662 = vmatprep.subr.mxu0 0.0
      %3663 = vmatpush1.msra.mxu0 0.0
      %3664 = vmatprep.subr.mxu0 0.0
      %3665 = vmatpush1.msra.mxu0 0.0
      %3666 = vmatprep.subr.mxu0 0.0
      %3667 = vmatpush1.msra.mxu0 0.0
      %3668 = vmatprep.subr.mxu0 0.0
      %3669 = vmatpush1.msra.mxu0 0.0
      %3670 = vmatprep.subr.mxu0 0.0
      %3671 = vmatpush1.msra.mxu0 0.0
      %3672 = vmatprep.subr.mxu0 0.0
      %3673 = vmatpush1.msra.mxu0 0.0
      %3674 = vmatprep.subr.mxu0 0.0
      %3675 = vmatpush1.msra.mxu0 0.0
      %3676 = vmatprep.subr.mxu0 0.0
      %3677 = vmatpush1.msra.mxu0 0.0
      %3678 = vmatprep.subr.mxu0 0.0
      %3679 = vmatpush1.msra.mxu0 0.0
      %3680 = vmatprep.subr.mxu0 0.0
      %3681 = vmatpush1.msra.mxu0 0.0
      %3682 = vmatprep.mubr.f32.mxu0 0.0
      %3683 = vmatmul.mubr.f32.gmra.mrb[0].mxu0 %v3523
      %v3684 = vpop.f32.mrb[0].mxu0
      %v3685 = vadd.f32 0.0, %v3684
      %v3686 = vpop.f32.mrb[0].mxu0
      %3687 = vmatprep.mubr.f32.mxu0 0.0
      %3688 = vmatmul.mubr.f32.gmra.mrb[0].mxu0 %v3526
      %v3689 = vpop.f32.mrb[0].mxu0
      %v3690 = vadd.f32 0.0, %v3689
      %v3691 = vpop.f32.mrb[0].mxu0
      %3692 = vmatprep.mubr.f32.mxu0 0.0
      %3693 = vmatmul.mubr.f32.gmra.mrb[0].mxu0 %v3529
      %v3694 = vpop.f32.mrb[0].mxu0
      %v3695 = vadd.f32 0.0, %v3694
      %v3696 = vpop.f32.mrb[0].mxu0
      %3697 = vmatprep.mubr.f32.mxu0 0.0
      %3698 = vmatmul.mubr.f32.gmra.mrb[0].mxu0 %v3532
      %v3699 = vpop.f32.mrb[0].mxu0
      %v3700 = vadd.f32 0.0, %v3699
      %v3701 = vpop.f32.mrb[0].mxu0
      %3702 = vmatprep.mubr.f32.mxu0 0.0
      %3703 = vmatmul.mubr.f32.gmra.mrb[0].mxu0 %v3535
      %v3704 = vpop.f32.mrb[0].mxu0
      %v3705 = vadd.f32 0.0, %v3704
      %v3706 = vpop.f32.mrb[0].mxu0
      %3707 = vmatprep.mubr.f32.mxu0 0.0
      %3708 = vmatmul.mubr.f32.gmra.mrb[0].mxu0 %v3538
      %v3709 = vpop.f32.mrb[0].mxu0
      %v3710 = vadd.f32 0.0, %v3709
      %v3711 = vpop.f32.mrb[0].mxu0
      %3712 = vmatprep.mubr.f32.mxu0 0.0
      %3713 = vmatmul.mubr.f32.gmra.mrb[0].mxu0 %v3541
      %v3714 = vpop.f32.mrb[0].mxu0
      %v3715 = vadd.f32 0.0, %v3714
      %v3716 = vpop.f32.mrb[0].mxu0
      %3717 = vmatprep.mubr.f32.mxu0 0.0
      %3718 = vmatmul.mubr.f32.gmra.mrb[0].mxu0 %v3544
      %v3719 = vpop.f32.mrb[0].mxu0
      %v3720 = vadd.f32 0.0, %v3719
      %v3721 = vpop.f32.mrb[0].mxu0
      %3722 = vmatprep.mubr.f32.mxu0 0.0
      %3723 = vmatmul.mubr.f32.gmra.mrb[0].mxu0 %v3547
      %v3724 = vpop.f32.mrb[0].mxu0
      %v3725 = vadd.f32 0.0, %v3724
      %v3726 = vpop.f32.mrb[0].mxu0
      %3727 = vmatprep.mubr.f32.mxu0 0.0
      %3728 = vmatmul.mubr.f32.gmra.mrb[0].mxu0 %v3550
      %v3729 = vpop.f32.mrb[0].mxu0
      %v3730 = vadd.f32 0.0, %v3729
      %v3731 = vpop.f32.mrb[0].mxu0
      %3732 = vmatprep.mubr.f32.mxu0 0.0
      %3733 = vmatmul.mubr.f32.gmra.mrb[0].mxu0 %v3553
      %v3734 = vpop.f32.mrb[0].mxu0
      %v3735 = vadd.f32 0.0, %v3734
      %v3736 = vpop.f32.mrb[0].mxu0
      %3737 = vmatprep.mubr.f32.mxu0 0.0
      %3738 = vmatmul.mubr.f32.gmra.mrb[0].mxu0 %v3556
      %v3739 = vpop.f32.mrb[0].mxu0
      %v3740 = vadd.f32 0.0, %v3739
      %v3741 = vpop.f32.mrb[0].mxu0
      %3742 = vmatprep.mubr.f32.mxu0 0.0
      %3743 = vmatmul.mubr.f32.gmra.mrb[0].mxu0 %v3559
      %v3744 = vpop.f32.mrb[0].mxu0
      %v3745 = vadd.f32 0.0, %v3744
      %v3746 = vpop.f32.mrb[0].mxu0
      %3747 = vmatprep.mubr.f32.mxu0 0.0
      %3748 = vmatmul.mubr.f32.gmra.mrb[0].mxu0 %v3562
      %v3749 = vpop.f32.mrb[0].mxu0
      %v3750 = vadd.f32 0.0, %v3749
      %v3751 = vpop.f32.mrb[0].mxu0
      %3752 = vmatprep.mubr.f32.mxu0 0.0
      %3753 = vmatmul.mubr.f32.gmra.mrb[0].mxu0 %v3565
      %v3754 = vpop.f32.mrb[0].mxu0
      %v3755 = vadd.f32 0.0, %v3754
      %v3756 = vpop.f32.mrb[0].mxu0
      %3757 = vmatprep.mubr.f32.mxu0 0.0
      %3758 = vmatmul.mubr.f32.gmra.mrb[0].mxu0 %v3568
      %v3759 = vpop.f32.mrb[0].mxu0
      %v3760 = vadd.f32 0.0, %v3759
      %v3761 = vpop.f32.mrb[0].mxu0
      %3762 = vmatprep.mubr.f32.mxu0 0.0
      %3763 = vmatmul.mubr.f32.gmra.mrb[0].mxu0 %v3571
      %v3764 = vpop.f32.mrb[0].mxu0
      %v3765 = vadd.f32 0.0, %v3764
      %v3766 = vpop.f32.mrb[0].mxu0
      %3767 = vmatprep.mubr.f32.mxu0 0.0
      %3768 = vmatmul.mubr.f32.gmra.mrb[0].mxu0 %v3574
      %v3769 = vpop.f32.mrb[0].mxu0
      %v3770 = vadd.f32 0.0, %v3769
      %v3771 = vpop.f32.mrb[0].mxu0
      %3772 = vmatprep.mubr.f32.mxu0 0.0
      %3773 = vmatmul.mubr.f32.gmra.mrb[0].mxu0 %v3577
      %v3774 = vpop.f32.mrb[0].mxu0
      %v3775 = vadd.f32 0.0, %v3774
      %v3776 = vpop.f32.mrb[0].mxu0
      %3777 = vmatprep.mubr.f32.mxu0 0.0
      %3778 = vmatmul.mubr.f32.gmra.mrb[0].mxu0 %v3580
      %v3779 = vpop.f32.mrb[0].mxu0
      %v3780 = vadd.f32 0.0, %v3779
      %v3781 = vpop.f32.mrb[0].mxu0
      %3782 = vmatprep.mubr.f32.mxu0 0.0
      %3783 = vmatmul.mubr.f32.gmra.mrb[0].mxu0 %v3583
      %v3784 = vpop.f32.mrb[0].mxu0
      %v3785 = vadd.f32 0.0, %v3784
      %v3786 = vpop.f32.mrb[0].mxu0
      %3787 = vmatprep.mubr.f32.mxu0 0.0
      %3788 = vmatmul.mubr.f32.gmra.mrb[0].mxu0 %v3586
      %v3789 = vpop.f32.mrb[0].mxu0
      %v3790 = vadd.f32 0.0, %v3789
      %v3791 = vpop.f32.mrb[0].mxu0
      %3792 = vmatprep.mubr.f32.mxu0 0.0
      %3793 = vmatmul.mubr.f32.gmra.mrb[0].mxu0 %v3589
      %v3794 = vpop.f32.mrb[0].mxu0
      %v3795 = vadd.f32 0.0, %v3794
      %v3796 = vpop.f32.mrb[0].mxu0
      %3797 = vmatprep.mubr.f32.mxu0 0.0
      %3798 = vmatmul.mubr.f32.gmra.mrb[0].mxu0 %v3592
      %v3799 = vpop.f32.mrb[0].mxu0
      %v3800 = vadd.f32 0.0, %v3799
      %v3801 = vpop.f32.mrb[0].mxu0
      %3802 = vmatprep.mubr.f32.mxu0 0.0
      %3803 = vmatmul.mubr.f32.gmra.mrb[0].mxu0 %v3595
      %v3804 = vpop.f32.mrb[0].mxu0
      %v3805 = vadd.f32 0.0, %v3804
      %v3806 = vpop.f32.mrb[0].mxu0
      %3807 = vmatprep.mubr.f32.mxu0 0.0
      %3808 = vmatmul.mubr.f32.gmra.mrb[0].mxu0 %v3598
      %v3809 = vpop.f32.mrb[0].mxu0
      %v3810 = vadd.f32 0.0, %v3809
      %v3811 = vpop.f32.mrb[0].mxu0
      %3812 = vmatprep.mubr.f32.mxu0 0.0
      %3813 = vmatmul.mubr.f32.gmra.mrb[0].mxu0 %v3601
      %v3814 = vpop.f32.mrb[0].mxu0
      %v3815 = vadd.f32 0.0, %v3814
      %v3816 = vpop.f32.mrb[0].mxu0
      %3817 = vmatprep.mubr.f32.mxu0 0.0
      %3818 = vmatmul.mubr.f32.gmra.mrb[0].mxu0 %v3604
      %v3819 = vpop.f32.mrb[0].mxu0
      %v3820 = vadd.f32 0.0, %v3819
      %v3821 = vpop.f32.mrb[0].mxu0
      %3822 = vmatprep.mubr.f32.mxu0 0.0
      %3823 = vmatmul.mubr.f32.gmra.mrb[0].mxu0 %v3607
      %v3824 = vpop.f32.mrb[0].mxu0
      %v3825 = vadd.f32 0.0, %v3824
      %v3826 = vpop.f32.mrb[0].mxu0
      %3827 = vmatprep.mubr.f32.mxu0 0.0
      %3828 = vmatmul.mubr.f32.gmra.mrb[0].mxu0 %v3610
      %v3829 = vpop.f32.mrb[0].mxu0
      %v3830 = vadd.f32 0.0, %v3829
      %v3831 = vpop.f32.mrb[0].mxu0
      %3832 = vmatprep.mubr.f32.mxu0 0.0
      %3833 = vmatmul.mubr.f32.gmra.mrb[0].mxu0 %v3613
      %v3834 = vpop.f32.mrb[0].mxu0
      %v3835 = vadd.f32 0.0, %v3834
      %v3836 = vpop.f32.mrb[0].mxu0
      %3837 = vmatprep.mubr.f32.mxu0 0.0
      %3838 = vmatmul.mubr.f32.gmra.mrb[0].mxu0 %v3616
      %v3839 = vpop.f32.mrb[0].mxu0
      %v3840 = vadd.f32 0.0, %v3839
      %v3841 = vpop.f32.mrb[0].mxu0
      %3842 = vdwg.mxu0
      %v3843 = vadd.f32 %v3448, %v3685
      %v3844 = vadd.f32 %v3449, %v3690
      %v3845 = vadd.f32 %v3450, %v3695
      %v3846 = vadd.f32 %v3451, %v3700
      %v3847 = vadd.f32 %v3452, %v3705
      %v3848 = vadd.f32 %v3453, %v3710
      %v3849 = vadd.f32 %v3454, %v3715
      %v3850 = vadd.f32 %v3455, %v3720
      %v3851 = vadd.f32 %v3456, %v3725
      %v3852 = vadd.f32 %v3457, %v3730
      %v3853 = vadd.f32 %v3458, %v3735
      %v3854 = vadd.f32 %v3459, %v3740
      %v3855 = vadd.f32 %v3460, %v3745
      %v3856 = vadd.f32 %v3461, %v3750
      %v3857 = vadd.f32 %v3462, %v3755
      %v3858 = vadd.f32 %v3463, %v3760
      %v3859 = vadd.f32 %v3464, %v3765
      %v3860 = vadd.f32 %v3465, %v3770
      %v3861 = vadd.f32 %v3466, %v3775
      %v3862 = vadd.f32 %v3467, %v3780
      %v3863 = vadd.f32 %v3468, %v3785
      %v3864 = vadd.f32 %v3469, %v3790
      %v3865 = vadd.f32 %v3470, %v3795
      %v3866 = vadd.f32 %v3471, %v3800
      %v3867 = vadd.f32 %v3472, %v3805
      %v3868 = vadd.f32 %v3473, %v3810
      %v3869 = vadd.f32 %v3474, %v3815
      %v3870 = vadd.f32 %v3475, %v3820
      %v3871 = vadd.f32 %v3476, %v3825
      %v3872 = vadd.f32 %v3477, %v3830
      %v3873 = vadd.f32 %v3478, %v3835
      %v3874 = vadd.f32 %v3479, %v3840
      %v3875 = vld [vmem:[%s3480 + $0x8] sm:$0xff]
      %v3876 = vld [vmem:[%s3480 + $0x10] sm:$0xff]
      %v3877 = vld [vmem:[%s3480 + $0x28] sm:$0xff]
      %v3878 = vld [vmem:[%s3480 + $0x30] sm:$0xff]
      %v3879 = vld [vmem:[%s3480 + $0x48] sm:$0xff]
      %v3880 = vld [vmem:[%s3480 + $0x50] sm:$0xff]
      %v3881 = vld [vmem:[%s3480 + $0x68] sm:$0xff]
      %v3882 = vld [vmem:[%s3480 + $0x70] sm:$0xff]
      %v3883 = vld [vmem:[%s3480 + $0x88] sm:$0xff]
      %v3884 = vld [vmem:[%s3480 + $0x90] sm:$0xff]
      %v3885 = vld [vmem:[%s3480 + $0xa8] sm:$0xff]
      %v3886 = vld [vmem:[%s3480 + $0xb0] sm:$0xff]
      %v3887 = vld [vmem:[%s3480 + $0xc8] sm:$0xff]
      %v3888 = vld [vmem:[%s3480 + $0xd0] sm:$0xff]
      %v3889 = vld [vmem:[%s3480 + $0xe8] sm:$0xff]
      %v3890 = vld [vmem:[%s3480 + $0xf0] sm:$0xff]
      %v3891 = vld [vmem:[%s3480 + $0x108] sm:$0xff]
      %v3892 = vld [vmem:[%s3480 + $0x110] sm:$0xff]
      %v3893 = vld [vmem:[%s3480 + $0x128] sm:$0xff]
      %v3894 = vld [vmem:[%s3480 + $0x130] sm:$0xff]
      %v3895 = vld [vmem:[%s3480 + $0x148] sm:$0xff]
      %v3896 = vld [vmem:[%s3480 + $0x150] sm:$0xff]
      %v3897 = vld [vmem:[%s3480 + $0x168] sm:$0xff]
      %v3898 = vld [vmem:[%s3480 + $0x170] sm:$0xff]
      %v3899 = vld [vmem:[%s3480 + $0x188] sm:$0xff]
      %v3900 = vld [vmem:[%s3480 + $0x190] sm:$0xff]
      %v3901 = vld [vmem:[%s3480 + $0x1a8] sm:$0xff]
      %v3902 = vld [vmem:[%s3480 + $0x1b0] sm:$0xff]
      %v3903 = vld [vmem:[%s3480 + $0x1c8] sm:$0xff]
      %v3904 = vld [vmem:[%s3480 + $0x1d0] sm:$0xff]
      %v3905 = vld [vmem:[%s3480 + $0x1e8] sm:$0xff]
      %v3906 = vld [vmem:[%s3480 + $0x1f0] sm:$0xff]
      %s3907 = scalar_lea.vmem %s3, 448
      %v3908 = vld [vmem:[%s3907] sm:$0xff]
      %v3909 = vld [vmem:[%s3907 + $0x8] sm:$0xff]
      %v3910 = vld [vmem:[%s3907 + $0x10] sm:$0xff]
      %v3911 = vld [vmem:[%s3907 + $0x18] sm:$0xff]
      %v3912 = vld [vmem:[%s3907 + $0x20] sm:$0xff]
      %v3913 = vld [vmem:[%s3907 + $0x28] sm:$0xff]
      %v3914 = vld [vmem:[%s3907 + $0x30] sm:$0xff]
      %v3915 = vld [vmem:[%s3907 + $0x38] sm:$0xff]
      %v3917 = vsel %vm676, %v3875, 0
      %v3920 = vsel %vm676, %v3876, 0
      %v3923 = vsel %vm676, %v3877, 0
      %v3926 = vsel %vm676, %v3878, 0
      %v3929 = vsel %vm676, %v3879, 0
      %v3932 = vsel %vm676, %v3880, 0
      %v3935 = vsel %vm676, %v3881, 0
      %v3938 = vsel %vm676, %v3882, 0
      %v3941 = vsel %vm676, %v3883, 0
      %v3944 = vsel %vm676, %v3884, 0
      %v3947 = vsel %vm676, %v3885, 0
      %v3950 = vsel %vm676, %v3886, 0
      %v3953 = vsel %vm676, %v3887, 0
      %v3956 = vsel %vm676, %v3888, 0
      %v3959 = vsel %vm676, %v3889, 0
      %v3962 = vsel %vm676, %v3890, 0
      %v3965 = vsel %vm676, %v3891, 0
      %v3968 = vsel %vm676, %v3892, 0
      %v3971 = vsel %vm676, %v3893, 0
      %v3974 = vsel %vm676, %v3894, 0
      %v3977 = vsel %vm676, %v3895, 0
      %v3980 = vsel %vm676, %v3896, 0
      %v3983 = vsel %vm676, %v3897, 0
      %v3986 = vsel %vm676, %v3898, 0
      %v3989 = vsel %vm676, %v3899, 0
      %v3992 = vsel %vm676, %v3900, 0
      %v3995 = vsel %vm676, %v3901, 0
      %v3998 = vsel %vm676, %v3902, 0
      %v4001 = vsel %vm676, %v3903, 0
      %v4004 = vsel %vm676, %v3904, 0
      %v4007 = vsel %vm676, %v3905, 0
      %v4010 = vsel %vm676, %v3906, 0
      %4012 = vmatprep.subr.mxu0 0.0
      %4013 = vmatpush1.msra.mxu0 %v3908
      %4014 = vmatprep.subr.mxu0 0.0
      %4015 = vmatpush1.msra.mxu0 %v3909
      %4016 = vmatprep.subr.mxu0 0.0
      %4017 = vmatpush1.msra.mxu0 %v3910
      %4018 = vmatprep.subr.mxu0 0.0
      %4019 = vmatpush1.msra.mxu0 %v3911
      %4020 = vmatprep.subr.mxu0 0.0
      %4021 = vmatpush1.msra.mxu0 %v3912
      %4022 = vmatprep.subr.mxu0 0.0
      %4023 = vmatpush1.msra.mxu0 %v3913
      %4024 = vmatprep.subr.mxu0 0.0
      %4025 = vmatpush1.msra.mxu0 %v3914
      %4026 = vmatprep.subr.mxu0 0.0
      %4027 = vmatpush1.msra.mxu0 %v3915
      %4028 = vmatprep.subr.mxu0 0.0
      %4029 = vmatpush1.msra.mxu0 0.0
      %4030 = vmatprep.subr.mxu0 0.0
      %4031 = vmatpush1.msra.mxu0 0.0
      %4032 = vmatprep.subr.mxu0 0.0
      %4033 = vmatpush1.msra.mxu0 0.0
      %4034 = vmatprep.subr.mxu0 0.0
      %4035 = vmatpush1.msra.mxu0 0.0
      %4036 = vmatprep.subr.mxu0 0.0
      %4037 = vmatpush1.msra.mxu0 0.0
      %4038 = vmatprep.subr.mxu0 0.0
      %4039 = vmatpush1.msra.mxu0 0.0
      %4040 = vmatprep.subr.mxu0 0.0
      %4041 = vmatpush1.msra.mxu0 0.0
      %4042 = vmatprep.subr.mxu0 0.0
      %4043 = vmatpush1.msra.mxu0 0.0
      %4044 = vmatprep.subr.mxu0 0.0
      %4045 = vmatpush1.msra.mxu0 0.0
      %4046 = vmatprep.subr.mxu0 0.0
      %4047 = vmatpush1.msra.mxu0 0.0
      %4048 = vmatprep.subr.mxu0 0.0
      %4049 = vmatpush1.msra.mxu0 0.0
      %4050 = vmatprep.subr.mxu0 0.0
      %4051 = vmatpush1.msra.mxu0 0.0
      %4052 = vmatprep.subr.mxu0 0.0
      %4053 = vmatpush1.msra.mxu0 0.0
      %4054 = vmatprep.subr.mxu0 0.0
      %4055 = vmatpush1.msra.mxu0 0.0
      %4056 = vmatprep.subr.mxu0 0.0
      %4057 = vmatpush1.msra.mxu0 0.0
      %4058 = vmatprep.subr.mxu0 0.0
      %4059 = vmatpush1.msra.mxu0 0.0
      %4060 = vmatprep.subr.mxu0 0.0
      %4061 = vmatpush1.msra.mxu0 0.0
      %4062 = vmatprep.subr.mxu0 0.0
      %4063 = vmatpush1.msra.mxu0 0.0
      %4064 = vmatprep.subr.mxu0 0.0
      %4065 = vmatpush1.msra.mxu0 0.0
      %4066 = vmatprep.subr.mxu0 0.0
      %4067 = vmatpush1.msra.mxu0 0.0
      %4068 = vmatprep.subr.mxu0 0.0
      %4069 = vmatpush1.msra.mxu0 0.0
      %4070 = vmatprep.subr.mxu0 0.0
      %4071 = vmatpush1.msra.mxu0 0.0
      %4072 = vmatprep.subr.mxu0 0.0
      %4073 = vmatpush1.msra.mxu0 0.0
      %4074 = vmatprep.subr.mxu0 0.0
      %4075 = vmatpush1.msra.mxu0 0.0
      %4076 = vmatprep.mubr.f32.mxu0 0.0
      %4077 = vmatmul.mubr.f32.gmra.mrb[0].mxu0 %v3917
      %v4078 = vpop.f32.mrb[0].mxu0
      %v4079 = vadd.f32 0.0, %v4078
      %v4080 = vpop.f32.mrb[0].mxu0
      %4081 = vmatprep.mubr.f32.mxu0 0.0
      %4082 = vmatmul.mubr.f32.gmra.mrb[0].mxu0 %v3920
      %v4083 = vpop.f32.mrb[0].mxu0
      %v4084 = vadd.f32 0.0, %v4083
      %v4085 = vpop.f32.mrb[0].mxu0
      %4086 = vmatprep.mubr.f32.mxu0 0.0
      %4087 = vmatmul.mubr.f32.gmra.mrb[0].mxu0 %v3923
      %v4088 = vpop.f32.mrb[0].mxu0
      %v4089 = vadd.f32 0.0, %v4088
      %v4090 = vpop.f32.mrb[0].mxu0
      %4091 = vmatprep.mubr.f32.mxu0 0.0
      %4092 = vmatmul.mubr.f32.gmra.mrb[0].mxu0 %v3926
      %v4093 = vpop.f32.mrb[0].mxu0
      %v4094 = vadd.f32 0.0, %v4093
      %v4095 = vpop.f32.mrb[0].mxu0
      %4096 = vmatprep.mubr.f32.mxu0 0.0
      %4097 = vmatmul.mubr.f32.gmra.mrb[0].mxu0 %v3929
      %v4098 = vpop.f32.mrb[0].mxu0
      %v4099 = vadd.f32 0.0, %v4098
      %v4100 = vpop.f32.mrb[0].mxu0
      %4101 = vmatprep.mubr.f32.mxu0 0.0
      %4102 = vmatmul.mubr.f32.gmra.mrb[0].mxu0 %v3932
      %v4103 = vpop.f32.mrb[0].mxu0
      %v4104 = vadd.f32 0.0, %v4103
      %v4105 = vpop.f32.mrb[0].mxu0
      %4106 = vmatprep.mubr.f32.mxu0 0.0
      %4107 = vmatmul.mubr.f32.gmra.mrb[0].mxu0 %v3935
      %v4108 = vpop.f32.mrb[0].mxu0
      %v4109 = vadd.f32 0.0, %v4108
      %v4110 = vpop.f32.mrb[0].mxu0
      %4111 = vmatprep.mubr.f32.mxu0 0.0
      %4112 = vmatmul.mubr.f32.gmra.mrb[0].mxu0 %v3938
      %v4113 = vpop.f32.mrb[0].mxu0
      %v4114 = vadd.f32 0.0, %v4113
      %v4115 = vpop.f32.mrb[0].mxu0
      %4116 = vmatprep.mubr.f32.mxu0 0.0
      %4117 = vmatmul.mubr.f32.gmra.mrb[0].mxu0 %v3941
      %v4118 = vpop.f32.mrb[0].mxu0
      %v4119 = vadd.f32 0.0, %v4118
      %v4120 = vpop.f32.mrb[0].mxu0
      %4121 = vmatprep.mubr.f32.mxu0 0.0
      %4122 = vmatmul.mubr.f32.gmra.mrb[0].mxu0 %v3944
      %v4123 = vpop.f32.mrb[0].mxu0
      %v4124 = vadd.f32 0.0, %v4123
      %v4125 = vpop.f32.mrb[0].mxu0
      %4126 = vmatprep.mubr.f32.mxu0 0.0
      %4127 = vmatmul.mubr.f32.gmra.mrb[0].mxu0 %v3947
      %v4128 = vpop.f32.mrb[0].mxu0
      %v4129 = vadd.f32 0.0, %v4128
      %v4130 = vpop.f32.mrb[0].mxu0
      %4131 = vmatprep.mubr.f32.mxu0 0.0
      %4132 = vmatmul.mubr.f32.gmra.mrb[0].mxu0 %v3950
      %v4133 = vpop.f32.mrb[0].mxu0
      %v4134 = vadd.f32 0.0, %v4133
      %v4135 = vpop.f32.mrb[0].mxu0
      %4136 = vmatprep.mubr.f32.mxu0 0.0
      %4137 = vmatmul.mubr.f32.gmra.mrb[0].mxu0 %v3953
      %v4138 = vpop.f32.mrb[0].mxu0
      %v4139 = vadd.f32 0.0, %v4138
      %v4140 = vpop.f32.mrb[0].mxu0
      %4141 = vmatprep.mubr.f32.mxu0 0.0
      %4142 = vmatmul.mubr.f32.gmra.mrb[0].mxu0 %v3956
      %v4143 = vpop.f32.mrb[0].mxu0
      %v4144 = vadd.f32 0.0, %v4143
      %v4145 = vpop.f32.mrb[0].mxu0
      %4146 = vmatprep.mubr.f32.mxu0 0.0
      %4147 = vmatmul.mubr.f32.gmra.mrb[0].mxu0 %v3959
      %v4148 = vpop.f32.mrb[0].mxu0
      %v4149 = vadd.f32 0.0, %v4148
      %v4150 = vpop.f32.mrb[0].mxu0
      %4151 = vmatprep.mubr.f32.mxu0 0.0
      %4152 = vmatmul.mubr.f32.gmra.mrb[0].mxu0 %v3962
      %v4153 = vpop.f32.mrb[0].mxu0
      %v4154 = vadd.f32 0.0, %v4153
      %v4155 = vpop.f32.mrb[0].mxu0
      %4156 = vmatprep.mubr.f32.mxu0 0.0
      %4157 = vmatmul.mubr.f32.gmra.mrb[0].mxu0 %v3965
      %v4158 = vpop.f32.mrb[0].mxu0
      %v4159 = vadd.f32 0.0, %v4158
      %v4160 = vpop.f32.mrb[0].mxu0
      %4161 = vmatprep.mubr.f32.mxu0 0.0
      %4162 = vmatmul.mubr.f32.gmra.mrb[0].mxu0 %v3968
      %v4163 = vpop.f32.mrb[0].mxu0
      %v4164 = vadd.f32 0.0, %v4163
      %v4165 = vpop.f32.mrb[0].mxu0
      %4166 = vmatprep.mubr.f32.mxu0 0.0
      %4167 = vmatmul.mubr.f32.gmra.mrb[0].mxu0 %v3971
      %v4168 = vpop.f32.mrb[0].mxu0
      %v4169 = vadd.f32 0.0, %v4168
      %v4170 = vpop.f32.mrb[0].mxu0
      %4171 = vmatprep.mubr.f32.mxu0 0.0
      %4172 = vmatmul.mubr.f32.gmra.mrb[0].mxu0 %v3974
      %v4173 = vpop.f32.mrb[0].mxu0
      %v4174 = vadd.f32 0.0, %v4173
      %v4175 = vpop.f32.mrb[0].mxu0
      %4176 = vmatprep.mubr.f32.mxu0 0.0
      %4177 = vmatmul.mubr.f32.gmra.mrb[0].mxu0 %v3977
      %v4178 = vpop.f32.mrb[0].mxu0
      %v4179 = vadd.f32 0.0, %v4178
      %v4180 = vpop.f32.mrb[0].mxu0
      %4181 = vmatprep.mubr.f32.mxu0 0.0
      %4182 = vmatmul.mubr.f32.gmra.mrb[0].mxu0 %v3980
      %v4183 = vpop.f32.mrb[0].mxu0
      %v4184 = vadd.f32 0.0, %v4183
      %v4185 = vpop.f32.mrb[0].mxu0
      %4186 = vmatprep.mubr.f32.mxu0 0.0
      %4187 = vmatmul.mubr.f32.gmra.mrb[0].mxu0 %v3983
      %v4188 = vpop.f32.mrb[0].mxu0
      %v4189 = vadd.f32 0.0, %v4188
      %v4190 = vpop.f32.mrb[0].mxu0
      %4191 = vmatprep.mubr.f32.mxu0 0.0
      %4192 = vmatmul.mubr.f32.gmra.mrb[0].mxu0 %v3986
      %v4193 = vpop.f32.mrb[0].mxu0
      %v4194 = vadd.f32 0.0, %v4193
      %v4195 = vpop.f32.mrb[0].mxu0
      %4196 = vmatprep.mubr.f32.mxu0 0.0
      %4197 = vmatmul.mubr.f32.gmra.mrb[0].mxu0 %v3989
      %v4198 = vpop.f32.mrb[0].mxu0
      %v4199 = vadd.f32 0.0, %v4198
      %v4200 = vpop.f32.mrb[0].mxu0
      %4201 = vmatprep.mubr.f32.mxu0 0.0
      %4202 = vmatmul.mubr.f32.gmra.mrb[0].mxu0 %v3992
      %v4203 = vpop.f32.mrb[0].mxu0
      %v4204 = vadd.f32 0.0, %v4203
      %v4205 = vpop.f32.mrb[0].mxu0
      %4206 = vmatprep.mubr.f32.mxu0 0.0
      %4207 = vmatmul.mubr.f32.gmra.mrb[0].mxu0 %v3995
      %v4208 = vpop.f32.mrb[0].mxu0
      %v4209 = vadd.f32 0.0, %v4208
      %v4210 = vpop.f32.mrb[0].mxu0
      %4211 = vmatprep.mubr.f32.mxu0 0.0
      %4212 = vmatmul.mubr.f32.gmra.mrb[0].mxu0 %v3998
      %v4213 = vpop.f32.mrb[0].mxu0
      %v4214 = vadd.f32 0.0, %v4213
      %v4215 = vpop.f32.mrb[0].mxu0
      %4216 = vmatprep.mubr.f32.mxu0 0.0
      %4217 = vmatmul.mubr.f32.gmra.mrb[0].mxu0 %v4001
      %v4218 = vpop.f32.mrb[0].mxu0
      %v4219 = vadd.f32 0.0, %v4218
      %v4220 = vpop.f32.mrb[0].mxu0
      %4221 = vmatprep.mubr.f32.mxu0 0.0
      %4222 = vmatmul.mubr.f32.gmra.mrb[0].mxu0 %v4004
      %v4223 = vpop.f32.mrb[0].mxu0
      %v4224 = vadd.f32 0.0, %v4223
      %v4225 = vpop.f32.mrb[0].mxu0
      %4226 = vmatprep.mubr.f32.mxu0 0.0
      %4227 = vmatmul.mubr.f32.gmra.mrb[0].mxu0 %v4007
      %v4228 = vpop.f32.mrb[0].mxu0
      %v4229 = vadd.f32 0.0, %v4228
      %v4230 = vpop.f32.mrb[0].mxu0
      %4231 = vmatprep.mubr.f32.mxu0 0.0
      %4232 = vmatmul.mubr.f32.gmra.mrb[0].mxu0 %v4010
      %v4233 = vpop.f32.mrb[0].mxu0
      %v4234 = vadd.f32 0.0, %v4233
      %v4235 = vpop.f32.mrb[0].mxu0
      %4236 = vdwg.mxu0
      %v4237 = vadd.f32 %v3843, %v4079
      %v4238 = vadd.f32 %v3844, %v4084
      %v4239 = vadd.f32 %v3845, %v4089
      %v4240 = vadd.f32 %v3846, %v4094
      %v4241 = vadd.f32 %v3847, %v4099
      %v4242 = vadd.f32 %v3848, %v4104
      %v4243 = vadd.f32 %v3849, %v4109
      %v4244 = vadd.f32 %v3850, %v4114
      %v4245 = vadd.f32 %v3851, %v4119
      %v4246 = vadd.f32 %v3852, %v4124
      %v4247 = vadd.f32 %v3853, %v4129
      %v4248 = vadd.f32 %v3854, %v4134
      %v4249 = vadd.f32 %v3855, %v4139
      %v4250 = vadd.f32 %v3856, %v4144
      %v4251 = vadd.f32 %v3857, %v4149
      %v4252 = vadd.f32 %v3858, %v4154
      %v4253 = vadd.f32 %v3859, %v4159
      %v4254 = vadd.f32 %v3860, %v4164
      %v4255 = vadd.f32 %v3861, %v4169
      %v4256 = vadd.f32 %v3862, %v4174
      %v4257 = vadd.f32 %v3863, %v4179
      %v4258 = vadd.f32 %v3864, %v4184
      %v4259 = vadd.f32 %v3865, %v4189
      %v4260 = vadd.f32 %v3866, %v4194
      %v4261 = vadd.f32 %v3867, %v4199
      %v4262 = vadd.f32 %v3868, %v4204
      %v4263 = vadd.f32 %v3869, %v4209
      %v4264 = vadd.f32 %v3870, %v4214
      %v4265 = vadd.f32 %v3871, %v4219
      %v4266 = vadd.f32 %v3872, %v4224
      %v4267 = vadd.f32 %v3873, %v4229
      %v4268 = vadd.f32 %v3874, %v4234
      %v4269 = vld [vmem:[%s3480 + $0x9] sm:$0xff]
      %v4270 = vld [vmem:[%s3480 + $0x11] sm:$0xff]
      %v4271 = vld [vmem:[%s3480 + $0x29] sm:$0xff]
      %v4272 = vld [vmem:[%s3480 + $0x31] sm:$0xff]
      %v4273 = vld [vmem:[%s3480 + $0x49] sm:$0xff]
      %v4274 = vld [vmem:[%s3480 + $0x51] sm:$0xff]
      %v4275 = vld [vmem:[%s3480 + $0x69] sm:$0xff]
      %v4276 = vld [vmem:[%s3480 + $0x71] sm:$0xff]
      %v4277 = vld [vmem:[%s3480 + $0x89] sm:$0xff]
      %v4278 = vld [vmem:[%s3480 + $0x91] sm:$0xff]
      %v4279 = vld [vmem:[%s3480 + $0xa9] sm:$0xff]
      %v4280 = vld [vmem:[%s3480 + $0xb1] sm:$0xff]
      %v4281 = vld [vmem:[%s3480 + $0xc9] sm:$0xff]
      %v4282 = vld [vmem:[%s3480 + $0xd1] sm:$0xff]
      %v4283 = vld [vmem:[%s3480 + $0xe9] sm:$0xff]
      %v4284 = vld [vmem:[%s3480 + $0xf1] sm:$0xff]
      %v4285 = vld [vmem:[%s3480 + $0x109] sm:$0xff]
      %v4286 = vld [vmem:[%s3480 + $0x111] sm:$0xff]
      %v4287 = vld [vmem:[%s3480 + $0x129] sm:$0xff]
      %v4288 = vld [vmem:[%s3480 + $0x131] sm:$0xff]
      %v4289 = vld [vmem:[%s3480 + $0x149] sm:$0xff]
      %v4290 = vld [vmem:[%s3480 + $0x151] sm:$0xff]
      %v4291 = vld [vmem:[%s3480 + $0x169] sm:$0xff]
      %v4292 = vld [vmem:[%s3480 + $0x171] sm:$0xff]
      %v4293 = vld [vmem:[%s3480 + $0x189] sm:$0xff]
      %v4294 = vld [vmem:[%s3480 + $0x191] sm:$0xff]
      %v4295 = vld [vmem:[%s3480 + $0x1a9] sm:$0xff]
      %v4296 = vld [vmem:[%s3480 + $0x1b1] sm:$0xff]
      %v4297 = vld [vmem:[%s3480 + $0x1c9] sm:$0xff]
      %v4298 = vld [vmem:[%s3480 + $0x1d1] sm:$0xff]
      %v4299 = vld [vmem:[%s3480 + $0x1e9] sm:$0xff]
      %v4300 = vld [vmem:[%s3480 + $0x1f1] sm:$0xff]
      %s4301 = scalar_lea.vmem %s3, 512
      %v4302 = vld [vmem:[%s4301] sm:$0xff]
      %v4303 = vld [vmem:[%s4301 + $0x8] sm:$0xff]
      %v4304 = vld [vmem:[%s4301 + $0x10] sm:$0xff]
      %v4305 = vld [vmem:[%s4301 + $0x18] sm:$0xff]
      %v4306 = vld [vmem:[%s4301 + $0x20] sm:$0xff]
      %v4307 = vld [vmem:[%s4301 + $0x28] sm:$0xff]
      %v4308 = vld [vmem:[%s4301 + $0x30] sm:$0xff]
      %v4309 = vld [vmem:[%s4301 + $0x38] sm:$0xff]
      %v4311 = vsel %vm676, %v4269, 0
      %v4314 = vsel %vm676, %v4270, 0
      %v4317 = vsel %vm676, %v4271, 0
      %v4320 = vsel %vm676, %v4272, 0
      %v4323 = vsel %vm676, %v4273, 0
      %v4326 = vsel %vm676, %v4274, 0
      %v4329 = vsel %vm676, %v4275, 0
      %v4332 = vsel %vm676, %v4276, 0
      %v4335 = vsel %vm676, %v4277, 0
      %v4338 = vsel %vm676, %v4278, 0
      %v4341 = vsel %vm676, %v4279, 0
      %v4344 = vsel %vm676, %v4280, 0
      %v4347 = vsel %vm676, %v4281, 0
      %v4350 = vsel %vm676, %v4282, 0
      %v4353 = vsel %vm676, %v4283, 0
      %v4356 = vsel %vm676, %v4284, 0
      %v4359 = vsel %vm676, %v4285, 0
      %v4362 = vsel %vm676, %v4286, 0
      %v4365 = vsel %vm676, %v4287, 0
      %v4368 = vsel %vm676, %v4288, 0
      %v4371 = vsel %vm676, %v4289, 0
      %v4374 = vsel %vm676, %v4290, 0
      %v4377 = vsel %vm676, %v4291, 0
      %v4380 = vsel %vm676, %v4292, 0
      %v4383 = vsel %vm676, %v4293, 0
      %v4386 = vsel %vm676, %v4294, 0
      %v4389 = vsel %vm676, %v4295, 0
      %v4392 = vsel %vm676, %v4296, 0
      %v4395 = vsel %vm676, %v4297, 0
      %v4398 = vsel %vm676, %v4298, 0
      %v4401 = vsel %vm676, %v4299, 0
      %v4404 = vsel %vm676, %v4300, 0
      %4406 = vmatprep.subr.mxu0 0.0
      %4407 = vmatpush1.msra.mxu0 %v4302
      %4408 = vmatprep.subr.mxu0 0.0
      %4409 = vmatpush1.msra.mxu0 %v4303
      %4410 = vmatprep.subr.mxu0 0.0
      %4411 = vmatpush1.msra.mxu0 %v4304
      %4412 = vmatprep.subr.mxu0 0.0
      %4413 = vmatpush1.msra.mxu0 %v4305
      %4414 = vmatprep.subr.mxu0 0.0
      %4415 = vmatpush1.msra.mxu0 %v4306
      %4416 = vmatprep.subr.mxu0 0.0
      %4417 = vmatpush1.msra.mxu0 %v4307
      %4418 = vmatprep.subr.mxu0 0.0
      %4419 = vmatpush1.msra.mxu0 %v4308
      %4420 = vmatprep.subr.mxu0 0.0
      %4421 = vmatpush1.msra.mxu0 %v4309
      %4422 = vmatprep.subr.mxu0 0.0
      %4423 = vmatpush1.msra.mxu0 0.0
      %4424 = vmatprep.subr.mxu0 0.0
      %4425 = vmatpush1.msra.mxu0 0.0
      %4426 = vmatprep.subr.mxu0 0.0
      %4427 = vmatpush1.msra.mxu0 0.0
      %4428 = vmatprep.subr.mxu0 0.0
      %4429 = vmatpush1.msra.mxu0 0.0
      %4430 = vmatprep.subr.mxu0 0.0
      %4431 = vmatpush1.msra.mxu0 0.0
      %4432 = vmatprep.subr.mxu0 0.0
      %4433 = vmatpush1.msra.mxu0 0.0
      %4434 = vmatprep.subr.mxu0 0.0
      %4435 = vmatpush1.msra.mxu0 0.0
      %4436 = vmatprep.subr.mxu0 0.0
      %4437 = vmatpush1.msra.mxu0 0.0
      %4438 = vmatprep.subr.mxu0 0.0
      %4439 = vmatpush1.msra.mxu0 0.0
      %4440 = vmatprep.subr.mxu0 0.0
      %4441 = vmatpush1.msra.mxu0 0.0
      %4442 = vmatprep.subr.mxu0 0.0
      %4443 = vmatpush1.msra.mxu0 0.0
      %4444 = vmatprep.subr.mxu0 0.0
      %4445 = vmatpush1.msra.mxu0 0.0
      %4446 = vmatprep.subr.mxu0 0.0
      %4447 = vmatpush1.msra.mxu0 0.0
      %4448 = vmatprep.subr.mxu0 0.0
      %4449 = vmatpush1.msra.mxu0 0.0
      %4450 = vmatprep.subr.mxu0 0.0
      %4451 = vmatpush1.msra.mxu0 0.0
      %4452 = vmatprep.subr.mxu0 0.0
      %4453 = vmatpush1.msra.mxu0 0.0
      %4454 = vmatprep.subr.mxu0 0.0
      %4455 = vmatpush1.msra.mxu0 0.0
      %4456 = vmatprep.subr.mxu0 0.0
      %4457 = vmatpush1.msra.mxu0 0.0
      %4458 = vmatprep.subr.mxu0 0.0
      %4459 = vmatpush1.msra.mxu0 0.0
      %4460 = vmatprep.subr.mxu0 0.0
      %4461 = vmatpush1.msra.mxu0 0.0
      %4462 = vmatprep.subr.mxu0 0.0
      %4463 = vmatpush1.msra.mxu0 0.0
      %4464 = vmatprep.subr.mxu0 0.0
      %4465 = vmatpush1.msra.mxu0 0.0
      %4466 = vmatprep.subr.mxu0 0.0
      %4467 = vmatpush1.msra.mxu0 0.0
      %4468 = vmatprep.subr.mxu0 0.0
      %4469 = vmatpush1.msra.mxu0 0.0
      %4470 = vmatprep.mubr.f32.mxu0 0.0
      %4471 = vmatmul.mubr.f32.gmra.mrb[0].mxu0 %v4311
      %v4472 = vpop.f32.mrb[0].mxu0
      %v4473 = vadd.f32 0.0, %v4472
      %v4474 = vpop.f32.mrb[0].mxu0
      %4475 = vmatprep.mubr.f32.mxu0 0.0
      %4476 = vmatmul.mubr.f32.gmra.mrb[0].mxu0 %v4314
      %v4477 = vpop.f32.mrb[0].mxu0
      %v4478 = vadd.f32 0.0, %v4477
      %v4479 = vpop.f32.mrb[0].mxu0
      %4480 = vmatprep.mubr.f32.mxu0 0.0
      %4481 = vmatmul.mubr.f32.gmra.mrb[0].mxu0 %v4317
      %v4482 = vpop.f32.mrb[0].mxu0
      %v4483 = vadd.f32 0.0, %v4482
      %v4484 = vpop.f32.mrb[0].mxu0
      %4485 = vmatprep.mubr.f32.mxu0 0.0
      %4486 = vmatmul.mubr.f32.gmra.mrb[0].mxu0 %v4320
      %v4487 = vpop.f32.mrb[0].mxu0
      %v4488 = vadd.f32 0.0, %v4487
      %v4489 = vpop.f32.mrb[0].mxu0
      %4490 = vmatprep.mubr.f32.mxu0 0.0
      %4491 = vmatmul.mubr.f32.gmra.mrb[0].mxu0 %v4323
      %v4492 = vpop.f32.mrb[0].mxu0
      %v4493 = vadd.f32 0.0, %v4492
      %v4494 = vpop.f32.mrb[0].mxu0
      %4495 = vmatprep.mubr.f32.mxu0 0.0
      %4496 = vmatmul.mubr.f32.gmra.mrb[0].mxu0 %v4326
      %v4497 = vpop.f32.mrb[0].mxu0
      %v4498 = vadd.f32 0.0, %v4497
      %v4499 = vpop.f32.mrb[0].mxu0
      %4500 = vmatprep.mubr.f32.mxu0 0.0
      %4501 = vmatmul.mubr.f32.gmra.mrb[0].mxu0 %v4329
      %v4502 = vpop.f32.mrb[0].mxu0
      %v4503 = vadd.f32 0.0, %v4502
      %v4504 = vpop.f32.mrb[0].mxu0
      %4505 = vmatprep.mubr.f32.mxu0 0.0
      %4506 = vmatmul.mubr.f32.gmra.mrb[0].mxu0 %v4332
      %v4507 = vpop.f32.mrb[0].mxu0
      %v4508 = vadd.f32 0.0, %v4507
      %v4509 = vpop.f32.mrb[0].mxu0
      %4510 = vmatprep.mubr.f32.mxu0 0.0
      %4511 = vmatmul.mubr.f32.gmra.mrb[0].mxu0 %v4335
      %v4512 = vpop.f32.mrb[0].mxu0
      %v4513 = vadd.f32 0.0, %v4512
      %v4514 = vpop.f32.mrb[0].mxu0
      %4515 = vmatprep.mubr.f32.mxu0 0.0
      %4516 = vmatmul.mubr.f32.gmra.mrb[0].mxu0 %v4338
      %v4517 = vpop.f32.mrb[0].mxu0
      %v4518 = vadd.f32 0.0, %v4517
      %v4519 = vpop.f32.mrb[0].mxu0
      %4520 = vmatprep.mubr.f32.mxu0 0.0
      %4521 = vmatmul.mubr.f32.gmra.mrb[0].mxu0 %v4341
      %v4522 = vpop.f32.mrb[0].mxu0
      %v4523 = vadd.f32 0.0, %v4522
      %v4524 = vpop.f32.mrb[0].mxu0
      %4525 = vmatprep.mubr.f32.mxu0 0.0
      %4526 = vmatmul.mubr.f32.gmra.mrb[0].mxu0 %v4344
      %v4527 = vpop.f32.mrb[0].mxu0
      %v4528 = vadd.f32 0.0, %v4527
      %v4529 = vpop.f32.mrb[0].mxu0
      %4530 = vmatprep.mubr.f32.mxu0 0.0
      %4531 = vmatmul.mubr.f32.gmra.mrb[0].mxu0 %v4347
      %v4532 = vpop.f32.mrb[0].mxu0
      %v4533 = vadd.f32 0.0, %v4532
      %v4534 = vpop.f32.mrb[0].mxu0
      %4535 = vmatprep.mubr.f32.mxu0 0.0
      %4536 = vmatmul.mubr.f32.gmra.mrb[0].mxu0 %v4350
      %v4537 = vpop.f32.mrb[0].mxu0
      %v4538 = vadd.f32 0.0, %v4537
      %v4539 = vpop.f32.mrb[0].mxu0
      %4540 = vmatprep.mubr.f32.mxu0 0.0
      %4541 = vmatmul.mubr.f32.gmra.mrb[0].mxu0 %v4353
      %v4542 = vpop.f32.mrb[0].mxu0
      %v4543 = vadd.f32 0.0, %v4542
      %v4544 = vpop.f32.mrb[0].mxu0
      %4545 = vmatprep.mubr.f32.mxu0 0.0
      %4546 = vmatmul.mubr.f32.gmra.mrb[0].mxu0 %v4356
      %v4547 = vpop.f32.mrb[0].mxu0
      %v4548 = vadd.f32 0.0, %v4547
      %v4549 = vpop.f32.mrb[0].mxu0
      %4550 = vmatprep.mubr.f32.mxu0 0.0
      %4551 = vmatmul.mubr.f32.gmra.mrb[0].mxu0 %v4359
      %v4552 = vpop.f32.mrb[0].mxu0
      %v4553 = vadd.f32 0.0, %v4552
      %v4554 = vpop.f32.mrb[0].mxu0
      %4555 = vmatprep.mubr.f32.mxu0 0.0
      %4556 = vmatmul.mubr.f32.gmra.mrb[0].mxu0 %v4362
      %v4557 = vpop.f32.mrb[0].mxu0
      %v4558 = vadd.f32 0.0, %v4557
      %v4559 = vpop.f32.mrb[0].mxu0
      %4560 = vmatprep.mubr.f32.mxu0 0.0
      %4561 = vmatmul.mubr.f32.gmra.mrb[0].mxu0 %v4365
      %v4562 = vpop.f32.mrb[0].mxu0
      %v4563 = vadd.f32 0.0, %v4562
      %v4564 = vpop.f32.mrb[0].mxu0
      %4565 = vmatprep.mubr.f32.mxu0 0.0
      %4566 = vmatmul.mubr.f32.gmra.mrb[0].mxu0 %v4368
      %v4567 = vpop.f32.mrb[0].mxu0
      %v4568 = vadd.f32 0.0, %v4567
      %v4569 = vpop.f32.mrb[0].mxu0
      %4570 = vmatprep.mubr.f32.mxu0 0.0
      %4571 = vmatmul.mubr.f32.gmra.mrb[0].mxu0 %v4371
      %v4572 = vpop.f32.mrb[0].mxu0
      %v4573 = vadd.f32 0.0, %v4572
      %v4574 = vpop.f32.mrb[0].mxu0
      %4575 = vmatprep.mubr.f32.mxu0 0.0
      %4576 = vmatmul.mubr.f32.gmra.mrb[0].mxu0 %v4374
      %v4577 = vpop.f32.mrb[0].mxu0
      %v4578 = vadd.f32 0.0, %v4577
      %v4579 = vpop.f32.mrb[0].mxu0
      %4580 = vmatprep.mubr.f32.mxu0 0.0
      %4581 = vmatmul.mubr.f32.gmra.mrb[0].mxu0 %v4377
      %v4582 = vpop.f32.mrb[0].mxu0
      %v4583 = vadd.f32 0.0, %v4582
      %v4584 = vpop.f32.mrb[0].mxu0
      %4585 = vmatprep.mubr.f32.mxu0 0.0
      %4586 = vmatmul.mubr.f32.gmra.mrb[0].mxu0 %v4380
      %v4587 = vpop.f32.mrb[0].mxu0
      %v4588 = vadd.f32 0.0, %v4587
      %v4589 = vpop.f32.mrb[0].mxu0
      %4590 = vmatprep.mubr.f32.mxu0 0.0
      %4591 = vmatmul.mubr.f32.gmra.mrb[0].mxu0 %v4383
      %v4592 = vpop.f32.mrb[0].mxu0
      %v4593 = vadd.f32 0.0, %v4592
      %v4594 = vpop.f32.mrb[0].mxu0
      %4595 = vmatprep.mubr.f32.mxu0 0.0
      %4596 = vmatmul.mubr.f32.gmra.mrb[0].mxu0 %v4386
      %v4597 = vpop.f32.mrb[0].mxu0
      %v4598 = vadd.f32 0.0, %v4597
      %v4599 = vpop.f32.mrb[0].mxu0
      %4600 = vmatprep.mubr.f32.mxu0 0.0
      %4601 = vmatmul.mubr.f32.gmra.mrb[0].mxu0 %v4389
      %v4602 = vpop.f32.mrb[0].mxu0
      %v4603 = vadd.f32 0.0, %v4602
      %v4604 = vpop.f32.mrb[0].mxu0
      %4605 = vmatprep.mubr.f32.mxu0 0.0
      %4606 = vmatmul.mubr.f32.gmra.mrb[0].mxu0 %v4392
      %v4607 = vpop.f32.mrb[0].mxu0
      %v4608 = vadd.f32 0.0, %v4607
      %v4609 = vpop.f32.mrb[0].mxu0
      %4610 = vmatprep.mubr.f32.mxu0 0.0
      %4611 = vmatmul.mubr.f32.gmra.mrb[0].mxu0 %v4395
      %v4612 = vpop.f32.mrb[0].mxu0
      %v4613 = vadd.f32 0.0, %v4612
      %v4614 = vpop.f32.mrb[0].mxu0
      %4615 = vmatprep.mubr.f32.mxu0 0.0
      %4616 = vmatmul.mubr.f32.gmra.mrb[0].mxu0 %v4398
      %v4617 = vpop.f32.mrb[0].mxu0
      %v4618 = vadd.f32 0.0, %v4617
      %v4619 = vpop.f32.mrb[0].mxu0
      %4620 = vmatprep.mubr.f32.mxu0 0.0
      %4621 = vmatmul.mubr.f32.gmra.mrb[0].mxu0 %v4401
      %v4622 = vpop.f32.mrb[0].mxu0
      %v4623 = vadd.f32 0.0, %v4622
      %v4624 = vpop.f32.mrb[0].mxu0
      %4625 = vmatprep.mubr.f32.mxu0 0.0
      %4626 = vmatmul.mubr.f32.gmra.mrb[0].mxu0 %v4404
      %v4627 = vpop.f32.mrb[0].mxu0
      %v4628 = vadd.f32 0.0, %v4627
      %v4629 = vpop.f32.mrb[0].mxu0
      %4630 = vdwg.mxu0
      %v4631 = vadd.f32 %v4237, %v4473
      %v4632 = vadd.f32 %v4238, %v4478
      %v4633 = vadd.f32 %v4239, %v4483
      %v4634 = vadd.f32 %v4240, %v4488
      %v4635 = vadd.f32 %v4241, %v4493
      %v4636 = vadd.f32 %v4242, %v4498
      %v4637 = vadd.f32 %v4243, %v4503
      %v4638 = vadd.f32 %v4244, %v4508
      %v4639 = vadd.f32 %v4245, %v4513
      %v4640 = vadd.f32 %v4246, %v4518
      %v4641 = vadd.f32 %v4247, %v4523
      %v4642 = vadd.f32 %v4248, %v4528
      %v4643 = vadd.f32 %v4249, %v4533
      %v4644 = vadd.f32 %v4250, %v4538
      %v4645 = vadd.f32 %v4251, %v4543
      %v4646 = vadd.f32 %v4252, %v4548
      %v4647 = vadd.f32 %v4253, %v4553
      %v4648 = vadd.f32 %v4254, %v4558
      %v4649 = vadd.f32 %v4255, %v4563
      %v4650 = vadd.f32 %v4256, %v4568
      %v4651 = vadd.f32 %v4257, %v4573
      %v4652 = vadd.f32 %v4258, %v4578
      %v4653 = vadd.f32 %v4259, %v4583
      %v4654 = vadd.f32 %v4260, %v4588
      %v4655 = vadd.f32 %v4261, %v4593
      %v4656 = vadd.f32 %v4262, %v4598
      %v4657 = vadd.f32 %v4263, %v4603
      %v4658 = vadd.f32 %v4264, %v4608
      %v4659 = vadd.f32 %v4265, %v4613
      %v4660 = vadd.f32 %v4266, %v4618
      %v4661 = vadd.f32 %v4267, %v4623
      %v4662 = vadd.f32 %v4268, %v4628
      %v4663 = vld [vmem:[%s5 + $0x4] sm:$0x1]
      %v4664 = vlaneseq
      %v4665 = vshrl.u32 %v4664, 7
      %v4666 = vsub.s32 0, %v4665
      %v4667 = vrot.slane %v4663, %v4666
      %v4668 = vadd.f32 %v4631, %v4667
      %v4669 = vadd.f32 %v4632, %v4667
      %v4670 = vadd.f32 %v4633, %v4667
      %v4671 = vadd.f32 %v4634, %v4667
      %v4672 = vadd.f32 %v4635, %v4667
      %v4673 = vadd.f32 %v4636, %v4667
      %v4674 = vadd.f32 %v4637, %v4667
      %v4675 = vadd.f32 %v4638, %v4667
      %v4676 = vadd.f32 %v4639, %v4667
      %v4677 = vadd.f32 %v4640, %v4667
      %v4678 = vadd.f32 %v4641, %v4667
      %v4679 = vadd.f32 %v4642, %v4667
      %v4680 = vadd.f32 %v4643, %v4667
      %v4681 = vadd.f32 %v4644, %v4667
      %v4682 = vadd.f32 %v4645, %v4667
      %v4683 = vadd.f32 %v4646, %v4667
      %v4684 = vadd.f32 %v4647, %v4667
      %v4685 = vadd.f32 %v4648, %v4667
      %v4686 = vadd.f32 %v4649, %v4667
      %v4687 = vadd.f32 %v4650, %v4667
      %v4688 = vadd.f32 %v4651, %v4667
      %v4689 = vadd.f32 %v4652, %v4667
      %v4690 = vadd.f32 %v4653, %v4667
      %v4691 = vadd.f32 %v4654, %v4667
      %v4692 = vadd.f32 %v4655, %v4667
      %v4693 = vadd.f32 %v4656, %v4667
      %v4694 = vadd.f32 %v4657, %v4667
      %v4695 = vadd.f32 %v4658, %v4667
      %v4696 = vadd.f32 %v4659, %v4667
      %v4697 = vadd.f32 %v4660, %v4667
      %v4698 = vadd.f32 %v4661, %v4667
      %v4699 = vadd.f32 %v4662, %v4667
      %v4700 = vmax.f32 %v4668, 0.0
      %v4701 = vmax.f32 %v4669, 0.0
      %v4702 = vmax.f32 %v4670, 0.0
      %v4703 = vmax.f32 %v4671, 0.0
      %v4704 = vmax.f32 %v4672, 0.0
      %v4705 = vmax.f32 %v4673, 0.0
      %v4706 = vmax.f32 %v4674, 0.0
      %v4707 = vmax.f32 %v4675, 0.0
      %v4708 = vmax.f32 %v4676, 0.0
      %v4709 = vmax.f32 %v4677, 0.0
      %v4710 = vmax.f32 %v4678, 0.0
      %v4711 = vmax.f32 %v4679, 0.0
      %v4712 = vmax.f32 %v4680, 0.0
      %v4713 = vmax.f32 %v4681, 0.0
      %v4714 = vmax.f32 %v4682, 0.0
      %v4715 = vmax.f32 %v4683, 0.0
      %v4716 = vmax.f32 %v4684, 0.0
      %v4717 = vmax.f32 %v4685, 0.0
      %v4718 = vmax.f32 %v4686, 0.0
      %v4719 = vmax.f32 %v4687, 0.0
      %v4720 = vmax.f32 %v4688, 0.0
      %v4721 = vmax.f32 %v4689, 0.0
      %v4722 = vmax.f32 %v4690, 0.0
      %v4723 = vmax.f32 %v4691, 0.0
      %v4724 = vmax.f32 %v4692, 0.0
      %v4725 = vmax.f32 %v4693, 0.0
      %v4726 = vmax.f32 %v4694, 0.0
      %v4727 = vmax.f32 %v4695, 0.0
      %v4728 = vmax.f32 %v4696, 0.0
      %v4729 = vmax.f32 %v4697, 0.0
      %v4730 = vmax.f32 %v4698, 0.0
      %v4731 = vmax.f32 %v4699, 0.0
      %v4732 = vld [vmem:[%s5 + $0x5] sm:$0x1]
      %v4733 = vlaneseq
      %v4734 = vshrl.u32 %v4733, 7
      %v4735 = vsub.s32 0, %v4734
      %v4736 = vrot.slane %v4732, %v4735
      %v4737 = vmul.f32 %v4700, %v4736
      %v4738 = vmul.f32 %v4701, %v4736
      %v4739 = vmul.f32 %v4702, %v4736
      %v4740 = vmul.f32 %v4703, %v4736
      %v4741 = vmul.f32 %v4704, %v4736
      %v4742 = vmul.f32 %v4705, %v4736
      %v4743 = vmul.f32 %v4706, %v4736
      %v4744 = vmul.f32 %v4707, %v4736
      %v4745 = vmul.f32 %v4708, %v4736
      %v4746 = vmul.f32 %v4709, %v4736
      %v4747 = vmul.f32 %v4710, %v4736
      %v4748 = vmul.f32 %v4711, %v4736
      %v4749 = vmul.f32 %v4712, %v4736
      %v4750 = vmul.f32 %v4713, %v4736
      %v4751 = vmul.f32 %v4714, %v4736
      %v4752 = vmul.f32 %v4715, %v4736
      %v4753 = vmul.f32 %v4716, %v4736
      %v4754 = vmul.f32 %v4717, %v4736
      %v4755 = vmul.f32 %v4718, %v4736
      %v4756 = vmul.f32 %v4719, %v4736
      %v4757 = vmul.f32 %v4720, %v4736
      %v4758 = vmul.f32 %v4721, %v4736
      %v4759 = vmul.f32 %v4722, %v4736
      %v4760 = vmul.f32 %v4723, %v4736
      %v4761 = vmul.f32 %v4724, %v4736
      %v4762 = vmul.f32 %v4725, %v4736
      %v4763 = vmul.f32 %v4726, %v4736
      %v4764 = vmul.f32 %v4727, %v4736
      %v4765 = vmul.f32 %v4728, %v4736
      %v4766 = vmul.f32 %v4729, %v4736
      %v4767 = vmul.f32 %v4730, %v4736
      %v4768 = vmul.f32 %v4731, %v4736
      %v4769 = vld [vmem:[%s5 + $0x6] sm:$0x1]
      %v4770 = vlaneseq
      %v4771 = vshrl.u32 %v4770, 7
      %v4772 = vsub.s32 0, %v4771
      %v4773 = vrot.slane %v4769, %v4772
      %v4774 = vadd.f32 %v4737, %v4773
      %v4775 = vadd.f32 %v4738, %v4773
      %v4776 = vadd.f32 %v4739, %v4773
      %v4777 = vadd.f32 %v4740, %v4773
      %v4778 = vadd.f32 %v4741, %v4773
      %v4779 = vadd.f32 %v4742, %v4773
      %v4780 = vadd.f32 %v4743, %v4773
      %v4781 = vadd.f32 %v4744, %v4773
      %v4782 = vadd.f32 %v4745, %v4773
      %v4783 = vadd.f32 %v4746, %v4773
      %v4784 = vadd.f32 %v4747, %v4773
      %v4785 = vadd.f32 %v4748, %v4773
      %v4786 = vadd.f32 %v4749, %v4773
      %v4787 = vadd.f32 %v4750, %v4773
      %v4788 = vadd.f32 %v4751, %v4773
      %v4789 = vadd.f32 %v4752, %v4773
      %v4790 = vadd.f32 %v4753, %v4773
      %v4791 = vadd.f32 %v4754, %v4773
      %v4792 = vadd.f32 %v4755, %v4773
      %v4793 = vadd.f32 %v4756, %v4773
      %v4794 = vadd.f32 %v4757, %v4773
      %v4795 = vadd.f32 %v4758, %v4773
      %v4796 = vadd.f32 %v4759, %v4773
      %v4797 = vadd.f32 %v4760, %v4773
      %v4798 = vadd.f32 %v4761, %v4773
      %v4799 = vadd.f32 %v4762, %v4773
      %v4800 = vadd.f32 %v4763, %v4773
      %v4801 = vadd.f32 %v4764, %v4773
      %v4802 = vadd.f32 %v4765, %v4773
      %v4803 = vadd.f32 %v4766, %v4773
      %v4804 = vadd.f32 %v4767, %v4773
      %v4805 = vadd.f32 %v4768, %v4773
      %vm4806 = vcmask 261120
      %4807 = vst.msk [vmem:[#allocation3] sm:$0xff] %vm4806, 0.0
      %4808 = vst.msk [vmem:[#allocation3 + $0x8] sm:$0xff] %vm4806, 0.0
      %4809 = vst.msk [vmem:[#allocation3 + $0x10] sm:$0xff] %vm4806, 0.0
      %4810 = vst.msk [vmem:[#allocation3 + $0x18] sm:$0xff] %vm4806, 0.0
      %4811 = vst.msk [vmem:[#allocation3 + $0x20] sm:$0xff] %vm4806, 0.0
      %4812 = vst.msk [vmem:[#allocation3 + $0x28] sm:$0xff] %vm4806, 0.0
      %4813 = vst.msk [vmem:[#allocation3 + $0x30] sm:$0xff] %vm4806, 0.0
      %4814 = vst.msk [vmem:[#allocation3 + $0x38] sm:$0xff] %vm4806, 0.0
      %s4815 = scalar_lea.vmem [#allocation3], 576
      %4816 = vst.msk [vmem:[%s4815] sm:$0xff] %vm4806, 0.0
      %4817 = vst.msk [vmem:[%s4815 + $0x8] sm:$0xff] %vm4806, 0.0
      %4818 = vst.msk [vmem:[%s4815 + $0x10] sm:$0xff] %vm4806, 0.0
      %4819 = vst.msk [vmem:[%s4815 + $0x18] sm:$0xff] %vm4806, 0.0
      %4820 = vst.msk [vmem:[%s4815 + $0x20] sm:$0xff] %vm4806, 0.0
      %4821 = vst.msk [vmem:[%s4815 + $0x28] sm:$0xff] %vm4806, 0.0
      %4822 = vst.msk [vmem:[%s4815 + $0x30] sm:$0xff] %vm4806, 0.0
      %4823 = vst.msk [vmem:[%s4815 + $0x38] sm:$0xff] %vm4806, 0.0
      %vm4824 = vcmask 254976
      %4825 = vst.msk [vmem:[#allocation3 + $0x6] sm:$0x3] %vm4824, 0.0
      %4826 = vst.msk [vmem:[#allocation3 + $0x26] sm:$0x3] %vm4824, 0.0
      %4827 = vst.msk [vmem:[#allocation3 + $0x46] sm:$0x3] %vm4824, 0.0
      %4828 = vst.msk [vmem:[#allocation3 + $0x66] sm:$0x3] %vm4824, 0.0
      %4829 = vst.msk [vmem:[#allocation3 + $0x86] sm:$0x3] %vm4824, 0.0
      %4830 = vst.msk [vmem:[#allocation3 + $0xa6] sm:$0x3] %vm4824, 0.0
      %4831 = vst.msk [vmem:[#allocation3 + $0xc6] sm:$0x3] %vm4824, 0.0
      %4832 = vst.msk [vmem:[#allocation3 + $0xe6] sm:$0x3] %vm4824, 0.0
      %4833 = vst.msk [vmem:[#allocation3 + $0x106] sm:$0x3] %vm4824, 0.0
      %4834 = vst.msk [vmem:[#allocation3 + $0x126] sm:$0x3] %vm4824, 0.0
      %4835 = vst.msk [vmem:[#allocation3 + $0x146] sm:$0x3] %vm4824, 0.0
      %4836 = vst.msk [vmem:[#allocation3 + $0x166] sm:$0x3] %vm4824, 0.0
      %4837 = vst.msk [vmem:[#allocation3 + $0x186] sm:$0x3] %vm4824, 0.0
      %4838 = vst.msk [vmem:[#allocation3 + $0x1a6] sm:$0x3] %vm4824, 0.0
      %4839 = vst.msk [vmem:[#allocation3 + $0x1c6] sm:$0x3] %vm4824, 0.0
      %4840 = vst.msk [vmem:[#allocation3 + $0x1e6] sm:$0x3] %vm4824, 0.0
      %4841 = vst.msk [vmem:[#allocation3 + $0x206] sm:$0x3] %vm4824, 0.0
      %4842 = vst.msk [vmem:[#allocation3 + $0x226] sm:$0x3] %vm4824, 0.0
      %4843 = vst.msk [vmem:[#allocation3 + $0x246] sm:$0x3] %vm4824, 0.0
      %4844 = vst.msk [vmem:[#allocation3 + $0x266] sm:$0x3] %vm4824, 0.0
      %4845 = vst.msk [vmem:[#allocation3 + $0x18] sm:$0x3] %vm4824, 0.0
      %4846 = vst.msk [vmem:[#allocation3 + $0x38] sm:$0x3] %vm4824, 0.0
      %4847 = vst.msk [vmem:[#allocation3 + $0x58] sm:$0x3] %vm4824, 0.0
      %4848 = vst.msk [vmem:[#allocation3 + $0x78] sm:$0x3] %vm4824, 0.0
      %4849 = vst.msk [vmem:[#allocation3 + $0x98] sm:$0x3] %vm4824, 0.0
      %4850 = vst.msk [vmem:[#allocation3 + $0xb8] sm:$0x3] %vm4824, 0.0
      %4851 = vst.msk [vmem:[#allocation3 + $0xd8] sm:$0x3] %vm4824, 0.0
      %4852 = vst.msk [vmem:[#allocation3 + $0xf8] sm:$0x3] %vm4824, 0.0
      %4853 = vst.msk [vmem:[#allocation3 + $0x118] sm:$0x3] %vm4824, 0.0
      %4854 = vst.msk [vmem:[#allocation3 + $0x138] sm:$0x3] %vm4824, 0.0
      %4855 = vst.msk [vmem:[#allocation3 + $0x158] sm:$0x3] %vm4824, 0.0
      %4856 = vst.msk [vmem:[#allocation3 + $0x178] sm:$0x3] %vm4824, 0.0
      %4857 = vst.msk [vmem:[#allocation3 + $0x198] sm:$0x3] %vm4824, 0.0
      %4858 = vst.msk [vmem:[#allocation3 + $0x1b8] sm:$0x3] %vm4824, 0.0
      %4859 = vst.msk [vmem:[#allocation3 + $0x1d8] sm:$0x3] %vm4824, 0.0
      %4860 = vst.msk [vmem:[#allocation3 + $0x1f8] sm:$0x3] %vm4824, 0.0
      %4861 = vst.msk [vmem:[#allocation3 + $0x218] sm:$0x3] %vm4824, 0.0
      %4862 = vst.msk [vmem:[#allocation3 + $0x238] sm:$0x3] %vm4824, 0.0
      %4863 = vst.msk [vmem:[#allocation3 + $0x258] sm:$0x3] %vm4824, 0.0
      %4864 = vst.msk [vmem:[#allocation3 + $0x278] sm:$0x3] %vm4824, 0.0
      %s4865 = scalar_lea.vmem [#allocation3], 64
      %4866 = vst.msk [vmem:[%s4865 + $0x8] sm:$0xff] %vm4806, %v4774
      %4867 = vst.msk [vmem:[%s4865 + $0x10] sm:$0xff] %vm4806, %v4775
      %4868 = vst.msk [vmem:[%s4865 + $0x28] sm:$0xff] %vm4806, %v4776
      %4869 = vst.msk [vmem:[%s4865 + $0x30] sm:$0xff] %vm4806, %v4777
      %4870 = vst.msk [vmem:[%s4865 + $0x48] sm:$0xff] %vm4806, %v4778
      %4871 = vst.msk [vmem:[%s4865 + $0x50] sm:$0xff] %vm4806, %v4779
      %4872 = vst.msk [vmem:[%s4865 + $0x68] sm:$0xff] %vm4806, %v4780
      %4873 = vst.msk [vmem:[%s4865 + $0x70] sm:$0xff] %vm4806, %v4781
      %4874 = vst.msk [vmem:[%s4865 + $0x88] sm:$0xff] %vm4806, %v4782
      %4875 = vst.msk [vmem:[%s4865 + $0x90] sm:$0xff] %vm4806, %v4783
      %4876 = vst.msk [vmem:[%s4865 + $0xa8] sm:$0xff] %vm4806, %v4784
      %4877 = vst.msk [vmem:[%s4865 + $0xb0] sm:$0xff] %vm4806, %v4785
      %4878 = vst.msk [vmem:[%s4865 + $0xc8] sm:$0xff] %vm4806, %v4786
      %4879 = vst.msk [vmem:[%s4865 + $0xd0] sm:$0xff] %vm4806, %v4787
      %4880 = vst.msk [vmem:[%s4865 + $0xe8] sm:$0xff] %vm4806, %v4788
      %4881 = vst.msk [vmem:[%s4865 + $0xf0] sm:$0xff] %vm4806, %v4789
      %4882 = vst.msk [vmem:[%s4865 + $0x108] sm:$0xff] %vm4806, %v4790
      %4883 = vst.msk [vmem:[%s4865 + $0x110] sm:$0xff] %vm4806, %v4791
      %4884 = vst.msk [vmem:[%s4865 + $0x128] sm:$0xff] %vm4806, %v4792
      %4885 = vst.msk [vmem:[%s4865 + $0x130] sm:$0xff] %vm4806, %v4793
      %4886 = vst.msk [vmem:[%s4865 + $0x148] sm:$0xff] %vm4806, %v4794
      %4887 = vst.msk [vmem:[%s4865 + $0x150] sm:$0xff] %vm4806, %v4795
      %4888 = vst.msk [vmem:[%s4865 + $0x168] sm:$0xff] %vm4806, %v4796
      %4889 = vst.msk [vmem:[%s4865 + $0x170] sm:$0xff] %vm4806, %v4797
      %4890 = vst.msk [vmem:[%s4865 + $0x188] sm:$0xff] %vm4806, %v4798
      %4891 = vst.msk [vmem:[%s4865 + $0x190] sm:$0xff] %vm4806, %v4799
      %4892 = vst.msk [vmem:[%s4865 + $0x1a8] sm:$0xff] %vm4806, %v4800
      %4893 = vst.msk [vmem:[%s4865 + $0x1b0] sm:$0xff] %vm4806, %v4801
      %4894 = vst.msk [vmem:[%s4865 + $0x1c8] sm:$0xff] %vm4806, %v4802
      %4895 = vst.msk [vmem:[%s4865 + $0x1d0] sm:$0xff] %vm4806, %v4803
      %4896 = vst.msk [vmem:[%s4865 + $0x1e8] sm:$0xff] %vm4806, %v4804
      %4897 = vst.msk [vmem:[%s4865 + $0x1f0] sm:$0xff] %vm4806, %v4805
      %v4898 = vld [vmem:[#allocation3 + $0x6] sm:$0xff]
      %v4899 = vld [vmem:[#allocation3 + $0xe] sm:$0xff]
      %v4900 = vld [vmem:[#allocation3 + $0x26] sm:$0xff]
      %v4901 = vld [vmem:[#allocation3 + $0x2e] sm:$0xff]
      %v4902 = vld [vmem:[#allocation3 + $0x46] sm:$0xff]
      %v4903 = vld [vmem:[#allocation3 + $0x4e] sm:$0xff]
      %v4904 = vld [vmem:[#allocation3 + $0x66] sm:$0xff]
      %v4905 = vld [vmem:[#allocation3 + $0x6e] sm:$0xff]
      %v4906 = vld [vmem:[#allocation3 + $0x86] sm:$0xff]
      %v4907 = vld [vmem:[#allocation3 + $0x8e] sm:$0xff]
      %v4908 = vld [vmem:[#allocation3 + $0xa6] sm:$0xff]
      %v4909 = vld [vmem:[#allocation3 + $0xae] sm:$0xff]
      %v4910 = vld [vmem:[#allocation3 + $0xc6] sm:$0xff]
      %v4911 = vld [vmem:[#allocation3 + $0xce] sm:$0xff]
      %v4912 = vld [vmem:[#allocation3 + $0xe6] sm:$0xff]
      %v4913 = vld [vmem:[#allocation3 + $0xee] sm:$0xff]
      %v4914 = vld [vmem:[#allocation3 + $0x106] sm:$0xff]
      %v4915 = vld [vmem:[#allocation3 + $0x10e] sm:$0xff]
      %v4916 = vld [vmem:[#allocation3 + $0x126] sm:$0xff]
      %v4917 = vld [vmem:[#allocation3 + $0x12e] sm:$0xff]
      %v4918 = vld [vmem:[#allocation3 + $0x146] sm:$0xff]
      %v4919 = vld [vmem:[#allocation3 + $0x14e] sm:$0xff]
      %v4920 = vld [vmem:[#allocation3 + $0x166] sm:$0xff]
      %v4921 = vld [vmem:[#allocation3 + $0x16e] sm:$0xff]
      %v4922 = vld [vmem:[#allocation3 + $0x186] sm:$0xff]
      %v4923 = vld [vmem:[#allocation3 + $0x18e] sm:$0xff]
      %v4924 = vld [vmem:[#allocation3 + $0x1a6] sm:$0xff]
      %v4925 = vld [vmem:[#allocation3 + $0x1ae] sm:$0xff]
      %v4926 = vld [vmem:[#allocation3 + $0x1c6] sm:$0xff]
      %v4927 = vld [vmem:[#allocation3 + $0x1ce] sm:$0xff]
      %v4928 = vld [vmem:[#allocation3 + $0x1e6] sm:$0xff]
      %v4929 = vld [vmem:[#allocation3 + $0x1ee] sm:$0xff]
      %v4930 = vld [vmem:[%s4] sm:$0x1]
      %v4931 = vlaneseq
      %v4932 = vshrl.u32 %v4931, 7
      %v4933 = vsub.s32 0, %v4932
      %v4934 = vrot.slane %v4930, %v4933
      %v4935 = vmul.f32 %v4898, %v4934
      %v4936 = vmul.f32 %v4899, %v4934
      %v4937 = vmul.f32 %v4900, %v4934
      %v4938 = vmul.f32 %v4901, %v4934
      %v4939 = vmul.f32 %v4902, %v4934
      %v4940 = vmul.f32 %v4903, %v4934
      %v4941 = vmul.f32 %v4904, %v4934
      %v4942 = vmul.f32 %v4905, %v4934
      %v4943 = vmul.f32 %v4906, %v4934
      %v4944 = vmul.f32 %v4907, %v4934
      %v4945 = vmul.f32 %v4908, %v4934
      %v4946 = vmul.f32 %v4909, %v4934
      %v4947 = vmul.f32 %v4910, %v4934
      %v4948 = vmul.f32 %v4911, %v4934
      %v4949 = vmul.f32 %v4912, %v4934
      %v4950 = vmul.f32 %v4913, %v4934
      %v4951 = vmul.f32 %v4914, %v4934
      %v4952 = vmul.f32 %v4915, %v4934
      %v4953 = vmul.f32 %v4916, %v4934
      %v4954 = vmul.f32 %v4917, %v4934
      %v4955 = vmul.f32 %v4918, %v4934
      %v4956 = vmul.f32 %v4919, %v4934
      %v4957 = vmul.f32 %v4920, %v4934
      %v4958 = vmul.f32 %v4921, %v4934
      %v4959 = vmul.f32 %v4922, %v4934
      %v4960 = vmul.f32 %v4923, %v4934
      %v4961 = vmul.f32 %v4924, %v4934
      %v4962 = vmul.f32 %v4925, %v4934
      %v4963 = vmul.f32 %v4926, %v4934
      %v4964 = vmul.f32 %v4927, %v4934
      %v4965 = vmul.f32 %v4928, %v4934
      %v4966 = vmul.f32 %v4929, %v4934
      %v4967 = vadd.f32 %v4935, 0.0
      %v4968 = vadd.f32 %v4936, 0.0
      %v4969 = vadd.f32 %v4937, 0.0
      %v4970 = vadd.f32 %v4938, 0.0
      %v4971 = vadd.f32 %v4939, 0.0
      %v4972 = vadd.f32 %v4940, 0.0
      %v4973 = vadd.f32 %v4941, 0.0
      %v4974 = vadd.f32 %v4942, 0.0
      %v4975 = vadd.f32 %v4943, 0.0
      %v4976 = vadd.f32 %v4944, 0.0
      %v4977 = vadd.f32 %v4945, 0.0
      %v4978 = vadd.f32 %v4946, 0.0
      %v4979 = vadd.f32 %v4947, 0.0
      %v4980 = vadd.f32 %v4948, 0.0
      %v4981 = vadd.f32 %v4949, 0.0
      %v4982 = vadd.f32 %v4950, 0.0
      %v4983 = vadd.f32 %v4951, 0.0
      %v4984 = vadd.f32 %v4952, 0.0
      %v4985 = vadd.f32 %v4953, 0.0
      %v4986 = vadd.f32 %v4954, 0.0
      %v4987 = vadd.f32 %v4955, 0.0
      %v4988 = vadd.f32 %v4956, 0.0
      %v4989 = vadd.f32 %v4957, 0.0
      %v4990 = vadd.f32 %v4958, 0.0
      %v4991 = vadd.f32 %v4959, 0.0
      %v4992 = vadd.f32 %v4960, 0.0
      %v4993 = vadd.f32 %v4961, 0.0
      %v4994 = vadd.f32 %v4962, 0.0
      %v4995 = vadd.f32 %v4963, 0.0
      %v4996 = vadd.f32 %v4964, 0.0
      %v4997 = vadd.f32 %v4965, 0.0
      %v4998 = vadd.f32 %v4966, 0.0
      %v4999 = vld [vmem:[#allocation3 + $0x7] sm:$0xff]
      %v5000 = vld [vmem:[#allocation3 + $0xf] sm:$0xff]
      %v5001 = vld [vmem:[#allocation3 + $0x27] sm:$0xff]
      %v5002 = vld [vmem:[#allocation3 + $0x2f] sm:$0xff]
      %v5003 = vld [vmem:[#allocation3 + $0x47] sm:$0xff]
      %v5004 = vld [vmem:[#allocation3 + $0x4f] sm:$0xff]
      %v5005 = vld [vmem:[#allocation3 + $0x67] sm:$0xff]
      %v5006 = vld [vmem:[#allocation3 + $0x6f] sm:$0xff]
      %v5007 = vld [vmem:[#allocation3 + $0x87] sm:$0xff]
      %v5008 = vld [vmem:[#allocation3 + $0x8f] sm:$0xff]
      %v5009 = vld [vmem:[#allocation3 + $0xa7] sm:$0xff]
      %v5010 = vld [vmem:[#allocation3 + $0xaf] sm:$0xff]
      %v5011 = vld [vmem:[#allocation3 + $0xc7] sm:$0xff]
      %v5012 = vld [vmem:[#allocation3 + $0xcf] sm:$0xff]
      %v5013 = vld [vmem:[#allocation3 + $0xe7] sm:$0xff]
      %v5014 = vld [vmem:[#allocation3 + $0xef] sm:$0xff]
      %v5015 = vld [vmem:[#allocation3 + $0x107] sm:$0xff]
      %v5016 = vld [vmem:[#allocation3 + $0x10f] sm:$0xff]
      %v5017 = vld [vmem:[#allocation3 + $0x127] sm:$0xff]
      %v5018 = vld [vmem:[#allocation3 + $0x12f] sm:$0xff]
      %v5019 = vld [vmem:[#allocation3 + $0x147] sm:$0xff]
      %v5020 = vld [vmem:[#allocation3 + $0x14f] sm:$0xff]
      %v5021 = vld [vmem:[#allocation3 + $0x167] sm:$0xff]
      %v5022 = vld [vmem:[#allocation3 + $0x16f] sm:$0xff]
      %v5023 = vld [vmem:[#allocation3 + $0x187] sm:$0xff]
      %v5024 = vld [vmem:[#allocation3 + $0x18f] sm:$0xff]
      %v5025 = vld [vmem:[#allocation3 + $0x1a7] sm:$0xff]
      %v5026 = vld [vmem:[#allocation3 + $0x1af] sm:$0xff]
      %v5027 = vld [vmem:[#allocation3 + $0x1c7] sm:$0xff]
      %v5028 = vld [vmem:[#allocation3 + $0x1cf] sm:$0xff]
      %v5029 = vld [vmem:[#allocation3 + $0x1e7] sm:$0xff]
      %v5030 = vld [vmem:[#allocation3 + $0x1ef] sm:$0xff]
      %v5031 = vld [vmem:[%s4 + $0x1] sm:$0x1]
      %v5032 = vlaneseq
      %v5033 = vshrl.u32 %v5032, 7
      %v5034 = vsub.s32 0, %v5033
      %v5035 = vrot.slane %v5031, %v5034
      %v5036 = vmul.f32 %v4999, %v5035
      %v5037 = vmul.f32 %v5000, %v5035
      %v5038 = vmul.f32 %v5001, %v5035
      %v5039 = vmul.f32 %v5002, %v5035
      %v5040 = vmul.f32 %v5003, %v5035
      %v5041 = vmul.f32 %v5004, %v5035
      %v5042 = vmul.f32 %v5005, %v5035
      %v5043 = vmul.f32 %v5006, %v5035
      %v5044 = vmul.f32 %v5007, %v5035
      %v5045 = vmul.f32 %v5008, %v5035
      %v5046 = vmul.f32 %v5009, %v5035
      %v5047 = vmul.f32 %v5010, %v5035
      %v5048 = vmul.f32 %v5011, %v5035
      %v5049 = vmul.f32 %v5012, %v5035
      %v5050 = vmul.f32 %v5013, %v5035
      %v5051 = vmul.f32 %v5014, %v5035
      %v5052 = vmul.f32 %v5015, %v5035
      %v5053 = vmul.f32 %v5016, %v5035
      %v5054 = vmul.f32 %v5017, %v5035
      %v5055 = vmul.f32 %v5018, %v5035
      %v5056 = vmul.f32 %v5019, %v5035
      %v5057 = vmul.f32 %v5020, %v5035
      %v5058 = vmul.f32 %v5021, %v5035
      %v5059 = vmul.f32 %v5022, %v5035
      %v5060 = vmul.f32 %v5023, %v5035
      %v5061 = vmul.f32 %v5024, %v5035
      %v5062 = vmul.f32 %v5025, %v5035
      %v5063 = vmul.f32 %v5026, %v5035
      %v5064 = vmul.f32 %v5027, %v5035
      %v5065 = vmul.f32 %v5028, %v5035
      %v5066 = vmul.f32 %v5029, %v5035
      %v5067 = vmul.f32 %v5030, %v5035
      %v5068 = vadd.f32 %v4967, %v5036
      %v5069 = vadd.f32 %v4968, %v5037
      %v5070 = vadd.f32 %v4969, %v5038
      %v5071 = vadd.f32 %v4970, %v5039
      %v5072 = vadd.f32 %v4971, %v5040
      %v5073 = vadd.f32 %v4972, %v5041
      %v5074 = vadd.f32 %v4973, %v5042
      %v5075 = vadd.f32 %v4974, %v5043
      %v5076 = vadd.f32 %v4975, %v5044
      %v5077 = vadd.f32 %v4976, %v5045
      %v5078 = vadd.f32 %v4977, %v5046
      %v5079 = vadd.f32 %v4978, %v5047
      %v5080 = vadd.f32 %v4979, %v5048
      %v5081 = vadd.f32 %v4980, %v5049
      %v5082 = vadd.f32 %v4981, %v5050
      %v5083 = vadd.f32 %v4982, %v5051
      %v5084 = vadd.f32 %v4983, %v5052
      %v5085 = vadd.f32 %v4984, %v5053
      %v5086 = vadd.f32 %v4985, %v5054
      %v5087 = vadd.f32 %v4986, %v5055
      %v5088 = vadd.f32 %v4987, %v5056
      %v5089 = vadd.f32 %v4988, %v5057
      %v5090 = vadd.f32 %v4989, %v5058
      %v5091 = vadd.f32 %v4990, %v5059
      %v5092 = vadd.f32 %v4991, %v5060
      %v5093 = vadd.f32 %v4992, %v5061
      %v5094 = vadd.f32 %v4993, %v5062
      %v5095 = vadd.f32 %v4994, %v5063
      %v5096 = vadd.f32 %v4995, %v5064
      %v5097 = vadd.f32 %v4996, %v5065
      %v5098 = vadd.f32 %v4997, %v5066
      %v5099 = vadd.f32 %v4998, %v5067
      %v5100 = vld [vmem:[#allocation3 + $0x8] sm:$0xff]
      %v5101 = vld [vmem:[#allocation3 + $0x10] sm:$0xff]
      %v5102 = vld [vmem:[#allocation3 + $0x28] sm:$0xff]
      %v5103 = vld [vmem:[#allocation3 + $0x30] sm:$0xff]
      %v5104 = vld [vmem:[#allocation3 + $0x48] sm:$0xff]
      %v5105 = vld [vmem:[#allocation3 + $0x50] sm:$0xff]
      %v5106 = vld [vmem:[#allocation3 + $0x68] sm:$0xff]
      %v5107 = vld [vmem:[#allocation3 + $0x70] sm:$0xff]
      %v5108 = vld [vmem:[#allocation3 + $0x88] sm:$0xff]
      %v5109 = vld [vmem:[#allocation3 + $0x90] sm:$0xff]
      %v5110 = vld [vmem:[#allocation3 + $0xa8] sm:$0xff]
      %v5111 = vld [vmem:[#allocation3 + $0xb0] sm:$0xff]
      %v5112 = vld [vmem:[#allocation3 + $0xc8] sm:$0xff]
      %v5113 = vld [vmem:[#allocation3 + $0xd0] sm:$0xff]
      %v5114 = vld [vmem:[#allocation3 + $0xe8] sm:$0xff]
      %v5115 = vld [vmem:[#allocation3 + $0xf0] sm:$0xff]
      %v5116 = vld [vmem:[#allocation3 + $0x108] sm:$0xff]
      %v5117 = vld [vmem:[#allocation3 + $0x110] sm:$0xff]
      %v5118 = vld [vmem:[#allocation3 + $0x128] sm:$0xff]
      %v5119 = vld [vmem:[#allocation3 + $0x130] sm:$0xff]
      %v5120 = vld [vmem:[#allocation3 + $0x148] sm:$0xff]
      %v5121 = vld [vmem:[#allocation3 + $0x150] sm:$0xff]
      %v5122 = vld [vmem:[#allocation3 + $0x168] sm:$0xff]
      %v5123 = vld [vmem:[#allocation3 + $0x170] sm:$0xff]
      %v5124 = vld [vmem:[#allocation3 + $0x188] sm:$0xff]
      %v5125 = vld [vmem:[#allocation3 + $0x190] sm:$0xff]
      %v5126 = vld [vmem:[#allocation3 + $0x1a8] sm:$0xff]
      %v5127 = vld [vmem:[#allocation3 + $0x1b0] sm:$0xff]
      %v5128 = vld [vmem:[#allocation3 + $0x1c8] sm:$0xff]
      %v5129 = vld [vmem:[#allocation3 + $0x1d0] sm:$0xff]
      %v5130 = vld [vmem:[#allocation3 + $0x1e8] sm:$0xff]
      %v5131 = vld [vmem:[#allocation3 + $0x1f0] sm:$0xff]
      %v5132 = vld [vmem:[%s4 + $0x2] sm:$0x1]
      %v5133 = vlaneseq
      %v5134 = vshrl.u32 %v5133, 7
      %v5135 = vsub.s32 0, %v5134
      %v5136 = vrot.slane %v5132, %v5135
      %v5137 = vmul.f32 %v5100, %v5136
      %v5138 = vmul.f32 %v5101, %v5136
      %v5139 = vmul.f32 %v5102, %v5136
      %v5140 = vmul.f32 %v5103, %v5136
      %v5141 = vmul.f32 %v5104, %v5136
      %v5142 = vmul.f32 %v5105, %v5136
      %v5143 = vmul.f32 %v5106, %v5136
      %v5144 = vmul.f32 %v5107, %v5136
      %v5145 = vmul.f32 %v5108, %v5136
      %v5146 = vmul.f32 %v5109, %v5136
      %v5147 = vmul.f32 %v5110, %v5136
      %v5148 = vmul.f32 %v5111, %v5136
      %v5149 = vmul.f32 %v5112, %v5136
      %v5150 = vmul.f32 %v5113, %v5136
      %v5151 = vmul.f32 %v5114, %v5136
      %v5152 = vmul.f32 %v5115, %v5136
      %v5153 = vmul.f32 %v5116, %v5136
      %v5154 = vmul.f32 %v5117, %v5136
      %v5155 = vmul.f32 %v5118, %v5136
      %v5156 = vmul.f32 %v5119, %v5136
      %v5157 = vmul.f32 %v5120, %v5136
      %v5158 = vmul.f32 %v5121, %v5136
      %v5159 = vmul.f32 %v5122, %v5136
      %v5160 = vmul.f32 %v5123, %v5136
      %v5161 = vmul.f32 %v5124, %v5136
      %v5162 = vmul.f32 %v5125, %v5136
      %v5163 = vmul.f32 %v5126, %v5136
      %v5164 = vmul.f32 %v5127, %v5136
      %v5165 = vmul.f32 %v5128, %v5136
      %v5166 = vmul.f32 %v5129, %v5136
      %v5167 = vmul.f32 %v5130, %v5136
      %v5168 = vmul.f32 %v5131, %v5136
      %v5169 = vadd.f32 %v5068, %v5137
      %v5170 = vadd.f32 %v5069, %v5138
      %v5171 = vadd.f32 %v5070, %v5139
      %v5172 = vadd.f32 %v5071, %v5140
      %v5173 = vadd.f32 %v5072, %v5141
      %v5174 = vadd.f32 %v5073, %v5142
      %v5175 = vadd.f32 %v5074, %v5143
      %v5176 = vadd.f32 %v5075, %v5144
      %v5177 = vadd.f32 %v5076, %v5145
      %v5178 = vadd.f32 %v5077, %v5146
      %v5179 = vadd.f32 %v5078, %v5147
      %v5180 = vadd.f32 %v5079, %v5148
      %v5181 = vadd.f32 %v5080, %v5149
      %v5182 = vadd.f32 %v5081, %v5150
      %v5183 = vadd.f32 %v5082, %v5151
      %v5184 = vadd.f32 %v5083, %v5152
      %v5185 = vadd.f32 %v5084, %v5153
      %v5186 = vadd.f32 %v5085, %v5154
      %v5187 = vadd.f32 %v5086, %v5155
      %v5188 = vadd.f32 %v5087, %v5156
      %v5189 = vadd.f32 %v5088, %v5157
      %v5190 = vadd.f32 %v5089, %v5158
      %v5191 = vadd.f32 %v5090, %v5159
      %v5192 = vadd.f32 %v5091, %v5160
      %v5193 = vadd.f32 %v5092, %v5161
      %v5194 = vadd.f32 %v5093, %v5162
      %v5195 = vadd.f32 %v5094, %v5163
      %v5196 = vadd.f32 %v5095, %v5164
      %v5197 = vadd.f32 %v5096, %v5165
      %v5198 = vadd.f32 %v5097, %v5166
      %v5199 = vadd.f32 %v5098, %v5167
      %v5200 = vadd.f32 %v5099, %v5168
      %v5201 = vld [vmem:[#allocation3 + $0x9] sm:$0xff]
      %v5202 = vld [vmem:[#allocation3 + $0x11] sm:$0xff]
      %v5203 = vld [vmem:[#allocation3 + $0x29] sm:$0xff]
      %v5204 = vld [vmem:[#allocation3 + $0x31] sm:$0xff]
      %v5205 = vld [vmem:[#allocation3 + $0x49] sm:$0xff]
      %v5206 = vld [vmem:[#allocation3 + $0x51] sm:$0xff]
      %v5207 = vld [vmem:[#allocation3 + $0x69] sm:$0xff]
      %v5208 = vld [vmem:[#allocation3 + $0x71] sm:$0xff]
      %v5209 = vld [vmem:[#allocation3 + $0x89] sm:$0xff]
      %v5210 = vld [vmem:[#allocation3 + $0x91] sm:$0xff]
      %v5211 = vld [vmem:[#allocation3 + $0xa9] sm:$0xff]
      %v5212 = vld [vmem:[#allocation3 + $0xb1] sm:$0xff]
      %v5213 = vld [vmem:[#allocation3 + $0xc9] sm:$0xff]
      %v5214 = vld [vmem:[#allocation3 + $0xd1] sm:$0xff]
      %v5215 = vld [vmem:[#allocation3 + $0xe9] sm:$0xff]
      %v5216 = vld [vmem:[#allocation3 + $0xf1] sm:$0xff]
      %v5217 = vld [vmem:[#allocation3 + $0x109] sm:$0xff]
      %v5218 = vld [vmem:[#allocation3 + $0x111] sm:$0xff]
      %v5219 = vld [vmem:[#allocation3 + $0x129] sm:$0xff]
      %v5220 = vld [vmem:[#allocation3 + $0x131] sm:$0xff]
      %v5221 = vld [vmem:[#allocation3 + $0x149] sm:$0xff]
      %v5222 = vld [vmem:[#allocation3 + $0x151] sm:$0xff]
      %v5223 = vld [vmem:[#allocation3 + $0x169] sm:$0xff]
      %v5224 = vld [vmem:[#allocation3 + $0x171] sm:$0xff]
      %v5225 = vld [vmem:[#allocation3 + $0x189] sm:$0xff]
      %v5226 = vld [vmem:[#allocation3 + $0x191] sm:$0xff]
      %v5227 = vld [vmem:[#allocation3 + $0x1a9] sm:$0xff]
      %v5228 = vld [vmem:[#allocation3 + $0x1b1] sm:$0xff]
      %v5229 = vld [vmem:[#allocation3 + $0x1c9] sm:$0xff]
      %v5230 = vld [vmem:[#allocation3 + $0x1d1] sm:$0xff]
      %v5231 = vld [vmem:[#allocation3 + $0x1e9] sm:$0xff]
      %v5232 = vld [vmem:[#allocation3 + $0x1f1] sm:$0xff]
      %v5233 = vld [vmem:[%s4 + $0x3] sm:$0x1]
      %v5234 = vlaneseq
      %v5235 = vshrl.u32 %v5234, 7
      %v5236 = vsub.s32 0, %v5235
      %v5237 = vrot.slane %v5233, %v5236
      %v5238 = vmul.f32 %v5201, %v5237
      %v5239 = vmul.f32 %v5202, %v5237
      %v5240 = vmul.f32 %v5203, %v5237
      %v5241 = vmul.f32 %v5204, %v5237
      %v5242 = vmul.f32 %v5205, %v5237
      %v5243 = vmul.f32 %v5206, %v5237
      %v5244 = vmul.f32 %v5207, %v5237
      %v5245 = vmul.f32 %v5208, %v5237
      %v5246 = vmul.f32 %v5209, %v5237
      %v5247 = vmul.f32 %v5210, %v5237
      %v5248 = vmul.f32 %v5211, %v5237
      %v5249 = vmul.f32 %v5212, %v5237
      %v5250 = vmul.f32 %v5213, %v5237
      %v5251 = vmul.f32 %v5214, %v5237
      %v5252 = vmul.f32 %v5215, %v5237
      %v5253 = vmul.f32 %v5216, %v5237
      %v5254 = vmul.f32 %v5217, %v5237
      %v5255 = vmul.f32 %v5218, %v5237
      %v5256 = vmul.f32 %v5219, %v5237
      %v5257 = vmul.f32 %v5220, %v5237
      %v5258 = vmul.f32 %v5221, %v5237
      %v5259 = vmul.f32 %v5222, %v5237
      %v5260 = vmul.f32 %v5223, %v5237
      %v5261 = vmul.f32 %v5224, %v5237
      %v5262 = vmul.f32 %v5225, %v5237
      %v5263 = vmul.f32 %v5226, %v5237
      %v5264 = vmul.f32 %v5227, %v5237
      %v5265 = vmul.f32 %v5228, %v5237
      %v5266 = vmul.f32 %v5229, %v5237
      %v5267 = vmul.f32 %v5230, %v5237
      %v5268 = vmul.f32 %v5231, %v5237
      %v5269 = vmul.f32 %v5232, %v5237
      %v5270 = vadd.f32 %v5169, %v5238
      %v5271 = vadd.f32 %v5170, %v5239
      %v5272 = vadd.f32 %v5171, %v5240
      %v5273 = vadd.f32 %v5172, %v5241
      %v5274 = vadd.f32 %v5173, %v5242
      %v5275 = vadd.f32 %v5174, %v5243
      %v5276 = vadd.f32 %v5175, %v5244
      %v5277 = vadd.f32 %v5176, %v5245
      %v5278 = vadd.f32 %v5177, %v5246
      %v5279 = vadd.f32 %v5178, %v5247
      %v5280 = vadd.f32 %v5179, %v5248
      %v5281 = vadd.f32 %v5180, %v5249
      %v5282 = vadd.f32 %v5181, %v5250
      %v5283 = vadd.f32 %v5182, %v5251
      %v5284 = vadd.f32 %v5183, %v5252
      %v5285 = vadd.f32 %v5184, %v5253
      %v5286 = vadd.f32 %v5185, %v5254
      %v5287 = vadd.f32 %v5186, %v5255
      %v5288 = vadd.f32 %v5187, %v5256
      %v5289 = vadd.f32 %v5188, %v5257
      %v5290 = vadd.f32 %v5189, %v5258
      %v5291 = vadd.f32 %v5190, %v5259
      %v5292 = vadd.f32 %v5191, %v5260
      %v5293 = vadd.f32 %v5192, %v5261
      %v5294 = vadd.f32 %v5193, %v5262
      %v5295 = vadd.f32 %v5194, %v5263
      %v5296 = vadd.f32 %v5195, %v5264
      %v5297 = vadd.f32 %v5196, %v5265
      %v5298 = vadd.f32 %v5197, %v5266
      %v5299 = vadd.f32 %v5198, %v5267
      %v5300 = vadd.f32 %v5199, %v5268
      %v5301 = vadd.f32 %v5200, %v5269
      %v5302 = vld [vmem:[#allocation3 + $0xa] sm:$0xff]
      %v5303 = vld [vmem:[#allocation3 + $0x12] sm:$0xff]
      %v5304 = vld [vmem:[#allocation3 + $0x2a] sm:$0xff]
      %v5305 = vld [vmem:[#allocation3 + $0x32] sm:$0xff]
      %v5306 = vld [vmem:[#allocation3 + $0x4a] sm:$0xff]
      %v5307 = vld [vmem:[#allocation3 + $0x52] sm:$0xff]
      %v5308 = vld [vmem:[#allocation3 + $0x6a] sm:$0xff]
      %v5309 = vld [vmem:[#allocation3 + $0x72] sm:$0xff]
      %v5310 = vld [vmem:[#allocation3 + $0x8a] sm:$0xff]
      %v5311 = vld [vmem:[#allocation3 + $0x92] sm:$0xff]
      %v5312 = vld [vmem:[#allocation3 + $0xaa] sm:$0xff]
      %v5313 = vld [vmem:[#allocation3 + $0xb2] sm:$0xff]
      %v5314 = vld [vmem:[#allocation3 + $0xca] sm:$0xff]
      %v5315 = vld [vmem:[#allocation3 + $0xd2] sm:$0xff]
      %v5316 = vld [vmem:[#allocation3 + $0xea] sm:$0xff]
      %v5317 = vld [vmem:[#allocation3 + $0xf2] sm:$0xff]
      %v5318 = vld [vmem:[#allocation3 + $0x10a] sm:$0xff]
      %v5319 = vld [vmem:[#allocation3 + $0x112] sm:$0xff]
      %v5320 = vld [vmem:[#allocation3 + $0x12a] sm:$0xff]
      %v5321 = vld [vmem:[#allocation3 + $0x132] sm:$0xff]
      %v5322 = vld [vmem:[#allocation3 + $0x14a] sm:$0xff]
      %v5323 = vld [vmem:[#allocation3 + $0x152] sm:$0xff]
      %v5324 = vld [vmem:[#allocation3 + $0x16a] sm:$0xff]
      %v5325 = vld [vmem:[#allocation3 + $0x172] sm:$0xff]
      %v5326 = vld [vmem:[#allocation3 + $0x18a] sm:$0xff]
      %v5327 = vld [vmem:[#allocation3 + $0x192] sm:$0xff]
      %v5328 = vld [vmem:[#allocation3 + $0x1aa] sm:$0xff]
      %v5329 = vld [vmem:[#allocation3 + $0x1b2] sm:$0xff]
      %v5330 = vld [vmem:[#allocation3 + $0x1ca] sm:$0xff]
      %v5331 = vld [vmem:[#allocation3 + $0x1d2] sm:$0xff]
      %v5332 = vld [vmem:[#allocation3 + $0x1ea] sm:$0xff]
      %v5333 = vld [vmem:[#allocation3 + $0x1f2] sm:$0xff]
      %v5334 = vld [vmem:[%s4 + $0x4] sm:$0x1]
      %v5335 = vlaneseq
      %v5336 = vshrl.u32 %v5335, 7
      %v5337 = vsub.s32 0, %v5336
      %v5338 = vrot.slane %v5334, %v5337
      %v5339 = vmul.f32 %v5302, %v5338
      %v5340 = vmul.f32 %v5303, %v5338
      %v5341 = vmul.f32 %v5304, %v5338
      %v5342 = vmul.f32 %v5305, %v5338
      %v5343 = vmul.f32 %v5306, %v5338
      %v5344 = vmul.f32 %v5307, %v5338
      %v5345 = vmul.f32 %v5308, %v5338
      %v5346 = vmul.f32 %v5309, %v5338
      %v5347 = vmul.f32 %v5310, %v5338
      %v5348 = vmul.f32 %v5311, %v5338
      %v5349 = vmul.f32 %v5312, %v5338
      %v5350 = vmul.f32 %v5313, %v5338
      %v5351 = vmul.f32 %v5314, %v5338
      %v5352 = vmul.f32 %v5315, %v5338
      %v5353 = vmul.f32 %v5316, %v5338
      %v5354 = vmul.f32 %v5317, %v5338
      %v5355 = vmul.f32 %v5318, %v5338
      %v5356 = vmul.f32 %v5319, %v5338
      %v5357 = vmul.f32 %v5320, %v5338
      %v5358 = vmul.f32 %v5321, %v5338
      %v5359 = vmul.f32 %v5322, %v5338
      %v5360 = vmul.f32 %v5323, %v5338
      %v5361 = vmul.f32 %v5324, %v5338
      %v5362 = vmul.f32 %v5325, %v5338
      %v5363 = vmul.f32 %v5326, %v5338
      %v5364 = vmul.f32 %v5327, %v5338
      %v5365 = vmul.f32 %v5328, %v5338
      %v5366 = vmul.f32 %v5329, %v5338
      %v5367 = vmul.f32 %v5330, %v5338
      %v5368 = vmul.f32 %v5331, %v5338
      %v5369 = vmul.f32 %v5332, %v5338
      %v5370 = vmul.f32 %v5333, %v5338
      %v5371 = vadd.f32 %v5270, %v5339
      %v5372 = vadd.f32 %v5271, %v5340
      %v5373 = vadd.f32 %v5272, %v5341
      %v5374 = vadd.f32 %v5273, %v5342
      %v5375 = vadd.f32 %v5274, %v5343
      %v5376 = vadd.f32 %v5275, %v5344
      %v5377 = vadd.f32 %v5276, %v5345
      %v5378 = vadd.f32 %v5277, %v5346
      %v5379 = vadd.f32 %v5278, %v5347
      %v5380 = vadd.f32 %v5279, %v5348
      %v5381 = vadd.f32 %v5280, %v5349
      %v5382 = vadd.f32 %v5281, %v5350
      %v5383 = vadd.f32 %v5282, %v5351
      %v5384 = vadd.f32 %v5283, %v5352
      %v5385 = vadd.f32 %v5284, %v5353
      %v5386 = vadd.f32 %v5285, %v5354
      %v5387 = vadd.f32 %v5286, %v5355
      %v5388 = vadd.f32 %v5287, %v5356
      %v5389 = vadd.f32 %v5288, %v5357
      %v5390 = vadd.f32 %v5289, %v5358
      %v5391 = vadd.f32 %v5290, %v5359
      %v5392 = vadd.f32 %v5291, %v5360
      %v5393 = vadd.f32 %v5292, %v5361
      %v5394 = vadd.f32 %v5293, %v5362
      %v5395 = vadd.f32 %v5294, %v5363
      %v5396 = vadd.f32 %v5295, %v5364
      %v5397 = vadd.f32 %v5296, %v5365
      %v5398 = vadd.f32 %v5297, %v5366
      %v5399 = vadd.f32 %v5298, %v5367
      %v5400 = vadd.f32 %v5299, %v5368
      %v5401 = vadd.f32 %v5300, %v5369
      %v5402 = vadd.f32 %v5301, %v5370
      %s5403 = scalar_lea.vmem [#allocation3], 32
      %v5404 = vld [vmem:[%s5403 + $0x6] sm:$0xff]
      %v5405 = vld [vmem:[%s5403 + $0xe] sm:$0xff]
      %v5406 = vld [vmem:[%s5403 + $0x26] sm:$0xff]
      %v5407 = vld [vmem:[%s5403 + $0x2e] sm:$0xff]
      %v5408 = vld [vmem:[%s5403 + $0x46] sm:$0xff]
      %v5409 = vld [vmem:[%s5403 + $0x4e] sm:$0xff]
      %v5410 = vld [vmem:[%s5403 + $0x66] sm:$0xff]
      %v5411 = vld [vmem:[%s5403 + $0x6e] sm:$0xff]
      %v5412 = vld [vmem:[%s5403 + $0x86] sm:$0xff]
      %v5413 = vld [vmem:[%s5403 + $0x8e] sm:$0xff]
      %v5414 = vld [vmem:[%s5403 + $0xa6] sm:$0xff]
      %v5415 = vld [vmem:[%s5403 + $0xae] sm:$0xff]
      %v5416 = vld [vmem:[%s5403 + $0xc6] sm:$0xff]
      %v5417 = vld [vmem:[%s5403 + $0xce] sm:$0xff]
      %v5418 = vld [vmem:[%s5403 + $0xe6] sm:$0xff]
      %v5419 = vld [vmem:[%s5403 + $0xee] sm:$0xff]
      %v5420 = vld [vmem:[%s5403 + $0x106] sm:$0xff]
      %v5421 = vld [vmem:[%s5403 + $0x10e] sm:$0xff]
      %v5422 = vld [vmem:[%s5403 + $0x126] sm:$0xff]
      %v5423 = vld [vmem:[%s5403 + $0x12e] sm:$0xff]
      %v5424 = vld [vmem:[%s5403 + $0x146] sm:$0xff]
      %v5425 = vld [vmem:[%s5403 + $0x14e] sm:$0xff]
      %v5426 = vld [vmem:[%s5403 + $0x166] sm:$0xff]
      %v5427 = vld [vmem:[%s5403 + $0x16e] sm:$0xff]
      %v5428 = vld [vmem:[%s5403 + $0x186] sm:$0xff]
      %v5429 = vld [vmem:[%s5403 + $0x18e] sm:$0xff]
      %v5430 = vld [vmem:[%s5403 + $0x1a6] sm:$0xff]
      %v5431 = vld [vmem:[%s5403 + $0x1ae] sm:$0xff]
      %v5432 = vld [vmem:[%s5403 + $0x1c6] sm:$0xff]
      %v5433 = vld [vmem:[%s5403 + $0x1ce] sm:$0xff]
      %v5434 = vld [vmem:[%s5403 + $0x1e6] sm:$0xff]
      %v5435 = vld [vmem:[%s5403 + $0x1ee] sm:$0xff]
      %v5436 = vld [vmem:[%s4 + $0x5] sm:$0x1]
      %v5437 = vlaneseq
      %v5438 = vshrl.u32 %v5437, 7
      %v5439 = vsub.s32 0, %v5438
      %v5440 = vrot.slane %v5436, %v5439
      %v5441 = vmul.f32 %v5404, %v5440
      %v5442 = vmul.f32 %v5405, %v5440
      %v5443 = vmul.f32 %v5406, %v5440
      %v5444 = vmul.f32 %v5407, %v5440
      %v5445 = vmul.f32 %v5408, %v5440
      %v5446 = vmul.f32 %v5409, %v5440
      %v5447 = vmul.f32 %v5410, %v5440
      %v5448 = vmul.f32 %v5411, %v5440
      %v5449 = vmul.f32 %v5412, %v5440
      %v5450 = vmul.f32 %v5413, %v5440
      %v5451 = vmul.f32 %v5414, %v5440
      %v5452 = vmul.f32 %v5415, %v5440
      %v5453 = vmul.f32 %v5416, %v5440
      %v5454 = vmul.f32 %v5417, %v5440
      %v5455 = vmul.f32 %v5418, %v5440
      %v5456 = vmul.f32 %v5419, %v5440
      %v5457 = vmul.f32 %v5420, %v5440
      %v5458 = vmul.f32 %v5421, %v5440
      %v5459 = vmul.f32 %v5422, %v5440
      %v5460 = vmul.f32 %v5423, %v5440
      %v5461 = vmul.f32 %v5424, %v5440
      %v5462 = vmul.f32 %v5425, %v5440
      %v5463 = vmul.f32 %v5426, %v5440
      %v5464 = vmul.f32 %v5427, %v5440
      %v5465 = vmul.f32 %v5428, %v5440
      %v5466 = vmul.f32 %v5429, %v5440
      %v5467 = vmul.f32 %v5430, %v5440
      %v5468 = vmul.f32 %v5431, %v5440
      %v5469 = vmul.f32 %v5432, %v5440
      %v5470 = vmul.f32 %v5433, %v5440
      %v5471 = vmul.f32 %v5434, %v5440
      %v5472 = vmul.f32 %v5435, %v5440
      %v5473 = vadd.f32 %v5371, %v5441
      %v5474 = vadd.f32 %v5372, %v5442
      %v5475 = vadd.f32 %v5373, %v5443
      %v5476 = vadd.f32 %v5374, %v5444
      %v5477 = vadd.f32 %v5375, %v5445
      %v5478 = vadd.f32 %v5376, %v5446
      %v5479 = vadd.f32 %v5377, %v5447
      %v5480 = vadd.f32 %v5378, %v5448
      %v5481 = vadd.f32 %v5379, %v5449
      %v5482 = vadd.f32 %v5380, %v5450
      %v5483 = vadd.f32 %v5381, %v5451
      %v5484 = vadd.f32 %v5382, %v5452
      %v5485 = vadd.f32 %v5383, %v5453
      %v5486 = vadd.f32 %v5384, %v5454
      %v5487 = vadd.f32 %v5385, %v5455
      %v5488 = vadd.f32 %v5386, %v5456
      %v5489 = vadd.f32 %v5387, %v5457
      %v5490 = vadd.f32 %v5388, %v5458
      %v5491 = vadd.f32 %v5389, %v5459
      %v5492 = vadd.f32 %v5390, %v5460
      %v5493 = vadd.f32 %v5391, %v5461
      %v5494 = vadd.f32 %v5392, %v5462
      %v5495 = vadd.f32 %v5393, %v5463
      %v5496 = vadd.f32 %v5394, %v5464
      %v5497 = vadd.f32 %v5395, %v5465
      %v5498 = vadd.f32 %v5396, %v5466
      %v5499 = vadd.f32 %v5397, %v5467
      %v5500 = vadd.f32 %v5398, %v5468
      %v5501 = vadd.f32 %v5399, %v5469
      %v5502 = vadd.f32 %v5400, %v5470
      %v5503 = vadd.f32 %v5401, %v5471
      %v5504 = vadd.f32 %v5402, %v5472
      %v5505 = vld [vmem:[%s5403 + $0x7] sm:$0xff]
      %v5506 = vld [vmem:[%s5403 + $0xf] sm:$0xff]
      %v5507 = vld [vmem:[%s5403 + $0x27] sm:$0xff]
      %v5508 = vld [vmem:[%s5403 + $0x2f] sm:$0xff]
      %v5509 = vld [vmem:[%s5403 + $0x47] sm:$0xff]
      %v5510 = vld [vmem:[%s5403 + $0x4f] sm:$0xff]
      %v5511 = vld [vmem:[%s5403 + $0x67] sm:$0xff]
      %v5512 = vld [vmem:[%s5403 + $0x6f] sm:$0xff]
      %v5513 = vld [vmem:[%s5403 + $0x87] sm:$0xff]
      %v5514 = vld [vmem:[%s5403 + $0x8f] sm:$0xff]
      %v5515 = vld [vmem:[%s5403 + $0xa7] sm:$0xff]
      %v5516 = vld [vmem:[%s5403 + $0xaf] sm:$0xff]
      %v5517 = vld [vmem:[%s5403 + $0xc7] sm:$0xff]
      %v5518 = vld [vmem:[%s5403 + $0xcf] sm:$0xff]
      %v5519 = vld [vmem:[%s5403 + $0xe7] sm:$0xff]
      %v5520 = vld [vmem:[%s5403 + $0xef] sm:$0xff]
      %v5521 = vld [vmem:[%s5403 + $0x107] sm:$0xff]
      %v5522 = vld [vmem:[%s5403 + $0x10f] sm:$0xff]
      %v5523 = vld [vmem:[%s5403 + $0x127] sm:$0xff]
      %v5524 = vld [vmem:[%s5403 + $0x12f] sm:$0xff]
      %v5525 = vld [vmem:[%s5403 + $0x147] sm:$0xff]
      %v5526 = vld [vmem:[%s5403 + $0x14f] sm:$0xff]
      %v5527 = vld [vmem:[%s5403 + $0x167] sm:$0xff]
      %v5528 = vld [vmem:[%s5403 + $0x16f] sm:$0xff]
      %v5529 = vld [vmem:[%s5403 + $0x187] sm:$0xff]
      %v5530 = vld [vmem:[%s5403 + $0x18f] sm:$0xff]
      %v5531 = vld [vmem:[%s5403 + $0x1a7] sm:$0xff]
      %v5532 = vld [vmem:[%s5403 + $0x1af] sm:$0xff]
      %v5533 = vld [vmem:[%s5403 + $0x1c7] sm:$0xff]
      %v5534 = vld [vmem:[%s5403 + $0x1cf] sm:$0xff]
      %v5535 = vld [vmem:[%s5403 + $0x1e7] sm:$0xff]
      %v5536 = vld [vmem:[%s5403 + $0x1ef] sm:$0xff]
      %v5537 = vld [vmem:[%s4 + $0x6] sm:$0x1]
      %v5538 = vlaneseq
      %v5539 = vshrl.u32 %v5538, 7
      %v5540 = vsub.s32 0, %v5539
      %v5541 = vrot.slane %v5537, %v5540
      %v5542 = vmul.f32 %v5505, %v5541
      %v5543 = vmul.f32 %v5506, %v5541
      %v5544 = vmul.f32 %v5507, %v5541
      %v5545 = vmul.f32 %v5508, %v5541
      %v5546 = vmul.f32 %v5509, %v5541
      %v5547 = vmul.f32 %v5510, %v5541
      %v5548 = vmul.f32 %v5511, %v5541
      %v5549 = vmul.f32 %v5512, %v5541
      %v5550 = vmul.f32 %v5513, %v5541
      %v5551 = vmul.f32 %v5514, %v5541
      %v5552 = vmul.f32 %v5515, %v5541
      %v5553 = vmul.f32 %v5516, %v5541
      %v5554 = vmul.f32 %v5517, %v5541
      %v5555 = vmul.f32 %v5518, %v5541
      %v5556 = vmul.f32 %v5519, %v5541
      %v5557 = vmul.f32 %v5520, %v5541
      %v5558 = vmul.f32 %v5521, %v5541
      %v5559 = vmul.f32 %v5522, %v5541
      %v5560 = vmul.f32 %v5523, %v5541
      %v5561 = vmul.f32 %v5524, %v5541
      %v5562 = vmul.f32 %v5525, %v5541
      %v5563 = vmul.f32 %v5526, %v5541
      %v5564 = vmul.f32 %v5527, %v5541
      %v5565 = vmul.f32 %v5528, %v5541
      %v5566 = vmul.f32 %v5529, %v5541
      %v5567 = vmul.f32 %v5530, %v5541
      %v5568 = vmul.f32 %v5531, %v5541
      %v5569 = vmul.f32 %v5532, %v5541
      %v5570 = vmul.f32 %v5533, %v5541
      %v5571 = vmul.f32 %v5534, %v5541
      %v5572 = vmul.f32 %v5535, %v5541
      %v5573 = vmul.f32 %v5536, %v5541
      %v5574 = vadd.f32 %v5473, %v5542
      %v5575 = vadd.f32 %v5474, %v5543
      %v5576 = vadd.f32 %v5475, %v5544
      %v5577 = vadd.f32 %v5476, %v5545
      %v5578 = vadd.f32 %v5477, %v5546
      %v5579 = vadd.f32 %v5478, %v5547
      %v5580 = vadd.f32 %v5479, %v5548
      %v5581 = vadd.f32 %v5480, %v5549
      %v5582 = vadd.f32 %v5481, %v5550
      %v5583 = vadd.f32 %v5482, %v5551
      %v5584 = vadd.f32 %v5483, %v5552
      %v5585 = vadd.f32 %v5484, %v5553
      %v5586 = vadd.f32 %v5485, %v5554
      %v5587 = vadd.f32 %v5486, %v5555
      %v5588 = vadd.f32 %v5487, %v5556
      %v5589 = vadd.f32 %v5488, %v5557
      %v5590 = vadd.f32 %v5489, %v5558
      %v5591 = vadd.f32 %v5490, %v5559
      %v5592 = vadd.f32 %v5491, %v5560
      %v5593 = vadd.f32 %v5492, %v5561
      %v5594 = vadd.f32 %v5493, %v5562
      %v5595 = vadd.f32 %v5494, %v5563
      %v5596 = vadd.f32 %v5495, %v5564
      %v5597 = vadd.f32 %v5496, %v5565
      %v5598 = vadd.f32 %v5497, %v5566
      %v5599 = vadd.f32 %v5498, %v5567
      %v5600 = vadd.f32 %v5499, %v5568
      %v5601 = vadd.f32 %v5500, %v5569
      %v5602 = vadd.f32 %v5501, %v5570
      %v5603 = vadd.f32 %v5502, %v5571
      %v5604 = vadd.f32 %v5503, %v5572
      %v5605 = vadd.f32 %v5504, %v5573
      %v5606 = vld [vmem:[%s5403 + $0x8] sm:$0xff]
      %v5607 = vld [vmem:[%s5403 + $0x10] sm:$0xff]
      %v5608 = vld [vmem:[%s5403 + $0x28] sm:$0xff]
      %v5609 = vld [vmem:[%s5403 + $0x30] sm:$0xff]
      %v5610 = vld [vmem:[%s5403 + $0x48] sm:$0xff]
      %v5611 = vld [vmem:[%s5403 + $0x50] sm:$0xff]
      %v5612 = vld [vmem:[%s5403 + $0x68] sm:$0xff]
      %v5613 = vld [vmem:[%s5403 + $0x70] sm:$0xff]
      %v5614 = vld [vmem:[%s5403 + $0x88] sm:$0xff]
      %v5615 = vld [vmem:[%s5403 + $0x90] sm:$0xff]
      %v5616 = vld [vmem:[%s5403 + $0xa8] sm:$0xff]
      %v5617 = vld [vmem:[%s5403 + $0xb0] sm:$0xff]
      %v5618 = vld [vmem:[%s5403 + $0xc8] sm:$0xff]
      %v5619 = vld [vmem:[%s5403 + $0xd0] sm:$0xff]
      %v5620 = vld [vmem:[%s5403 + $0xe8] sm:$0xff]
      %v5621 = vld [vmem:[%s5403 + $0xf0] sm:$0xff]
      %v5622 = vld [vmem:[%s5403 + $0x108] sm:$0xff]
      %v5623 = vld [vmem:[%s5403 + $0x110] sm:$0xff]
      %v5624 = vld [vmem:[%s5403 + $0x128] sm:$0xff]
      %v5625 = vld [vmem:[%s5403 + $0x130] sm:$0xff]
      %v5626 = vld [vmem:[%s5403 + $0x148] sm:$0xff]
      %v5627 = vld [vmem:[%s5403 + $0x150] sm:$0xff]
      %v5628 = vld [vmem:[%s5403 + $0x168] sm:$0xff]
      %v5629 = vld [vmem:[%s5403 + $0x170] sm:$0xff]
      %v5630 = vld [vmem:[%s5403 + $0x188] sm:$0xff]
      %v5631 = vld [vmem:[%s5403 + $0x190] sm:$0xff]
      %v5632 = vld [vmem:[%s5403 + $0x1a8] sm:$0xff]
      %v5633 = vld [vmem:[%s5403 + $0x1b0] sm:$0xff]
      %v5634 = vld [vmem:[%s5403 + $0x1c8] sm:$0xff]
      %v5635 = vld [vmem:[%s5403 + $0x1d0] sm:$0xff]
      %v5636 = vld [vmem:[%s5403 + $0x1e8] sm:$0xff]
      %v5637 = vld [vmem:[%s5403 + $0x1f0] sm:$0xff]
      %v5638 = vld [vmem:[%s4 + $0x7] sm:$0x1]
      %v5639 = vlaneseq
      %v5640 = vshrl.u32 %v5639, 7
      %v5641 = vsub.s32 0, %v5640
      %v5642 = vrot.slane %v5638, %v5641
      %v5643 = vmul.f32 %v5606, %v5642
      %v5644 = vmul.f32 %v5607, %v5642
      %v5645 = vmul.f32 %v5608, %v5642
      %v5646 = vmul.f32 %v5609, %v5642
      %v5647 = vmul.f32 %v5610, %v5642
      %v5648 = vmul.f32 %v5611, %v5642
      %v5649 = vmul.f32 %v5612, %v5642
      %v5650 = vmul.f32 %v5613, %v5642
      %v5651 = vmul.f32 %v5614, %v5642
      %v5652 = vmul.f32 %v5615, %v5642
      %v5653 = vmul.f32 %v5616, %v5642
      %v5654 = vmul.f32 %v5617, %v5642
      %v5655 = vmul.f32 %v5618, %v5642
      %v5656 = vmul.f32 %v5619, %v5642
      %v5657 = vmul.f32 %v5620, %v5642
      %v5658 = vmul.f32 %v5621, %v5642
      %v5659 = vmul.f32 %v5622, %v5642
      %v5660 = vmul.f32 %v5623, %v5642
      %v5661 = vmul.f32 %v5624, %v5642
      %v5662 = vmul.f32 %v5625, %v5642
      %v5663 = vmul.f32 %v5626, %v5642
      %v5664 = vmul.f32 %v5627, %v5642
      %v5665 = vmul.f32 %v5628, %v5642
      %v5666 = vmul.f32 %v5629, %v5642
      %v5667 = vmul.f32 %v5630, %v5642
      %v5668 = vmul.f32 %v5631, %v5642
      %v5669 = vmul.f32 %v5632, %v5642
      %v5670 = vmul.f32 %v5633, %v5642
      %v5671 = vmul.f32 %v5634, %v5642
      %v5672 = vmul.f32 %v5635, %v5642
      %v5673 = vmul.f32 %v5636, %v5642
      %v5674 = vmul.f32 %v5637, %v5642
      %v5675 = vadd.f32 %v5574, %v5643
      %v5676 = vadd.f32 %v5575, %v5644
      %v5677 = vadd.f32 %v5576, %v5645
      %v5678 = vadd.f32 %v5577, %v5646
      %v5679 = vadd.f32 %v5578, %v5647
      %v5680 = vadd.f32 %v5579, %v5648
      %v5681 = vadd.f32 %v5580, %v5649
      %v5682 = vadd.f32 %v5581, %v5650
      %v5683 = vadd.f32 %v5582, %v5651
      %v5684 = vadd.f32 %v5583, %v5652
      %v5685 = vadd.f32 %v5584, %v5653
      %v5686 = vadd.f32 %v5585, %v5654
      %v5687 = vadd.f32 %v5586, %v5655
      %v5688 = vadd.f32 %v5587, %v5656
      %v5689 = vadd.f32 %v5588, %v5657
      %v5690 = vadd.f32 %v5589, %v5658
      %v5691 = vadd.f32 %v5590, %v5659
      %v5692 = vadd.f32 %v5591, %v5660
      %v5693 = vadd.f32 %v5592, %v5661
      %v5694 = vadd.f32 %v5593, %v5662
      %v5695 = vadd.f32 %v5594, %v5663
      %v5696 = vadd.f32 %v5595, %v5664
      %v5697 = vadd.f32 %v5596, %v5665
      %v5698 = vadd.f32 %v5597, %v5666
      %v5699 = vadd.f32 %v5598, %v5667
      %v5700 = vadd.f32 %v5599, %v5668
      %v5701 = vadd.f32 %v5600, %v5669
      %v5702 = vadd.f32 %v5601, %v5670
      %v5703 = vadd.f32 %v5602, %v5671
      %v5704 = vadd.f32 %v5603, %v5672
      %v5705 = vadd.f32 %v5604, %v5673
      %v5706 = vadd.f32 %v5605, %v5674
      %v5707 = vld [vmem:[%s5403 + $0x9] sm:$0xff]
      %v5708 = vld [vmem:[%s5403 + $0x11] sm:$0xff]
      %v5709 = vld [vmem:[%s5403 + $0x29] sm:$0xff]
      %v5710 = vld [vmem:[%s5403 + $0x31] sm:$0xff]
      %v5711 = vld [vmem:[%s5403 + $0x49] sm:$0xff]
      %v5712 = vld [vmem:[%s5403 + $0x51] sm:$0xff]
      %v5713 = vld [vmem:[%s5403 + $0x69] sm:$0xff]
      %v5714 = vld [vmem:[%s5403 + $0x71] sm:$0xff]
      %v5715 = vld [vmem:[%s5403 + $0x89] sm:$0xff]
      %v5716 = vld [vmem:[%s5403 + $0x91] sm:$0xff]
      %v5717 = vld [vmem:[%s5403 + $0xa9] sm:$0xff]
      %v5718 = vld [vmem:[%s5403 + $0xb1] sm:$0xff]
      %v5719 = vld [vmem:[%s5403 + $0xc9] sm:$0xff]
      %v5720 = vld [vmem:[%s5403 + $0xd1] sm:$0xff]
      %v5721 = vld [vmem:[%s5403 + $0xe9] sm:$0xff]
      %v5722 = vld [vmem:[%s5403 + $0xf1] sm:$0xff]
      %v5723 = vld [vmem:[%s5403 + $0x109] sm:$0xff]
      %v5724 = vld [vmem:[%s5403 + $0x111] sm:$0xff]
      %v5725 = vld [vmem:[%s5403 + $0x129] sm:$0xff]
      %v5726 = vld [vmem:[%s5403 + $0x131] sm:$0xff]
      %v5727 = vld [vmem:[%s5403 + $0x149] sm:$0xff]
      %v5728 = vld [vmem:[%s5403 + $0x151] sm:$0xff]
      %v5729 = vld [vmem:[%s5403 + $0x169] sm:$0xff]
      %v5730 = vld [vmem:[%s5403 + $0x171] sm:$0xff]
      %v5731 = vld [vmem:[%s5403 + $0x189] sm:$0xff]
      %v5732 = vld [vmem:[%s5403 + $0x191] sm:$0xff]
      %v5733 = vld [vmem:[%s5403 + $0x1a9] sm:$0xff]
      %v5734 = vld [vmem:[%s5403 + $0x1b1] sm:$0xff]
      %v5735 = vld [vmem:[%s5403 + $0x1c9] sm:$0xff]
      %v5736 = vld [vmem:[%s5403 + $0x1d1] sm:$0xff]
      %v5737 = vld [vmem:[%s5403 + $0x1e9] sm:$0xff]
      %v5738 = vld [vmem:[%s5403 + $0x1f1] sm:$0xff]
      %v5739 = vld [vmem:[%s4 + $0x8] sm:$0x1]
      %v5740 = vlaneseq
      %v5741 = vshrl.u32 %v5740, 7
      %v5742 = vsub.s32 0, %v5741
      %v5743 = vrot.slane %v5739, %v5742
      %v5744 = vmul.f32 %v5707, %v5743
      %v5745 = vmul.f32 %v5708, %v5743
      %v5746 = vmul.f32 %v5709, %v5743
      %v5747 = vmul.f32 %v5710, %v5743
      %v5748 = vmul.f32 %v5711, %v5743
      %v5749 = vmul.f32 %v5712, %v5743
      %v5750 = vmul.f32 %v5713, %v5743
      %v5751 = vmul.f32 %v5714, %v5743
      %v5752 = vmul.f32 %v5715, %v5743
      %v5753 = vmul.f32 %v5716, %v5743
      %v5754 = vmul.f32 %v5717, %v5743
      %v5755 = vmul.f32 %v5718, %v5743
      %v5756 = vmul.f32 %v5719, %v5743
      %v5757 = vmul.f32 %v5720, %v5743
      %v5758 = vmul.f32 %v5721, %v5743
      %v5759 = vmul.f32 %v5722, %v5743
      %v5760 = vmul.f32 %v5723, %v5743
      %v5761 = vmul.f32 %v5724, %v5743
      %v5762 = vmul.f32 %v5725, %v5743
      %v5763 = vmul.f32 %v5726, %v5743
      %v5764 = vmul.f32 %v5727, %v5743
      %v5765 = vmul.f32 %v5728, %v5743
      %v5766 = vmul.f32 %v5729, %v5743
      %v5767 = vmul.f32 %v5730, %v5743
      %v5768 = vmul.f32 %v5731, %v5743
      %v5769 = vmul.f32 %v5732, %v5743
      %v5770 = vmul.f32 %v5733, %v5743
      %v5771 = vmul.f32 %v5734, %v5743
      %v5772 = vmul.f32 %v5735, %v5743
      %v5773 = vmul.f32 %v5736, %v5743
      %v5774 = vmul.f32 %v5737, %v5743
      %v5775 = vmul.f32 %v5738, %v5743
      %v5776 = vadd.f32 %v5675, %v5744
      %v5777 = vadd.f32 %v5676, %v5745
      %v5778 = vadd.f32 %v5677, %v5746
      %v5779 = vadd.f32 %v5678, %v5747
      %v5780 = vadd.f32 %v5679, %v5748
      %v5781 = vadd.f32 %v5680, %v5749
      %v5782 = vadd.f32 %v5681, %v5750
      %v5783 = vadd.f32 %v5682, %v5751
      %v5784 = vadd.f32 %v5683, %v5752
      %v5785 = vadd.f32 %v5684, %v5753
      %v5786 = vadd.f32 %v5685, %v5754
      %v5787 = vadd.f32 %v5686, %v5755
      %v5788 = vadd.f32 %v5687, %v5756
      %v5789 = vadd.f32 %v5688, %v5757
      %v5790 = vadd.f32 %v5689, %v5758
      %v5791 = vadd.f32 %v5690, %v5759
      %v5792 = vadd.f32 %v5691, %v5760
      %v5793 = vadd.f32 %v5692, %v5761
      %v5794 = vadd.f32 %v5693, %v5762
      %v5795 = vadd.f32 %v5694, %v5763
      %v5796 = vadd.f32 %v5695, %v5764
      %v5797 = vadd.f32 %v5696, %v5765
      %v5798 = vadd.f32 %v5697, %v5766
      %v5799 = vadd.f32 %v5698, %v5767
      %v5800 = vadd.f32 %v5699, %v5768
      %v5801 = vadd.f32 %v5700, %v5769
      %v5802 = vadd.f32 %v5701, %v5770
      %v5803 = vadd.f32 %v5702, %v5771
      %v5804 = vadd.f32 %v5703, %v5772
      %v5805 = vadd.f32 %v5704, %v5773
      %v5806 = vadd.f32 %v5705, %v5774
      %v5807 = vadd.f32 %v5706, %v5775
      %v5808 = vld [vmem:[%s5403 + $0xa] sm:$0xff]
      %v5809 = vld [vmem:[%s5403 + $0x12] sm:$0xff]
      %v5810 = vld [vmem:[%s5403 + $0x2a] sm:$0xff]
      %v5811 = vld [vmem:[%s5403 + $0x32] sm:$0xff]
      %v5812 = vld [vmem:[%s5403 + $0x4a] sm:$0xff]
      %v5813 = vld [vmem:[%s5403 + $0x52] sm:$0xff]
      %v5814 = vld [vmem:[%s5403 + $0x6a] sm:$0xff]
      %v5815 = vld [vmem:[%s5403 + $0x72] sm:$0xff]
      %v5816 = vld [vmem:[%s5403 + $0x8a] sm:$0xff]
      %v5817 = vld [vmem:[%s5403 + $0x92] sm:$0xff]
      %v5818 = vld [vmem:[%s5403 + $0xaa] sm:$0xff]
      %v5819 = vld [vmem:[%s5403 + $0xb2] sm:$0xff]
      %v5820 = vld [vmem:[%s5403 + $0xca] sm:$0xff]
      %v5821 = vld [vmem:[%s5403 + $0xd2] sm:$0xff]
      %v5822 = vld [vmem:[%s5403 + $0xea] sm:$0xff]
      %v5823 = vld [vmem:[%s5403 + $0xf2] sm:$0xff]
      %v5824 = vld [vmem:[%s5403 + $0x10a] sm:$0xff]
      %v5825 = vld [vmem:[%s5403 + $0x112] sm:$0xff]
      %v5826 = vld [vmem:[%s5403 + $0x12a] sm:$0xff]
      %v5827 = vld [vmem:[%s5403 + $0x132] sm:$0xff]
      %v5828 = vld [vmem:[%s5403 + $0x14a] sm:$0xff]
      %v5829 = vld [vmem:[%s5403 + $0x152] sm:$0xff]
      %v5830 = vld [vmem:[%s5403 + $0x16a] sm:$0xff]
      %v5831 = vld [vmem:[%s5403 + $0x172] sm:$0xff]
      %v5832 = vld [vmem:[%s5403 + $0x18a] sm:$0xff]
      %v5833 = vld [vmem:[%s5403 + $0x192] sm:$0xff]
      %v5834 = vld [vmem:[%s5403 + $0x1aa] sm:$0xff]
      %v5835 = vld [vmem:[%s5403 + $0x1b2] sm:$0xff]
      %v5836 = vld [vmem:[%s5403 + $0x1ca] sm:$0xff]
      %v5837 = vld [vmem:[%s5403 + $0x1d2] sm:$0xff]
      %v5838 = vld [vmem:[%s5403 + $0x1ea] sm:$0xff]
      %v5839 = vld [vmem:[%s5403 + $0x1f2] sm:$0xff]
      %v5840 = vld [vmem:[%s4 + $0x9] sm:$0x1]
      %v5841 = vlaneseq
      %v5842 = vshrl.u32 %v5841, 7
      %v5843 = vsub.s32 0, %v5842
      %v5844 = vrot.slane %v5840, %v5843
      %v5845 = vmul.f32 %v5808, %v5844
      %v5846 = vmul.f32 %v5809, %v5844
      %v5847 = vmul.f32 %v5810, %v5844
      %v5848 = vmul.f32 %v5811, %v5844
      %v5849 = vmul.f32 %v5812, %v5844
      %v5850 = vmul.f32 %v5813, %v5844
      %v5851 = vmul.f32 %v5814, %v5844
      %v5852 = vmul.f32 %v5815, %v5844
      %v5853 = vmul.f32 %v5816, %v5844
      %v5854 = vmul.f32 %v5817, %v5844
      %v5855 = vmul.f32 %v5818, %v5844
      %v5856 = vmul.f32 %v5819, %v5844
      %v5857 = vmul.f32 %v5820, %v5844
      %v5858 = vmul.f32 %v5821, %v5844
      %v5859 = vmul.f32 %v5822, %v5844
      %v5860 = vmul.f32 %v5823, %v5844
      %v5861 = vmul.f32 %v5824, %v5844
      %v5862 = vmul.f32 %v5825, %v5844
      %v5863 = vmul.f32 %v5826, %v5844
      %v5864 = vmul.f32 %v5827, %v5844
      %v5865 = vmul.f32 %v5828, %v5844
      %v5866 = vmul.f32 %v5829, %v5844
      %v5867 = vmul.f32 %v5830, %v5844
      %v5868 = vmul.f32 %v5831, %v5844
      %v5869 = vmul.f32 %v5832, %v5844
      %v5870 = vmul.f32 %v5833, %v5844
      %v5871 = vmul.f32 %v5834, %v5844
      %v5872 = vmul.f32 %v5835, %v5844
      %v5873 = vmul.f32 %v5836, %v5844
      %v5874 = vmul.f32 %v5837, %v5844
      %v5875 = vmul.f32 %v5838, %v5844
      %v5876 = vmul.f32 %v5839, %v5844
      %v5877 = vadd.f32 %v5776, %v5845
      %v5878 = vadd.f32 %v5777, %v5846
      %v5879 = vadd.f32 %v5778, %v5847
      %v5880 = vadd.f32 %v5779, %v5848
      %v5881 = vadd.f32 %v5780, %v5849
      %v5882 = vadd.f32 %v5781, %v5850
      %v5883 = vadd.f32 %v5782, %v5851
      %v5884 = vadd.f32 %v5783, %v5852
      %v5885 = vadd.f32 %v5784, %v5853
      %v5886 = vadd.f32 %v5785, %v5854
      %v5887 = vadd.f32 %v5786, %v5855
      %v5888 = vadd.f32 %v5787, %v5856
      %v5889 = vadd.f32 %v5788, %v5857
      %v5890 = vadd.f32 %v5789, %v5858
      %v5891 = vadd.f32 %v5790, %v5859
      %v5892 = vadd.f32 %v5791, %v5860
      %v5893 = vadd.f32 %v5792, %v5861
      %v5894 = vadd.f32 %v5793, %v5862
      %v5895 = vadd.f32 %v5794, %v5863
      %v5896 = vadd.f32 %v5795, %v5864
      %v5897 = vadd.f32 %v5796, %v5865
      %v5898 = vadd.f32 %v5797, %v5866
      %v5899 = vadd.f32 %v5798, %v5867
      %v5900 = vadd.f32 %v5799, %v5868
      %v5901 = vadd.f32 %v5800, %v5869
      %v5902 = vadd.f32 %v5801, %v5870
      %v5903 = vadd.f32 %v5802, %v5871
      %v5904 = vadd.f32 %v5803, %v5872
      %v5905 = vadd.f32 %v5804, %v5873
      %v5906 = vadd.f32 %v5805, %v5874
      %v5907 = vadd.f32 %v5806, %v5875
      %v5908 = vadd.f32 %v5807, %v5876
      %v5909 = vld [vmem:[%s4865 + $0x6] sm:$0xff]
      %v5910 = vld [vmem:[%s4865 + $0xe] sm:$0xff]
      %v5911 = vld [vmem:[%s4865 + $0x26] sm:$0xff]
      %v5912 = vld [vmem:[%s4865 + $0x2e] sm:$0xff]
      %v5913 = vld [vmem:[%s4865 + $0x46] sm:$0xff]
      %v5914 = vld [vmem:[%s4865 + $0x4e] sm:$0xff]
      %v5915 = vld [vmem:[%s4865 + $0x66] sm:$0xff]
      %v5916 = vld [vmem:[%s4865 + $0x6e] sm:$0xff]
      %v5917 = vld [vmem:[%s4865 + $0x86] sm:$0xff]
      %v5918 = vld [vmem:[%s4865 + $0x8e] sm:$0xff]
      %v5919 = vld [vmem:[%s4865 + $0xa6] sm:$0xff]
      %v5920 = vld [vmem:[%s4865 + $0xae] sm:$0xff]
      %v5921 = vld [vmem:[%s4865 + $0xc6] sm:$0xff]
      %v5922 = vld [vmem:[%s4865 + $0xce] sm:$0xff]
      %v5923 = vld [vmem:[%s4865 + $0xe6] sm:$0xff]
      %v5924 = vld [vmem:[%s4865 + $0xee] sm:$0xff]
      %v5925 = vld [vmem:[%s4865 + $0x106] sm:$0xff]
      %v5926 = vld [vmem:[%s4865 + $0x10e] sm:$0xff]
      %v5927 = vld [vmem:[%s4865 + $0x126] sm:$0xff]
      %v5928 = vld [vmem:[%s4865 + $0x12e] sm:$0xff]
      %v5929 = vld [vmem:[%s4865 + $0x146] sm:$0xff]
      %v5930 = vld [vmem:[%s4865 + $0x14e] sm:$0xff]
      %v5931 = vld [vmem:[%s4865 + $0x166] sm:$0xff]
      %v5932 = vld [vmem:[%s4865 + $0x16e] sm:$0xff]
      %v5933 = vld [vmem:[%s4865 + $0x186] sm:$0xff]
      %v5934 = vld [vmem:[%s4865 + $0x18e] sm:$0xff]
      %v5935 = vld [vmem:[%s4865 + $0x1a6] sm:$0xff]
      %v5936 = vld [vmem:[%s4865 + $0x1ae] sm:$0xff]
      %v5937 = vld [vmem:[%s4865 + $0x1c6] sm:$0xff]
      %v5938 = vld [vmem:[%s4865 + $0x1ce] sm:$0xff]
      %v5939 = vld [vmem:[%s4865 + $0x1e6] sm:$0xff]
      %v5940 = vld [vmem:[%s4865 + $0x1ee] sm:$0xff]
      %v5941 = vld [vmem:[%s4 + $0xa] sm:$0x1]
      %v5942 = vlaneseq
      %v5943 = vshrl.u32 %v5942, 7
      %v5944 = vsub.s32 0, %v5943
      %v5945 = vrot.slane %v5941, %v5944
      %v5946 = vmul.f32 %v5909, %v5945
      %v5947 = vmul.f32 %v5910, %v5945
      %v5948 = vmul.f32 %v5911, %v5945
      %v5949 = vmul.f32 %v5912, %v5945
      %v5950 = vmul.f32 %v5913, %v5945
      %v5951 = vmul.f32 %v5914, %v5945
      %v5952 = vmul.f32 %v5915, %v5945
      %v5953 = vmul.f32 %v5916, %v5945
      %v5954 = vmul.f32 %v5917, %v5945
      %v5955 = vmul.f32 %v5918, %v5945
      %v5956 = vmul.f32 %v5919, %v5945
      %v5957 = vmul.f32 %v5920, %v5945
      %v5958 = vmul.f32 %v5921, %v5945
      %v5959 = vmul.f32 %v5922, %v5945
      %v5960 = vmul.f32 %v5923, %v5945
      %v5961 = vmul.f32 %v5924, %v5945
      %v5962 = vmul.f32 %v5925, %v5945
      %v5963 = vmul.f32 %v5926, %v5945
      %v5964 = vmul.f32 %v5927, %v5945
      %v5965 = vmul.f32 %v5928, %v5945
      %v5966 = vmul.f32 %v5929, %v5945
      %v5967 = vmul.f32 %v5930, %v5945
      %v5968 = vmul.f32 %v5931, %v5945
      %v5969 = vmul.f32 %v5932, %v5945
      %v5970 = vmul.f32 %v5933, %v5945
      %v5971 = vmul.f32 %v5934, %v5945
      %v5972 = vmul.f32 %v5935, %v5945
      %v5973 = vmul.f32 %v5936, %v5945
      %v5974 = vmul.f32 %v5937, %v5945
      %v5975 = vmul.f32 %v5938, %v5945
      %v5976 = vmul.f32 %v5939, %v5945
      %v5977 = vmul.f32 %v5940, %v5945
      %v5978 = vadd.f32 %v5877, %v5946
      %v5979 = vadd.f32 %v5878, %v5947
      %v5980 = vadd.f32 %v5879, %v5948
      %v5981 = vadd.f32 %v5880, %v5949
      %v5982 = vadd.f32 %v5881, %v5950
      %v5983 = vadd.f32 %v5882, %v5951
      %v5984 = vadd.f32 %v5883, %v5952
      %v5985 = vadd.f32 %v5884, %v5953
      %v5986 = vadd.f32 %v5885, %v5954
      %v5987 = vadd.f32 %v5886, %v5955
      %v5988 = vadd.f32 %v5887, %v5956
      %v5989 = vadd.f32 %v5888, %v5957
      %v5990 = vadd.f32 %v5889, %v5958
      %v5991 = vadd.f32 %v5890, %v5959
      %v5992 = vadd.f32 %v5891, %v5960
      %v5993 = vadd.f32 %v5892, %v5961
      %v5994 = vadd.f32 %v5893, %v5962
      %v5995 = vadd.f32 %v5894, %v5963
      %v5996 = vadd.f32 %v5895, %v5964
      %v5997 = vadd.f32 %v5896, %v5965
      %v5998 = vadd.f32 %v5897, %v5966
      %v5999 = vadd.f32 %v5898, %v5967
      %v6000 = vadd.f32 %v5899, %v5968
      %v6001 = vadd.f32 %v5900, %v5969
      %v6002 = vadd.f32 %v5901, %v5970
      %v6003 = vadd.f32 %v5902, %v5971
      %v6004 = vadd.f32 %v5903, %v5972
      %v6005 = vadd.f32 %v5904, %v5973
      %v6006 = vadd.f32 %v5905, %v5974
      %v6007 = vadd.f32 %v5906, %v5975
      %v6008 = vadd.f32 %v5907, %v5976
      %v6009 = vadd.f32 %v5908, %v5977
      %v6010 = vld [vmem:[%s4865 + $0x7] sm:$0xff]
      %v6011 = vld [vmem:[%s4865 + $0xf] sm:$0xff]
      %v6012 = vld [vmem:[%s4865 + $0x27] sm:$0xff]
      %v6013 = vld [vmem:[%s4865 + $0x2f] sm:$0xff]
      %v6014 = vld [vmem:[%s4865 + $0x47] sm:$0xff]
      %v6015 = vld [vmem:[%s4865 + $0x4f] sm:$0xff]
      %v6016 = vld [vmem:[%s4865 + $0x67] sm:$0xff]
      %v6017 = vld [vmem:[%s4865 + $0x6f] sm:$0xff]
      %v6018 = vld [vmem:[%s4865 + $0x87] sm:$0xff]
      %v6019 = vld [vmem:[%s4865 + $0x8f] sm:$0xff]
      %v6020 = vld [vmem:[%s4865 + $0xa7] sm:$0xff]
      %v6021 = vld [vmem:[%s4865 + $0xaf] sm:$0xff]
      %v6022 = vld [vmem:[%s4865 + $0xc7] sm:$0xff]
      %v6023 = vld [vmem:[%s4865 + $0xcf] sm:$0xff]
      %v6024 = vld [vmem:[%s4865 + $0xe7] sm:$0xff]
      %v6025 = vld [vmem:[%s4865 + $0xef] sm:$0xff]
      %v6026 = vld [vmem:[%s4865 + $0x107] sm:$0xff]
      %v6027 = vld [vmem:[%s4865 + $0x10f] sm:$0xff]
      %v6028 = vld [vmem:[%s4865 + $0x127] sm:$0xff]
      %v6029 = vld [vmem:[%s4865 + $0x12f] sm:$0xff]
      %v6030 = vld [vmem:[%s4865 + $0x147] sm:$0xff]
      %v6031 = vld [vmem:[%s4865 + $0x14f] sm:$0xff]
      %v6032 = vld [vmem:[%s4865 + $0x167] sm:$0xff]
      %v6033 = vld [vmem:[%s4865 + $0x16f] sm:$0xff]
      %v6034 = vld [vmem:[%s4865 + $0x187] sm:$0xff]
      %v6035 = vld [vmem:[%s4865 + $0x18f] sm:$0xff]
      %v6036 = vld [vmem:[%s4865 + $0x1a7] sm:$0xff]
      %v6037 = vld [vmem:[%s4865 + $0x1af] sm:$0xff]
      %v6038 = vld [vmem:[%s4865 + $0x1c7] sm:$0xff]
      %v6039 = vld [vmem:[%s4865 + $0x1cf] sm:$0xff]
      %v6040 = vld [vmem:[%s4865 + $0x1e7] sm:$0xff]
      %v6041 = vld [vmem:[%s4865 + $0x1ef] sm:$0xff]
      %v6042 = vld [vmem:[%s4 + $0xb] sm:$0x1]
      %v6043 = vlaneseq
      %v6044 = vshrl.u32 %v6043, 7
      %v6045 = vsub.s32 0, %v6044
      %v6046 = vrot.slane %v6042, %v6045
      %v6047 = vmul.f32 %v6010, %v6046
      %v6048 = vmul.f32 %v6011, %v6046
      %v6049 = vmul.f32 %v6012, %v6046
      %v6050 = vmul.f32 %v6013, %v6046
      %v6051 = vmul.f32 %v6014, %v6046
      %v6052 = vmul.f32 %v6015, %v6046
      %v6053 = vmul.f32 %v6016, %v6046
      %v6054 = vmul.f32 %v6017, %v6046
      %v6055 = vmul.f32 %v6018, %v6046
      %v6056 = vmul.f32 %v6019, %v6046
      %v6057 = vmul.f32 %v6020, %v6046
      %v6058 = vmul.f32 %v6021, %v6046
      %v6059 = vmul.f32 %v6022, %v6046
      %v6060 = vmul.f32 %v6023, %v6046
      %v6061 = vmul.f32 %v6024, %v6046
      %v6062 = vmul.f32 %v6025, %v6046
      %v6063 = vmul.f32 %v6026, %v6046
      %v6064 = vmul.f32 %v6027, %v6046
      %v6065 = vmul.f32 %v6028, %v6046
      %v6066 = vmul.f32 %v6029, %v6046
      %v6067 = vmul.f32 %v6030, %v6046
      %v6068 = vmul.f32 %v6031, %v6046
      %v6069 = vmul.f32 %v6032, %v6046
      %v6070 = vmul.f32 %v6033, %v6046
      %v6071 = vmul.f32 %v6034, %v6046
      %v6072 = vmul.f32 %v6035, %v6046
      %v6073 = vmul.f32 %v6036, %v6046
      %v6074 = vmul.f32 %v6037, %v6046
      %v6075 = vmul.f32 %v6038, %v6046
      %v6076 = vmul.f32 %v6039, %v6046
      %v6077 = vmul.f32 %v6040, %v6046
      %v6078 = vmul.f32 %v6041, %v6046
      %v6079 = vadd.f32 %v5978, %v6047
      %v6080 = vadd.f32 %v5979, %v6048
      %v6081 = vadd.f32 %v5980, %v6049
      %v6082 = vadd.f32 %v5981, %v6050
      %v6083 = vadd.f32 %v5982, %v6051
      %v6084 = vadd.f32 %v5983, %v6052
      %v6085 = vadd.f32 %v5984, %v6053
      %v6086 = vadd.f32 %v5985, %v6054
      %v6087 = vadd.f32 %v5986, %v6055
      %v6088 = vadd.f32 %v5987, %v6056
      %v6089 = vadd.f32 %v5988, %v6057
      %v6090 = vadd.f32 %v5989, %v6058
      %v6091 = vadd.f32 %v5990, %v6059
      %v6092 = vadd.f32 %v5991, %v6060
      %v6093 = vadd.f32 %v5992, %v6061
      %v6094 = vadd.f32 %v5993, %v6062
      %v6095 = vadd.f32 %v5994, %v6063
      %v6096 = vadd.f32 %v5995, %v6064
      %v6097 = vadd.f32 %v5996, %v6065
      %v6098 = vadd.f32 %v5997, %v6066
      %v6099 = vadd.f32 %v5998, %v6067
      %v6100 = vadd.f32 %v5999, %v6068
      %v6101 = vadd.f32 %v6000, %v6069
      %v6102 = vadd.f32 %v6001, %v6070
      %v6103 = vadd.f32 %v6002, %v6071
      %v6104 = vadd.f32 %v6003, %v6072
      %v6105 = vadd.f32 %v6004, %v6073
      %v6106 = vadd.f32 %v6005, %v6074
      %v6107 = vadd.f32 %v6006, %v6075
      %v6108 = vadd.f32 %v6007, %v6076
      %v6109 = vadd.f32 %v6008, %v6077
      %v6110 = vadd.f32 %v6009, %v6078
      %v6111 = vld [vmem:[%s4865 + $0x8] sm:$0xff]
      %v6112 = vld [vmem:[%s4865 + $0x10] sm:$0xff]
      %v6113 = vld [vmem:[%s4865 + $0x28] sm:$0xff]
      %v6114 = vld [vmem:[%s4865 + $0x30] sm:$0xff]
      %v6115 = vld [vmem:[%s4865 + $0x48] sm:$0xff]
      %v6116 = vld [vmem:[%s4865 + $0x50] sm:$0xff]
      %v6117 = vld [vmem:[%s4865 + $0x68] sm:$0xff]
      %v6118 = vld [vmem:[%s4865 + $0x70] sm:$0xff]
      %v6119 = vld [vmem:[%s4865 + $0x88] sm:$0xff]
      %v6120 = vld [vmem:[%s4865 + $0x90] sm:$0xff]
      %v6121 = vld [vmem:[%s4865 + $0xa8] sm:$0xff]
      %v6122 = vld [vmem:[%s4865 + $0xb0] sm:$0xff]
      %v6123 = vld [vmem:[%s4865 + $0xc8] sm:$0xff]
      %v6124 = vld [vmem:[%s4865 + $0xd0] sm:$0xff]
      %v6125 = vld [vmem:[%s4865 + $0xe8] sm:$0xff]
      %v6126 = vld [vmem:[%s4865 + $0xf0] sm:$0xff]
      %v6127 = vld [vmem:[%s4865 + $0x108] sm:$0xff]
      %v6128 = vld [vmem:[%s4865 + $0x110] sm:$0xff]
      %v6129 = vld [vmem:[%s4865 + $0x128] sm:$0xff]
      %v6130 = vld [vmem:[%s4865 + $0x130] sm:$0xff]
      %v6131 = vld [vmem:[%s4865 + $0x148] sm:$0xff]
      %v6132 = vld [vmem:[%s4865 + $0x150] sm:$0xff]
      %v6133 = vld [vmem:[%s4865 + $0x168] sm:$0xff]
      %v6134 = vld [vmem:[%s4865 + $0x170] sm:$0xff]
      %v6135 = vld [vmem:[%s4865 + $0x188] sm:$0xff]
      %v6136 = vld [vmem:[%s4865 + $0x190] sm:$0xff]
      %v6137 = vld [vmem:[%s4865 + $0x1a8] sm:$0xff]
      %v6138 = vld [vmem:[%s4865 + $0x1b0] sm:$0xff]
      %v6139 = vld [vmem:[%s4865 + $0x1c8] sm:$0xff]
      %v6140 = vld [vmem:[%s4865 + $0x1d0] sm:$0xff]
      %v6141 = vld [vmem:[%s4865 + $0x1e8] sm:$0xff]
      %v6142 = vld [vmem:[%s4865 + $0x1f0] sm:$0xff]
      %v6143 = vld [vmem:[%s4 + $0xc] sm:$0x1]
      %v6144 = vlaneseq
      %v6145 = vshrl.u32 %v6144, 7
      %v6146 = vsub.s32 0, %v6145
      %v6147 = vrot.slane %v6143, %v6146
      %v6148 = vmul.f32 %v6111, %v6147
      %v6149 = vmul.f32 %v6112, %v6147
      %v6150 = vmul.f32 %v6113, %v6147
      %v6151 = vmul.f32 %v6114, %v6147
      %v6152 = vmul.f32 %v6115, %v6147
      %v6153 = vmul.f32 %v6116, %v6147
      %v6154 = vmul.f32 %v6117, %v6147
      %v6155 = vmul.f32 %v6118, %v6147
      %v6156 = vmul.f32 %v6119, %v6147
      %v6157 = vmul.f32 %v6120, %v6147
      %v6158 = vmul.f32 %v6121, %v6147
      %v6159 = vmul.f32 %v6122, %v6147
      %v6160 = vmul.f32 %v6123, %v6147
      %v6161 = vmul.f32 %v6124, %v6147
      %v6162 = vmul.f32 %v6125, %v6147
      %v6163 = vmul.f32 %v6126, %v6147
      %v6164 = vmul.f32 %v6127, %v6147
      %v6165 = vmul.f32 %v6128, %v6147
      %v6166 = vmul.f32 %v6129, %v6147
      %v6167 = vmul.f32 %v6130, %v6147
      %v6168 = vmul.f32 %v6131, %v6147
      %v6169 = vmul.f32 %v6132, %v6147
      %v6170 = vmul.f32 %v6133, %v6147
      %v6171 = vmul.f32 %v6134, %v6147
      %v6172 = vmul.f32 %v6135, %v6147
      %v6173 = vmul.f32 %v6136, %v6147
      %v6174 = vmul.f32 %v6137, %v6147
      %v6175 = vmul.f32 %v6138, %v6147
      %v6176 = vmul.f32 %v6139, %v6147
      %v6177 = vmul.f32 %v6140, %v6147
      %v6178 = vmul.f32 %v6141, %v6147
      %v6179 = vmul.f32 %v6142, %v6147
      %v6180 = vadd.f32 %v6079, %v6148
      %v6181 = vadd.f32 %v6080, %v6149
      %v6182 = vadd.f32 %v6081, %v6150
      %v6183 = vadd.f32 %v6082, %v6151
      %v6184 = vadd.f32 %v6083, %v6152
      %v6185 = vadd.f32 %v6084, %v6153
      %v6186 = vadd.f32 %v6085, %v6154
      %v6187 = vadd.f32 %v6086, %v6155
      %v6188 = vadd.f32 %v6087, %v6156
      %v6189 = vadd.f32 %v6088, %v6157
      %v6190 = vadd.f32 %v6089, %v6158
      %v6191 = vadd.f32 %v6090, %v6159
      %v6192 = vadd.f32 %v6091, %v6160
      %v6193 = vadd.f32 %v6092, %v6161
      %v6194 = vadd.f32 %v6093, %v6162
      %v6195 = vadd.f32 %v6094, %v6163
      %v6196 = vadd.f32 %v6095, %v6164
      %v6197 = vadd.f32 %v6096, %v6165
      %v6198 = vadd.f32 %v6097, %v6166
      %v6199 = vadd.f32 %v6098, %v6167
      %v6200 = vadd.f32 %v6099, %v6168
      %v6201 = vadd.f32 %v6100, %v6169
      %v6202 = vadd.f32 %v6101, %v6170
      %v6203 = vadd.f32 %v6102, %v6171
      %v6204 = vadd.f32 %v6103, %v6172
      %v6205 = vadd.f32 %v6104, %v6173
      %v6206 = vadd.f32 %v6105, %v6174
      %v6207 = vadd.f32 %v6106, %v6175
      %v6208 = vadd.f32 %v6107, %v6176
      %v6209 = vadd.f32 %v6108, %v6177
      %v6210 = vadd.f32 %v6109, %v6178
      %v6211 = vadd.f32 %v6110, %v6179
      %v6212 = vld [vmem:[%s4865 + $0x9] sm:$0xff]
      %v6213 = vld [vmem:[%s4865 + $0x11] sm:$0xff]
      %v6214 = vld [vmem:[%s4865 + $0x29] sm:$0xff]
      %v6215 = vld [vmem:[%s4865 + $0x31] sm:$0xff]
      %v6216 = vld [vmem:[%s4865 + $0x49] sm:$0xff]
      %v6217 = vld [vmem:[%s4865 + $0x51] sm:$0xff]
      %v6218 = vld [vmem:[%s4865 + $0x69] sm:$0xff]
      %v6219 = vld [vmem:[%s4865 + $0x71] sm:$0xff]
      %v6220 = vld [vmem:[%s4865 + $0x89] sm:$0xff]
      %v6221 = vld [vmem:[%s4865 + $0x91] sm:$0xff]
      %v6222 = vld [vmem:[%s4865 + $0xa9] sm:$0xff]
      %v6223 = vld [vmem:[%s4865 + $0xb1] sm:$0xff]
      %v6224 = vld [vmem:[%s4865 + $0xc9] sm:$0xff]
      %v6225 = vld [vmem:[%s4865 + $0xd1] sm:$0xff]
      %v6226 = vld [vmem:[%s4865 + $0xe9] sm:$0xff]
      %v6227 = vld [vmem:[%s4865 + $0xf1] sm:$0xff]
      %v6228 = vld [vmem:[%s4865 + $0x109] sm:$0xff]
      %v6229 = vld [vmem:[%s4865 + $0x111] sm:$0xff]
      %v6230 = vld [vmem:[%s4865 + $0x129] sm:$0xff]
      %v6231 = vld [vmem:[%s4865 + $0x131] sm:$0xff]
      %v6232 = vld [vmem:[%s4865 + $0x149] sm:$0xff]
      %v6233 = vld [vmem:[%s4865 + $0x151] sm:$0xff]
      %v6234 = vld [vmem:[%s4865 + $0x169] sm:$0xff]
      %v6235 = vld [vmem:[%s4865 + $0x171] sm:$0xff]
      %v6236 = vld [vmem:[%s4865 + $0x189] sm:$0xff]
      %v6237 = vld [vmem:[%s4865 + $0x191] sm:$0xff]
      %v6238 = vld [vmem:[%s4865 + $0x1a9] sm:$0xff]
      %v6239 = vld [vmem:[%s4865 + $0x1b1] sm:$0xff]
      %v6240 = vld [vmem:[%s4865 + $0x1c9] sm:$0xff]
      %v6241 = vld [vmem:[%s4865 + $0x1d1] sm:$0xff]
      %v6242 = vld [vmem:[%s4865 + $0x1e9] sm:$0xff]
      %v6243 = vld [vmem:[%s4865 + $0x1f1] sm:$0xff]
      %v6244 = vld [vmem:[%s4 + $0xd] sm:$0x1]
      %v6245 = vlaneseq
      %v6246 = vshrl.u32 %v6245, 7
      %v6247 = vsub.s32 0, %v6246
      %v6248 = vrot.slane %v6244, %v6247
      %v6249 = vmul.f32 %v6212, %v6248
      %v6250 = vmul.f32 %v6213, %v6248
      %v6251 = vmul.f32 %v6214, %v6248
      %v6252 = vmul.f32 %v6215, %v6248
      %v6253 = vmul.f32 %v6216, %v6248
      %v6254 = vmul.f32 %v6217, %v6248
      %v6255 = vmul.f32 %v6218, %v6248
      %v6256 = vmul.f32 %v6219, %v6248
      %v6257 = vmul.f32 %v6220, %v6248
      %v6258 = vmul.f32 %v6221, %v6248
      %v6259 = vmul.f32 %v6222, %v6248
      %v6260 = vmul.f32 %v6223, %v6248
      %v6261 = vmul.f32 %v6224, %v6248
      %v6262 = vmul.f32 %v6225, %v6248
      %v6263 = vmul.f32 %v6226, %v6248
      %v6264 = vmul.f32 %v6227, %v6248
      %v6265 = vmul.f32 %v6228, %v6248
      %v6266 = vmul.f32 %v6229, %v6248
      %v6267 = vmul.f32 %v6230, %v6248
      %v6268 = vmul.f32 %v6231, %v6248
      %v6269 = vmul.f32 %v6232, %v6248
      %v6270 = vmul.f32 %v6233, %v6248
      %v6271 = vmul.f32 %v6234, %v6248
      %v6272 = vmul.f32 %v6235, %v6248
      %v6273 = vmul.f32 %v6236, %v6248
      %v6274 = vmul.f32 %v6237, %v6248
      %v6275 = vmul.f32 %v6238, %v6248
      %v6276 = vmul.f32 %v6239, %v6248
      %v6277 = vmul.f32 %v6240, %v6248
      %v6278 = vmul.f32 %v6241, %v6248
      %v6279 = vmul.f32 %v6242, %v6248
      %v6280 = vmul.f32 %v6243, %v6248
      %v6281 = vadd.f32 %v6180, %v6249
      %v6282 = vadd.f32 %v6181, %v6250
      %v6283 = vadd.f32 %v6182, %v6251
      %v6284 = vadd.f32 %v6183, %v6252
      %v6285 = vadd.f32 %v6184, %v6253
      %v6286 = vadd.f32 %v6185, %v6254
      %v6287 = vadd.f32 %v6186, %v6255
      %v6288 = vadd.f32 %v6187, %v6256
      %v6289 = vadd.f32 %v6188, %v6257
      %v6290 = vadd.f32 %v6189, %v6258
      %v6291 = vadd.f32 %v6190, %v6259
      %v6292 = vadd.f32 %v6191, %v6260
      %v6293 = vadd.f32 %v6192, %v6261
      %v6294 = vadd.f32 %v6193, %v6262
      %v6295 = vadd.f32 %v6194, %v6263
      %v6296 = vadd.f32 %v6195, %v6264
      %v6297 = vadd.f32 %v6196, %v6265
      %v6298 = vadd.f32 %v6197, %v6266
      %v6299 = vadd.f32 %v6198, %v6267
      %v6300 = vadd.f32 %v6199, %v6268
      %v6301 = vadd.f32 %v6200, %v6269
      %v6302 = vadd.f32 %v6201, %v6270
      %v6303 = vadd.f32 %v6202, %v6271
      %v6304 = vadd.f32 %v6203, %v6272
      %v6305 = vadd.f32 %v6204, %v6273
      %v6306 = vadd.f32 %v6205, %v6274
      %v6307 = vadd.f32 %v6206, %v6275
      %v6308 = vadd.f32 %v6207, %v6276
      %v6309 = vadd.f32 %v6208, %v6277
      %v6310 = vadd.f32 %v6209, %v6278
      %v6311 = vadd.f32 %v6210, %v6279
      %v6312 = vadd.f32 %v6211, %v6280
      %v6313 = vld [vmem:[%s4865 + $0xa] sm:$0xff]
      %v6314 = vld [vmem:[%s4865 + $0x12] sm:$0xff]
      %v6315 = vld [vmem:[%s4865 + $0x2a] sm:$0xff]
      %v6316 = vld [vmem:[%s4865 + $0x32] sm:$0xff]
      %v6317 = vld [vmem:[%s4865 + $0x4a] sm:$0xff]
      %v6318 = vld [vmem:[%s4865 + $0x52] sm:$0xff]
      %v6319 = vld [vmem:[%s4865 + $0x6a] sm:$0xff]
      %v6320 = vld [vmem:[%s4865 + $0x72] sm:$0xff]
      %v6321 = vld [vmem:[%s4865 + $0x8a] sm:$0xff]
      %v6322 = vld [vmem:[%s4865 + $0x92] sm:$0xff]
      %v6323 = vld [vmem:[%s4865 + $0xaa] sm:$0xff]
      %v6324 = vld [vmem:[%s4865 + $0xb2] sm:$0xff]
      %v6325 = vld [vmem:[%s4865 + $0xca] sm:$0xff]
      %v6326 = vld [vmem:[%s4865 + $0xd2] sm:$0xff]
      %v6327 = vld [vmem:[%s4865 + $0xea] sm:$0xff]
      %v6328 = vld [vmem:[%s4865 + $0xf2] sm:$0xff]
      %v6329 = vld [vmem:[%s4865 + $0x10a] sm:$0xff]
      %v6330 = vld [vmem:[%s4865 + $0x112] sm:$0xff]
      %v6331 = vld [vmem:[%s4865 + $0x12a] sm:$0xff]
      %v6332 = vld [vmem:[%s4865 + $0x132] sm:$0xff]
      %v6333 = vld [vmem:[%s4865 + $0x14a] sm:$0xff]
      %v6334 = vld [vmem:[%s4865 + $0x152] sm:$0xff]
      %v6335 = vld [vmem:[%s4865 + $0x16a] sm:$0xff]
      %v6336 = vld [vmem:[%s4865 + $0x172] sm:$0xff]
      %v6337 = vld [vmem:[%s4865 + $0x18a] sm:$0xff]
      %v6338 = vld [vmem:[%s4865 + $0x192] sm:$0xff]
      %v6339 = vld [vmem:[%s4865 + $0x1aa] sm:$0xff]
      %v6340 = vld [vmem:[%s4865 + $0x1b2] sm:$0xff]
      %v6341 = vld [vmem:[%s4865 + $0x1ca] sm:$0xff]
      %v6342 = vld [vmem:[%s4865 + $0x1d2] sm:$0xff]
      %v6343 = vld [vmem:[%s4865 + $0x1ea] sm:$0xff]
      %v6344 = vld [vmem:[%s4865 + $0x1f2] sm:$0xff]
      %v6345 = vld [vmem:[%s4 + $0xe] sm:$0x1]
      %v6346 = vlaneseq
      %v6347 = vshrl.u32 %v6346, 7
      %v6348 = vsub.s32 0, %v6347
      %v6349 = vrot.slane %v6345, %v6348
      %v6350 = vmul.f32 %v6313, %v6349
      %v6351 = vmul.f32 %v6314, %v6349
      %v6352 = vmul.f32 %v6315, %v6349
      %v6353 = vmul.f32 %v6316, %v6349
      %v6354 = vmul.f32 %v6317, %v6349
      %v6355 = vmul.f32 %v6318, %v6349
      %v6356 = vmul.f32 %v6319, %v6349
      %v6357 = vmul.f32 %v6320, %v6349
      %v6358 = vmul.f32 %v6321, %v6349
      %v6359 = vmul.f32 %v6322, %v6349
      %v6360 = vmul.f32 %v6323, %v6349
      %v6361 = vmul.f32 %v6324, %v6349
      %v6362 = vmul.f32 %v6325, %v6349
      %v6363 = vmul.f32 %v6326, %v6349
      %v6364 = vmul.f32 %v6327, %v6349
      %v6365 = vmul.f32 %v6328, %v6349
      %v6366 = vmul.f32 %v6329, %v6349
      %v6367 = vmul.f32 %v6330, %v6349
      %v6368 = vmul.f32 %v6331, %v6349
      %v6369 = vmul.f32 %v6332, %v6349
      %v6370 = vmul.f32 %v6333, %v6349
      %v6371 = vmul.f32 %v6334, %v6349
      %v6372 = vmul.f32 %v6335, %v6349
      %v6373 = vmul.f32 %v6336, %v6349
      %v6374 = vmul.f32 %v6337, %v6349
      %v6375 = vmul.f32 %v6338, %v6349
      %v6376 = vmul.f32 %v6339, %v6349
      %v6377 = vmul.f32 %v6340, %v6349
      %v6378 = vmul.f32 %v6341, %v6349
      %v6379 = vmul.f32 %v6342, %v6349
      %v6380 = vmul.f32 %v6343, %v6349
      %v6381 = vmul.f32 %v6344, %v6349
      %v6382 = vadd.f32 %v6281, %v6350
      %v6383 = vadd.f32 %v6282, %v6351
      %v6384 = vadd.f32 %v6283, %v6352
      %v6385 = vadd.f32 %v6284, %v6353
      %v6386 = vadd.f32 %v6285, %v6354
      %v6387 = vadd.f32 %v6286, %v6355
      %v6388 = vadd.f32 %v6287, %v6356
      %v6389 = vadd.f32 %v6288, %v6357
      %v6390 = vadd.f32 %v6289, %v6358
      %v6391 = vadd.f32 %v6290, %v6359
      %v6392 = vadd.f32 %v6291, %v6360
      %v6393 = vadd.f32 %v6292, %v6361
      %v6394 = vadd.f32 %v6293, %v6362
      %v6395 = vadd.f32 %v6294, %v6363
      %v6396 = vadd.f32 %v6295, %v6364
      %v6397 = vadd.f32 %v6296, %v6365
      %v6398 = vadd.f32 %v6297, %v6366
      %v6399 = vadd.f32 %v6298, %v6367
      %v6400 = vadd.f32 %v6299, %v6368
      %v6401 = vadd.f32 %v6300, %v6369
      %v6402 = vadd.f32 %v6301, %v6370
      %v6403 = vadd.f32 %v6302, %v6371
      %v6404 = vadd.f32 %v6303, %v6372
      %v6405 = vadd.f32 %v6304, %v6373
      %v6406 = vadd.f32 %v6305, %v6374
      %v6407 = vadd.f32 %v6306, %v6375
      %v6408 = vadd.f32 %v6307, %v6376
      %v6409 = vadd.f32 %v6308, %v6377
      %v6410 = vadd.f32 %v6309, %v6378
      %v6411 = vadd.f32 %v6310, %v6379
      %v6412 = vadd.f32 %v6311, %v6380
      %v6413 = vadd.f32 %v6312, %v6381
      %s6414 = scalar_lea.vmem [#allocation3], 96
      %v6415 = vld [vmem:[%s6414 + $0x6] sm:$0xff]
      %v6416 = vld [vmem:[%s6414 + $0xe] sm:$0xff]
      %v6417 = vld [vmem:[%s6414 + $0x26] sm:$0xff]
      %v6418 = vld [vmem:[%s6414 + $0x2e] sm:$0xff]
      %v6419 = vld [vmem:[%s6414 + $0x46] sm:$0xff]
      %v6420 = vld [vmem:[%s6414 + $0x4e] sm:$0xff]
      %v6421 = vld [vmem:[%s6414 + $0x66] sm:$0xff]
      %v6422 = vld [vmem:[%s6414 + $0x6e] sm:$0xff]
      %v6423 = vld [vmem:[%s6414 + $0x86] sm:$0xff]
      %v6424 = vld [vmem:[%s6414 + $0x8e] sm:$0xff]
      %v6425 = vld [vmem:[%s6414 + $0xa6] sm:$0xff]
      %v6426 = vld [vmem:[%s6414 + $0xae] sm:$0xff]
      %v6427 = vld [vmem:[%s6414 + $0xc6] sm:$0xff]
      %v6428 = vld [vmem:[%s6414 + $0xce] sm:$0xff]
      %v6429 = vld [vmem:[%s6414 + $0xe6] sm:$0xff]
      %v6430 = vld [vmem:[%s6414 + $0xee] sm:$0xff]
      %v6431 = vld [vmem:[%s6414 + $0x106] sm:$0xff]
      %v6432 = vld [vmem:[%s6414 + $0x10e] sm:$0xff]
      %v6433 = vld [vmem:[%s6414 + $0x126] sm:$0xff]
      %v6434 = vld [vmem:[%s6414 + $0x12e] sm:$0xff]
      %v6435 = vld [vmem:[%s6414 + $0x146] sm:$0xff]
      %v6436 = vld [vmem:[%s6414 + $0x14e] sm:$0xff]
      %v6437 = vld [vmem:[%s6414 + $0x166] sm:$0xff]
      %v6438 = vld [vmem:[%s6414 + $0x16e] sm:$0xff]
      %v6439 = vld [vmem:[%s6414 + $0x186] sm:$0xff]
      %v6440 = vld [vmem:[%s6414 + $0x18e] sm:$0xff]
      %v6441 = vld [vmem:[%s6414 + $0x1a6] sm:$0xff]
      %v6442 = vld [vmem:[%s6414 + $0x1ae] sm:$0xff]
      %v6443 = vld [vmem:[%s6414 + $0x1c6] sm:$0xff]
      %v6444 = vld [vmem:[%s6414 + $0x1ce] sm:$0xff]
      %v6445 = vld [vmem:[%s6414 + $0x1e6] sm:$0xff]
      %v6446 = vld [vmem:[%s6414 + $0x1ee] sm:$0xff]
      %v6447 = vld [vmem:[%s4 + $0xf] sm:$0x1]
      %v6448 = vlaneseq
      %v6449 = vshrl.u32 %v6448, 7
      %v6450 = vsub.s32 0, %v6449
      %v6451 = vrot.slane %v6447, %v6450
      %v6452 = vmul.f32 %v6415, %v6451
      %v6453 = vmul.f32 %v6416, %v6451
      %v6454 = vmul.f32 %v6417, %v6451
      %v6455 = vmul.f32 %v6418, %v6451
      %v6456 = vmul.f32 %v6419, %v6451
      %v6457 = vmul.f32 %v6420, %v6451
      %v6458 = vmul.f32 %v6421, %v6451
      %v6459 = vmul.f32 %v6422, %v6451
      %v6460 = vmul.f32 %v6423, %v6451
      %v6461 = vmul.f32 %v6424, %v6451
      %v6462 = vmul.f32 %v6425, %v6451
      %v6463 = vmul.f32 %v6426, %v6451
      %v6464 = vmul.f32 %v6427, %v6451
      %v6465 = vmul.f32 %v6428, %v6451
      %v6466 = vmul.f32 %v6429, %v6451
      %v6467 = vmul.f32 %v6430, %v6451
      %v6468 = vmul.f32 %v6431, %v6451
      %v6469 = vmul.f32 %v6432, %v6451
      %v6470 = vmul.f32 %v6433, %v6451
      %v6471 = vmul.f32 %v6434, %v6451
      %v6472 = vmul.f32 %v6435, %v6451
      %v6473 = vmul.f32 %v6436, %v6451
      %v6474 = vmul.f32 %v6437, %v6451
      %v6475 = vmul.f32 %v6438, %v6451
      %v6476 = vmul.f32 %v6439, %v6451
      %v6477 = vmul.f32 %v6440, %v6451
      %v6478 = vmul.f32 %v6441, %v6451
      %v6479 = vmul.f32 %v6442, %v6451
      %v6480 = vmul.f32 %v6443, %v6451
      %v6481 = vmul.f32 %v6444, %v6451
      %v6482 = vmul.f32 %v6445, %v6451
      %v6483 = vmul.f32 %v6446, %v6451
      %v6484 = vadd.f32 %v6382, %v6452
      %v6485 = vadd.f32 %v6383, %v6453
      %v6486 = vadd.f32 %v6384, %v6454
      %v6487 = vadd.f32 %v6385, %v6455
      %v6488 = vadd.f32 %v6386, %v6456
      %v6489 = vadd.f32 %v6387, %v6457
      %v6490 = vadd.f32 %v6388, %v6458
      %v6491 = vadd.f32 %v6389, %v6459
      %v6492 = vadd.f32 %v6390, %v6460
      %v6493 = vadd.f32 %v6391, %v6461
      %v6494 = vadd.f32 %v6392, %v6462
      %v6495 = vadd.f32 %v6393, %v6463
      %v6496 = vadd.f32 %v6394, %v6464
      %v6497 = vadd.f32 %v6395, %v6465
      %v6498 = vadd.f32 %v6396, %v6466
      %v6499 = vadd.f32 %v6397, %v6467
      %v6500 = vadd.f32 %v6398, %v6468
      %v6501 = vadd.f32 %v6399, %v6469
      %v6502 = vadd.f32 %v6400, %v6470
      %v6503 = vadd.f32 %v6401, %v6471
      %v6504 = vadd.f32 %v6402, %v6472
      %v6505 = vadd.f32 %v6403, %v6473
      %v6506 = vadd.f32 %v6404, %v6474
      %v6507 = vadd.f32 %v6405, %v6475
      %v6508 = vadd.f32 %v6406, %v6476
      %v6509 = vadd.f32 %v6407, %v6477
      %v6510 = vadd.f32 %v6408, %v6478
      %v6511 = vadd.f32 %v6409, %v6479
      %v6512 = vadd.f32 %v6410, %v6480
      %v6513 = vadd.f32 %v6411, %v6481
      %v6514 = vadd.f32 %v6412, %v6482
      %v6515 = vadd.f32 %v6413, %v6483
      %v6516 = vld [vmem:[%s6414 + $0x7] sm:$0xff]
      %v6517 = vld [vmem:[%s6414 + $0xf] sm:$0xff]
      %v6518 = vld [vmem:[%s6414 + $0x27] sm:$0xff]
      %v6519 = vld [vmem:[%s6414 + $0x2f] sm:$0xff]
      %v6520 = vld [vmem:[%s6414 + $0x47] sm:$0xff]
      %v6521 = vld [vmem:[%s6414 + $0x4f] sm:$0xff]
      %v6522 = vld [vmem:[%s6414 + $0x67] sm:$0xff]
      %v6523 = vld [vmem:[%s6414 + $0x6f] sm:$0xff]
      %v6524 = vld [vmem:[%s6414 + $0x87] sm:$0xff]
      %v6525 = vld [vmem:[%s6414 + $0x8f] sm:$0xff]
      %v6526 = vld [vmem:[%s6414 + $0xa7] sm:$0xff]
      %v6527 = vld [vmem:[%s6414 + $0xaf] sm:$0xff]
      %v6528 = vld [vmem:[%s6414 + $0xc7] sm:$0xff]
      %v6529 = vld [vmem:[%s6414 + $0xcf] sm:$0xff]
      %v6530 = vld [vmem:[%s6414 + $0xe7] sm:$0xff]
      %v6531 = vld [vmem:[%s6414 + $0xef] sm:$0xff]
      %v6532 = vld [vmem:[%s6414 + $0x107] sm:$0xff]
      %v6533 = vld [vmem:[%s6414 + $0x10f] sm:$0xff]
      %v6534 = vld [vmem:[%s6414 + $0x127] sm:$0xff]
      %v6535 = vld [vmem:[%s6414 + $0x12f] sm:$0xff]
      %v6536 = vld [vmem:[%s6414 + $0x147] sm:$0xff]
      %v6537 = vld [vmem:[%s6414 + $0x14f] sm:$0xff]
      %v6538 = vld [vmem:[%s6414 + $0x167] sm:$0xff]
      %v6539 = vld [vmem:[%s6414 + $0x16f] sm:$0xff]
      %v6540 = vld [vmem:[%s6414 + $0x187] sm:$0xff]
      %v6541 = vld [vmem:[%s6414 + $0x18f] sm:$0xff]
      %v6542 = vld [vmem:[%s6414 + $0x1a7] sm:$0xff]
      %v6543 = vld [vmem:[%s6414 + $0x1af] sm:$0xff]
      %v6544 = vld [vmem:[%s6414 + $0x1c7] sm:$0xff]
      %v6545 = vld [vmem:[%s6414 + $0x1cf] sm:$0xff]
      %v6546 = vld [vmem:[%s6414 + $0x1e7] sm:$0xff]
      %v6547 = vld [vmem:[%s6414 + $0x1ef] sm:$0xff]
      %v6548 = vld [vmem:[%s4 + $0x10] sm:$0x1]
      %v6549 = vlaneseq
      %v6550 = vshrl.u32 %v6549, 7
      %v6551 = vsub.s32 0, %v6550
      %v6552 = vrot.slane %v6548, %v6551
      %v6553 = vmul.f32 %v6516, %v6552
      %v6554 = vmul.f32 %v6517, %v6552
      %v6555 = vmul.f32 %v6518, %v6552
      %v6556 = vmul.f32 %v6519, %v6552
      %v6557 = vmul.f32 %v6520, %v6552
      %v6558 = vmul.f32 %v6521, %v6552
      %v6559 = vmul.f32 %v6522, %v6552
      %v6560 = vmul.f32 %v6523, %v6552
      %v6561 = vmul.f32 %v6524, %v6552
      %v6562 = vmul.f32 %v6525, %v6552
      %v6563 = vmul.f32 %v6526, %v6552
      %v6564 = vmul.f32 %v6527, %v6552
      %v6565 = vmul.f32 %v6528, %v6552
      %v6566 = vmul.f32 %v6529, %v6552
      %v6567 = vmul.f32 %v6530, %v6552
      %v6568 = vmul.f32 %v6531, %v6552
      %v6569 = vmul.f32 %v6532, %v6552
      %v6570 = vmul.f32 %v6533, %v6552
      %v6571 = vmul.f32 %v6534, %v6552
      %v6572 = vmul.f32 %v6535, %v6552
      %v6573 = vmul.f32 %v6536, %v6552
      %v6574 = vmul.f32 %v6537, %v6552
      %v6575 = vmul.f32 %v6538, %v6552
      %v6576 = vmul.f32 %v6539, %v6552
      %v6577 = vmul.f32 %v6540, %v6552
      %v6578 = vmul.f32 %v6541, %v6552
      %v6579 = vmul.f32 %v6542, %v6552
      %v6580 = vmul.f32 %v6543, %v6552
      %v6581 = vmul.f32 %v6544, %v6552
      %v6582 = vmul.f32 %v6545, %v6552
      %v6583 = vmul.f32 %v6546, %v6552
      %v6584 = vmul.f32 %v6547, %v6552
      %v6585 = vadd.f32 %v6484, %v6553
      %v6586 = vadd.f32 %v6485, %v6554
      %v6587 = vadd.f32 %v6486, %v6555
      %v6588 = vadd.f32 %v6487, %v6556
      %v6589 = vadd.f32 %v6488, %v6557
      %v6590 = vadd.f32 %v6489, %v6558
      %v6591 = vadd.f32 %v6490, %v6559
      %v6592 = vadd.f32 %v6491, %v6560
      %v6593 = vadd.f32 %v6492, %v6561
      %v6594 = vadd.f32 %v6493, %v6562
      %v6595 = vadd.f32 %v6494, %v6563
      %v6596 = vadd.f32 %v6495, %v6564
      %v6597 = vadd.f32 %v6496, %v6565
      %v6598 = vadd.f32 %v6497, %v6566
      %v6599 = vadd.f32 %v6498, %v6567
      %v6600 = vadd.f32 %v6499, %v6568
      %v6601 = vadd.f32 %v6500, %v6569
      %v6602 = vadd.f32 %v6501, %v6570
      %v6603 = vadd.f32 %v6502, %v6571
      %v6604 = vadd.f32 %v6503, %v6572
      %v6605 = vadd.f32 %v6504, %v6573
      %v6606 = vadd.f32 %v6505, %v6574
      %v6607 = vadd.f32 %v6506, %v6575
      %v6608 = vadd.f32 %v6507, %v6576
      %v6609 = vadd.f32 %v6508, %v6577
      %v6610 = vadd.f32 %v6509, %v6578
      %v6611 = vadd.f32 %v6510, %v6579
      %v6612 = vadd.f32 %v6511, %v6580
      %v6613 = vadd.f32 %v6512, %v6581
      %v6614 = vadd.f32 %v6513, %v6582
      %v6615 = vadd.f32 %v6514, %v6583
      %v6616 = vadd.f32 %v6515, %v6584
      %v6617 = vld [vmem:[%s6414 + $0x8] sm:$0xff]
      %v6618 = vld [vmem:[%s6414 + $0x10] sm:$0xff]
      %v6619 = vld [vmem:[%s6414 + $0x28] sm:$0xff]
      %v6620 = vld [vmem:[%s6414 + $0x30] sm:$0xff]
      %v6621 = vld [vmem:[%s6414 + $0x48] sm:$0xff]
      %v6622 = vld [vmem:[%s6414 + $0x50] sm:$0xff]
      %v6623 = vld [vmem:[%s6414 + $0x68] sm:$0xff]
      %v6624 = vld [vmem:[%s6414 + $0x70] sm:$0xff]
      %v6625 = vld [vmem:[%s6414 + $0x88] sm:$0xff]
      %v6626 = vld [vmem:[%s6414 + $0x90] sm:$0xff]
      %v6627 = vld [vmem:[%s6414 + $0xa8] sm:$0xff]
      %v6628 = vld [vmem:[%s6414 + $0xb0] sm:$0xff]
      %v6629 = vld [vmem:[%s6414 + $0xc8] sm:$0xff]
      %v6630 = vld [vmem:[%s6414 + $0xd0] sm:$0xff]
      %v6631 = vld [vmem:[%s6414 + $0xe8] sm:$0xff]
      %v6632 = vld [vmem:[%s6414 + $0xf0] sm:$0xff]
      %v6633 = vld [vmem:[%s6414 + $0x108] sm:$0xff]
      %v6634 = vld [vmem:[%s6414 + $0x110] sm:$0xff]
      %v6635 = vld [vmem:[%s6414 + $0x128] sm:$0xff]
      %v6636 = vld [vmem:[%s6414 + $0x130] sm:$0xff]
      %v6637 = vld [vmem:[%s6414 + $0x148] sm:$0xff]
      %v6638 = vld [vmem:[%s6414 + $0x150] sm:$0xff]
      %v6639 = vld [vmem:[%s6414 + $0x168] sm:$0xff]
      %v6640 = vld [vmem:[%s6414 + $0x170] sm:$0xff]
      %v6641 = vld [vmem:[%s6414 + $0x188] sm:$0xff]
      %v6642 = vld [vmem:[%s6414 + $0x190] sm:$0xff]
      %v6643 = vld [vmem:[%s6414 + $0x1a8] sm:$0xff]
      %v6644 = vld [vmem:[%s6414 + $0x1b0] sm:$0xff]
      %v6645 = vld [vmem:[%s6414 + $0x1c8] sm:$0xff]
      %v6646 = vld [vmem:[%s6414 + $0x1d0] sm:$0xff]
      %v6647 = vld [vmem:[%s6414 + $0x1e8] sm:$0xff]
      %v6648 = vld [vmem:[%s6414 + $0x1f0] sm:$0xff]
      %v6649 = vld [vmem:[%s4 + $0x11] sm:$0x1]
      %v6650 = vlaneseq
      %v6651 = vshrl.u32 %v6650, 7
      %v6652 = vsub.s32 0, %v6651
      %v6653 = vrot.slane %v6649, %v6652
      %v6654 = vmul.f32 %v6617, %v6653
      %v6655 = vmul.f32 %v6618, %v6653
      %v6656 = vmul.f32 %v6619, %v6653
      %v6657 = vmul.f32 %v6620, %v6653
      %v6658 = vmul.f32 %v6621, %v6653
      %v6659 = vmul.f32 %v6622, %v6653
      %v6660 = vmul.f32 %v6623, %v6653
      %v6661 = vmul.f32 %v6624, %v6653
      %v6662 = vmul.f32 %v6625, %v6653
      %v6663 = vmul.f32 %v6626, %v6653
      %v6664 = vmul.f32 %v6627, %v6653
      %v6665 = vmul.f32 %v6628, %v6653
      %v6666 = vmul.f32 %v6629, %v6653
      %v6667 = vmul.f32 %v6630, %v6653
      %v6668 = vmul.f32 %v6631, %v6653
      %v6669 = vmul.f32 %v6632, %v6653
      %v6670 = vmul.f32 %v6633, %v6653
      %v6671 = vmul.f32 %v6634, %v6653
      %v6672 = vmul.f32 %v6635, %v6653
      %v6673 = vmul.f32 %v6636, %v6653
      %v6674 = vmul.f32 %v6637, %v6653
      %v6675 = vmul.f32 %v6638, %v6653
      %v6676 = vmul.f32 %v6639, %v6653
      %v6677 = vmul.f32 %v6640, %v6653
      %v6678 = vmul.f32 %v6641, %v6653
      %v6679 = vmul.f32 %v6642, %v6653
      %v6680 = vmul.f32 %v6643, %v6653
      %v6681 = vmul.f32 %v6644, %v6653
      %v6682 = vmul.f32 %v6645, %v6653
      %v6683 = vmul.f32 %v6646, %v6653
      %v6684 = vmul.f32 %v6647, %v6653
      %v6685 = vmul.f32 %v6648, %v6653
      %v6686 = vadd.f32 %v6585, %v6654
      %v6687 = vadd.f32 %v6586, %v6655
      %v6688 = vadd.f32 %v6587, %v6656
      %v6689 = vadd.f32 %v6588, %v6657
      %v6690 = vadd.f32 %v6589, %v6658
      %v6691 = vadd.f32 %v6590, %v6659
      %v6692 = vadd.f32 %v6591, %v6660
      %v6693 = vadd.f32 %v6592, %v6661
      %v6694 = vadd.f32 %v6593, %v6662
      %v6695 = vadd.f32 %v6594, %v6663
      %v6696 = vadd.f32 %v6595, %v6664
      %v6697 = vadd.f32 %v6596, %v6665
      %v6698 = vadd.f32 %v6597, %v6666
      %v6699 = vadd.f32 %v6598, %v6667
      %v6700 = vadd.f32 %v6599, %v6668
      %v6701 = vadd.f32 %v6600, %v6669
      %v6702 = vadd.f32 %v6601, %v6670
      %v6703 = vadd.f32 %v6602, %v6671
      %v6704 = vadd.f32 %v6603, %v6672
      %v6705 = vadd.f32 %v6604, %v6673
      %v6706 = vadd.f32 %v6605, %v6674
      %v6707 = vadd.f32 %v6606, %v6675
      %v6708 = vadd.f32 %v6607, %v6676
      %v6709 = vadd.f32 %v6608, %v6677
      %v6710 = vadd.f32 %v6609, %v6678
      %v6711 = vadd.f32 %v6610, %v6679
      %v6712 = vadd.f32 %v6611, %v6680
      %v6713 = vadd.f32 %v6612, %v6681
      %v6714 = vadd.f32 %v6613, %v6682
      %v6715 = vadd.f32 %v6614, %v6683
      %v6716 = vadd.f32 %v6615, %v6684
      %v6717 = vadd.f32 %v6616, %v6685
      %v6718 = vld [vmem:[%s6414 + $0x9] sm:$0xff]
      %v6719 = vld [vmem:[%s6414 + $0x11] sm:$0xff]
      %v6720 = vld [vmem:[%s6414 + $0x29] sm:$0xff]
      %v6721 = vld [vmem:[%s6414 + $0x31] sm:$0xff]
      %v6722 = vld [vmem:[%s6414 + $0x49] sm:$0xff]
      %v6723 = vld [vmem:[%s6414 + $0x51] sm:$0xff]
      %v6724 = vld [vmem:[%s6414 + $0x69] sm:$0xff]
      %v6725 = vld [vmem:[%s6414 + $0x71] sm:$0xff]
      %v6726 = vld [vmem:[%s6414 + $0x89] sm:$0xff]
      %v6727 = vld [vmem:[%s6414 + $0x91] sm:$0xff]
      %v6728 = vld [vmem:[%s6414 + $0xa9] sm:$0xff]
      %v6729 = vld [vmem:[%s6414 + $0xb1] sm:$0xff]
      %v6730 = vld [vmem:[%s6414 + $0xc9] sm:$0xff]
      %v6731 = vld [vmem:[%s6414 + $0xd1] sm:$0xff]
      %v6732 = vld [vmem:[%s6414 + $0xe9] sm:$0xff]
      %v6733 = vld [vmem:[%s6414 + $0xf1] sm:$0xff]
      %v6734 = vld [vmem:[%s6414 + $0x109] sm:$0xff]
      %v6735 = vld [vmem:[%s6414 + $0x111] sm:$0xff]
      %v6736 = vld [vmem:[%s6414 + $0x129] sm:$0xff]
      %v6737 = vld [vmem:[%s6414 + $0x131] sm:$0xff]
      %v6738 = vld [vmem:[%s6414 + $0x149] sm:$0xff]
      %v6739 = vld [vmem:[%s6414 + $0x151] sm:$0xff]
      %v6740 = vld [vmem:[%s6414 + $0x169] sm:$0xff]
      %v6741 = vld [vmem:[%s6414 + $0x171] sm:$0xff]
      %v6742 = vld [vmem:[%s6414 + $0x189] sm:$0xff]
      %v6743 = vld [vmem:[%s6414 + $0x191] sm:$0xff]
      %v6744 = vld [vmem:[%s6414 + $0x1a9] sm:$0xff]
      %v6745 = vld [vmem:[%s6414 + $0x1b1] sm:$0xff]
      %v6746 = vld [vmem:[%s6414 + $0x1c9] sm:$0xff]
      %v6747 = vld [vmem:[%s6414 + $0x1d1] sm:$0xff]
      %v6748 = vld [vmem:[%s6414 + $0x1e9] sm:$0xff]
      %v6749 = vld [vmem:[%s6414 + $0x1f1] sm:$0xff]
      %v6750 = vld [vmem:[%s4 + $0x12] sm:$0x1]
      %v6751 = vlaneseq
      %v6752 = vshrl.u32 %v6751, 7
      %v6753 = vsub.s32 0, %v6752
      %v6754 = vrot.slane %v6750, %v6753
      %v6755 = vmul.f32 %v6718, %v6754
      %v6756 = vmul.f32 %v6719, %v6754
      %v6757 = vmul.f32 %v6720, %v6754
      %v6758 = vmul.f32 %v6721, %v6754
      %v6759 = vmul.f32 %v6722, %v6754
      %v6760 = vmul.f32 %v6723, %v6754
      %v6761 = vmul.f32 %v6724, %v6754
      %v6762 = vmul.f32 %v6725, %v6754
      %v6763 = vmul.f32 %v6726, %v6754
      %v6764 = vmul.f32 %v6727, %v6754
      %v6765 = vmul.f32 %v6728, %v6754
      %v6766 = vmul.f32 %v6729, %v6754
      %v6767 = vmul.f32 %v6730, %v6754
      %v6768 = vmul.f32 %v6731, %v6754
      %v6769 = vmul.f32 %v6732, %v6754
      %v6770 = vmul.f32 %v6733, %v6754
      %v6771 = vmul.f32 %v6734, %v6754
      %v6772 = vmul.f32 %v6735, %v6754
      %v6773 = vmul.f32 %v6736, %v6754
      %v6774 = vmul.f32 %v6737, %v6754
      %v6775 = vmul.f32 %v6738, %v6754
      %v6776 = vmul.f32 %v6739, %v6754
      %v6777 = vmul.f32 %v6740, %v6754
      %v6778 = vmul.f32 %v6741, %v6754
      %v6779 = vmul.f32 %v6742, %v6754
      %v6780 = vmul.f32 %v6743, %v6754
      %v6781 = vmul.f32 %v6744, %v6754
      %v6782 = vmul.f32 %v6745, %v6754
      %v6783 = vmul.f32 %v6746, %v6754
      %v6784 = vmul.f32 %v6747, %v6754
      %v6785 = vmul.f32 %v6748, %v6754
      %v6786 = vmul.f32 %v6749, %v6754
      %v6787 = vadd.f32 %v6686, %v6755
      %v6788 = vadd.f32 %v6687, %v6756
      %v6789 = vadd.f32 %v6688, %v6757
      %v6790 = vadd.f32 %v6689, %v6758
      %v6791 = vadd.f32 %v6690, %v6759
      %v6792 = vadd.f32 %v6691, %v6760
      %v6793 = vadd.f32 %v6692, %v6761
      %v6794 = vadd.f32 %v6693, %v6762
      %v6795 = vadd.f32 %v6694, %v6763
      %v6796 = vadd.f32 %v6695, %v6764
      %v6797 = vadd.f32 %v6696, %v6765
      %v6798 = vadd.f32 %v6697, %v6766
      %v6799 = vadd.f32 %v6698, %v6767
      %v6800 = vadd.f32 %v6699, %v6768
      %v6801 = vadd.f32 %v6700, %v6769
      %v6802 = vadd.f32 %v6701, %v6770
      %v6803 = vadd.f32 %v6702, %v6771
      %v6804 = vadd.f32 %v6703, %v6772
      %v6805 = vadd.f32 %v6704, %v6773
      %v6806 = vadd.f32 %v6705, %v6774
      %v6807 = vadd.f32 %v6706, %v6775
      %v6808 = vadd.f32 %v6707, %v6776
      %v6809 = vadd.f32 %v6708, %v6777
      %v6810 = vadd.f32 %v6709, %v6778
      %v6811 = vadd.f32 %v6710, %v6779
      %v6812 = vadd.f32 %v6711, %v6780
      %v6813 = vadd.f32 %v6712, %v6781
      %v6814 = vadd.f32 %v6713, %v6782
      %v6815 = vadd.f32 %v6714, %v6783
      %v6816 = vadd.f32 %v6715, %v6784
      %v6817 = vadd.f32 %v6716, %v6785
      %v6818 = vadd.f32 %v6717, %v6786
      %v6819 = vld [vmem:[%s6414 + $0xa] sm:$0xff]
      %v6820 = vld [vmem:[%s6414 + $0x12] sm:$0xff]
      %v6821 = vld [vmem:[%s6414 + $0x2a] sm:$0xff]
      %v6822 = vld [vmem:[%s6414 + $0x32] sm:$0xff]
      %v6823 = vld [vmem:[%s6414 + $0x4a] sm:$0xff]
      %v6824 = vld [vmem:[%s6414 + $0x52] sm:$0xff]
      %v6825 = vld [vmem:[%s6414 + $0x6a] sm:$0xff]
      %v6826 = vld [vmem:[%s6414 + $0x72] sm:$0xff]
      %v6827 = vld [vmem:[%s6414 + $0x8a] sm:$0xff]
      %v6828 = vld [vmem:[%s6414 + $0x92] sm:$0xff]
      %v6829 = vld [vmem:[%s6414 + $0xaa] sm:$0xff]
      %v6830 = vld [vmem:[%s6414 + $0xb2] sm:$0xff]
      %v6831 = vld [vmem:[%s6414 + $0xca] sm:$0xff]
      %v6832 = vld [vmem:[%s6414 + $0xd2] sm:$0xff]
      %v6833 = vld [vmem:[%s6414 + $0xea] sm:$0xff]
      %v6834 = vld [vmem:[%s6414 + $0xf2] sm:$0xff]
      %v6835 = vld [vmem:[%s6414 + $0x10a] sm:$0xff]
      %v6836 = vld [vmem:[%s6414 + $0x112] sm:$0xff]
      %v6837 = vld [vmem:[%s6414 + $0x12a] sm:$0xff]
      %v6838 = vld [vmem:[%s6414 + $0x132] sm:$0xff]
      %v6839 = vld [vmem:[%s6414 + $0x14a] sm:$0xff]
      %v6840 = vld [vmem:[%s6414 + $0x152] sm:$0xff]
      %v6841 = vld [vmem:[%s6414 + $0x16a] sm:$0xff]
      %v6842 = vld [vmem:[%s6414 + $0x172] sm:$0xff]
      %v6843 = vld [vmem:[%s6414 + $0x18a] sm:$0xff]
      %v6844 = vld [vmem:[%s6414 + $0x192] sm:$0xff]
      %v6845 = vld [vmem:[%s6414 + $0x1aa] sm:$0xff]
      %v6846 = vld [vmem:[%s6414 + $0x1b2] sm:$0xff]
      %v6847 = vld [vmem:[%s6414 + $0x1ca] sm:$0xff]
      %v6848 = vld [vmem:[%s6414 + $0x1d2] sm:$0xff]
      %v6849 = vld [vmem:[%s6414 + $0x1ea] sm:$0xff]
      %v6850 = vld [vmem:[%s6414 + $0x1f2] sm:$0xff]
      %v6851 = vld [vmem:[%s4 + $0x13] sm:$0x1]
      %v6852 = vlaneseq
      %v6853 = vshrl.u32 %v6852, 7
      %v6854 = vsub.s32 0, %v6853
      %v6855 = vrot.slane %v6851, %v6854
      %v6856 = vmul.f32 %v6819, %v6855
      %v6857 = vmul.f32 %v6820, %v6855
      %v6858 = vmul.f32 %v6821, %v6855
      %v6859 = vmul.f32 %v6822, %v6855
      %v6860 = vmul.f32 %v6823, %v6855
      %v6861 = vmul.f32 %v6824, %v6855
      %v6862 = vmul.f32 %v6825, %v6855
      %v6863 = vmul.f32 %v6826, %v6855
      %v6864 = vmul.f32 %v6827, %v6855
      %v6865 = vmul.f32 %v6828, %v6855
      %v6866 = vmul.f32 %v6829, %v6855
      %v6867 = vmul.f32 %v6830, %v6855
      %v6868 = vmul.f32 %v6831, %v6855
      %v6869 = vmul.f32 %v6832, %v6855
      %v6870 = vmul.f32 %v6833, %v6855
      %v6871 = vmul.f32 %v6834, %v6855
      %v6872 = vmul.f32 %v6835, %v6855
      %v6873 = vmul.f32 %v6836, %v6855
      %v6874 = vmul.f32 %v6837, %v6855
      %v6875 = vmul.f32 %v6838, %v6855
      %v6876 = vmul.f32 %v6839, %v6855
      %v6877 = vmul.f32 %v6840, %v6855
      %v6878 = vmul.f32 %v6841, %v6855
      %v6879 = vmul.f32 %v6842, %v6855
      %v6880 = vmul.f32 %v6843, %v6855
      %v6881 = vmul.f32 %v6844, %v6855
      %v6882 = vmul.f32 %v6845, %v6855
      %v6883 = vmul.f32 %v6846, %v6855
      %v6884 = vmul.f32 %v6847, %v6855
      %v6885 = vmul.f32 %v6848, %v6855
      %v6886 = vmul.f32 %v6849, %v6855
      %v6887 = vmul.f32 %v6850, %v6855
      %v6888 = vadd.f32 %v6787, %v6856
      %v6889 = vadd.f32 %v6788, %v6857
      %v6890 = vadd.f32 %v6789, %v6858
      %v6891 = vadd.f32 %v6790, %v6859
      %v6892 = vadd.f32 %v6791, %v6860
      %v6893 = vadd.f32 %v6792, %v6861
      %v6894 = vadd.f32 %v6793, %v6862
      %v6895 = vadd.f32 %v6794, %v6863
      %v6896 = vadd.f32 %v6795, %v6864
      %v6897 = vadd.f32 %v6796, %v6865
      %v6898 = vadd.f32 %v6797, %v6866
      %v6899 = vadd.f32 %v6798, %v6867
      %v6900 = vadd.f32 %v6799, %v6868
      %v6901 = vadd.f32 %v6800, %v6869
      %v6902 = vadd.f32 %v6801, %v6870
      %v6903 = vadd.f32 %v6802, %v6871
      %v6904 = vadd.f32 %v6803, %v6872
      %v6905 = vadd.f32 %v6804, %v6873
      %v6906 = vadd.f32 %v6805, %v6874
      %v6907 = vadd.f32 %v6806, %v6875
      %v6908 = vadd.f32 %v6807, %v6876
      %v6909 = vadd.f32 %v6808, %v6877
      %v6910 = vadd.f32 %v6809, %v6878
      %v6911 = vadd.f32 %v6810, %v6879
      %v6912 = vadd.f32 %v6811, %v6880
      %v6913 = vadd.f32 %v6812, %v6881
      %v6914 = vadd.f32 %v6813, %v6882
      %v6915 = vadd.f32 %v6814, %v6883
      %v6916 = vadd.f32 %v6815, %v6884
      %v6917 = vadd.f32 %v6816, %v6885
      %v6918 = vadd.f32 %v6817, %v6886
      %v6919 = vadd.f32 %v6818, %v6887
      %s6920 = scalar_lea.vmem [#allocation3], 128
      %v6921 = vld [vmem:[%s6920 + $0x6] sm:$0xff]
      %v6922 = vld [vmem:[%s6920 + $0xe] sm:$0xff]
      %v6923 = vld [vmem:[%s6920 + $0x26] sm:$0xff]
      %v6924 = vld [vmem:[%s6920 + $0x2e] sm:$0xff]
      %v6925 = vld [vmem:[%s6920 + $0x46] sm:$0xff]
      %v6926 = vld [vmem:[%s6920 + $0x4e] sm:$0xff]
      %v6927 = vld [vmem:[%s6920 + $0x66] sm:$0xff]
      %v6928 = vld [vmem:[%s6920 + $0x6e] sm:$0xff]
      %v6929 = vld [vmem:[%s6920 + $0x86] sm:$0xff]
      %v6930 = vld [vmem:[%s6920 + $0x8e] sm:$0xff]
      %v6931 = vld [vmem:[%s6920 + $0xa6] sm:$0xff]
      %v6932 = vld [vmem:[%s6920 + $0xae] sm:$0xff]
      %v6933 = vld [vmem:[%s6920 + $0xc6] sm:$0xff]
      %v6934 = vld [vmem:[%s6920 + $0xce] sm:$0xff]
      %v6935 = vld [vmem:[%s6920 + $0xe6] sm:$0xff]
      %v6936 = vld [vmem:[%s6920 + $0xee] sm:$0xff]
      %v6937 = vld [vmem:[%s6920 + $0x106] sm:$0xff]
      %v6938 = vld [vmem:[%s6920 + $0x10e] sm:$0xff]
      %v6939 = vld [vmem:[%s6920 + $0x126] sm:$0xff]
      %v6940 = vld [vmem:[%s6920 + $0x12e] sm:$0xff]
      %v6941 = vld [vmem:[%s6920 + $0x146] sm:$0xff]
      %v6942 = vld [vmem:[%s6920 + $0x14e] sm:$0xff]
      %v6943 = vld [vmem:[%s6920 + $0x166] sm:$0xff]
      %v6944 = vld [vmem:[%s6920 + $0x16e] sm:$0xff]
      %v6945 = vld [vmem:[%s6920 + $0x186] sm:$0xff]
      %v6946 = vld [vmem:[%s6920 + $0x18e] sm:$0xff]
      %v6947 = vld [vmem:[%s6920 + $0x1a6] sm:$0xff]
      %v6948 = vld [vmem:[%s6920 + $0x1ae] sm:$0xff]
      %v6949 = vld [vmem:[%s6920 + $0x1c6] sm:$0xff]
      %v6950 = vld [vmem:[%s6920 + $0x1ce] sm:$0xff]
      %v6951 = vld [vmem:[%s6920 + $0x1e6] sm:$0xff]
      %v6952 = vld [vmem:[%s6920 + $0x1ee] sm:$0xff]
      %v6953 = vld [vmem:[%s4 + $0x14] sm:$0x1]
      %v6954 = vlaneseq
      %v6955 = vshrl.u32 %v6954, 7
      %v6956 = vsub.s32 0, %v6955
      %v6957 = vrot.slane %v6953, %v6956
      %v6958 = vmul.f32 %v6921, %v6957
      %v6959 = vmul.f32 %v6922, %v6957
      %v6960 = vmul.f32 %v6923, %v6957
      %v6961 = vmul.f32 %v6924, %v6957
      %v6962 = vmul.f32 %v6925, %v6957
      %v6963 = vmul.f32 %v6926, %v6957
      %v6964 = vmul.f32 %v6927, %v6957
      %v6965 = vmul.f32 %v6928, %v6957
      %v6966 = vmul.f32 %v6929, %v6957
      %v6967 = vmul.f32 %v6930, %v6957
      %v6968 = vmul.f32 %v6931, %v6957
      %v6969 = vmul.f32 %v6932, %v6957
      %v6970 = vmul.f32 %v6933, %v6957
      %v6971 = vmul.f32 %v6934, %v6957
      %v6972 = vmul.f32 %v6935, %v6957
      %v6973 = vmul.f32 %v6936, %v6957
      %v6974 = vmul.f32 %v6937, %v6957
      %v6975 = vmul.f32 %v6938, %v6957
      %v6976 = vmul.f32 %v6939, %v6957
      %v6977 = vmul.f32 %v6940, %v6957
      %v6978 = vmul.f32 %v6941, %v6957
      %v6979 = vmul.f32 %v6942, %v6957
      %v6980 = vmul.f32 %v6943, %v6957
      %v6981 = vmul.f32 %v6944, %v6957
      %v6982 = vmul.f32 %v6945, %v6957
      %v6983 = vmul.f32 %v6946, %v6957
      %v6984 = vmul.f32 %v6947, %v6957
      %v6985 = vmul.f32 %v6948, %v6957
      %v6986 = vmul.f32 %v6949, %v6957
      %v6987 = vmul.f32 %v6950, %v6957
      %v6988 = vmul.f32 %v6951, %v6957
      %v6989 = vmul.f32 %v6952, %v6957
      %v6990 = vadd.f32 %v6888, %v6958
      %v6991 = vadd.f32 %v6889, %v6959
      %v6992 = vadd.f32 %v6890, %v6960
      %v6993 = vadd.f32 %v6891, %v6961
      %v6994 = vadd.f32 %v6892, %v6962
      %v6995 = vadd.f32 %v6893, %v6963
      %v6996 = vadd.f32 %v6894, %v6964
      %v6997 = vadd.f32 %v6895, %v6965
      %v6998 = vadd.f32 %v6896, %v6966
      %v6999 = vadd.f32 %v6897, %v6967
      %v7000 = vadd.f32 %v6898, %v6968
      %v7001 = vadd.f32 %v6899, %v6969
      %v7002 = vadd.f32 %v6900, %v6970
      %v7003 = vadd.f32 %v6901, %v6971
      %v7004 = vadd.f32 %v6902, %v6972
      %v7005 = vadd.f32 %v6903, %v6973
      %v7006 = vadd.f32 %v6904, %v6974
      %v7007 = vadd.f32 %v6905, %v6975
      %v7008 = vadd.f32 %v6906, %v6976
      %v7009 = vadd.f32 %v6907, %v6977
      %v7010 = vadd.f32 %v6908, %v6978
      %v7011 = vadd.f32 %v6909, %v6979
      %v7012 = vadd.f32 %v6910, %v6980
      %v7013 = vadd.f32 %v6911, %v6981
      %v7014 = vadd.f32 %v6912, %v6982
      %v7015 = vadd.f32 %v6913, %v6983
      %v7016 = vadd.f32 %v6914, %v6984
      %v7017 = vadd.f32 %v6915, %v6985
      %v7018 = vadd.f32 %v6916, %v6986
      %v7019 = vadd.f32 %v6917, %v6987
      %v7020 = vadd.f32 %v6918, %v6988
      %v7021 = vadd.f32 %v6919, %v6989
      %v7022 = vld [vmem:[%s6920 + $0x7] sm:$0xff]
      %v7023 = vld [vmem:[%s6920 + $0xf] sm:$0xff]
      %v7024 = vld [vmem:[%s6920 + $0x27] sm:$0xff]
      %v7025 = vld [vmem:[%s6920 + $0x2f] sm:$0xff]
      %v7026 = vld [vmem:[%s6920 + $0x47] sm:$0xff]
      %v7027 = vld [vmem:[%s6920 + $0x4f] sm:$0xff]
      %v7028 = vld [vmem:[%s6920 + $0x67] sm:$0xff]
      %v7029 = vld [vmem:[%s6920 + $0x6f] sm:$0xff]
      %v7030 = vld [vmem:[%s6920 + $0x87] sm:$0xff]
      %v7031 = vld [vmem:[%s6920 + $0x8f] sm:$0xff]
      %v7032 = vld [vmem:[%s6920 + $0xa7] sm:$0xff]
      %v7033 = vld [vmem:[%s6920 + $0xaf] sm:$0xff]
      %v7034 = vld [vmem:[%s6920 + $0xc7] sm:$0xff]
      %v7035 = vld [vmem:[%s6920 + $0xcf] sm:$0xff]
      %v7036 = vld [vmem:[%s6920 + $0xe7] sm:$0xff]
      %v7037 = vld [vmem:[%s6920 + $0xef] sm:$0xff]
      %v7038 = vld [vmem:[%s6920 + $0x107] sm:$0xff]
      %v7039 = vld [vmem:[%s6920 + $0x10f] sm:$0xff]
      %v7040 = vld [vmem:[%s6920 + $0x127] sm:$0xff]
      %v7041 = vld [vmem:[%s6920 + $0x12f] sm:$0xff]
      %v7042 = vld [vmem:[%s6920 + $0x147] sm:$0xff]
      %v7043 = vld [vmem:[%s6920 + $0x14f] sm:$0xff]
      %v7044 = vld [vmem:[%s6920 + $0x167] sm:$0xff]
      %v7045 = vld [vmem:[%s6920 + $0x16f] sm:$0xff]
      %v7046 = vld [vmem:[%s6920 + $0x187] sm:$0xff]
      %v7047 = vld [vmem:[%s6920 + $0x18f] sm:$0xff]
      %v7048 = vld [vmem:[%s6920 + $0x1a7] sm:$0xff]
      %v7049 = vld [vmem:[%s6920 + $0x1af] sm:$0xff]
      %v7050 = vld [vmem:[%s6920 + $0x1c7] sm:$0xff]
      %v7051 = vld [vmem:[%s6920 + $0x1cf] sm:$0xff]
      %v7052 = vld [vmem:[%s6920 + $0x1e7] sm:$0xff]
      %v7053 = vld [vmem:[%s6920 + $0x1ef] sm:$0xff]
      %v7054 = vld [vmem:[%s4 + $0x15] sm:$0x1]
      %v7055 = vlaneseq
      %v7056 = vshrl.u32 %v7055, 7
      %v7057 = vsub.s32 0, %v7056
      %v7058 = vrot.slane %v7054, %v7057
      %v7059 = vmul.f32 %v7022, %v7058
      %v7060 = vmul.f32 %v7023, %v7058
      %v7061 = vmul.f32 %v7024, %v7058
      %v7062 = vmul.f32 %v7025, %v7058
      %v7063 = vmul.f32 %v7026, %v7058
      %v7064 = vmul.f32 %v7027, %v7058
      %v7065 = vmul.f32 %v7028, %v7058
      %v7066 = vmul.f32 %v7029, %v7058
      %v7067 = vmul.f32 %v7030, %v7058
      %v7068 = vmul.f32 %v7031, %v7058
      %v7069 = vmul.f32 %v7032, %v7058
      %v7070 = vmul.f32 %v7033, %v7058
      %v7071 = vmul.f32 %v7034, %v7058
      %v7072 = vmul.f32 %v7035, %v7058
      %v7073 = vmul.f32 %v7036, %v7058
      %v7074 = vmul.f32 %v7037, %v7058
      %v7075 = vmul.f32 %v7038, %v7058
      %v7076 = vmul.f32 %v7039, %v7058
      %v7077 = vmul.f32 %v7040, %v7058
      %v7078 = vmul.f32 %v7041, %v7058
      %v7079 = vmul.f32 %v7042, %v7058
      %v7080 = vmul.f32 %v7043, %v7058
      %v7081 = vmul.f32 %v7044, %v7058
      %v7082 = vmul.f32 %v7045, %v7058
      %v7083 = vmul.f32 %v7046, %v7058
      %v7084 = vmul.f32 %v7047, %v7058
      %v7085 = vmul.f32 %v7048, %v7058
      %v7086 = vmul.f32 %v7049, %v7058
      %v7087 = vmul.f32 %v7050, %v7058
      %v7088 = vmul.f32 %v7051, %v7058
      %v7089 = vmul.f32 %v7052, %v7058
      %v7090 = vmul.f32 %v7053, %v7058
      %v7091 = vadd.f32 %v6990, %v7059
      %v7092 = vadd.f32 %v6991, %v7060
      %v7093 = vadd.f32 %v6992, %v7061
      %v7094 = vadd.f32 %v6993, %v7062
      %v7095 = vadd.f32 %v6994, %v7063
      %v7096 = vadd.f32 %v6995, %v7064
      %v7097 = vadd.f32 %v6996, %v7065
      %v7098 = vadd.f32 %v6997, %v7066
      %v7099 = vadd.f32 %v6998, %v7067
      %v7100 = vadd.f32 %v6999, %v7068
      %v7101 = vadd.f32 %v7000, %v7069
      %v7102 = vadd.f32 %v7001, %v7070
      %v7103 = vadd.f32 %v7002, %v7071
      %v7104 = vadd.f32 %v7003, %v7072
      %v7105 = vadd.f32 %v7004, %v7073
      %v7106 = vadd.f32 %v7005, %v7074
      %v7107 = vadd.f32 %v7006, %v7075
      %v7108 = vadd.f32 %v7007, %v7076
      %v7109 = vadd.f32 %v7008, %v7077
      %v7110 = vadd.f32 %v7009, %v7078
      %v7111 = vadd.f32 %v7010, %v7079
      %v7112 = vadd.f32 %v7011, %v7080
      %v7113 = vadd.f32 %v7012, %v7081
      %v7114 = vadd.f32 %v7013, %v7082
      %v7115 = vadd.f32 %v7014, %v7083
      %v7116 = vadd.f32 %v7015, %v7084
      %v7117 = vadd.f32 %v7016, %v7085
      %v7118 = vadd.f32 %v7017, %v7086
      %v7119 = vadd.f32 %v7018, %v7087
      %v7120 = vadd.f32 %v7019, %v7088
      %v7121 = vadd.f32 %v7020, %v7089
      %v7122 = vadd.f32 %v7021, %v7090
      %v7123 = vld [vmem:[%s6920 + $0x8] sm:$0xff]
      %v7124 = vld [vmem:[%s6920 + $0x10] sm:$0xff]
      %v7125 = vld [vmem:[%s6920 + $0x28] sm:$0xff]
      %v7126 = vld [vmem:[%s6920 + $0x30] sm:$0xff]
      %v7127 = vld [vmem:[%s6920 + $0x48] sm:$0xff]
      %v7128 = vld [vmem:[%s6920 + $0x50] sm:$0xff]
      %v7129 = vld [vmem:[%s6920 + $0x68] sm:$0xff]
      %v7130 = vld [vmem:[%s6920 + $0x70] sm:$0xff]
      %v7131 = vld [vmem:[%s6920 + $0x88] sm:$0xff]
      %v7132 = vld [vmem:[%s6920 + $0x90] sm:$0xff]
      %v7133 = vld [vmem:[%s6920 + $0xa8] sm:$0xff]
      %v7134 = vld [vmem:[%s6920 + $0xb0] sm:$0xff]
      %v7135 = vld [vmem:[%s6920 + $0xc8] sm:$0xff]
      %v7136 = vld [vmem:[%s6920 + $0xd0] sm:$0xff]
      %v7137 = vld [vmem:[%s6920 + $0xe8] sm:$0xff]
      %v7138 = vld [vmem:[%s6920 + $0xf0] sm:$0xff]
      %v7139 = vld [vmem:[%s6920 + $0x108] sm:$0xff]
      %v7140 = vld [vmem:[%s6920 + $0x110] sm:$0xff]
      %v7141 = vld [vmem:[%s6920 + $0x128] sm:$0xff]
      %v7142 = vld [vmem:[%s6920 + $0x130] sm:$0xff]
      %v7143 = vld [vmem:[%s6920 + $0x148] sm:$0xff]
      %v7144 = vld [vmem:[%s6920 + $0x150] sm:$0xff]
      %v7145 = vld [vmem:[%s6920 + $0x168] sm:$0xff]
      %v7146 = vld [vmem:[%s6920 + $0x170] sm:$0xff]
      %v7147 = vld [vmem:[%s6920 + $0x188] sm:$0xff]
      %v7148 = vld [vmem:[%s6920 + $0x190] sm:$0xff]
      %v7149 = vld [vmem:[%s6920 + $0x1a8] sm:$0xff]
      %v7150 = vld [vmem:[%s6920 + $0x1b0] sm:$0xff]
      %v7151 = vld [vmem:[%s6920 + $0x1c8] sm:$0xff]
      %v7152 = vld [vmem:[%s6920 + $0x1d0] sm:$0xff]
      %v7153 = vld [vmem:[%s6920 + $0x1e8] sm:$0xff]
      %v7154 = vld [vmem:[%s6920 + $0x1f0] sm:$0xff]
      %v7155 = vld [vmem:[%s4 + $0x16] sm:$0x1]
      %v7156 = vlaneseq
      %v7157 = vshrl.u32 %v7156, 7
      %v7158 = vsub.s32 0, %v7157
      %v7159 = vrot.slane %v7155, %v7158
      %v7160 = vmul.f32 %v7123, %v7159
      %v7161 = vmul.f32 %v7124, %v7159
      %v7162 = vmul.f32 %v7125, %v7159
      %v7163 = vmul.f32 %v7126, %v7159
      %v7164 = vmul.f32 %v7127, %v7159
      %v7165 = vmul.f32 %v7128, %v7159
      %v7166 = vmul.f32 %v7129, %v7159
      %v7167 = vmul.f32 %v7130, %v7159
      %v7168 = vmul.f32 %v7131, %v7159
      %v7169 = vmul.f32 %v7132, %v7159
      %v7170 = vmul.f32 %v7133, %v7159
      %v7171 = vmul.f32 %v7134, %v7159
      %v7172 = vmul.f32 %v7135, %v7159
      %v7173 = vmul.f32 %v7136, %v7159
      %v7174 = vmul.f32 %v7137, %v7159
      %v7175 = vmul.f32 %v7138, %v7159
      %v7176 = vmul.f32 %v7139, %v7159
      %v7177 = vmul.f32 %v7140, %v7159
      %v7178 = vmul.f32 %v7141, %v7159
      %v7179 = vmul.f32 %v7142, %v7159
      %v7180 = vmul.f32 %v7143, %v7159
      %v7181 = vmul.f32 %v7144, %v7159
      %v7182 = vmul.f32 %v7145, %v7159
      %v7183 = vmul.f32 %v7146, %v7159
      %v7184 = vmul.f32 %v7147, %v7159
      %v7185 = vmul.f32 %v7148, %v7159
      %v7186 = vmul.f32 %v7149, %v7159
      %v7187 = vmul.f32 %v7150, %v7159
      %v7188 = vmul.f32 %v7151, %v7159
      %v7189 = vmul.f32 %v7152, %v7159
      %v7190 = vmul.f32 %v7153, %v7159
      %v7191 = vmul.f32 %v7154, %v7159
      %v7192 = vadd.f32 %v7091, %v7160
      %v7193 = vadd.f32 %v7092, %v7161
      %v7194 = vadd.f32 %v7093, %v7162
      %v7195 = vadd.f32 %v7094, %v7163
      %v7196 = vadd.f32 %v7095, %v7164
      %v7197 = vadd.f32 %v7096, %v7165
      %v7198 = vadd.f32 %v7097, %v7166
      %v7199 = vadd.f32 %v7098, %v7167
      %v7200 = vadd.f32 %v7099, %v7168
      %v7201 = vadd.f32 %v7100, %v7169
      %v7202 = vadd.f32 %v7101, %v7170
      %v7203 = vadd.f32 %v7102, %v7171
      %v7204 = vadd.f32 %v7103, %v7172
      %v7205 = vadd.f32 %v7104, %v7173
      %v7206 = vadd.f32 %v7105, %v7174
      %v7207 = vadd.f32 %v7106, %v7175
      %v7208 = vadd.f32 %v7107, %v7176
      %v7209 = vadd.f32 %v7108, %v7177
      %v7210 = vadd.f32 %v7109, %v7178
      %v7211 = vadd.f32 %v7110, %v7179
      %v7212 = vadd.f32 %v7111, %v7180
      %v7213 = vadd.f32 %v7112, %v7181
      %v7214 = vadd.f32 %v7113, %v7182
      %v7215 = vadd.f32 %v7114, %v7183
      %v7216 = vadd.f32 %v7115, %v7184
      %v7217 = vadd.f32 %v7116, %v7185
      %v7218 = vadd.f32 %v7117, %v7186
      %v7219 = vadd.f32 %v7118, %v7187
      %v7220 = vadd.f32 %v7119, %v7188
      %v7221 = vadd.f32 %v7120, %v7189
      %v7222 = vadd.f32 %v7121, %v7190
      %v7223 = vadd.f32 %v7122, %v7191
      %v7224 = vld [vmem:[%s6920 + $0x9] sm:$0xff]
      %v7225 = vld [vmem:[%s6920 + $0x11] sm:$0xff]
      %v7226 = vld [vmem:[%s6920 + $0x29] sm:$0xff]
      %v7227 = vld [vmem:[%s6920 + $0x31] sm:$0xff]
      %v7228 = vld [vmem:[%s6920 + $0x49] sm:$0xff]
      %v7229 = vld [vmem:[%s6920 + $0x51] sm:$0xff]
      %v7230 = vld [vmem:[%s6920 + $0x69] sm:$0xff]
      %v7231 = vld [vmem:[%s6920 + $0x71] sm:$0xff]
      %v7232 = vld [vmem:[%s6920 + $0x89] sm:$0xff]
      %v7233 = vld [vmem:[%s6920 + $0x91] sm:$0xff]
      %v7234 = vld [vmem:[%s6920 + $0xa9] sm:$0xff]
      %v7235 = vld [vmem:[%s6920 + $0xb1] sm:$0xff]
      %v7236 = vld [vmem:[%s6920 + $0xc9] sm:$0xff]
      %v7237 = vld [vmem:[%s6920 + $0xd1] sm:$0xff]
      %v7238 = vld [vmem:[%s6920 + $0xe9] sm:$0xff]
      %v7239 = vld [vmem:[%s6920 + $0xf1] sm:$0xff]
      %v7240 = vld [vmem:[%s6920 + $0x109] sm:$0xff]
      %v7241 = vld [vmem:[%s6920 + $0x111] sm:$0xff]
      %v7242 = vld [vmem:[%s6920 + $0x129] sm:$0xff]
      %v7243 = vld [vmem:[%s6920 + $0x131] sm:$0xff]
      %v7244 = vld [vmem:[%s6920 + $0x149] sm:$0xff]
      %v7245 = vld [vmem:[%s6920 + $0x151] sm:$0xff]
      %v7246 = vld [vmem:[%s6920 + $0x169] sm:$0xff]
      %v7247 = vld [vmem:[%s6920 + $0x171] sm:$0xff]
      %v7248 = vld [vmem:[%s6920 + $0x189] sm:$0xff]
      %v7249 = vld [vmem:[%s6920 + $0x191] sm:$0xff]
      %v7250 = vld [vmem:[%s6920 + $0x1a9] sm:$0xff]
      %v7251 = vld [vmem:[%s6920 + $0x1b1] sm:$0xff]
      %v7252 = vld [vmem:[%s6920 + $0x1c9] sm:$0xff]
      %v7253 = vld [vmem:[%s6920 + $0x1d1] sm:$0xff]
      %v7254 = vld [vmem:[%s6920 + $0x1e9] sm:$0xff]
      %v7255 = vld [vmem:[%s6920 + $0x1f1] sm:$0xff]
      %v7256 = vld [vmem:[%s4 + $0x17] sm:$0x1]
      %v7257 = vlaneseq
      %v7258 = vshrl.u32 %v7257, 7
      %v7259 = vsub.s32 0, %v7258
      %v7260 = vrot.slane %v7256, %v7259
      %v7261 = vmul.f32 %v7224, %v7260
      %v7262 = vmul.f32 %v7225, %v7260
      %v7263 = vmul.f32 %v7226, %v7260
      %v7264 = vmul.f32 %v7227, %v7260
      %v7265 = vmul.f32 %v7228, %v7260
      %v7266 = vmul.f32 %v7229, %v7260
      %v7267 = vmul.f32 %v7230, %v7260
      %v7268 = vmul.f32 %v7231, %v7260
      %v7269 = vmul.f32 %v7232, %v7260
      %v7270 = vmul.f32 %v7233, %v7260
      %v7271 = vmul.f32 %v7234, %v7260
      %v7272 = vmul.f32 %v7235, %v7260
      %v7273 = vmul.f32 %v7236, %v7260
      %v7274 = vmul.f32 %v7237, %v7260
      %v7275 = vmul.f32 %v7238, %v7260
      %v7276 = vmul.f32 %v7239, %v7260
      %v7277 = vmul.f32 %v7240, %v7260
      %v7278 = vmul.f32 %v7241, %v7260
      %v7279 = vmul.f32 %v7242, %v7260
      %v7280 = vmul.f32 %v7243, %v7260
      %v7281 = vmul.f32 %v7244, %v7260
      %v7282 = vmul.f32 %v7245, %v7260
      %v7283 = vmul.f32 %v7246, %v7260
      %v7284 = vmul.f32 %v7247, %v7260
      %v7285 = vmul.f32 %v7248, %v7260
      %v7286 = vmul.f32 %v7249, %v7260
      %v7287 = vmul.f32 %v7250, %v7260
      %v7288 = vmul.f32 %v7251, %v7260
      %v7289 = vmul.f32 %v7252, %v7260
      %v7290 = vmul.f32 %v7253, %v7260
      %v7291 = vmul.f32 %v7254, %v7260
      %v7292 = vmul.f32 %v7255, %v7260
      %v7293 = vadd.f32 %v7192, %v7261
      %v7294 = vadd.f32 %v7193, %v7262
      %v7295 = vadd.f32 %v7194, %v7263
      %v7296 = vadd.f32 %v7195, %v7264
      %v7297 = vadd.f32 %v7196, %v7265
      %v7298 = vadd.f32 %v7197, %v7266
      %v7299 = vadd.f32 %v7198, %v7267
      %v7300 = vadd.f32 %v7199, %v7268
      %v7301 = vadd.f32 %v7200, %v7269
      %v7302 = vadd.f32 %v7201, %v7270
      %v7303 = vadd.f32 %v7202, %v7271
      %v7304 = vadd.f32 %v7203, %v7272
      %v7305 = vadd.f32 %v7204, %v7273
      %v7306 = vadd.f32 %v7205, %v7274
      %v7307 = vadd.f32 %v7206, %v7275
      %v7308 = vadd.f32 %v7207, %v7276
      %v7309 = vadd.f32 %v7208, %v7277
      %v7310 = vadd.f32 %v7209, %v7278
      %v7311 = vadd.f32 %v7210, %v7279
      %v7312 = vadd.f32 %v7211, %v7280
      %v7313 = vadd.f32 %v7212, %v7281
      %v7314 = vadd.f32 %v7213, %v7282
      %v7315 = vadd.f32 %v7214, %v7283
      %v7316 = vadd.f32 %v7215, %v7284
      %v7317 = vadd.f32 %v7216, %v7285
      %v7318 = vadd.f32 %v7217, %v7286
      %v7319 = vadd.f32 %v7218, %v7287
      %v7320 = vadd.f32 %v7219, %v7288
      %v7321 = vadd.f32 %v7220, %v7289
      %v7322 = vadd.f32 %v7221, %v7290
      %v7323 = vadd.f32 %v7222, %v7291
      %v7324 = vadd.f32 %v7223, %v7292
      %v7325 = vld [vmem:[%s6920 + $0xa] sm:$0xff]
      %v7326 = vld [vmem:[%s6920 + $0x12] sm:$0xff]
      %v7327 = vld [vmem:[%s6920 + $0x2a] sm:$0xff]
      %v7328 = vld [vmem:[%s6920 + $0x32] sm:$0xff]
      %v7329 = vld [vmem:[%s6920 + $0x4a] sm:$0xff]
      %v7330 = vld [vmem:[%s6920 + $0x52] sm:$0xff]
      %v7331 = vld [vmem:[%s6920 + $0x6a] sm:$0xff]
      %v7332 = vld [vmem:[%s6920 + $0x72] sm:$0xff]
      %v7333 = vld [vmem:[%s6920 + $0x8a] sm:$0xff]
      %v7334 = vld [vmem:[%s6920 + $0x92] sm:$0xff]
      %v7335 = vld [vmem:[%s6920 + $0xaa] sm:$0xff]
      %v7336 = vld [vmem:[%s6920 + $0xb2] sm:$0xff]
      %v7337 = vld [vmem:[%s6920 + $0xca] sm:$0xff]
      %v7338 = vld [vmem:[%s6920 + $0xd2] sm:$0xff]
      %v7339 = vld [vmem:[%s6920 + $0xea] sm:$0xff]
      %v7340 = vld [vmem:[%s6920 + $0xf2] sm:$0xff]
      %v7341 = vld [vmem:[%s6920 + $0x10a] sm:$0xff]
      %v7342 = vld [vmem:[%s6920 + $0x112] sm:$0xff]
      %v7343 = vld [vmem:[%s6920 + $0x12a] sm:$0xff]
      %v7344 = vld [vmem:[%s6920 + $0x132] sm:$0xff]
      %v7345 = vld [vmem:[%s6920 + $0x14a] sm:$0xff]
      %v7346 = vld [vmem:[%s6920 + $0x152] sm:$0xff]
      %v7347 = vld [vmem:[%s6920 + $0x16a] sm:$0xff]
      %v7348 = vld [vmem:[%s6920 + $0x172] sm:$0xff]
      %v7349 = vld [vmem:[%s6920 + $0x18a] sm:$0xff]
      %v7350 = vld [vmem:[%s6920 + $0x192] sm:$0xff]
      %v7351 = vld [vmem:[%s6920 + $0x1aa] sm:$0xff]
      %v7352 = vld [vmem:[%s6920 + $0x1b2] sm:$0xff]
      %v7353 = vld [vmem:[%s6920 + $0x1ca] sm:$0xff]
      %v7354 = vld [vmem:[%s6920 + $0x1d2] sm:$0xff]
      %v7355 = vld [vmem:[%s6920 + $0x1ea] sm:$0xff]
      %v7356 = vld [vmem:[%s6920 + $0x1f2] sm:$0xff]
      %v7357 = vld [vmem:[%s4 + $0x18] sm:$0x1]
      %v7358 = vlaneseq
      %v7359 = vshrl.u32 %v7358, 7
      %v7360 = vsub.s32 0, %v7359
      %v7361 = vrot.slane %v7357, %v7360
      %v7362 = vmul.f32 %v7325, %v7361
      %v7363 = vmul.f32 %v7326, %v7361
      %v7364 = vmul.f32 %v7327, %v7361
      %v7365 = vmul.f32 %v7328, %v7361
      %v7366 = vmul.f32 %v7329, %v7361
      %v7367 = vmul.f32 %v7330, %v7361
      %v7368 = vmul.f32 %v7331, %v7361
      %v7369 = vmul.f32 %v7332, %v7361
      %v7370 = vmul.f32 %v7333, %v7361
      %v7371 = vmul.f32 %v7334, %v7361
      %v7372 = vmul.f32 %v7335, %v7361
      %v7373 = vmul.f32 %v7336, %v7361
      %v7374 = vmul.f32 %v7337, %v7361
      %v7375 = vmul.f32 %v7338, %v7361
      %v7376 = vmul.f32 %v7339, %v7361
      %v7377 = vmul.f32 %v7340, %v7361
      %v7378 = vmul.f32 %v7341, %v7361
      %v7379 = vmul.f32 %v7342, %v7361
      %v7380 = vmul.f32 %v7343, %v7361
      %v7381 = vmul.f32 %v7344, %v7361
      %v7382 = vmul.f32 %v7345, %v7361
      %v7383 = vmul.f32 %v7346, %v7361
      %v7384 = vmul.f32 %v7347, %v7361
      %v7385 = vmul.f32 %v7348, %v7361
      %v7386 = vmul.f32 %v7349, %v7361
      %v7387 = vmul.f32 %v7350, %v7361
      %v7388 = vmul.f32 %v7351, %v7361
      %v7389 = vmul.f32 %v7352, %v7361
      %v7390 = vmul.f32 %v7353, %v7361
      %v7391 = vmul.f32 %v7354, %v7361
      %v7392 = vmul.f32 %v7355, %v7361
      %v7393 = vmul.f32 %v7356, %v7361
      %v7394 = vadd.f32 %v7293, %v7362
      %v7395 = vadd.f32 %v7294, %v7363
      %v7396 = vadd.f32 %v7295, %v7364
      %v7397 = vadd.f32 %v7296, %v7365
      %v7398 = vadd.f32 %v7297, %v7366
      %v7399 = vadd.f32 %v7298, %v7367
      %v7400 = vadd.f32 %v7299, %v7368
      %v7401 = vadd.f32 %v7300, %v7369
      %v7402 = vadd.f32 %v7301, %v7370
      %v7403 = vadd.f32 %v7302, %v7371
      %v7404 = vadd.f32 %v7303, %v7372
      %v7405 = vadd.f32 %v7304, %v7373
      %v7406 = vadd.f32 %v7305, %v7374
      %v7407 = vadd.f32 %v7306, %v7375
      %v7408 = vadd.f32 %v7307, %v7376
      %v7409 = vadd.f32 %v7308, %v7377
      %v7410 = vadd.f32 %v7309, %v7378
      %v7411 = vadd.f32 %v7310, %v7379
      %v7412 = vadd.f32 %v7311, %v7380
      %v7413 = vadd.f32 %v7312, %v7381
      %v7414 = vadd.f32 %v7313, %v7382
      %v7415 = vadd.f32 %v7314, %v7383
      %v7416 = vadd.f32 %v7315, %v7384
      %v7417 = vadd.f32 %v7316, %v7385
      %v7418 = vadd.f32 %v7317, %v7386
      %v7419 = vadd.f32 %v7318, %v7387
      %v7420 = vadd.f32 %v7319, %v7388
      %v7421 = vadd.f32 %v7320, %v7389
      %v7422 = vadd.f32 %v7321, %v7390
      %v7423 = vadd.f32 %v7322, %v7391
      %v7424 = vadd.f32 %v7323, %v7392
      %v7425 = vadd.f32 %v7324, %v7393
      %v7426 = vsel %vm4806, %v7394, 0.0
      %7427 = vadd.xlane.f32.xlu0 %v7426
      %v7428 = vpop.xlane.xlu0 %7427
      %v7429 = vsel %vm4806, %v7395, 0.0
      %7430 = vadd.xlane.f32.xlu0 %v7429
      %v7431 = vpop.xlane.xlu0 %7430
      %v7432 = vsel %vm4806, %v7396, 0.0
      %7433 = vadd.xlane.f32.xlu0 %v7432
      %v7434 = vpop.xlane.xlu0 %7433
      %v7435 = vsel %vm4806, %v7397, 0.0
      %7436 = vadd.xlane.f32.xlu0 %v7435
      %v7437 = vpop.xlane.xlu0 %7436
      %v7438 = vsel %vm4806, %v7398, 0.0
      %7439 = vadd.xlane.f32.xlu0 %v7438
      %v7440 = vpop.xlane.xlu0 %7439
      %v7441 = vsel %vm4806, %v7399, 0.0
      %7442 = vadd.xlane.f32.xlu0 %v7441
      %v7443 = vpop.xlane.xlu0 %7442
      %v7444 = vsel %vm4806, %v7400, 0.0
      %7445 = vadd.xlane.f32.xlu0 %v7444
      %v7446 = vpop.xlane.xlu0 %7445
      %v7447 = vsel %vm4806, %v7401, 0.0
      %7448 = vadd.xlane.f32.xlu0 %v7447
      %v7449 = vpop.xlane.xlu0 %7448
      %v7450 = vsel %vm4806, %v7402, 0.0
      %7451 = vadd.xlane.f32.xlu0 %v7450
      %v7452 = vpop.xlane.xlu0 %7451
      %v7453 = vsel %vm4806, %v7403, 0.0
      %7454 = vadd.xlane.f32.xlu0 %v7453
      %v7455 = vpop.xlane.xlu0 %7454
      %v7456 = vsel %vm4806, %v7404, 0.0
      %7457 = vadd.xlane.f32.xlu0 %v7456
      %v7458 = vpop.xlane.xlu0 %7457
      %v7459 = vsel %vm4806, %v7405, 0.0
      %7460 = vadd.xlane.f32.xlu0 %v7459
      %v7461 = vpop.xlane.xlu0 %7460
      %v7462 = vsel %vm4806, %v7406, 0.0
      %7463 = vadd.xlane.f32.xlu0 %v7462
      %v7464 = vpop.xlane.xlu0 %7463
      %v7465 = vsel %vm4806, %v7407, 0.0
      %7466 = vadd.xlane.f32.xlu0 %v7465
      %v7467 = vpop.xlane.xlu0 %7466
      %v7468 = vsel %vm4806, %v7408, 0.0
      %7469 = vadd.xlane.f32.xlu0 %v7468
      %v7470 = vpop.xlane.xlu0 %7469
      %v7471 = vsel %vm4806, %v7409, 0.0
      %7472 = vadd.xlane.f32.xlu0 %v7471
      %v7473 = vpop.xlane.xlu0 %7472
      %v7474 = vsel %vm4806, %v7410, 0.0
      %7475 = vadd.xlane.f32.xlu0 %v7474
      %v7476 = vpop.xlane.xlu0 %7475
      %v7477 = vsel %vm4806, %v7411, 0.0
      %7478 = vadd.xlane.f32.xlu0 %v7477
      %v7479 = vpop.xlane.xlu0 %7478
      %v7480 = vsel %vm4806, %v7412, 0.0
      %7481 = vadd.xlane.f32.xlu0 %v7480
      %v7482 = vpop.xlane.xlu0 %7481
      %v7483 = vsel %vm4806, %v7413, 0.0
      %7484 = vadd.xlane.f32.xlu0 %v7483
      %v7485 = vpop.xlane.xlu0 %7484
      %v7486 = vsel %vm4806, %v7414, 0.0
      %7487 = vadd.xlane.f32.xlu0 %v7486
      %v7488 = vpop.xlane.xlu0 %7487
      %v7489 = vsel %vm4806, %v7415, 0.0
      %7490 = vadd.xlane.f32.xlu0 %v7489
      %v7491 = vpop.xlane.xlu0 %7490
      %v7492 = vsel %vm4806, %v7416, 0.0
      %7493 = vadd.xlane.f32.xlu0 %v7492
      %v7494 = vpop.xlane.xlu0 %7493
      %v7495 = vsel %vm4806, %v7417, 0.0
      %7496 = vadd.xlane.f32.xlu0 %v7495
      %v7497 = vpop.xlane.xlu0 %7496
      %v7498 = vsel %vm4806, %v7418, 0.0
      %7499 = vadd.xlane.f32.xlu0 %v7498
      %v7500 = vpop.xlane.xlu0 %7499
      %v7501 = vsel %vm4806, %v7419, 0.0
      %7502 = vadd.xlane.f32.xlu0 %v7501
      %v7503 = vpop.xlane.xlu0 %7502
      %v7504 = vsel %vm4806, %v7420, 0.0
      %7505 = vadd.xlane.f32.xlu0 %v7504
      %v7506 = vpop.xlane.xlu0 %7505
      %v7507 = vsel %vm4806, %v7421, 0.0
      %7508 = vadd.xlane.f32.xlu0 %v7507
      %v7509 = vpop.xlane.xlu0 %7508
      %v7510 = vsel %vm4806, %v7422, 0.0
      %7511 = vadd.xlane.f32.xlu0 %v7510
      %v7512 = vpop.xlane.xlu0 %7511
      %v7513 = vsel %vm4806, %v7423, 0.0
      %7514 = vadd.xlane.f32.xlu0 %v7513
      %v7515 = vpop.xlane.xlu0 %7514
      %v7516 = vsel %vm4806, %v7424, 0.0
      %7517 = vadd.xlane.f32.xlu0 %v7516
      %v7518 = vpop.xlane.xlu0 %7517
      %v7519 = vsel %vm4806, %v7425, 0.0
      %7520 = vadd.xlane.f32.xlu0 %v7519
      %v7521 = vpop.xlane.xlu0 %7520
      %s7522 = sld [smem:[#allocation4]]
      %v7523 = vstv %s7522
      %v7524 = vadd.f32 %v7428, %v7523
      %v7525 = vadd.f32 %v7431, %v7523
      %v7526 = vadd.f32 %v7434, %v7523
      %v7527 = vadd.f32 %v7437, %v7523
      %v7528 = vadd.f32 %v7440, %v7523
      %v7529 = vadd.f32 %v7443, %v7523
      %v7530 = vadd.f32 %v7446, %v7523
      %v7531 = vadd.f32 %v7449, %v7523
      %v7532 = vadd.f32 %v7452, %v7523
      %v7533 = vadd.f32 %v7455, %v7523
      %v7534 = vadd.f32 %v7458, %v7523
      %v7535 = vadd.f32 %v7461, %v7523
      %v7536 = vadd.f32 %v7464, %v7523
      %v7537 = vadd.f32 %v7467, %v7523
      %v7538 = vadd.f32 %v7470, %v7523
      %v7539 = vadd.f32 %v7473, %v7523
      %v7540 = vadd.f32 %v7476, %v7523
      %v7541 = vadd.f32 %v7479, %v7523
      %v7542 = vadd.f32 %v7482, %v7523
      %v7543 = vadd.f32 %v7485, %v7523
      %v7544 = vadd.f32 %v7488, %v7523
      %v7545 = vadd.f32 %v7491, %v7523
      %v7546 = vadd.f32 %v7494, %v7523
      %v7547 = vadd.f32 %v7497, %v7523
      %v7548 = vadd.f32 %v7500, %v7523
      %v7549 = vadd.f32 %v7503, %v7523
      %v7550 = vadd.f32 %v7506, %v7523
      %v7551 = vadd.f32 %v7509, %v7523
      %v7552 = vadd.f32 %v7512, %v7523
      %v7553 = vadd.f32 %v7515, %v7523
      %v7554 = vadd.f32 %v7518, %v7523
      %v7555 = vadd.f32 %v7521, %v7523
      %v7588 = vlaneseq
      %v7589 = vand.u32 %v7588, 127
      %v7590 = vlaneseq
      %v7591 = vshrl.u32 %v7590, 7
      %v7592 = vsub.s32 %v7589, %v7591
      %v7593 = vrot.slane %v7524, %v7592
      %v7594 = vadd.s32 %v7589, 4294967288
      %v7595 = vlaneseq
      %v7596 = vshrl.u32 %v7595, 7
      %v7597 = vsub.s32 %v7594, %v7596
      %v7598 = vrot.slane %v7525, %v7597
      %vm7599 = vcmask 130112
      %v7600 = vsel %vm7599, %v7598, %v7593
      %v7601 = vlaneseq
      %v7602 = vshrl.u32 %v7601, 7
      %v7603 = vsub.s32 %v7589, %v7602
      %v7604 = vrot.slane %v7526, %v7603
      %v7605 = vlaneseq
      %v7606 = vshrl.u32 %v7605, 7
      %v7607 = vsub.s32 %v7594, %v7606
      %v7608 = vrot.slane %v7527, %v7607
      %v7609 = vsel %vm7599, %v7608, %v7604
      %v7610 = vlaneseq
      %v7611 = vshrl.u32 %v7610, 7
      %v7612 = vsub.s32 %v7589, %v7611
      %v7613 = vrot.slane %v7528, %v7612
      %v7614 = vlaneseq
      %v7615 = vshrl.u32 %v7614, 7
      %v7616 = vsub.s32 %v7594, %v7615
      %v7617 = vrot.slane %v7529, %v7616
      %v7618 = vsel %vm7599, %v7617, %v7613
      %v7619 = vlaneseq
      %v7620 = vshrl.u32 %v7619, 7
      %v7621 = vsub.s32 %v7589, %v7620
      %v7622 = vrot.slane %v7530, %v7621
      %v7623 = vlaneseq
      %v7624 = vshrl.u32 %v7623, 7
      %v7625 = vsub.s32 %v7594, %v7624
      %v7626 = vrot.slane %v7531, %v7625
      %v7627 = vsel %vm7599, %v7626, %v7622
      %v7628 = vlaneseq
      %v7629 = vshrl.u32 %v7628, 7
      %v7630 = vsub.s32 %v7589, %v7629
      %v7631 = vrot.slane %v7532, %v7630
      %v7632 = vlaneseq
      %v7633 = vshrl.u32 %v7632, 7
      %v7634 = vsub.s32 %v7594, %v7633
      %v7635 = vrot.slane %v7533, %v7634
      %v7636 = vsel %vm7599, %v7635, %v7631
      %v7637 = vlaneseq
      %v7638 = vshrl.u32 %v7637, 7
      %v7639 = vsub.s32 %v7589, %v7638
      %v7640 = vrot.slane %v7534, %v7639
      %v7641 = vlaneseq
      %v7642 = vshrl.u32 %v7641, 7
      %v7643 = vsub.s32 %v7594, %v7642
      %v7644 = vrot.slane %v7535, %v7643
      %v7645 = vsel %vm7599, %v7644, %v7640
      %v7646 = vlaneseq
      %v7647 = vshrl.u32 %v7646, 7
      %v7648 = vsub.s32 %v7589, %v7647
      %v7649 = vrot.slane %v7536, %v7648
      %v7650 = vlaneseq
      %v7651 = vshrl.u32 %v7650, 7
      %v7652 = vsub.s32 %v7594, %v7651
      %v7653 = vrot.slane %v7537, %v7652
      %v7654 = vsel %vm7599, %v7653, %v7649
      %v7655 = vlaneseq
      %v7656 = vshrl.u32 %v7655, 7
      %v7657 = vsub.s32 %v7589, %v7656
      %v7658 = vrot.slane %v7538, %v7657
      %v7659 = vlaneseq
      %v7660 = vshrl.u32 %v7659, 7
      %v7661 = vsub.s32 %v7594, %v7660
      %v7662 = vrot.slane %v7539, %v7661
      %v7663 = vsel %vm7599, %v7662, %v7658
      %v7664 = vlaneseq
      %v7665 = vshrl.u32 %v7664, 7
      %v7666 = vsub.s32 %v7589, %v7665
      %v7667 = vrot.slane %v7540, %v7666
      %v7668 = vlaneseq
      %v7669 = vshrl.u32 %v7668, 7
      %v7670 = vsub.s32 %v7594, %v7669
      %v7671 = vrot.slane %v7541, %v7670
      %v7672 = vsel %vm7599, %v7671, %v7667
      %v7673 = vlaneseq
      %v7674 = vshrl.u32 %v7673, 7
      %v7675 = vsub.s32 %v7589, %v7674
      %v7676 = vrot.slane %v7542, %v7675
      %v7677 = vlaneseq
      %v7678 = vshrl.u32 %v7677, 7
      %v7679 = vsub.s32 %v7594, %v7678
      %v7680 = vrot.slane %v7543, %v7679
      %v7681 = vsel %vm7599, %v7680, %v7676
      %v7682 = vlaneseq
      %v7683 = vshrl.u32 %v7682, 7
      %v7684 = vsub.s32 %v7589, %v7683
      %v7685 = vrot.slane %v7544, %v7684
      %v7686 = vlaneseq
      %v7687 = vshrl.u32 %v7686, 7
      %v7688 = vsub.s32 %v7594, %v7687
      %v7689 = vrot.slane %v7545, %v7688
      %v7690 = vsel %vm7599, %v7689, %v7685
      %v7691 = vlaneseq
      %v7692 = vshrl.u32 %v7691, 7
      %v7693 = vsub.s32 %v7589, %v7692
      %v7694 = vrot.slane %v7546, %v7693
      %v7695 = vlaneseq
      %v7696 = vshrl.u32 %v7695, 7
      %v7697 = vsub.s32 %v7594, %v7696
      %v7698 = vrot.slane %v7547, %v7697
      %v7699 = vsel %vm7599, %v7698, %v7694
      %v7700 = vlaneseq
      %v7701 = vshrl.u32 %v7700, 7
      %v7702 = vsub.s32 %v7589, %v7701
      %v7703 = vrot.slane %v7548, %v7702
      %v7704 = vlaneseq
      %v7705 = vshrl.u32 %v7704, 7
      %v7706 = vsub.s32 %v7594, %v7705
      %v7707 = vrot.slane %v7549, %v7706
      %v7708 = vsel %vm7599, %v7707, %v7703
      %v7709 = vlaneseq
      %v7710 = vshrl.u32 %v7709, 7
      %v7711 = vsub.s32 %v7589, %v7710
      %v7712 = vrot.slane %v7550, %v7711
      %v7713 = vlaneseq
      %v7714 = vshrl.u32 %v7713, 7
      %v7715 = vsub.s32 %v7594, %v7714
      %v7716 = vrot.slane %v7551, %v7715
      %v7717 = vsel %vm7599, %v7716, %v7712
      %v7718 = vlaneseq
      %v7719 = vshrl.u32 %v7718, 7
      %v7720 = vsub.s32 %v7589, %v7719
      %v7721 = vrot.slane %v7552, %v7720
      %v7722 = vlaneseq
      %v7723 = vshrl.u32 %v7722, 7
      %v7724 = vsub.s32 %v7594, %v7723
      %v7725 = vrot.slane %v7553, %v7724
      %v7726 = vsel %vm7599, %v7725, %v7721
      %v7727 = vlaneseq
      %v7728 = vshrl.u32 %v7727, 7
      %v7729 = vsub.s32 %v7589, %v7728
      %v7730 = vrot.slane %v7554, %v7729
      %v7731 = vlaneseq
      %v7732 = vshrl.u32 %v7731, 7
      %v7733 = vsub.s32 %v7594, %v7732
      %v7734 = vrot.slane %v7555, %v7733
      %v7735 = vsel %vm7599, %v7734, %v7730
      %vm7736 = vcmask 1041409
      %v7737 = vsel %vm7736, %v7609, %v7600
      %vm7738 = vcmask 1042434
      %v7739 = vsel %vm7738, %v7618, %v7737
      %vm7740 = vcmask 1043459
      %v7741 = vsel %vm7740, %v7627, %v7739
      %vm7742 = vcmask 1044484
      %v7743 = vsel %vm7742, %v7636, %v7741
      %vm7744 = vcmask 1045509
      %v7745 = vsel %vm7744, %v7645, %v7743
      %vm7746 = vcmask 1046534
      %v7747 = vsel %vm7746, %v7654, %v7745
      %vm7748 = vcmask 1047559
      %v7749 = vsel %vm7748, %v7663, %v7747
      %v7750 = vsel %vm7736, %v7681, %v7672
      %v7751 = vsel %vm7738, %v7690, %v7750
      %v7752 = vsel %vm7740, %v7699, %v7751
      %v7753 = vsel %vm7742, %v7708, %v7752
      %v7754 = vsel %vm7744, %v7717, %v7753
      %v7755 = vsel %vm7746, %v7726, %v7754
      %v7756 = vsel %vm7748, %v7735, %v7755
      %v7759 = vcombine.high %v7749, 0.0
      %v7761 = vunpack.c.l.s4 1983009808
      %v7762 = vunpack.c.0.s8 %v7761
      %v7763 = vlaneseq
      %v7764 = vshrl.u32 %v7763, 7
      %v7765 = vsub.s32 %v7762, %v7764
      %v7766 = vrot.slane %v7749, %v7765
      %v7768 = vunpack.c.l.s4 1983009808
      %v7769 = vunpack.c.0.s8 %v7768
      %v7770 = vlaneseq
      %v7771 = vshrl.u32 %v7770, 7
      %v7772 = vsub.s32 %v7769, %v7771
      %v7773 = vrot.slane %v7759, %v7772
      %v7774 = vcombine.high %v7766, 0.0
      %v7776 = vunpack.c.l.s4 1934713408
      %v7777 = vunpack.c.0.s8 %v7776
      %v7778 = vlaneseq
      %v7779 = vshrl.u32 %v7778, 7
      %v7780 = vsub.s32 %v7777, %v7779
      %v7781 = vrot.slane %v7766, %v7780
      %v7783 = vunpack.c.l.s4 1934713408
      %v7784 = vunpack.c.0.s8 %v7783
      %v7785 = vlaneseq
      %v7786 = vshrl.u32 %v7785, 7
      %v7787 = vsub.s32 %v7784, %v7786
      %v7788 = vrot.slane %v7774, %v7787
      %v7789 = vcombine.high %v7773, 0.0
      %v7791 = vunpack.c.l.s4 1934713408
      %v7792 = vunpack.c.0.s8 %v7791
      %v7793 = vlaneseq
      %v7794 = vshrl.u32 %v7793, 7
      %v7795 = vsub.s32 %v7792, %v7794
      %v7796 = vrot.slane %v7773, %v7795
      %v7798 = vunpack.c.l.s4 1934713408
      %v7799 = vunpack.c.0.s8 %v7798
      %v7800 = vlaneseq
      %v7801 = vshrl.u32 %v7800, 7
      %v7802 = vsub.s32 %v7799, %v7801
      %v7803 = vrot.slane %v7789, %v7802
      %v7804 = vcombine.high %v7781, 0.0
      %v7805 = vcombine.high %v7788, 0.0
      %v7806 = vcombine.high %v7796, 0.0
      %v7807 = vcombine.high %v7803, 0.0
      %v7808 = vcombine.high %v7756, 0.0
      %v7810 = vunpack.c.l.s4 1983009808
      %v7811 = vunpack.c.0.s8 %v7810
      %v7812 = vlaneseq
      %v7813 = vshrl.u32 %v7812, 7
      %v7814 = vsub.s32 %v7811, %v7813
      %v7815 = vrot.slane %v7756, %v7814
      %v7817 = vunpack.c.l.s4 1983009808
      %v7818 = vunpack.c.0.s8 %v7817
      %v7819 = vlaneseq
      %v7820 = vshrl.u32 %v7819, 7
      %v7821 = vsub.s32 %v7818, %v7820
      %v7822 = vrot.slane %v7808, %v7821
      %v7823 = vcombine.high %v7815, 0.0
      %v7825 = vunpack.c.l.s4 1934713408
      %v7826 = vunpack.c.0.s8 %v7825
      %v7827 = vlaneseq
      %v7828 = vshrl.u32 %v7827, 7
      %v7829 = vsub.s32 %v7826, %v7828
      %v7830 = vrot.slane %v7815, %v7829
      %v7832 = vunpack.c.l.s4 1934713408
      %v7833 = vunpack.c.0.s8 %v7832
      %v7834 = vlaneseq
      %v7835 = vshrl.u32 %v7834, 7
      %v7836 = vsub.s32 %v7833, %v7835
      %v7837 = vrot.slane %v7823, %v7836
      %v7838 = vcombine.high %v7822, 0.0
      %v7840 = vunpack.c.l.s4 1934713408
      %v7841 = vunpack.c.0.s8 %v7840
      %v7842 = vlaneseq
      %v7843 = vshrl.u32 %v7842, 7
      %v7844 = vsub.s32 %v7841, %v7843
      %v7845 = vrot.slane %v7822, %v7844
      %v7847 = vunpack.c.l.s4 1934713408
      %v7848 = vunpack.c.0.s8 %v7847
      %v7849 = vlaneseq
      %v7850 = vshrl.u32 %v7849, 7
      %v7851 = vsub.s32 %v7848, %v7850
      %v7852 = vrot.slane %v7838, %v7851
      %v7853 = vcombine.high %v7830, 0.0
      %v7854 = vcombine.high %v7837, 0.0
      %v7855 = vcombine.high %v7845, 0.0
      %v7856 = vcombine.high %v7852, 0.0
      %7858 = vrot.lane.b32.xlu0 %v7804, 16
      %v7859 = vpop.permute.xlu0 %7858
      %7862 = vrot.lane.b32.xlu0 %v7788, 32
      %v7863 = vpop.permute.xlu0 %7862
      %7866 = vrot.lane.b32.xlu0 %v7805, 48
      %v7867 = vpop.permute.xlu0 %7866
      %7870 = vrot.lane.b32.xlu0 %v7796, 64
      %v7871 = vpop.permute.xlu0 %7870
      %7874 = vrot.lane.b32.xlu0 %v7806, 80
      %v7875 = vpop.permute.xlu0 %7874
      %7878 = vrot.lane.b32.xlu0 %v7803, 96
      %v7879 = vpop.permute.xlu0 %7878
      %7882 = vrot.lane.b32.xlu0 %v7807, 112
      %v7883 = vpop.permute.xlu0 %7882
      %7886 = vrot.lane.b32.xlu0 %v7853, 16
      %v7887 = vpop.permute.xlu0 %7886
      %7890 = vrot.lane.b32.xlu0 %v7837, 32
      %v7891 = vpop.permute.xlu0 %7890
      %7894 = vrot.lane.b32.xlu0 %v7854, 48
      %v7895 = vpop.permute.xlu0 %7894
      %7898 = vrot.lane.b32.xlu0 %v7845, 64
      %v7899 = vpop.permute.xlu0 %7898
      %7902 = vrot.lane.b32.xlu0 %v7855, 80
      %v7903 = vpop.permute.xlu0 %7902
      %7906 = vrot.lane.b32.xlu0 %v7852, 96
      %v7907 = vpop.permute.xlu0 %7906
      %7910 = vrot.lane.b32.xlu0 %v7856, 112
      %v7911 = vpop.permute.xlu0 %7910
      %vm7913 = vcmask 130048
      %v7914 = vsel %vm7913, %v7781, %v7859
      %v7915 = vsel %vm4806, %v7914, %v7863
      %vm7916 = vcmask 392192
      %v7917 = vsel %vm7916, %v7915, %v7867
      %v7918 = vsel %vm676, %v7917, %v7871
      %vm7919 = vcmask 654336
      %v7920 = vsel %vm7919, %v7918, %v7875
      %vm7921 = vcmask 785408
      %v7922 = vsel %vm7921, %v7920, %v7879
      %vm7923 = vcmask 916480
      %v7924 = vsel %vm7923, %v7922, %v7883
      %v7925 = vsel %vm7913, %v7830, %v7887
      %v7926 = vsel %vm4806, %v7925, %v7891
      %v7927 = vsel %vm7916, %v7926, %v7895
      %v7928 = vsel %vm676, %v7927, %v7899
      %v7929 = vsel %vm7919, %v7928, %v7903
      %v7930 = vsel %vm7921, %v7929, %v7907
      %v7931 = vsel %vm7923, %v7930, %v7911
      %v7934 = vcombine.low %v7924, %v7931
      %v7936 = vunpack.c.l.s4 1966171168
      %v7937 = vunpack.c.0.s8 %v7936
      %v7938 = vlaneseq
      %v7939 = vshrl.u32 %v7938, 7
      %v7940 = vsub.s32 %v7937, %v7939
      %v7941 = vrot.slane %v7934, %v7940
      %v7943 = vunpack.c.l.s4 1966171168
      %v7944 = vunpack.c.0.s8 %v7943
      %v7945 = vlaneseq
      %v7946 = vshrl.u32 %v7945, 7
      %v7947 = vsub.s32 %v7944, %v7946
      %v7948 = vrot.slane %v7941, %v7947
      %v7950 = vlaneseq
      %vm7951 = vcmp.ge.s32.totalorder %v7950, 0
      %vm7952 = vcmp.lt.s32.totalorder %v7950, 256
      %vm7953 = vmand %vm7951, %vm7952
      %7954 = vst.msk [vmem:[%s279] sm:$0x3] %vm7953, %v7948
      %p7955 = scmp.lt.s32.totalorder %s19, 1
      %s7956 = scalar_select %p7955, %s19, 1
      %s7957 = smul.addr %s7956, 2
      %s7958 = scalar_lea.vmem %s7, %s7957
      // Predicated region
      $region49: #{_lambda_.1} parent=47 // pred_check
        %p7959 = pneg %p189
      $region50: #{_lambda_.1} parent=47 // pred_check_branch
        %7961 = sbr.rel (%p7959) target = $region52
      $region51: #{_lambda_.1} parent=47 // pred_region
        _
      $region52: #{_lambda_.1} parent=47 // pred_fallthru
        _
    $region48: #{_lambda_.1} parent=5 // pred_fallthru
      _
    %p7962 = scmp.le.s32.totalorder 2, %s14
    // Predicated region
    $region53: #{_lambda_.1} parent=5 // pred_check
      %p7963 = pneg %p7962
    $region54: #{_lambda_.1} parent=5 // pred_check_branch
      %7965 = sbr.rel (%p7963) target = $region56
    $region55: #{_lambda_.1} parent=5 // pred_region
      %s7966 = ssub.s32 %s14, 2
      // Predicated region
      $region57: #{_lambda_.1} parent=55 // pred_check
        %p7967 = pneg %p195
      $region58: #{_lambda_.1} parent=55 // pred_check_branch
        %7969 = sbr.rel (%p7967) target = $region60
      $region59: #{_lambda_.1} parent=55 // pred_region
        %p7970 = scmp.lt.s32.totalorder %s20, 1
        %s7971 = scalar_select %p7970, %s20, 1
        %s7972 = smul.addr %s7971, 2
        %s7973 = scalar_lea.vmem %s7, %s7972
      $region60: #{_lambda_.1} parent=55 // pred_fallthru
        _
    $region56: #{_lambda_.1} parent=5 // pred_fallthru
      _
  $region6: #{_lambda_.1} parent=0 // loop_footer
    %s18 = sadd.s32 1, %s14
  $region7: #{_lambda_.1} parent=0 // loop_footer_branch
    %13 = sbr.rel target = $region3
  $region8: #{_lambda_.1} parent=0 // loop_exit
    _

</llo_original>
